<compile_context>
chip_gen: v7x
topology: tpu7x:2x2x1
jax: 0.10.0
libtpu: 0.0.40
codegen_flags: <defaults>
</compile_context>

<pallas_src>
import numpy as np
import jax
import jax.numpy as jnp
from jax.experimental import pallas as pl
from jax.experimental.pallas import tpu as pltpu


LANES = 128  # TPU vreg lane width


def _dw_shifts(W4, Q):
    """Distinct packed-row shifts needed by a 5x5 depthwise conv in the packed layout."""
    s = set()
    for sh in range(-2, 3):
        for sw in range(-2, 3):
            d = sh * W4 + sw
            a, r = divmod(d, Q)
            s.add(a)
            if r:
                s.add(a + 1)
    return sorted(s)


# -----------------------------------------------------------------------------
# Fused Pallas kernel (grid iterates LiteConv blocks; activation carried in VMEM)
# -----------------------------------------------------------------------------
def _make_kernel(conv_num, TOT, shifts, margin):
    def add_bias(y, b8):
        # b8 is pre-broadcast to (8, 128): one vreg reused per row-tile, no
        # broadcast_in_dim. (R,128)->(R/8,8,128) reshape is free on TPU.
        r = y.shape[0]
        return (y.reshape(r // 8, 8, LANES) + b8).reshape(r, LANES)

    def kernel(x_ref, mask_ref, dww_ref, dwb_ref, pww_ref, pwb_ref,
               hw_ref, hb_ref, o_ref, buf_ref):
        b = pl.program_id(0)

        @pl.when(b == 0)
        def _init():
            # Zero the halo margins once; they are never written afterwards.
            buf_ref[:margin, :] = jnp.zeros((margin, LANES), jnp.float32)
            buf_ref[margin + TOT:, :] = jnp.zeros((margin, LANES), jnp.float32)
            # Packed input already has zero gutters.
            buf_ref[margin:margin + TOT, :] = x_ref[...]

        def dw(k):
            # 5x5 depthwise conv as a sum of banded matmuls on the MXU.
            # buf_ref's centre holds the (gutter-zeroed) input activation.
            acc = None
            for si, s in enumerate(shifts):
                win = buf_ref[margin + s: margin + s + TOT, :]
                part = jnp.dot(win, dww_ref[0, k, si],
                               preferred_element_type=jnp.float32)
                acc = part if acc is None else acc + part
            return jnp.clip(add_bias(acc, dwb_ref[0, k]), 0.0, 6.0)

        def pw(y, k):
            # 1x1 conv as a block-diagonal matmul in the packed layout.
            z = jnp.dot(y, pww_ref[0, k], preferred_element_type=jnp.float32)
            return jnp.clip(add_bias(z, pwb_ref[0, k]), 0.0, 6.0)

        # LiteConv block b: dw5x5, pw1x1, pw1x1, dw5x5 (BN folded, ReLU6).
        y = pw(pw(dw(0), 0), 1)
        # Gutters must be re-zeroed only before a depthwise conv.
        buf_ref[margin:margin + TOT, :] = y * mask_ref[...]
        y = dw(1)

        @pl.when(b < conv_num - 1)
        def _carry():
            # Carry the (gutter-zeroed) activation to the next block.
            buf_ref[margin:margin + TOT, :] = y * mask_ref[...]

        @pl.when(b == conv_num - 1)
        def _head():
            # Head: 1x1 conv with bias, lane-dense 128-wide store (upper lanes 0).
            z = jnp.dot(y, hw_ref[...], preferred_element_type=jnp.float32)
            o_ref[...] = add_bias(z, hb_ref[...]).astype(o_ref.dtype)

    return kernel


# -----------------------------------------------------------------------------
# Forward wrapper
# -----------------------------------------------------------------------------
def build_forward(conv_num, ch_in, ch_out, planes_out, H, W):
    assert LANES % ch_out == 0, "packed layout needs ch_out to divide 128"
    assert ch_in <= ch_out
    C = ch_out
    Q = LANES // C
    H4, W4 = H + 4, W + 4
    assert (H4 * W4) % Q == 0, "packed layout needs Q to divide (H+4)*(W+4)"
    PR = (H4 * W4) // Q
    shifts = _dw_shifts(W4, Q)
    NS = len(shifts)
    margin = -(-max(abs(shifts[0]), abs(shifts[-1])) // 8) * 8
    QPO = Q * planes_out
    assert QPO <= LANES

    @jax.jit
    def forward(x_nchw, packed):
        N = x_nchw.shape[0]
        TOT = -(-(N * PR) // 8) * 8          # packed rows, multiple of 8
        BUF_R = TOT + 2 * margin

        # NCHW -> packed (TOT, 128): 2-px zero halo, channels zero-padded to C,
        # Q pixels folded into the lane axis, batch stacked along packed rows.
        x = jnp.transpose(x_nchw.astype(jnp.float32), (0, 2, 3, 1))
        x = jnp.pad(x, ((0, 0), (2, 2), (2, 2), (0, C - x.shape[-1])))
        x = x.reshape(N * PR, LANES)
        x = jnp.pad(x, ((0, TOT - N * PR), (0, 0)))

        kernel = _make_kernel(conv_num, TOT, shifts, margin)

        out = pl.pallas_call(
            kernel,
            out_shape=jax.ShapeDtypeStruct((TOT, LANES), jnp.float32),
            grid=(conv_num,),
            in_specs=[
                pl.BlockSpec((TOT, LANES), lambda b: (0, 0)),                    # x
                pl.BlockSpec((TOT, LANES), lambda b: (0, 0)),                    # mask
                pl.BlockSpec((1, 2, NS, LANES, LANES), lambda b: (b, 0, 0, 0, 0)),  # dw banded mats
                pl.BlockSpec((1, 2, 8, LANES), lambda b: (b, 0, 0, 0)),          # dw biases
                pl.BlockSpec((1, 2, LANES, LANES), lambda b: (b, 0, 0, 0)),      # pw block-diag mats
                pl.BlockSpec((1, 2, 8, LANES), lambda b: (b, 0, 0, 0)),          # pw biases
                pl.BlockSpec((LANES, LANES), lambda b: (0, 0)),                  # head weight
                pl.BlockSpec((8, LANES), lambda b: (0, 0)),                      # head bias
            ],
            out_specs=pl.BlockSpec((TOT, LANES), lambda b: (0, 0)),
            scratch_shapes=[pltpu.VMEM((BUF_R, LANES), jnp.float32)],
            compiler_params=pltpu.CompilerParams(
                dimension_semantics=("arbitrary",),   # blocks carry state: sequential
                allow_input_fusion=[True] + [False] * 7,
            ),
        )(x, packed["mask"], packed["dw_w"], packed["dw_b"],
          packed["pw_w"], packed["pw_b"], packed["head_w"], packed["head_b"])

        # Unpack: crop the lane-padded head output, split batch, drop halo, NCHW.
        y = out[:N * PR, :QPO].reshape(N, H4, W4, planes_out)
        y = y[:, 2:2 + H, 2:2 + W, :]
        return jnp.transpose(y, (0, 3, 1, 2))

    return forward


# -----------------------------------------------------------------------------
# Parameter preparation (one-time, outside the forward): fold BN, pad channels,
# build the banded depthwise matmul matrices, block-diagonalize 1x1 weights,
# pre-broadcast all biases across sublanes, build the gutter mask.
# -----------------------------------------------------------------------------
def prepare_params(params, N, H, W, ch_out, planes_out):
    C = ch_out
    Q = LANES // C
    H4, W4 = H + 4, W + 4
    assert (H4 * W4) % Q == 0
    PR = (H4 * W4) // Q
    TOT = -(-(N * PR) // 8) * 8
    shifts = _dw_shifts(W4, Q)
    idx = {s: i for i, s in enumerate(shifts)}
    NS = len(shifts)

    def pack_dw(w, scale, shift):
        # w: (5,5,cw); scale/shift: (cw,) folded-BN scale/shift.
        w = np.asarray(w, np.float32)
        scale = np.asarray(scale, np.float32)
        shift = np.asarray(shift, np.float32)
        cw = w.shape[-1]
        wf = np.zeros((5, 5, C), np.float32)
        wf[:, :, :cw] = w * scale[None, None, :]
        mats = np.zeros((NS, LANES, LANES), np.float32)
        j = np.arange(LANES)
        for kh in range(5):
            for kw in range(5):
                d = (kh - 2) * W4 + (kw - 2)      # tap offset in pixels
                a, r = divmod(d, Q)               # packed-row shift, lane-group shift
                i_full = j + r * C
                wl = wf[kh, kw, j % C]
                lo = i_full < LANES
                mats[idx[a], i_full[lo], j[lo]] += wl[lo]
                if r:
                    hi = ~lo                      # wrap-carry into the next packed row
                    mats[idx[a + 1], i_full[hi] - LANES, j[hi]] += wl[hi]
        bf = np.zeros((C,), np.float32)
        bf[:cw] = shift
        b8 = np.array(np.broadcast_to(np.tile(bf, Q)[None, :], (8, LANES)), np.float32)
        return mats, b8

    def pack_pw(w, scale, shift, out_lanes):
        # w: (cin, cout); scale/shift: (cout,).
        w = np.asarray(w, np.float32)
        scale = np.asarray(scale, np.float32)
        shift = np.asarray(shift, np.float32)
        cw, cout = w.shape
        wf = np.zeros((C, cout), np.float32)
        wf[:cw] = w * scale[None, :]
        big = np.kron(np.eye(Q, dtype=np.float32), wf)        # (128, Q*cout) block-diag
        bias = np.tile(shift, Q)
        if big.shape[1] < out_lanes:                           # lane-dense pad (head)
            big = np.pad(big, ((0, 0), (0, out_lanes - big.shape[1])))
            bias = np.pad(bias, (0, out_lanes - bias.shape[0]))
        b8 = np.array(np.broadcast_to(bias[None, :], (8, out_lanes)), np.float32)
        return big.astype(np.float32), b8

    dw_w, dw_b, pw_w, pw_b = [], [], [], []
    for p in params["feat"]:
        m1, b1 = pack_dw(p["dw1_w"], p["dw1_s"], p["dw1_b"])
        m2, b2 = pack_dw(p["dw2_w"], p["dw2_s"], p["dw2_b"])
        w1, c1 = pack_pw(p["pw1_w"], p["pw1_s"], p["pw1_b"], LANES)
        w2, c2 = pack_pw(p["pw2_w"], p["pw2_s"], p["pw2_b"], LANES)
        dw_w.append(np.stack([m1, m2]))
        dw_b.append(np.stack([b1, b2]))
        pw_w.append(np.stack([w1, w2]))
        pw_b.append(np.stack([c1, c2]))

    head_w, head_b = pack_pw(params["head_w"],
                             np.ones((planes_out,), np.float32),
                             params["head_b"], LANES)

    # Gutter mask in the packed layout: 1 on interior pixels of each image,
    # 0 on the 2-px halo and on the batch-padding tail rows.
    k = Q * np.arange(PR)[:, None] + np.arange(LANES)[None, :] // C
    hh, ww = k // W4, k % W4
    m_img = ((hh >= 2) & (hh < 2 + H) & (ww >= 2) & (ww < 2 + W)).astype(np.float32)
    mask = np.zeros((TOT, LANES), np.float32)
    mask[:N * PR] = np.tile(m_img, (N, 1))

    return dict(mask=jnp.asarray(mask),
                dw_w=jnp.asarray(np.stack(dw_w)),   # (conv_num, 2, NS, 128, 128)
                dw_b=jnp.asarray(np.stack(dw_b)),   # (conv_num, 2, 8, 128)
                pw_w=jnp.asarray(np.stack(pw_w)),   # (conv_num, 2, 128, 128)
                pw_b=jnp.asarray(np.stack(pw_b)),   # (conv_num, 2, 8, 128)
                head_w=jnp.asarray(head_w),         # (128, 128)
                head_b=jnp.asarray(head_b))         # (8, 128)


# -----------------------------------------------------------------------------
# Deterministic "logical" parameter construction (same as the PyTorch module)
# -----------------------------------------------------------------------------
def _bn_fold(key, C):
    k1, k2, k3, k4 = jax.random.split(key, 4)
    gamma = 1.0 + 0.05 * jax.random.normal(k1, (C,), jnp.float32)
    beta = 0.05 * jax.random.normal(k2, (C,), jnp.float32)
    mean = 0.05 * jax.random.normal(k3, (C,), jnp.float32)
    var = 1.0 + 0.05 * jnp.abs(jax.random.normal(k4, (C,), jnp.float32))
    scale = gamma / jnp.sqrt(var + 1e-5)
    shift = beta - mean * scale
    return scale, shift


def make_params(key, ch_in, ch_out, planes_out, conv_num, std=0.1):
    feat = []
    for i in range(conv_num):
        cin = ch_in if i == 0 else ch_out
        key, *ks = jax.random.split(key, 9)
        s1, b1 = _bn_fold(ks[4], cin)
        s2, b2 = _bn_fold(ks[5], ch_out)
        s3, b3 = _bn_fold(ks[6], ch_out)
        s4, b4 = _bn_fold(ks[7], ch_out)
        feat.append(dict(
            dw1_w=std * jax.random.normal(ks[0], (5, 5, cin), jnp.float32),
            dw1_s=s1, dw1_b=b1,
            pw1_w=std * jax.random.normal(ks[1], (cin, ch_out), jnp.float32),
            pw1_s=s2, pw1_b=b2,
            pw2_w=std * jax.random.normal(ks[2], (ch_out, ch_out), jnp.float32),
            pw2_s=s3, pw2_b=b3,
            dw2_w=std * jax.random.normal(ks[3], (5, 5, ch_out), jnp.float32),
            dw2_s=s4, dw2_b=b4,
        ))
    key, kh = jax.random.split(key)
    head_w = 0.01 * jax.random.normal(kh, (ch_out, planes_out), jnp.float32)
    head_b = jnp.full((planes_out,), 0.01, jnp.float32)   # nn.init.constant_ style
    return dict(feat=feat, head_w=head_w, head_b=head_b)


# -----------------------------------------------------------------------------
# Pure-JAX reference (for correctness check)
# -----------------------------------------------------------------------------
def ref_forward(x_nchw, params):
    x = jnp.transpose(x_nchw, (0, 2, 3, 1))

    def dw(x, w, s, b):
        y = jax.lax.conv_general_dilated(
            x, w[:, :, None, :], (1, 1), "SAME",
            dimension_numbers=("NHWC", "HWIO", "NHWC"),
            feature_group_count=x.shape[-1])
        return jnp.clip(y * s + b, 0.0, 6.0)

    def pw(x, w, s, b, act=True):
        y = jnp.einsum("nhwc,cd->nhwd", x, w) * s + b
        return jnp.clip(y, 0.0, 6.0) if act else y

    for p in params["feat"]:
        x = dw(x, p["dw1_w"], p["dw1_s"], p["dw1_b"])
        x = pw(x, p["pw1_w"], p["pw1_s"], p["pw1_b"])
        x = pw(x, p["pw2_w"], p["pw2_s"], p["pw2_b"])
        x = dw(x, p["dw2_w"], p["dw2_s"], p["dw2_b"])
    y = pw(x, params["head_w"], jnp.ones_like(params["head_b"]),
           params["head_b"], act=False)
    return jnp.transpose(y, (0, 3, 1, 2))


# -----------------------------------------------------------------------------
if __name__ == "__main__":
    # HeadModuleLite(ch_in=8, ch_out=32, planes_out=16, conv_num=2) on
    # x of shape (N=2, C=8, H=16, W=16).
    N, CH_IN, CH_OUT, PLANES_OUT, H, W = 2, 8, 32, 16, 16, 16
    CONV_NUM = 2

    key = jax.random.PRNGKey(0)
    kx, kp = jax.random.split(key)
    x = jax.random.normal(kx, (N, CH_IN, H, W), jnp.float32)
    params = make_params(kp, CH_IN, CH_OUT, PLANES_OUT, conv_num=CONV_NUM)
    packed = prepare_params(params, N, H, W, CH_OUT, PLANES_OUT)

    forward = build_forward(CONV_NUM, CH_IN, CH_OUT, PLANES_OUT, H, W)
    out = jax.block_until_ready(forward(x, packed))

    assert out.shape == (N, PLANES_OUT, H, W), out.shape
    assert bool(jnp.all(jnp.isfinite(out)))

    ref = jax.block_until_ready(ref_forward(x, params))
    np.testing.assert_allclose(np.asarray(out), np.asarray(ref),
                               rtol=2e-3, atol=1e-3)

    print("KERNEL_OK")
</pallas_src>

<mosaic_0001>
module attributes {stable_mosaic.version = 11 : i64} {
  func.func @kernel(%arg0: i32, %arg1: memref<200x128xf32, #tpu.memory_space<vmem>>, %arg2: memref<200x128xf32, #tpu.memory_space<vmem>>, %arg3: memref<1x2x15x128x128xf32, #tpu.memory_space<vmem>>, %arg4: memref<1x2x8x128xf32, #tpu.memory_space<vmem>>, %arg5: memref<1x2x128x128xf32, #tpu.memory_space<vmem>>, %arg6: memref<1x2x8x128xf32, #tpu.memory_space<vmem>>, %arg7: memref<128x128xf32, #tpu.memory_space<vmem>>, %arg8: memref<8x128xf32, #tpu.memory_space<vmem>>, %arg9: memref<200x128xf32, #tpu.memory_space<vmem>>, %arg10: memref<232x128xf32, #tpu.memory_space<vmem>>) attributes {dimension_semantics = [#tpu.dimension_semantics<arbitrary>], iteration_bounds = array<i64: 2>, scalar_prefetch = 0 : i64, scratch_operands = 1 : i64, tpu.core_type = #tpu.core_type<tc>, window_params = [{pipeline_mode = #tpu.pipeline_mode<synchronous>, transform_indices = @transform_0, window_bounds = array<i64: 200, 128>}, {pipeline_mode = #tpu.pipeline_mode<synchronous>, transform_indices = @transform_1, window_bounds = array<i64: 200, 128>}, {transform_indices = @transform_2, window_bounds = array<i64: 1, 2, 15, 128, 128>}, {transform_indices = @transform_3, window_bounds = array<i64: 1, 2, 8, 128>}, {transform_indices = @transform_4, window_bounds = array<i64: 1, 2, 128, 128>}, {transform_indices = @transform_5, window_bounds = array<i64: 1, 2, 8, 128>}, {pipeline_mode = #tpu.pipeline_mode<synchronous>, transform_indices = @transform_6, window_bounds = array<i64: 128, 128>}, {pipeline_mode = #tpu.pipeline_mode<synchronous>, transform_indices = @transform_7, window_bounds = array<i64: 8, 128>}, {pipeline_mode = #tpu.pipeline_mode<synchronous>, transform_indices = @transform_8, window_bounds = array<i64: 200, 128>}]} {
    %c0_i32 = arith.constant 0 : i32
    %0 = arith.cmpi eq, %arg0, %c0_i32 : i32
    %1 = arith.extui %0 : i1 to i32
    %c0_i32_0 = arith.constant 0 : i32
    %2 = arith.cmpi ne, %1, %c0_i32_0 : i32
    scf.if %2 {
      %cst_257 = arith.constant 0.000000e+00 : f32
      %210 = vector.broadcast %cst_257 : f32 to vector<16x128xf32>
      %c0_258 = arith.constant 0 : index
      %c0_259 = arith.constant 0 : index
      %211 = vector.load %arg10[%c0_258, %c0_259] : memref<232x128xf32, #tpu.memory_space<vmem>>, vector<16x128xf32>
      tpu.vector_store %arg10[%c0_258, %c0_259], %210 {strides = array<i32>} : memref<232x128xf32, #tpu.memory_space<vmem>>, vector<16x128xf32>,
      %cst_260 = arith.constant 0.000000e+00 : f32
      %212 = vector.broadcast %cst_260 : f32 to vector<16x128xf32>
      %c216 = arith.constant 216 : index
      %c0_261 = arith.constant 0 : index
      %213 = vector.load %arg10[%c216, %c0_261] : memref<232x128xf32, #tpu.memory_space<vmem>>, vector<16x128xf32>
      tpu.vector_store %arg10[%c216, %c0_261], %212 {strides = array<i32>} : memref<232x128xf32, #tpu.memory_space<vmem>>, vector<16x128xf32>,
      %c0_262 = arith.constant 0 : index
      %c0_263 = arith.constant 0 : index
      %214 = vector.load %arg1[%c0_262, %c0_263] : memref<200x128xf32, #tpu.memory_space<vmem>>, vector<200x128xf32>
      %c16_264 = arith.constant 16 : index
      %c0_265 = arith.constant 0 : index
      %215 = vector.load %arg10[%c16_264, %c0_265] : memref<232x128xf32, #tpu.memory_space<vmem>>, vector<200x128xf32>
      tpu.vector_store %arg10[%c16_264, %c0_265], %214 {strides = array<i32>} : memref<232x128xf32, #tpu.memory_space<vmem>>, vector<200x128xf32>,
    } else {
    }
    %c5 = arith.constant 5 : index
    %c0 = arith.constant 0 : index
    %3 = vector.load %arg10[%c5, %c0] : memref<232x128xf32, #tpu.memory_space<vmem>>, vector<200x128xf32>
    %c0_1 = arith.constant 0 : index
    %c0_2 = arith.constant 0 : index
    %c0_3 = arith.constant 0 : index
    %c0_4 = arith.constant 0 : index
    %c0_5 = arith.constant 0 : index
    %4 = vector.load %arg3[%c0_1, %c0_2, %c0_3, %c0_4, %c0_5] : memref<1x2x15x128x128xf32, #tpu.memory_space<vmem>>, vector<1x1x1x128x128xf32>
    %5 = vector.shape_cast %4 : vector<1x1x1x128x128xf32> to vector<128x128xf32>
    %cst = arith.constant dense<0.000000e+00> : vector<200x128xf32>
    %6 = tpu.matmul %3, %5, %cst {dimension_numbers = #tpu.dot_dimension_numbers<[1], [0], [0], [1], [0, 0, 1, 1], [], []>} : vector<200x128xf32>, vector<128x128xf32>, vector<200x128xf32> -> vector<200x128xf32>
    %c6 = arith.constant 6 : index
    %c0_6 = arith.constant 0 : index
    %7 = vector.load %arg10[%c6, %c0_6] : memref<232x128xf32, #tpu.memory_space<vmem>>, vector<200x128xf32>
    %c0_7 = arith.constant 0 : index
    %c0_8 = arith.constant 0 : index
    %c1 = arith.constant 1 : index
    %c0_9 = arith.constant 0 : index
    %c0_10 = arith.constant 0 : index
    %8 = vector.load %arg3[%c0_7, %c0_8, %c1, %c0_9, %c0_10] : memref<1x2x15x128x128xf32, #tpu.memory_space<vmem>>, vector<1x1x1x128x128xf32>
    %9 = vector.shape_cast %8 : vector<1x1x1x128x128xf32> to vector<128x128xf32>
    %cst_11 = arith.constant dense<0.000000e+00> : vector<200x128xf32>
    %10 = tpu.matmul %7, %9, %cst_11 {dimension_numbers = #tpu.dot_dimension_numbers<[1], [0], [0], [1], [0, 0, 1, 1], [], []>} : vector<200x128xf32>, vector<128x128xf32>, vector<200x128xf32> -> vector<200x128xf32>
    %11 = arith.addf %6, %10 : vector<200x128xf32>
    %c7 = arith.constant 7 : index
    %c0_12 = arith.constant 0 : index
    %12 = vector.load %arg10[%c7, %c0_12] : memref<232x128xf32, #tpu.memory_space<vmem>>, vector<200x128xf32>
    %c0_13 = arith.constant 0 : index
    %c0_14 = arith.constant 0 : index
    %c2 = arith.constant 2 : index
    %c0_15 = arith.constant 0 : index
    %c0_16 = arith.constant 0 : index
    %13 = vector.load %arg3[%c0_13, %c0_14, %c2, %c0_15, %c0_16] : memref<1x2x15x128x128xf32, #tpu.memory_space<vmem>>, vector<1x1x1x128x128xf32>
    %14 = vector.shape_cast %13 : vector<1x1x1x128x128xf32> to vector<128x128xf32>
    %cst_17 = arith.constant dense<0.000000e+00> : vector<200x128xf32>
    %15 = tpu.matmul %12, %14, %cst_17 {dimension_numbers = #tpu.dot_dimension_numbers<[1], [0], [0], [1], [0, 0, 1, 1], [], []>} : vector<200x128xf32>, vector<128x128xf32>, vector<200x128xf32> -> vector<200x128xf32>
    %16 = arith.addf %11, %15 : vector<200x128xf32>
    %c10 = arith.constant 10 : index
    %c0_18 = arith.constant 0 : index
    %17 = vector.load %arg10[%c10, %c0_18] : memref<232x128xf32, #tpu.memory_space<vmem>>, vector<200x128xf32>
    %c0_19 = arith.constant 0 : index
    %c0_20 = arith.constant 0 : index
    %c3 = arith.constant 3 : index
    %c0_21 = arith.constant 0 : index
    %c0_22 = arith.constant 0 : index
    %18 = vector.load %arg3[%c0_19, %c0_20, %c3, %c0_21, %c0_22] : memref<1x2x15x128x128xf32, #tpu.memory_space<vmem>>, vector<1x1x1x128x128xf32>
    %19 = vector.shape_cast %18 : vector<1x1x1x128x128xf32> to vector<128x128xf32>
    %cst_23 = arith.constant dense<0.000000e+00> : vector<200x128xf32>
    %20 = tpu.matmul %17, %19, %cst_23 {dimension_numbers = #tpu.dot_dimension_numbers<[1], [0], [0], [1], [0, 0, 1, 1], [], []>} : vector<200x128xf32>, vector<128x128xf32>, vector<200x128xf32> -> vector<200x128xf32>
    %21 = arith.addf %16, %20 : vector<200x128xf32>
    %c11 = arith.constant 11 : index
    %c0_24 = arith.constant 0 : index
    %22 = vector.load %arg10[%c11, %c0_24] : memref<232x128xf32, #tpu.memory_space<vmem>>, vector<200x128xf32>
    %c0_25 = arith.constant 0 : index
    %c0_26 = arith.constant 0 : index
    %c4 = arith.constant 4 : index
    %c0_27 = arith.constant 0 : index
    %c0_28 = arith.constant 0 : index
    %23 = vector.load %arg3[%c0_25, %c0_26, %c4, %c0_27, %c0_28] : memref<1x2x15x128x128xf32, #tpu.memory_space<vmem>>, vector<1x1x1x128x128xf32>
    %24 = vector.shape_cast %23 : vector<1x1x1x128x128xf32> to vector<128x128xf32>
    %cst_29 = arith.constant dense<0.000000e+00> : vector<200x128xf32>
    %25 = tpu.matmul %22, %24, %cst_29 {dimension_numbers = #tpu.dot_dimension_numbers<[1], [0], [0], [1], [0, 0, 1, 1], [], []>} : vector<200x128xf32>, vector<128x128xf32>, vector<200x128xf32> -> vector<200x128xf32>
    %26 = arith.addf %21, %25 : vector<200x128xf32>
    %c12 = arith.constant 12 : index
    %c0_30 = arith.constant 0 : index
    %27 = vector.load %arg10[%c12, %c0_30] : memref<232x128xf32, #tpu.memory_space<vmem>>, vector<200x128xf32>
    %c0_31 = arith.constant 0 : index
    %c0_32 = arith.constant 0 : index
    %c5_33 = arith.constant 5 : index
    %c0_34 = arith.constant 0 : index
    %c0_35 = arith.constant 0 : index
    %28 = vector.load %arg3[%c0_31, %c0_32, %c5_33, %c0_34, %c0_35] : memref<1x2x15x128x128xf32, #tpu.memory_space<vmem>>, vector<1x1x1x128x128xf32>
    %29 = vector.shape_cast %28 : vector<1x1x1x128x128xf32> to vector<128x128xf32>
    %cst_36 = arith.constant dense<0.000000e+00> : vector<200x128xf32>
    %30 = tpu.matmul %27, %29, %cst_36 {dimension_numbers = #tpu.dot_dimension_numbers<[1], [0], [0], [1], [0, 0, 1, 1], [], []>} : vector<200x128xf32>, vector<128x128xf32>, vector<200x128xf32> -> vector<200x128xf32>
    %31 = arith.addf %26, %30 : vector<200x128xf32>
    %c15 = arith.constant 15 : index
    %c0_37 = arith.constant 0 : index
    %32 = vector.load %arg10[%c15, %c0_37] : memref<232x128xf32, #tpu.memory_space<vmem>>, vector<200x128xf32>
    %c0_38 = arith.constant 0 : index
    %c0_39 = arith.constant 0 : index
    %c6_40 = arith.constant 6 : index
    %c0_41 = arith.constant 0 : index
    %c0_42 = arith.constant 0 : index
    %33 = vector.load %arg3[%c0_38, %c0_39, %c6_40, %c0_41, %c0_42] : memref<1x2x15x128x128xf32, #tpu.memory_space<vmem>>, vector<1x1x1x128x128xf32>
    %34 = vector.shape_cast %33 : vector<1x1x1x128x128xf32> to vector<128x128xf32>
    %cst_43 = arith.constant dense<0.000000e+00> : vector<200x128xf32>
    %35 = tpu.matmul %32, %34, %cst_43 {dimension_numbers = #tpu.dot_dimension_numbers<[1], [0], [0], [1], [0, 0, 1, 1], [], []>} : vector<200x128xf32>, vector<128x128xf32>, vector<200x128xf32> -> vector<200x128xf32>
    %36 = arith.addf %31, %35 : vector<200x128xf32>
    %c16 = arith.constant 16 : index
    %c0_44 = arith.constant 0 : index
    %37 = vector.load %arg10[%c16, %c0_44] : memref<232x128xf32, #tpu.memory_space<vmem>>, vector<200x128xf32>
    %c0_45 = arith.constant 0 : index
    %c0_46 = arith.constant 0 : index
    %c7_47 = arith.constant 7 : index
    %c0_48 = arith.constant 0 : index
    %c0_49 = arith.constant 0 : index
    %38 = vector.load %arg3[%c0_45, %c0_46, %c7_47, %c0_48, %c0_49] : memref<1x2x15x128x128xf32, #tpu.memory_space<vmem>>, vector<1x1x1x128x128xf32>
    %39 = vector.shape_cast %38 : vector<1x1x1x128x128xf32> to vector<128x128xf32>
    %cst_50 = arith.constant dense<0.000000e+00> : vector<200x128xf32>
    %40 = tpu.matmul %37, %39, %cst_50 {dimension_numbers = #tpu.dot_dimension_numbers<[1], [0], [0], [1], [0, 0, 1, 1], [], []>} : vector<200x128xf32>, vector<128x128xf32>, vector<200x128xf32> -> vector<200x128xf32>
    %41 = arith.addf %36, %40 : vector<200x128xf32>
    %c17 = arith.constant 17 : index
    %c0_51 = arith.constant 0 : index
    %42 = vector.load %arg10[%c17, %c0_51] : memref<232x128xf32, #tpu.memory_space<vmem>>, vector<200x128xf32>
    %c0_52 = arith.constant 0 : index
    %c0_53 = arith.constant 0 : index
    %c8 = arith.constant 8 : index
    %c0_54 = arith.constant 0 : index
    %c0_55 = arith.constant 0 : index
    %43 = vector.load %arg3[%c0_52, %c0_53, %c8, %c0_54, %c0_55] : memref<1x2x15x128x128xf32, #tpu.memory_space<vmem>>, vector<1x1x1x128x128xf32>
    %44 = vector.shape_cast %43 : vector<1x1x1x128x128xf32> to vector<128x128xf32>
    %cst_56 = arith.constant dense<0.000000e+00> : vector<200x128xf32>
    %45 = tpu.matmul %42, %44, %cst_56 {dimension_numbers = #tpu.dot_dimension_numbers<[1], [0], [0], [1], [0, 0, 1, 1], [], []>} : vector<200x128xf32>, vector<128x128xf32>, vector<200x128xf32> -> vector<200x128xf32>
    %46 = arith.addf %41, %45 : vector<200x128xf32>
    %c20 = arith.constant 20 : index
    %c0_57 = arith.constant 0 : index
    %47 = vector.load %arg10[%c20, %c0_57] : memref<232x128xf32, #tpu.memory_space<vmem>>, vector<200x128xf32>
    %c0_58 = arith.constant 0 : index
    %c0_59 = arith.constant 0 : index
    %c9 = arith.constant 9 : index
    %c0_60 = arith.constant 0 : index
    %c0_61 = arith.constant 0 : index
    %48 = vector.load %arg3[%c0_58, %c0_59, %c9, %c0_60, %c0_61] : memref<1x2x15x128x128xf32, #tpu.memory_space<vmem>>, vector<1x1x1x128x128xf32>
    %49 = vector.shape_cast %48 : vector<1x1x1x128x128xf32> to vector<128x128xf32>
    %cst_62 = arith.constant dense<0.000000e+00> : vector<200x128xf32>
    %50 = tpu.matmul %47, %49, %cst_62 {dimension_numbers = #tpu.dot_dimension_numbers<[1], [0], [0], [1], [0, 0, 1, 1], [], []>} : vector<200x128xf32>, vector<128x128xf32>, vector<200x128xf32> -> vector<200x128xf32>
    %51 = arith.addf %46, %50 : vector<200x128xf32>
    %c21 = arith.constant 21 : index
    %c0_63 = arith.constant 0 : index
    %52 = vector.load %arg10[%c21, %c0_63] : memref<232x128xf32, #tpu.memory_space<vmem>>, vector<200x128xf32>
    %c0_64 = arith.constant 0 : index
    %c0_65 = arith.constant 0 : index
    %c10_66 = arith.constant 10 : index
    %c0_67 = arith.constant 0 : index
    %c0_68 = arith.constant 0 : index
    %53 = vector.load %arg3[%c0_64, %c0_65, %c10_66, %c0_67, %c0_68] : memref<1x2x15x128x128xf32, #tpu.memory_space<vmem>>, vector<1x1x1x128x128xf32>
    %54 = vector.shape_cast %53 : vector<1x1x1x128x128xf32> to vector<128x128xf32>
    %cst_69 = arith.constant dense<0.000000e+00> : vector<200x128xf32>
    %55 = tpu.matmul %52, %54, %cst_69 {dimension_numbers = #tpu.dot_dimension_numbers<[1], [0], [0], [1], [0, 0, 1, 1], [], []>} : vector<200x128xf32>, vector<128x128xf32>, vector<200x128xf32> -> vector<200x128xf32>
    %56 = arith.addf %51, %55 : vector<200x128xf32>
    %c22 = arith.constant 22 : index
    %c0_70 = arith.constant 0 : index
    %57 = vector.load %arg10[%c22, %c0_70] : memref<232x128xf32, #tpu.memory_space<vmem>>, vector<200x128xf32>
    %c0_71 = arith.constant 0 : index
    %c0_72 = arith.constant 0 : index
    %c11_73 = arith.constant 11 : index
    %c0_74 = arith.constant 0 : index
    %c0_75 = arith.constant 0 : index
    %58 = vector.load %arg3[%c0_71, %c0_72, %c11_73, %c0_74, %c0_75] : memref<1x2x15x128x128xf32, #tpu.memory_space<vmem>>, vector<1x1x1x128x128xf32>
    %59 = vector.shape_cast %58 : vector<1x1x1x128x128xf32> to vector<128x128xf32>
    %cst_76 = arith.constant dense<0.000000e+00> : vector<200x128xf32>
    %60 = tpu.matmul %57, %59, %cst_76 {dimension_numbers = #tpu.dot_dimension_numbers<[1], [0], [0], [1], [0, 0, 1, 1], [], []>} : vector<200x128xf32>, vector<128x128xf32>, vector<200x128xf32> -> vector<200x128xf32>
    %61 = arith.addf %56, %60 : vector<200x128xf32>
    %c25 = arith.constant 25 : index
    %c0_77 = arith.constant 0 : index
    %62 = vector.load %arg10[%c25, %c0_77] : memref<232x128xf32, #tpu.memory_space<vmem>>, vector<200x128xf32>
    %c0_78 = arith.constant 0 : index
    %c0_79 = arith.constant 0 : index
    %c12_80 = arith.constant 12 : index
    %c0_81 = arith.constant 0 : index
    %c0_82 = arith.constant 0 : index
    %63 = vector.load %arg3[%c0_78, %c0_79, %c12_80, %c0_81, %c0_82] : memref<1x2x15x128x128xf32, #tpu.memory_space<vmem>>, vector<1x1x1x128x128xf32>
    %64 = vector.shape_cast %63 : vector<1x1x1x128x128xf32> to vector<128x128xf32>
    %cst_83 = arith.constant dense<0.000000e+00> : vector<200x128xf32>
    %65 = tpu.matmul %62, %64, %cst_83 {dimension_numbers = #tpu.dot_dimension_numbers<[1], [0], [0], [1], [0, 0, 1, 1], [], []>} : vector<200x128xf32>, vector<128x128xf32>, vector<200x128xf32> -> vector<200x128xf32>
    %66 = arith.addf %61, %65 : vector<200x128xf32>
    %c26 = arith.constant 26 : index
    %c0_84 = arith.constant 0 : index
    %67 = vector.load %arg10[%c26, %c0_84] : memref<232x128xf32, #tpu.memory_space<vmem>>, vector<200x128xf32>
    %c0_85 = arith.constant 0 : index
    %c0_86 = arith.constant 0 : index
    %c13 = arith.constant 13 : index
    %c0_87 = arith.constant 0 : index
    %c0_88 = arith.constant 0 : index
    %68 = vector.load %arg3[%c0_85, %c0_86, %c13, %c0_87, %c0_88] : memref<1x2x15x128x128xf32, #tpu.memory_space<vmem>>, vector<1x1x1x128x128xf32>
    %69 = vector.shape_cast %68 : vector<1x1x1x128x128xf32> to vector<128x128xf32>
    %cst_89 = arith.constant dense<0.000000e+00> : vector<200x128xf32>
    %70 = tpu.matmul %67, %69, %cst_89 {dimension_numbers = #tpu.dot_dimension_numbers<[1], [0], [0], [1], [0, 0, 1, 1], [], []>} : vector<200x128xf32>, vector<128x128xf32>, vector<200x128xf32> -> vector<200x128xf32>
    %71 = arith.addf %66, %70 : vector<200x128xf32>
    %c27 = arith.constant 27 : index
    %c0_90 = arith.constant 0 : index
    %72 = vector.load %arg10[%c27, %c0_90] : memref<232x128xf32, #tpu.memory_space<vmem>>, vector<200x128xf32>
    %c0_91 = arith.constant 0 : index
    %c0_92 = arith.constant 0 : index
    %c14 = arith.constant 14 : index
    %c0_93 = arith.constant 0 : index
    %c0_94 = arith.constant 0 : index
    %73 = vector.load %arg3[%c0_91, %c0_92, %c14, %c0_93, %c0_94] : memref<1x2x15x128x128xf32, #tpu.memory_space<vmem>>, vector<1x1x1x128x128xf32>
    %74 = vector.shape_cast %73 : vector<1x1x1x128x128xf32> to vector<128x128xf32>
    %cst_95 = arith.constant dense<0.000000e+00> : vector<200x128xf32>
    %75 = tpu.matmul %72, %74, %cst_95 {dimension_numbers = #tpu.dot_dimension_numbers<[1], [0], [0], [1], [0, 0, 1, 1], [], []>} : vector<200x128xf32>, vector<128x128xf32>, vector<200x128xf32> -> vector<200x128xf32>
    %76 = arith.addf %71, %75 : vector<200x128xf32>
    %c0_96 = arith.constant 0 : index
    %c0_97 = arith.constant 0 : index
    %c0_98 = arith.constant 0 : index
    %c0_99 = arith.constant 0 : index
    %77 = vector.load %arg4[%c0_96, %c0_97, %c0_98, %c0_99] : memref<1x2x8x128xf32, #tpu.memory_space<vmem>>, vector<1x1x8x128xf32>
    %78 = vector.shape_cast %77 : vector<1x1x8x128xf32> to vector<8x128xf32>
    %79 = vector.shape_cast %76 : vector<200x128xf32> to vector<25x8x128xf32>
    %80 = vector.shape_cast %78 : vector<8x128xf32> to vector<1x8x128xf32>
    %81 = vector.broadcast %80 : vector<1x8x128xf32> to vector<25x8x128xf32>
    %82 = arith.addf %79, %81 : vector<25x8x128xf32>
    %83 = vector.shape_cast %82 : vector<25x8x128xf32> to vector<200x128xf32>
    %cst_100 = arith.constant 0.000000e+00 : f32
    %cst_101 = arith.constant 6.000000e+00 : f32
    %84 = vector.broadcast %cst_100 : f32 to vector<200x128xf32>
    %85 = arith.maximumf %84, %83 : vector<200x128xf32>
    %86 = vector.broadcast %cst_101 : f32 to vector<200x128xf32>
    %87 = arith.minimumf %86, %85 : vector<200x128xf32>
    %c0_102 = arith.constant 0 : index
    %c0_103 = arith.constant 0 : index
    %c0_104 = arith.constant 0 : index
    %c0_105 = arith.constant 0 : index
    %88 = vector.load %arg5[%c0_102, %c0_103, %c0_104, %c0_105] : memref<1x2x128x128xf32, #tpu.memory_space<vmem>>, vector<1x1x128x128xf32>
    %89 = vector.shape_cast %88 : vector<1x1x128x128xf32> to vector<128x128xf32>
    %cst_106 = arith.constant dense<0.000000e+00> : vector<200x128xf32>
    %90 = tpu.matmul %87, %89, %cst_106 {dimension_numbers = #tpu.dot_dimension_numbers<[1], [0], [0], [1], [0, 0, 1, 1], [], []>} : vector<200x128xf32>, vector<128x128xf32>, vector<200x128xf32> -> vector<200x128xf32>
    %c0_107 = arith.constant 0 : index
    %c0_108 = arith.constant 0 : index
    %c0_109 = arith.constant 0 : index
    %c0_110 = arith.constant 0 : index
    %91 = vector.load %arg6[%c0_107, %c0_108, %c0_109, %c0_110] : memref<1x2x8x128xf32, #tpu.memory_space<vmem>>, vector<1x1x8x128xf32>
    %92 = vector.shape_cast %91 : vector<1x1x8x128xf32> to vector<8x128xf32>
    %93 = vector.shape_cast %90 : vector<200x128xf32> to vector<25x8x128xf32>
    %94 = vector.shape_cast %92 : vector<8x128xf32> to vector<1x8x128xf32>
    %95 = vector.broadcast %94 : vector<1x8x128xf32> to vector<25x8x128xf32>
    %96 = arith.addf %93, %95 : vector<25x8x128xf32>
    %97 = vector.shape_cast %96 : vector<25x8x128xf32> to vector<200x128xf32>
    %cst_111 = arith.constant 0.000000e+00 : f32
    %cst_112 = arith.constant 6.000000e+00 : f32
    %98 = vector.broadcast %cst_111 : f32 to vector<200x128xf32>
    %99 = arith.maximumf %98, %97 : vector<200x128xf32>
    %100 = vector.broadcast %cst_112 : f32 to vector<200x128xf32>
    %101 = arith.minimumf %100, %99 : vector<200x128xf32>
    %c0_113 = arith.constant 0 : index
    %c1_114 = arith.constant 1 : index
    %c0_115 = arith.constant 0 : index
    %c0_116 = arith.constant 0 : index
    %102 = vector.load %arg5[%c0_113, %c1_114, %c0_115, %c0_116] : memref<1x2x128x128xf32, #tpu.memory_space<vmem>>, vector<1x1x128x128xf32>
    %103 = vector.shape_cast %102 : vector<1x1x128x128xf32> to vector<128x128xf32>
    %cst_117 = arith.constant dense<0.000000e+00> : vector<200x128xf32>
    %104 = tpu.matmul %101, %103, %cst_117 {dimension_numbers = #tpu.dot_dimension_numbers<[1], [0], [0], [1], [0, 0, 1, 1], [], []>} : vector<200x128xf32>, vector<128x128xf32>, vector<200x128xf32> -> vector<200x128xf32>
    %c0_118 = arith.constant 0 : index
    %c1_119 = arith.constant 1 : index
    %c0_120 = arith.constant 0 : index
    %c0_121 = arith.constant 0 : index
    %105 = vector.load %arg6[%c0_118, %c1_119, %c0_120, %c0_121] : memref<1x2x8x128xf32, #tpu.memory_space<vmem>>, vector<1x1x8x128xf32>
    %106 = vector.shape_cast %105 : vector<1x1x8x128xf32> to vector<8x128xf32>
    %107 = vector.shape_cast %104 : vector<200x128xf32> to vector<25x8x128xf32>
    %108 = vector.shape_cast %106 : vector<8x128xf32> to vector<1x8x128xf32>
    %109 = vector.broadcast %108 : vector<1x8x128xf32> to vector<25x8x128xf32>
    %110 = arith.addf %107, %109 : vector<25x8x128xf32>
    %111 = vector.shape_cast %110 : vector<25x8x128xf32> to vector<200x128xf32>
    %cst_122 = arith.constant 0.000000e+00 : f32
    %cst_123 = arith.constant 6.000000e+00 : f32
    %112 = vector.broadcast %cst_122 : f32 to vector<200x128xf32>
    %113 = arith.maximumf %112, %111 : vector<200x128xf32>
    %114 = vector.broadcast %cst_123 : f32 to vector<200x128xf32>
    %115 = arith.minimumf %114, %113 : vector<200x128xf32>
    %c0_124 = arith.constant 0 : index
    %c0_125 = arith.constant 0 : index
    %116 = vector.load %arg2[%c0_124, %c0_125] : memref<200x128xf32, #tpu.memory_space<vmem>>, vector<200x128xf32>
    %117 = arith.mulf %115, %116 : vector<200x128xf32>
    %c16_126 = arith.constant 16 : index
    %c0_127 = arith.constant 0 : index
    %118 = vector.load %arg10[%c16_126, %c0_127] : memref<232x128xf32, #tpu.memory_space<vmem>>, vector<200x128xf32>
    tpu.vector_store %arg10[%c16_126, %c0_127], %117 {strides = array<i32>} : memref<232x128xf32, #tpu.memory_space<vmem>>, vector<200x128xf32>,
    %c5_128 = arith.constant 5 : index
    %c0_129 = arith.constant 0 : index
    %119 = vector.load %arg10[%c5_128, %c0_129] : memref<232x128xf32, #tpu.memory_space<vmem>>, vector<200x128xf32>
    %c0_130 = arith.constant 0 : index
    %c1_131 = arith.constant 1 : index
    %c0_132 = arith.constant 0 : index
    %c0_133 = arith.constant 0 : index
    %c0_134 = arith.constant 0 : index
    %120 = vector.load %arg3[%c0_130, %c1_131, %c0_132, %c0_133, %c0_134] : memref<1x2x15x128x128xf32, #tpu.memory_space<vmem>>, vector<1x1x1x128x128xf32>
    %121 = vector.shape_cast %120 : vector<1x1x1x128x128xf32> to vector<128x128xf32>
    %cst_135 = arith.constant dense<0.000000e+00> : vector<200x128xf32>
    %122 = tpu.matmul %119, %121, %cst_135 {dimension_numbers = #tpu.dot_dimension_numbers<[1], [0], [0], [1], [0, 0, 1, 1], [], []>} : vector<200x128xf32>, vector<128x128xf32>, vector<200x128xf32> -> vector<200x128xf32>
    %c6_136 = arith.constant 6 : index
    %c0_137 = arith.constant 0 : index
    %123 = vector.load %arg10[%c6_136, %c0_137] : memref<232x128xf32, #tpu.memory_space<vmem>>, vector<200x128xf32>
    %c0_138 = arith.constant 0 : index
    %c1_139 = arith.constant 1 : index
    %c1_140 = arith.constant 1 : index
    %c0_141 = arith.constant 0 : index
    %c0_142 = arith.constant 0 : index
    %124 = vector.load %arg3[%c0_138, %c1_139, %c1_140, %c0_141, %c0_142] : memref<1x2x15x128x128xf32, #tpu.memory_space<vmem>>, vector<1x1x1x128x128xf32>
    %125 = vector.shape_cast %124 : vector<1x1x1x128x128xf32> to vector<128x128xf32>
    %cst_143 = arith.constant dense<0.000000e+00> : vector<200x128xf32>
    %126 = tpu.matmul %123, %125, %cst_143 {dimension_numbers = #tpu.dot_dimension_numbers<[1], [0], [0], [1], [0, 0, 1, 1], [], []>} : vector<200x128xf32>, vector<128x128xf32>, vector<200x128xf32> -> vector<200x128xf32>
    %127 = arith.addf %122, %126 : vector<200x128xf32>
    %c7_144 = arith.constant 7 : index
    %c0_145 = arith.constant 0 : index
    %128 = vector.load %arg10[%c7_144, %c0_145] : memref<232x128xf32, #tpu.memory_space<vmem>>, vector<200x128xf32>
    %c0_146 = arith.constant 0 : index
    %c1_147 = arith.constant 1 : index
    %c2_148 = arith.constant 2 : index
    %c0_149 = arith.constant 0 : index
    %c0_150 = arith.constant 0 : index
    %129 = vector.load %arg3[%c0_146, %c1_147, %c2_148, %c0_149, %c0_150] : memref<1x2x15x128x128xf32, #tpu.memory_space<vmem>>, vector<1x1x1x128x128xf32>
    %130 = vector.shape_cast %129 : vector<1x1x1x128x128xf32> to vector<128x128xf32>
    %cst_151 = arith.constant dense<0.000000e+00> : vector<200x128xf32>
    %131 = tpu.matmul %128, %130, %cst_151 {dimension_numbers = #tpu.dot_dimension_numbers<[1], [0], [0], [1], [0, 0, 1, 1], [], []>} : vector<200x128xf32>, vector<128x128xf32>, vector<200x128xf32> -> vector<200x128xf32>
    %132 = arith.addf %127, %131 : vector<200x128xf32>
    %c10_152 = arith.constant 10 : index
    %c0_153 = arith.constant 0 : index
    %133 = vector.load %arg10[%c10_152, %c0_153] : memref<232x128xf32, #tpu.memory_space<vmem>>, vector<200x128xf32>
    %c0_154 = arith.constant 0 : index
    %c1_155 = arith.constant 1 : index
    %c3_156 = arith.constant 3 : index
    %c0_157 = arith.constant 0 : index
    %c0_158 = arith.constant 0 : index
    %134 = vector.load %arg3[%c0_154, %c1_155, %c3_156, %c0_157, %c0_158] : memref<1x2x15x128x128xf32, #tpu.memory_space<vmem>>, vector<1x1x1x128x128xf32>
    %135 = vector.shape_cast %134 : vector<1x1x1x128x128xf32> to vector<128x128xf32>
    %cst_159 = arith.constant dense<0.000000e+00> : vector<200x128xf32>
    %136 = tpu.matmul %133, %135, %cst_159 {dimension_numbers = #tpu.dot_dimension_numbers<[1], [0], [0], [1], [0, 0, 1, 1], [], []>} : vector<200x128xf32>, vector<128x128xf32>, vector<200x128xf32> -> vector<200x128xf32>
    %137 = arith.addf %132, %136 : vector<200x128xf32>
    %c11_160 = arith.constant 11 : index
    %c0_161 = arith.constant 0 : index
    %138 = vector.load %arg10[%c11_160, %c0_161] : memref<232x128xf32, #tpu.memory_space<vmem>>, vector<200x128xf32>
    %c0_162 = arith.constant 0 : index
    %c1_163 = arith.constant 1 : index
    %c4_164 = arith.constant 4 : index
    %c0_165 = arith.constant 0 : index
    %c0_166 = arith.constant 0 : index
    %139 = vector.load %arg3[%c0_162, %c1_163, %c4_164, %c0_165, %c0_166] : memref<1x2x15x128x128xf32, #tpu.memory_space<vmem>>, vector<1x1x1x128x128xf32>
    %140 = vector.shape_cast %139 : vector<1x1x1x128x128xf32> to vector<128x128xf32>
    %cst_167 = arith.constant dense<0.000000e+00> : vector<200x128xf32>
    %141 = tpu.matmul %138, %140, %cst_167 {dimension_numbers = #tpu.dot_dimension_numbers<[1], [0], [0], [1], [0, 0, 1, 1], [], []>} : vector<200x128xf32>, vector<128x128xf32>, vector<200x128xf32> -> vector<200x128xf32>
    %142 = arith.addf %137, %141 : vector<200x128xf32>
    %c12_168 = arith.constant 12 : index
    %c0_169 = arith.constant 0 : index
    %143 = vector.load %arg10[%c12_168, %c0_169] : memref<232x128xf32, #tpu.memory_space<vmem>>, vector<200x128xf32>
    %c0_170 = arith.constant 0 : index
    %c1_171 = arith.constant 1 : index
    %c5_172 = arith.constant 5 : index
    %c0_173 = arith.constant 0 : index
    %c0_174 = arith.constant 0 : index
    %144 = vector.load %arg3[%c0_170, %c1_171, %c5_172, %c0_173, %c0_174] : memref<1x2x15x128x128xf32, #tpu.memory_space<vmem>>, vector<1x1x1x128x128xf32>
    %145 = vector.shape_cast %144 : vector<1x1x1x128x128xf32> to vector<128x128xf32>
    %cst_175 = arith.constant dense<0.000000e+00> : vector<200x128xf32>
    %146 = tpu.matmul %143, %145, %cst_175 {dimension_numbers = #tpu.dot_dimension_numbers<[1], [0], [0], [1], [0, 0, 1, 1], [], []>} : vector<200x128xf32>, vector<128x128xf32>, vector<200x128xf32> -> vector<200x128xf32>
    %147 = arith.addf %142, %146 : vector<200x128xf32>
    %c15_176 = arith.constant 15 : index
    %c0_177 = arith.constant 0 : index
    %148 = vector.load %arg10[%c15_176, %c0_177] : memref<232x128xf32, #tpu.memory_space<vmem>>, vector<200x128xf32>
    %c0_178 = arith.constant 0 : index
    %c1_179 = arith.constant 1 : index
    %c6_180 = arith.constant 6 : index
    %c0_181 = arith.constant 0 : index
    %c0_182 = arith.constant 0 : index
    %149 = vector.load %arg3[%c0_178, %c1_179, %c6_180, %c0_181, %c0_182] : memref<1x2x15x128x128xf32, #tpu.memory_space<vmem>>, vector<1x1x1x128x128xf32>
    %150 = vector.shape_cast %149 : vector<1x1x1x128x128xf32> to vector<128x128xf32>
    %cst_183 = arith.constant dense<0.000000e+00> : vector<200x128xf32>
    %151 = tpu.matmul %148, %150, %cst_183 {dimension_numbers = #tpu.dot_dimension_numbers<[1], [0], [0], [1], [0, 0, 1, 1], [], []>} : vector<200x128xf32>, vector<128x128xf32>, vector<200x128xf32> -> vector<200x128xf32>
    %152 = arith.addf %147, %151 : vector<200x128xf32>
    %c16_184 = arith.constant 16 : index
    %c0_185 = arith.constant 0 : index
    %153 = vector.load %arg10[%c16_184, %c0_185] : memref<232x128xf32, #tpu.memory_space<vmem>>, vector<200x128xf32>
    %c0_186 = arith.constant 0 : index
    %c1_187 = arith.constant 1 : index
    %c7_188 = arith.constant 7 : index
    %c0_189 = arith.constant 0 : index
    %c0_190 = arith.constant 0 : index
    %154 = vector.load %arg3[%c0_186, %c1_187, %c7_188, %c0_189, %c0_190] : memref<1x2x15x128x128xf32, #tpu.memory_space<vmem>>, vector<1x1x1x128x128xf32>
    %155 = vector.shape_cast %154 : vector<1x1x1x128x128xf32> to vector<128x128xf32>
    %cst_191 = arith.constant dense<0.000000e+00> : vector<200x128xf32>
    %156 = tpu.matmul %153, %155, %cst_191 {dimension_numbers = #tpu.dot_dimension_numbers<[1], [0], [0], [1], [0, 0, 1, 1], [], []>} : vector<200x128xf32>, vector<128x128xf32>, vector<200x128xf32> -> vector<200x128xf32>
    %157 = arith.addf %152, %156 : vector<200x128xf32>
    %c17_192 = arith.constant 17 : index
    %c0_193 = arith.constant 0 : index
    %158 = vector.load %arg10[%c17_192, %c0_193] : memref<232x128xf32, #tpu.memory_space<vmem>>, vector<200x128xf32>
    %c0_194 = arith.constant 0 : index
    %c1_195 = arith.constant 1 : index
    %c8_196 = arith.constant 8 : index
    %c0_197 = arith.constant 0 : index
    %c0_198 = arith.constant 0 : index
    %159 = vector.load %arg3[%c0_194, %c1_195, %c8_196, %c0_197, %c0_198] : memref<1x2x15x128x128xf32, #tpu.memory_space<vmem>>, vector<1x1x1x128x128xf32>
    %160 = vector.shape_cast %159 : vector<1x1x1x128x128xf32> to vector<128x128xf32>
    %cst_199 = arith.constant dense<0.000000e+00> : vector<200x128xf32>
    %161 = tpu.matmul %158, %160, %cst_199 {dimension_numbers = #tpu.dot_dimension_numbers<[1], [0], [0], [1], [0, 0, 1, 1], [], []>} : vector<200x128xf32>, vector<128x128xf32>, vector<200x128xf32> -> vector<200x128xf32>
    %162 = arith.addf %157, %161 : vector<200x128xf32>
    %c20_200 = arith.constant 20 : index
    %c0_201 = arith.constant 0 : index
    %163 = vector.load %arg10[%c20_200, %c0_201] : memref<232x128xf32, #tpu.memory_space<vmem>>, vector<200x128xf32>
    %c0_202 = arith.constant 0 : index
    %c1_203 = arith.constant 1 : index
    %c9_204 = arith.constant 9 : index
    %c0_205 = arith.constant 0 : index
    %c0_206 = arith.constant 0 : index
    %164 = vector.load %arg3[%c0_202, %c1_203, %c9_204, %c0_205, %c0_206] : memref<1x2x15x128x128xf32, #tpu.memory_space<vmem>>, vector<1x1x1x128x128xf32>
    %165 = vector.shape_cast %164 : vector<1x1x1x128x128xf32> to vector<128x128xf32>
    %cst_207 = arith.constant dense<0.000000e+00> : vector<200x128xf32>
    %166 = tpu.matmul %163, %165, %cst_207 {dimension_numbers = #tpu.dot_dimension_numbers<[1], [0], [0], [1], [0, 0, 1, 1], [], []>} : vector<200x128xf32>, vector<128x128xf32>, vector<200x128xf32> -> vector<200x128xf32>
    %167 = arith.addf %162, %166 : vector<200x128xf32>
    %c21_208 = arith.constant 21 : index
    %c0_209 = arith.constant 0 : index
    %168 = vector.load %arg10[%c21_208, %c0_209] : memref<232x128xf32, #tpu.memory_space<vmem>>, vector<200x128xf32>
    %c0_210 = arith.constant 0 : index
    %c1_211 = arith.constant 1 : index
    %c10_212 = arith.constant 10 : index
    %c0_213 = arith.constant 0 : index
    %c0_214 = arith.constant 0 : index
    %169 = vector.load %arg3[%c0_210, %c1_211, %c10_212, %c0_213, %c0_214] : memref<1x2x15x128x128xf32, #tpu.memory_space<vmem>>, vector<1x1x1x128x128xf32>
    %170 = vector.shape_cast %169 : vector<1x1x1x128x128xf32> to vector<128x128xf32>
    %cst_215 = arith.constant dense<0.000000e+00> : vector<200x128xf32>
    %171 = tpu.matmul %168, %170, %cst_215 {dimension_numbers = #tpu.dot_dimension_numbers<[1], [0], [0], [1], [0, 0, 1, 1], [], []>} : vector<200x128xf32>, vector<128x128xf32>, vector<200x128xf32> -> vector<200x128xf32>
    %172 = arith.addf %167, %171 : vector<200x128xf32>
    %c22_216 = arith.constant 22 : index
    %c0_217 = arith.constant 0 : index
    %173 = vector.load %arg10[%c22_216, %c0_217] : memref<232x128xf32, #tpu.memory_space<vmem>>, vector<200x128xf32>
    %c0_218 = arith.constant 0 : index
    %c1_219 = arith.constant 1 : index
    %c11_220 = arith.constant 11 : index
    %c0_221 = arith.constant 0 : index
    %c0_222 = arith.constant 0 : index
    %174 = vector.load %arg3[%c0_218, %c1_219, %c11_220, %c0_221, %c0_222] : memref<1x2x15x128x128xf32, #tpu.memory_space<vmem>>, vector<1x1x1x128x128xf32>
    %175 = vector.shape_cast %174 : vector<1x1x1x128x128xf32> to vector<128x128xf32>
    %cst_223 = arith.constant dense<0.000000e+00> : vector<200x128xf32>
    %176 = tpu.matmul %173, %175, %cst_223 {dimension_numbers = #tpu.dot_dimension_numbers<[1], [0], [0], [1], [0, 0, 1, 1], [], []>} : vector<200x128xf32>, vector<128x128xf32>, vector<200x128xf32> -> vector<200x128xf32>
    %177 = arith.addf %172, %176 : vector<200x128xf32>
    %c25_224 = arith.constant 25 : index
    %c0_225 = arith.constant 0 : index
    %178 = vector.load %arg10[%c25_224, %c0_225] : memref<232x128xf32, #tpu.memory_space<vmem>>, vector<200x128xf32>
    %c0_226 = arith.constant 0 : index
    %c1_227 = arith.constant 1 : index
    %c12_228 = arith.constant 12 : index
    %c0_229 = arith.constant 0 : index
    %c0_230 = arith.constant 0 : index
    %179 = vector.load %arg3[%c0_226, %c1_227, %c12_228, %c0_229, %c0_230] : memref<1x2x15x128x128xf32, #tpu.memory_space<vmem>>, vector<1x1x1x128x128xf32>
    %180 = vector.shape_cast %179 : vector<1x1x1x128x128xf32> to vector<128x128xf32>
    %cst_231 = arith.constant dense<0.000000e+00> : vector<200x128xf32>
    %181 = tpu.matmul %178, %180, %cst_231 {dimension_numbers = #tpu.dot_dimension_numbers<[1], [0], [0], [1], [0, 0, 1, 1], [], []>} : vector<200x128xf32>, vector<128x128xf32>, vector<200x128xf32> -> vector<200x128xf32>
    %182 = arith.addf %177, %181 : vector<200x128xf32>
    %c26_232 = arith.constant 26 : index
    %c0_233 = arith.constant 0 : index
    %183 = vector.load %arg10[%c26_232, %c0_233] : memref<232x128xf32, #tpu.memory_space<vmem>>, vector<200x128xf32>
    %c0_234 = arith.constant 0 : index
    %c1_235 = arith.constant 1 : index
    %c13_236 = arith.constant 13 : index
    %c0_237 = arith.constant 0 : index
    %c0_238 = arith.constant 0 : index
    %184 = vector.load %arg3[%c0_234, %c1_235, %c13_236, %c0_237, %c0_238] : memref<1x2x15x128x128xf32, #tpu.memory_space<vmem>>, vector<1x1x1x128x128xf32>
    %185 = vector.shape_cast %184 : vector<1x1x1x128x128xf32> to vector<128x128xf32>
    %cst_239 = arith.constant dense<0.000000e+00> : vector<200x128xf32>
    %186 = tpu.matmul %183, %185, %cst_239 {dimension_numbers = #tpu.dot_dimension_numbers<[1], [0], [0], [1], [0, 0, 1, 1], [], []>} : vector<200x128xf32>, vector<128x128xf32>, vector<200x128xf32> -> vector<200x128xf32>
    %187 = arith.addf %182, %186 : vector<200x128xf32>
    %c27_240 = arith.constant 27 : index
    %c0_241 = arith.constant 0 : index
    %188 = vector.load %arg10[%c27_240, %c0_241] : memref<232x128xf32, #tpu.memory_space<vmem>>, vector<200x128xf32>
    %c0_242 = arith.constant 0 : index
    %c1_243 = arith.constant 1 : index
    %c14_244 = arith.constant 14 : index
    %c0_245 = arith.constant 0 : index
    %c0_246 = arith.constant 0 : index
    %189 = vector.load %arg3[%c0_242, %c1_243, %c14_244, %c0_245, %c0_246] : memref<1x2x15x128x128xf32, #tpu.memory_space<vmem>>, vector<1x1x1x128x128xf32>
    %190 = vector.shape_cast %189 : vector<1x1x1x128x128xf32> to vector<128x128xf32>
    %cst_247 = arith.constant dense<0.000000e+00> : vector<200x128xf32>
    %191 = tpu.matmul %188, %190, %cst_247 {dimension_numbers = #tpu.dot_dimension_numbers<[1], [0], [0], [1], [0, 0, 1, 1], [], []>} : vector<200x128xf32>, vector<128x128xf32>, vector<200x128xf32> -> vector<200x128xf32>
    %192 = arith.addf %187, %191 : vector<200x128xf32>
    %c0_248 = arith.constant 0 : index
    %c1_249 = arith.constant 1 : index
    %c0_250 = arith.constant 0 : index
    %c0_251 = arith.constant 0 : index
    %193 = vector.load %arg4[%c0_248, %c1_249, %c0_250, %c0_251] : memref<1x2x8x128xf32, #tpu.memory_space<vmem>>, vector<1x1x8x128xf32>
    %194 = vector.shape_cast %193 : vector<1x1x8x128xf32> to vector<8x128xf32>
    %195 = vector.shape_cast %192 : vector<200x128xf32> to vector<25x8x128xf32>
    %196 = vector.shape_cast %194 : vector<8x128xf32> to vector<1x8x128xf32>
    %197 = vector.broadcast %196 : vector<1x8x128xf32> to vector<25x8x128xf32>
    %198 = arith.addf %195, %197 : vector<25x8x128xf32>
    %199 = vector.shape_cast %198 : vector<25x8x128xf32> to vector<200x128xf32>
    %cst_252 = arith.constant 0.000000e+00 : f32
    %cst_253 = arith.constant 6.000000e+00 : f32
    %200 = vector.broadcast %cst_252 : f32 to vector<200x128xf32>
    %201 = arith.maximumf %200, %199 : vector<200x128xf32>
    %202 = vector.broadcast %cst_253 : f32 to vector<200x128xf32>
    %203 = arith.minimumf %202, %201 : vector<200x128xf32>
    %c1_i32 = arith.constant 1 : i32
    %204 = arith.cmpi slt, %arg0, %c1_i32 : i32
    %205 = arith.extui %204 : i1 to i32
    %c0_i32_254 = arith.constant 0 : i32
    %206 = arith.cmpi ne, %205, %c0_i32_254 : i32
    scf.if %206 {
      %c0_257 = arith.constant 0 : index
      %c0_258 = arith.constant 0 : index
      %210 = vector.load %arg2[%c0_257, %c0_258] : memref<200x128xf32, #tpu.memory_space<vmem>>, vector<200x128xf32>
      %211 = arith.mulf %203, %210 : vector<200x128xf32>
      %c16_259 = arith.constant 16 : index
      %c0_260 = arith.constant 0 : index
      %212 = vector.load %arg10[%c16_259, %c0_260] : memref<232x128xf32, #tpu.memory_space<vmem>>, vector<200x128xf32>
      tpu.vector_store %arg10[%c16_259, %c0_260], %211 {strides = array<i32>} : memref<232x128xf32, #tpu.memory_space<vmem>>, vector<200x128xf32>,
    } else {
    }
    %c1_i32_255 = arith.constant 1 : i32
    %207 = arith.cmpi eq, %arg0, %c1_i32_255 : i32
    %208 = arith.extui %207 : i1 to i32
    %c0_i32_256 = arith.constant 0 : i32
    %209 = arith.cmpi ne, %208, %c0_i32_256 : i32
    scf.if %209 {
      %c0_257 = arith.constant 0 : index
      %c0_258 = arith.constant 0 : index
      %210 = vector.load %arg7[%c0_257, %c0_258] : memref<128x128xf32, #tpu.memory_space<vmem>>, vector<128x128xf32>
      %cst_259 = arith.constant dense<0.000000e+00> : vector<200x128xf32>
      %211 = tpu.matmul %203, %210, %cst_259 {dimension_numbers = #tpu.dot_dimension_numbers<[1], [0], [0], [1], [0, 0, 1, 1], [], []>} : vector<200x128xf32>, vector<128x128xf32>, vector<200x128xf32> -> vector<200x128xf32>
      %c0_260 = arith.constant 0 : index
      %c0_261 = arith.constant 0 : index
      %212 = vector.load %arg8[%c0_260, %c0_261] : memref<8x128xf32, #tpu.memory_space<vmem>>, vector<8x128xf32>
      %213 = vector.shape_cast %211 : vector<200x128xf32> to vector<25x8x128xf32>
      %214 = vector.shape_cast %212 : vector<8x128xf32> to vector<1x8x128xf32>
      %215 = vector.broadcast %214 : vector<1x8x128xf32> to vector<25x8x128xf32>
      %216 = arith.addf %213, %215 : vector<25x8x128xf32>
      %217 = vector.shape_cast %216 : vector<25x8x128xf32> to vector<200x128xf32>
      %c0_262 = arith.constant 0 : index
      %c0_263 = arith.constant 0 : index
      %218 = vector.load %arg9[%c0_262, %c0_263] : memref<200x128xf32, #tpu.memory_space<vmem>>, vector<200x128xf32>
      tpu.vector_store %arg9[%c0_262, %c0_263], %217 {strides = array<i32>} : memref<200x128xf32, #tpu.memory_space<vmem>>, vector<200x128xf32>,
    } else {
    }
    return
  }
  func.func @transform_0(%arg0: i32) -> (i32, i32) {
    %c0_i32 = arith.constant 0 : i32
    %c0_i32_0 = arith.constant 0 : i32
    %c0_i32_1 = arith.constant 0 : i32
    return %c0_i32, %c0_i32_0 : i32, i32
  }
  func.func @transform_1(%arg0: i32) -> (i32, i32) {
    %c0_i32 = arith.constant 0 : i32
    %c0_i32_0 = arith.constant 0 : i32
    %c0_i32_1 = arith.constant 0 : i32
    return %c0_i32, %c0_i32_0 : i32, i32
  }
  func.func @transform_2(%arg0: i32) -> (i32, i32, i32, i32, i32) {
    %c0_i32 = arith.constant 0 : i32
    %c0_i32_0 = arith.constant 0 : i32
    %c0_i32_1 = arith.constant 0 : i32
    %c0_i32_2 = arith.constant 0 : i32
    %c0_i32_3 = arith.constant 0 : i32
    return %arg0, %c0_i32, %c0_i32_0, %c0_i32_1, %c0_i32_2 : i32, i32, i32, i32, i32
  }
  func.func @transform_3(%arg0: i32) -> (i32, i32, i32, i32) {
    %c0_i32 = arith.constant 0 : i32
    %c0_i32_0 = arith.constant 0 : i32
    %c0_i32_1 = arith.constant 0 : i32
    %c0_i32_2 = arith.constant 0 : i32
    return %arg0, %c0_i32, %c0_i32_0, %c0_i32_1 : i32, i32, i32, i32
  }
  func.func @transform_4(%arg0: i32) -> (i32, i32, i32, i32) {
    %c0_i32 = arith.constant 0 : i32
    %c0_i32_0 = arith.constant 0 : i32
    %c0_i32_1 = arith.constant 0 : i32
    %c0_i32_2 = arith.constant 0 : i32
    return %arg0, %c0_i32, %c0_i32_0, %c0_i32_1 : i32, i32, i32, i32
  }
  func.func @transform_5(%arg0: i32) -> (i32, i32, i32, i32) {
    %c0_i32 = arith.constant 0 : i32
    %c0_i32_0 = arith.constant 0 : i32
    %c0_i32_1 = arith.constant 0 : i32
    %c0_i32_2 = arith.constant 0 : i32
    return %arg0, %c0_i32, %c0_i32_0, %c0_i32_1 : i32, i32, i32, i32
  }
  func.func @transform_6(%arg0: i32) -> (i32, i32) {
    %c0_i32 = arith.constant 0 : i32
    %c0_i32_0 = arith.constant 0 : i32
    %c0_i32_1 = arith.constant 0 : i32
    return %c0_i32, %c0_i32_0 : i32, i32
  }
  func.func @transform_7(%arg0: i32) -> (i32, i32) {
    %c0_i32 = arith.constant 0 : i32
    %c0_i32_0 = arith.constant 0 : i32
    %c0_i32_1 = arith.constant 0 : i32
    return %c0_i32, %c0_i32_0 : i32, i32
  }
  func.func @transform_8(%arg0: i32) -> (i32, i32) {
    %c0_i32 = arith.constant 0 : i32
    %c0_i32_0 = arith.constant 0 : i32
    %c0_i32_1 = arith.constant 0 : i32
    return %c0_i32, %c0_i32_0 : i32, i32
  }
}

</mosaic_0001>

<llo_original>
// kernel: forward.1
$region0: #{forward.1}
  #allocation0 [shape = 'u32[]', space=smem, size = 0x4, offset = 0x4, fixed_abs, tag = 'smem constant byte address 0x4 - core index']
  #allocation1 [shape = 'u32[144,128]{1,0:T(1,128)}', space=vmem, size = 0x12000, scoped, tag = 'internal scratch']
  #allocation2 [shape = 'f32[232,128]{1,0:T(8,128)}', space=vmem, size = 0x1d000, scoped, tag = 'scratch operand']
  %s0 = inlined_call_operand.vmem [shape: f32[200,128], index: 0, kind: input, shape index: {}]
  %s1 = inlined_call_operand.hbm [shape: f32[200,128], index: 1, kind: input, shape index: {}]
  %s2 = inlined_call_operand.hbm [shape: f32[2,2,15,128,128], index: 2, kind: input, shape index: {}]
  %s3 = inlined_call_operand.hbm [shape: f32[2,2,8,128], index: 3, kind: input, shape index: {}]
  %s4 = inlined_call_operand.hbm [shape: f32[2,2,128,128], index: 4, kind: input, shape index: {}]
  %s5 = inlined_call_operand.hbm [shape: f32[2,2,8,128], index: 5, kind: input, shape index: {}]
  %s6 = inlined_call_operand.hbm [shape: f32[128,128], index: 6, kind: input, shape index: {}]
  %s7 = inlined_call_operand.hbm [shape: f32[8,128], index: 7, kind: input, shape index: {}]
  %s8 = inlined_call_operand.vmem [shape: f32[200,128], index: 8, kind: output, shape index: {}]
  %s9 = sld [smem:[#allocation0]]
  $region105: #{forward.1} parent=0
    _
  %s11 = ssub.s32 1, %s9
  %s12 = scalar_select 0, %s11, %s9
  $region1: #{forward.1} parent=0
    #allocation3 [shape = 'u8[102400]{0}', space=vmem, size = 0x19000, scoped, tag = 'input window, operand 1, single buffered']
    #allocation4 [shape = 's32[2]{0}', space=sflag, size = 0x8, scoped, tag = 'scoped memory for forward.1']
    #allocation5 [shape = 'u8[3932160]{0}', space=vmem, size = 0x3c0000, scoped, tag = 'input window, operand 2']
    #allocation6 [shape = 's32[2]{0}', space=sflag, size = 0x8, scoped, tag = 'scoped memory for forward.1']
    #allocation7 [shape = 'u8[16384]{0}', space=vmem, size = 0x4000, scoped, tag = 'input window, operand 3']
    #allocation8 [shape = 'u8[262144]{0}', space=vmem, size = 0x40000, scoped, tag = 'input window, operand 4']
    #allocation9 [shape = 's32[2]{0}', space=sflag, size = 0x8, scoped, tag = 'scoped memory for forward.1']
    #allocation10 [shape = 'u8[16384]{0}', space=vmem, size = 0x4000, scoped, tag = 'input window, operand 5']
    #allocation11 [shape = 'u8[65536]{0}', space=vmem, size = 0x10000, scoped, tag = 'input window, operand 6, single buffered']
    #allocation12 [shape = 's32[1]{0}', space=sflag, size = 0x4, scoped, tag = 'scoped memory for forward.1']
    #allocation13 [shape = 'u8[4096]{0}', space=vmem, size = 0x1000, scoped, tag = 'input window, operand 7, single buffered']
    %13 = vsyncpa [#allocation4], 0
    %14 = vsyncpa [#allocation6], 0
    %s15 = scalar_lea.sflag [#allocation6], 1
    %16 = vsyncpa %s15, 0
    %17 = vsyncpa [#allocation9], 0
    %s18 = scalar_lea.sflag [#allocation9], 1
    %19 = vsyncpa %s18, 0
    %20 = vsyncpa [#allocation12], 0
    loop: start=0, step=1, limit=4
    $region2: #{forward.1} parent=1 // loop_pre_header
      _
    $region3: #{forward.1} parent=1 // loop_header
      %s22 = sphi 0, %s26
      %p23 = scmp.ge.s32.totalorder %s22, 4
      %s30 = sphi 0, %s30
      %s32 = sphi 0, %s30
      %s33 = sphi 0, %s32
      %s47 = sphi 0, %s33
      %s51 = sphi 0, %s51
      %s53 = sphi 0, %s51
      %s54 = sphi 0, %s53
      %s68 = sphi 0, %s54
      %s74 = sphi 0, %s76
      %s77 = sphi 0, %s74
      %s78 = sphi 0, %s77
      %s94 = sphi 0, %s78
      %s100 = sphi 0, %s102
      %s103 = sphi 0, %s100
      %s104 = sphi 0, %s103
      %s120 = sphi 0, %s104
      %s126 = sphi 0, %s128
      %s129 = sphi 0, %s126
      %s130 = sphi 0, %s129
      %s146 = sphi 0, %s130
      %s152 = sphi 0, %s154
      %s155 = sphi 0, %s152
      %s156 = sphi 0, %s155
      %s172 = sphi 0, %s156
      %s176 = sphi 0, %s176
      %s178 = sphi 0, %s176
      %s179 = sphi 0, %s178
      %s193 = sphi 0, %s179
      %s197 = sphi 0, %s197
      %s199 = sphi 0, %s197
      %s200 = sphi 0, %s199
      %s214 = sphi 0, %s200
      %s218 = sphi 0, %s218
      %s220 = sphi 0, %s218
      %s221 = sphi 0, %s220
      %s235 = sphi 0, %s221
    $region4: #{forward.1} parent=1 // loop_header_branch
      %25 = sbr.rel (%p23) target = $region8
    $region5: #{forward.1} parent=1 // loop_body
      %s27 = ssub.s32 %s22, 1
      %s28 = ssub.s32 %s22, 2
      %s29 = sadd.s32 %s22, 1
      %s31 = sadd.s32 %s30, 1
      %p34 = scmp.eq.s32.totalorder %s22, 1
      %p35 = scmp.ne.s32.totalorder %s30, %s32
      %p36 = scmp.eq.s32.totalorder %s22, 0
      %p37 = por %p35, %p36
      %p38 = scmp.ne.s32.totalorder %s30, %s32
      %p39 = scmp.eq.s32.totalorder %s27, 1
      %p40 = por %p38, %p39
      %p41 = scmp.ne.s32.totalorder %s32, %s33
      %p42 = scmp.eq.s32.totalorder %s27, 0
      %p43 = por %p41, %p42
      %p44 = scmp.ne.s32.totalorder %s32, %s33
      %p45 = scmp.eq.s32.totalorder %s28, 1
      %p46 = por %p44, %p45
      %p48 = scmp.ne.s32.totalorder %s33, %s47
      %p49 = scmp.eq.s32.totalorder %s28, 0
      %p50 = por %p48, %p49
      %s52 = sadd.s32 %s51, 1
      %p55 = scmp.eq.s32.totalorder %s22, 1
      %p56 = scmp.ne.s32.totalorder %s51, %s53
      %p57 = scmp.eq.s32.totalorder %s22, 0
      %p58 = por %p56, %p57
      %p59 = scmp.ne.s32.totalorder %s51, %s53
      %p60 = scmp.eq.s32.totalorder %s27, 1
      %p61 = por %p59, %p60
      %p62 = scmp.ne.s32.totalorder %s53, %s54
      %p63 = scmp.eq.s32.totalorder %s27, 0
      %p64 = por %p62, %p63
      %p65 = scmp.ne.s32.totalorder %s53, %s54
      %p66 = scmp.eq.s32.totalorder %s28, 1
      %p67 = por %p65, %p66
      %p69 = scmp.ne.s32.totalorder %s54, %s68
      %p70 = scmp.eq.s32.totalorder %s28, 0
      %p71 = por %p69, %p70
      %s72 = ssub.s32 %s22, %s29
      %p73 = scmp.eq.s32.totalorder %s72, 0
      %s75 = sadd.s32 %s74, 1
      %s76 = scalar_select %p73, %s74, %s75
      %p79 = pneg %p73
      %p80 = scmp.eq.s32.totalorder %s22, 1
      %p81 = por %p79, %p80
      %p82 = scmp.ne.s32.totalorder %s74, %s77
      %p83 = scmp.eq.s32.totalorder %s22, 0
      %p84 = por %p82, %p83
      %p85 = scmp.ne.s32.totalorder %s74, %s77
      %p86 = scmp.eq.s32.totalorder %s27, 1
      %p87 = por %p85, %p86
      %p88 = scmp.ne.s32.totalorder %s77, %s78
      %p89 = scmp.eq.s32.totalorder %s27, 0
      %p90 = por %p88, %p89
      %p91 = scmp.ne.s32.totalorder %s77, %s78
      %p92 = scmp.eq.s32.totalorder %s28, 1
      %p93 = por %p91, %p92
      %p95 = scmp.ne.s32.totalorder %s78, %s94
      %p96 = scmp.eq.s32.totalorder %s28, 0
      %p97 = por %p95, %p96
      %s98 = ssub.s32 %s22, %s29
      %p99 = scmp.eq.s32.totalorder %s98, 0
      %s101 = sadd.s32 %s100, 1
      %s102 = scalar_select %p99, %s100, %s101
      %p105 = pneg %p99
      %p106 = scmp.eq.s32.totalorder %s22, 1
      %p107 = por %p105, %p106
      %p108 = scmp.ne.s32.totalorder %s100, %s103
      %p109 = scmp.eq.s32.totalorder %s22, 0
      %p110 = por %p108, %p109
      %p111 = scmp.ne.s32.totalorder %s100, %s103
      %p112 = scmp.eq.s32.totalorder %s27, 1
      %p113 = por %p111, %p112
      %p114 = scmp.ne.s32.totalorder %s103, %s104
      %p115 = scmp.eq.s32.totalorder %s27, 0
      %p116 = por %p114, %p115
      %p117 = scmp.ne.s32.totalorder %s103, %s104
      %p118 = scmp.eq.s32.totalorder %s28, 1
      %p119 = por %p117, %p118
      %p121 = scmp.ne.s32.totalorder %s104, %s120
      %p122 = scmp.eq.s32.totalorder %s28, 0
      %p123 = por %p121, %p122
      %s124 = ssub.s32 %s22, %s29
      %p125 = scmp.eq.s32.totalorder %s124, 0
      %s127 = sadd.s32 %s126, 1
      %s128 = scalar_select %p125, %s126, %s127
      %p131 = pneg %p125
      %p132 = scmp.eq.s32.totalorder %s22, 1
      %p133 = por %p131, %p132
      %p134 = scmp.ne.s32.totalorder %s126, %s129
      %p135 = scmp.eq.s32.totalorder %s22, 0
      %p136 = por %p134, %p135
      %p137 = scmp.ne.s32.totalorder %s126, %s129
      %p138 = scmp.eq.s32.totalorder %s27, 1
      %p139 = por %p137, %p138
      %p140 = scmp.ne.s32.totalorder %s129, %s130
      %p141 = scmp.eq.s32.totalorder %s27, 0
      %p142 = por %p140, %p141
      %p143 = scmp.ne.s32.totalorder %s129, %s130
      %p144 = scmp.eq.s32.totalorder %s28, 1
      %p145 = por %p143, %p144
      %p147 = scmp.ne.s32.totalorder %s130, %s146
      %p148 = scmp.eq.s32.totalorder %s28, 0
      %p149 = por %p147, %p148
      %s150 = ssub.s32 %s22, %s29
      %p151 = scmp.eq.s32.totalorder %s150, 0
      %s153 = sadd.s32 %s152, 1
      %s154 = scalar_select %p151, %s152, %s153
      %p157 = pneg %p151
      %p158 = scmp.eq.s32.totalorder %s22, 1
      %p159 = por %p157, %p158
      %p160 = scmp.ne.s32.totalorder %s152, %s155
      %p161 = scmp.eq.s32.totalorder %s22, 0
      %p162 = por %p160, %p161
      %p163 = scmp.ne.s32.totalorder %s152, %s155
      %p164 = scmp.eq.s32.totalorder %s27, 1
      %p165 = por %p163, %p164
      %p166 = scmp.ne.s32.totalorder %s155, %s156
      %p167 = scmp.eq.s32.totalorder %s27, 0
      %p168 = por %p166, %p167
      %p169 = scmp.ne.s32.totalorder %s155, %s156
      %p170 = scmp.eq.s32.totalorder %s28, 1
      %p171 = por %p169, %p170
      %p173 = scmp.ne.s32.totalorder %s156, %s172
      %p174 = scmp.eq.s32.totalorder %s28, 0
      %p175 = por %p173, %p174
      %s177 = sadd.s32 %s176, 1
      %p180 = scmp.eq.s32.totalorder %s22, 1
      %p181 = scmp.ne.s32.totalorder %s176, %s178
      %p182 = scmp.eq.s32.totalorder %s22, 0
      %p183 = por %p181, %p182
      %p184 = scmp.ne.s32.totalorder %s176, %s178
      %p185 = scmp.eq.s32.totalorder %s27, 1
      %p186 = por %p184, %p185
      %p187 = scmp.ne.s32.totalorder %s178, %s179
      %p188 = scmp.eq.s32.totalorder %s27, 0
      %p189 = por %p187, %p188
      %p190 = scmp.ne.s32.totalorder %s178, %s179
      %p191 = scmp.eq.s32.totalorder %s28, 1
      %p192 = por %p190, %p191
      %p194 = scmp.ne.s32.totalorder %s179, %s193
      %p195 = scmp.eq.s32.totalorder %s28, 0
      %p196 = por %p194, %p195
      %s198 = sadd.s32 %s197, 1
      %p201 = scmp.eq.s32.totalorder %s22, 1
      %p202 = scmp.ne.s32.totalorder %s197, %s199
      %p203 = scmp.eq.s32.totalorder %s22, 0
      %p204 = por %p202, %p203
      %p205 = scmp.ne.s32.totalorder %s197, %s199
      %p206 = scmp.eq.s32.totalorder %s27, 1
      %p207 = por %p205, %p206
      %p208 = scmp.ne.s32.totalorder %s199, %s200
      %p209 = scmp.eq.s32.totalorder %s27, 0
      %p210 = por %p208, %p209
      %p211 = scmp.ne.s32.totalorder %s199, %s200
      %p212 = scmp.eq.s32.totalorder %s28, 1
      %p213 = por %p211, %p212
      %p215 = scmp.ne.s32.totalorder %s200, %s214
      %p216 = scmp.eq.s32.totalorder %s28, 0
      %p217 = por %p215, %p216
      %s219 = sadd.s32 %s218, 1
      %p222 = scmp.eq.s32.totalorder %s22, 1
      %p223 = scmp.ne.s32.totalorder %s218, %s220
      %p224 = scmp.eq.s32.totalorder %s22, 0
      %p225 = por %p223, %p224
      %p226 = scmp.ne.s32.totalorder %s218, %s220
      %p227 = scmp.eq.s32.totalorder %s27, 1
      %p228 = por %p226, %p227
      %p229 = scmp.ne.s32.totalorder %s220, %s221
      %p230 = scmp.eq.s32.totalorder %s27, 0
      %p231 = por %p229, %p230
      %p232 = scmp.ne.s32.totalorder %s220, %s221
      %p233 = scmp.eq.s32.totalorder %s28, 1
      %p234 = por %p232, %p233
      %p236 = scmp.ne.s32.totalorder %s221, %s235
      %p237 = scmp.eq.s32.totalorder %s28, 0
      %p238 = por %p236, %p237
      %p239 = scmp.le.s32.totalorder 1, %s22
      %p240 = scmp.lt.s32.totalorder %s22, 3
      %p241 = pnand %p239, %p240
      %p242 = pneg %p241
      // Predicated region
      $region9: #{forward.1} parent=5 // pred_check
        _
      $region10: #{forward.1} parent=5 // pred_check_branch
        %244 = sbr.rel (%p241) target = $region12
      $region11: #{forward.1} parent=5 // pred_region
        %s245 = ssub.s32 %s22, 1
        // Predicated region
        $region13: #{forward.1} parent=11 // pred_check
          %p246 = pneg %p43
        $region14: #{forward.1} parent=11 // pred_check_branch
          %248 = sbr.rel (%p246) target = $region16
        $region15: #{forward.1} parent=11 // pred_region
          _
        $region16: #{forward.1} parent=11 // pred_fallthru
          _
        // Predicated region
        $region17: #{forward.1} parent=11 // pred_check
          %p249 = pneg %p64
        $region18: #{forward.1} parent=11 // pred_check_branch
          %251 = sbr.rel (%p249) target = $region20
        $region19: #{forward.1} parent=11 // pred_region
          %s253 = ssub.s32 3200, 3200
          %254 = vsyncadd [#allocation4], %s253
          %s255 = sshll.u32 [#allocation3], 4
          %s256 = int_to_ptr.vmem [resolvable:$true] %s255
          %261 = dma.hbm_to_vmem [thread:$0]  %s1, 3200, %s256, [#allocation4], 128, 128, 8
        $region20: #{forward.1} parent=11 // pred_fallthru
          _
        // Predicated region
        $region21: #{forward.1} parent=11 // pred_check
          %p262 = pneg %p189
        $region22: #{forward.1} parent=11 // pred_check_branch
          %264 = sbr.rel (%p262) target = $region24
        $region23: #{forward.1} parent=11 // pred_region
          %s266 = ssub.s32 2048, 2048
          %267 = vsyncadd [#allocation12], %s266
          %s268 = sshll.u32 [#allocation11], 4
          %s269 = int_to_ptr.vmem [resolvable:$true] %s268
          %274 = dma.hbm_to_vmem [thread:$0]  %s6, 2048, %s269, [#allocation12], 128, 128, 8
        $region24: #{forward.1} parent=11 // pred_fallthru
          _
        // Predicated region
        $region25: #{forward.1} parent=11 // pred_check
          %p275 = pneg %p210
        $region26: #{forward.1} parent=11 // pred_check_branch
          %277 = sbr.rel (%p275) target = $region28
        $region27: #{forward.1} parent=11 // pred_region
          %s279 = ssub.s32 128, 128
          %280 = vsyncadd [#allocation12], %s279
          %s282 = sshll.u32 [#allocation13], 4
          %s283 = int_to_ptr.vmem [resolvable:$true] %s282
          %285 = dma.hbm_to_vmem [thread:$0]  %s7, 128, %s283, [#allocation12]
        $region28: #{forward.1} parent=11 // pred_fallthru
          _
      $region12: #{forward.1} parent=5 // pred_fallthru
        _
      %p286 = scmp.lt.s32.totalorder %s22, 2
      // Predicated region
      $region29: #{forward.1} parent=5 // pred_check
        %p287 = pneg %p286
      $region30: #{forward.1} parent=5 // pred_check_branch
        %289 = sbr.rel (%p287) target = $region32
      $region31: #{forward.1} parent=5 // pred_region
        // Predicated region
        $region33: #{forward.1} parent=31 // pred_check
          %p290 = pneg %p84
        $region34: #{forward.1} parent=31 // pred_check_branch
          %292 = sbr.rel (%p290) target = $region36
        $region35: #{forward.1} parent=31 // pred_region
          %s293 = sand.u32 %s22, 1
          %s294 = scalar_lea.sflag [#allocation6], %s293
          %s295 = sand.u32 %s74, 1
          %s296 = smul.addr %s295, 3840
          %s297 = scalar_lea.vmem [#allocation5], %s296
          %s299 = ssub.s32 61440, 61440
          %300 = vsyncadd %s294, %s299
          %s301 = smul.addr %s22, 480
          %s302 = smul.addr %s301, 128
          %s303 = scalar_lea.hbm %s2, %s302
          %s304 = sshll.u32 %s297, 4
          %s305 = int_to_ptr.vmem [resolvable:$true] %s304
          %310 = dma.hbm_to_vmem [thread:$0]  %s303, 61440, %s305, %s294, 128, 128, 8
        $region36: #{forward.1} parent=31 // pred_fallthru
          _
        // Predicated region
        $region37: #{forward.1} parent=31 // pred_check
          %p311 = pneg %p110
        $region38: #{forward.1} parent=31 // pred_check_branch
          %313 = sbr.rel (%p311) target = $region40
        $region39: #{forward.1} parent=31 // pred_region
          %s314 = sand.u32 %s22, 1
          %s315 = scalar_lea.sflag [#allocation6], %s314
          %s316 = sand.u32 %s100, 1
          %s317 = smul.addr %s316, 16
          %s318 = scalar_lea.vmem [#allocation7], %s317
          %s320 = ssub.s32 256, 256
          %321 = vsyncadd %s315, %s320
          %s322 = smul.addr %s22, 2
          %s323 = smul.addr %s322, 128
          %s324 = scalar_lea.hbm %s3, %s323
          %s325 = sshll.u32 %s318, 4
          %s326 = int_to_ptr.vmem [resolvable:$true] %s325
          %331 = dma.hbm_to_vmem [thread:$0]  %s324, 256, %s326, %s315, 128, 128, 8
        $region40: #{forward.1} parent=31 // pred_fallthru
          _
        // Predicated region
        $region41: #{forward.1} parent=31 // pred_check
          %p332 = pneg %p136
        $region42: #{forward.1} parent=31 // pred_check_branch
          %334 = sbr.rel (%p332) target = $region44
        $region43: #{forward.1} parent=31 // pred_region
          %s335 = sand.u32 %s22, 1
          %s336 = scalar_lea.sflag [#allocation9], %s335
          %s337 = sand.u32 %s126, 1
          %s338 = smul.addr %s337, 256
          %s339 = scalar_lea.vmem [#allocation8], %s338
          %s341 = ssub.s32 4096, 4096
          %342 = vsyncadd %s336, %s341
          %s343 = smul.addr %s22, 32
          %s344 = smul.addr %s343, 128
          %s345 = scalar_lea.hbm %s4, %s344
          %s346 = sshll.u32 %s339, 4
          %s347 = int_to_ptr.vmem [resolvable:$true] %s346
          %352 = dma.hbm_to_vmem [thread:$0]  %s345, 4096, %s347, %s336, 128, 128, 8
        $region44: #{forward.1} parent=31 // pred_fallthru
          _
        // Predicated region
        $region45: #{forward.1} parent=31 // pred_check
          %p353 = pneg %p162
        $region46: #{forward.1} parent=31 // pred_check_branch
          %355 = sbr.rel (%p353) target = $region48
        $region47: #{forward.1} parent=31 // pred_region
          %s356 = sand.u32 %s22, 1
          %s357 = scalar_lea.sflag [#allocation9], %s356
          %s358 = sand.u32 %s152, 1
          %s359 = smul.addr %s358, 16
          %s360 = scalar_lea.vmem [#allocation10], %s359
          %s362 = ssub.s32 256, 256
          %363 = vsyncadd %s357, %s362
          %s364 = smul.addr %s22, 2
          %s365 = smul.addr %s364, 128
          %s366 = scalar_lea.hbm %s5, %s365
          %s367 = sshll.u32 %s360, 4
          %s368 = int_to_ptr.vmem [resolvable:$true] %s367
          %373 = dma.hbm_to_vmem [thread:$0]  %s366, 256, %s368, %s357, 128, 128, 8
        $region48: #{forward.1} parent=31 // pred_fallthru
          _
      $region32: #{forward.1} parent=5 // pred_fallthru
        _
      %p374 = scmp.le.s32.totalorder 1, %s22
      %p375 = scmp.lt.s32.totalorder %s22, 3
      %p376 = pnand %p374, %p375
      %p377 = pneg %p376
      // Predicated region
      $region49: #{forward.1} parent=5 // pred_check
        _
      $region50: #{forward.1} parent=5 // pred_check_branch
        %379 = sbr.rel (%p376) target = $region52
      $region51: #{forward.1} parent=5 // pred_region
        %s380 = ssub.s32 %s22, 1
        // Predicated region
        $region53: #{forward.1} parent=51 // pred_check
          %p381 = pneg %p64
        $region54: #{forward.1} parent=51 // pred_check_branch
          %383 = sbr.rel (%p381) target = $region56
        $region55: #{forward.1} parent=51 // pred_region
          %384 = dma.done [#allocation4], 3200
        $region56: #{forward.1} parent=51 // pred_fallthru
          _
        %s385 = sand.u32 %s27, 1
        %s386 = scalar_lea.sflag [#allocation6], %s385
        %s387 = sand.u32 %s77, 1
        %s388 = smul.addr %s387, 3840
        %s389 = scalar_lea.vmem [#allocation5], %s388
        // Predicated region
        $region57: #{forward.1} parent=51 // pred_check
          %p390 = pneg %p90
        $region58: #{forward.1} parent=51 // pred_check_branch
          %392 = sbr.rel (%p390) target = $region60
        $region59: #{forward.1} parent=51 // pred_region
          %393 = dma.done %s386, 61440
        $region60: #{forward.1} parent=51 // pred_fallthru
          _
        %s394 = sand.u32 %s27, 1
        %s395 = scalar_lea.sflag [#allocation6], %s394
        %s396 = sand.u32 %s103, 1
        %s397 = smul.addr %s396, 16
        %s398 = scalar_lea.vmem [#allocation7], %s397
        // Predicated region
        $region61: #{forward.1} parent=51 // pred_check
          %p399 = pneg %p116
        $region62: #{forward.1} parent=51 // pred_check_branch
          %401 = sbr.rel (%p399) target = $region64
        $region63: #{forward.1} parent=51 // pred_region
          %402 = dma.done %s395, 256
        $region64: #{forward.1} parent=51 // pred_fallthru
          _
        %s403 = sand.u32 %s27, 1
        %s404 = scalar_lea.sflag [#allocation9], %s403
        %s405 = sand.u32 %s129, 1
        %s406 = smul.addr %s405, 256
        %s407 = scalar_lea.vmem [#allocation8], %s406
        // Predicated region
        $region65: #{forward.1} parent=51 // pred_check
          %p408 = pneg %p142
        $region66: #{forward.1} parent=51 // pred_check_branch
          %410 = sbr.rel (%p408) target = $region68
        $region67: #{forward.1} parent=51 // pred_region
          %411 = dma.done %s404, 4096
        $region68: #{forward.1} parent=51 // pred_fallthru
          _
        %s412 = sand.u32 %s27, 1
        %s413 = scalar_lea.sflag [#allocation9], %s412
        %s414 = sand.u32 %s155, 1
        %s415 = smul.addr %s414, 16
        %s416 = scalar_lea.vmem [#allocation10], %s415
        // Predicated region
        $region69: #{forward.1} parent=51 // pred_check
          %p417 = pneg %p168
        $region70: #{forward.1} parent=51 // pred_check_branch
          %419 = sbr.rel (%p417) target = $region72
        $region71: #{forward.1} parent=51 // pred_region
          %420 = dma.done %s413, 256
        $region72: #{forward.1} parent=51 // pred_fallthru
          _
        // Predicated region
        $region73: #{forward.1} parent=51 // pred_check
          %p421 = pneg %p189
        $region74: #{forward.1} parent=51 // pred_check_branch
          %423 = sbr.rel (%p421) target = $region76
        $region75: #{forward.1} parent=51 // pred_region
          %424 = dma.done [#allocation12], 2048
        $region76: #{forward.1} parent=51 // pred_fallthru
          _
        // Predicated region
        $region77: #{forward.1} parent=51 // pred_check
          %p425 = pneg %p210
        $region78: #{forward.1} parent=51 // pred_check_branch
          %427 = sbr.rel (%p425) target = $region80
        $region79: #{forward.1} parent=51 // pred_region
          %428 = dma.done [#allocation12], 128
        $region80: #{forward.1} parent=51 // pred_fallthru
          _
        %p429 = pneg %p43
        %p430 = pneg %p40
        %p431 = pneg %p64
        %p432 = pneg %p61
        %s433 = sand.u32 %s27, 1
        %s434 = scalar_lea.sflag [#allocation6], %s433
        %s435 = sand.u32 %s77, 1
        %s436 = smul.addr %s435, 3840
        %s437 = scalar_lea.vmem [#allocation5], %s436
        %p438 = pneg %p90
        %p439 = pneg %p87
        %s440 = sand.u32 %s27, 1
        %s441 = scalar_lea.sflag [#allocation6], %s440
        %s442 = sand.u32 %s103, 1
        %s443 = smul.addr %s442, 16
        %s444 = scalar_lea.vmem [#allocation7], %s443
        %p445 = pneg %p116
        %p446 = pneg %p113
        %s447 = sand.u32 %s27, 1
        %s448 = scalar_lea.sflag [#allocation9], %s447
        %s449 = sand.u32 %s129, 1
        %s450 = smul.addr %s449, 256
        %s451 = scalar_lea.vmem [#allocation8], %s450
        %p452 = pneg %p142
        %p453 = pneg %p139
        %s454 = sand.u32 %s27, 1
        %s455 = scalar_lea.sflag [#allocation9], %s454
        %s456 = sand.u32 %s155, 1
        %s457 = smul.addr %s456, 16
        %s458 = scalar_lea.vmem [#allocation10], %s457
        %p459 = pneg %p168
        %p460 = pneg %p165
        %p461 = pneg %p189
        %p462 = pneg %p186
        %p463 = pneg %p210
        %p464 = pneg %p207
        %p465 = pneg %p231
        %p466 = pneg %p228
        %p467 = scmp.eq.s32.totalorder %s27, 0
        // Predicated region
        $region81: #{forward.1} parent=51 // pred_check
          %p468 = pneg %p467
        $region82: #{forward.1} parent=51 // pred_check_branch
          %470 = sbr.rel (%p468) target = $region84
        $region83: #{forward.1} parent=51 // pred_region
          %471 = vst [vmem:[#allocation2] sm:$0xff] 0.0
          %472 = vst [vmem:[#allocation2 + $0x8] sm:$0xff] 0.0
          %473 = vst [vmem:[#allocation2 + $0xd8] sm:$0xff] 0.0
          %474 = vst [vmem:[#allocation2 + $0xe0] sm:$0xff] 0.0
          %v475 = vld [vmem:[%s0] sm:$0xff]
          %v476 = vld [vmem:[%s0 + $0x8] sm:$0xff]
          %v477 = vld [vmem:[%s0 + $0x10] sm:$0xff]
          %v478 = vld [vmem:[%s0 + $0x18] sm:$0xff]
          %v479 = vld [vmem:[%s0 + $0x20] sm:$0xff]
          %v480 = vld [vmem:[%s0 + $0x28] sm:$0xff]
          %v481 = vld [vmem:[%s0 + $0x30] sm:$0xff]
          %v482 = vld [vmem:[%s0 + $0x38] sm:$0xff]
          %v483 = vld [vmem:[%s0 + $0x40] sm:$0xff]
          %v484 = vld [vmem:[%s0 + $0x48] sm:$0xff]
          %v485 = vld [vmem:[%s0 + $0x50] sm:$0xff]
          %v486 = vld [vmem:[%s0 + $0x58] sm:$0xff]
          %v487 = vld [vmem:[%s0 + $0x60] sm:$0xff]
          %v488 = vld [vmem:[%s0 + $0x68] sm:$0xff]
          %v489 = vld [vmem:[%s0 + $0x70] sm:$0xff]
          %v490 = vld [vmem:[%s0 + $0x78] sm:$0xff]
          %v491 = vld [vmem:[%s0 + $0x80] sm:$0xff]
          %v492 = vld [vmem:[%s0 + $0x88] sm:$0xff]
          %v493 = vld [vmem:[%s0 + $0x90] sm:$0xff]
          %v494 = vld [vmem:[%s0 + $0x98] sm:$0xff]
          %v495 = vld [vmem:[%s0 + $0xa0] sm:$0xff]
          %v496 = vld [vmem:[%s0 + $0xa8] sm:$0xff]
          %v497 = vld [vmem:[%s0 + $0xb0] sm:$0xff]
          %v498 = vld [vmem:[%s0 + $0xb8] sm:$0xff]
          %v499 = vld [vmem:[%s0 + $0xc0] sm:$0xff]
          %500 = vst [vmem:[#allocation2 + $0x10] sm:$0xff] %v475
          %501 = vst [vmem:[#allocation2 + $0x18] sm:$0xff] %v476
          %502 = vst [vmem:[#allocation2 + $0x20] sm:$0xff] %v477
          %503 = vst [vmem:[#allocation2 + $0x28] sm:$0xff] %v478
          %504 = vst [vmem:[#allocation2 + $0x30] sm:$0xff] %v479
          %505 = vst [vmem:[#allocation2 + $0x38] sm:$0xff] %v480
          %506 = vst [vmem:[#allocation2 + $0x40] sm:$0xff] %v481
          %507 = vst [vmem:[#allocation2 + $0x48] sm:$0xff] %v482
          %508 = vst [vmem:[#allocation2 + $0x50] sm:$0xff] %v483
          %509 = vst [vmem:[#allocation2 + $0x58] sm:$0xff] %v484
          %510 = vst [vmem:[#allocation2 + $0x60] sm:$0xff] %v485
          %511 = vst [vmem:[#allocation2 + $0x68] sm:$0xff] %v486
          %512 = vst [vmem:[#allocation2 + $0x70] sm:$0xff] %v487
          %513 = vst [vmem:[#allocation2 + $0x78] sm:$0xff] %v488
          %514 = vst [vmem:[#allocation2 + $0x80] sm:$0xff] %v489
          %515 = vst [vmem:[#allocation2 + $0x88] sm:$0xff] %v490
          %516 = vst [vmem:[#allocation2 + $0x90] sm:$0xff] %v491
          %517 = vst [vmem:[#allocation2 + $0x98] sm:$0xff] %v492
          %518 = vst [vmem:[#allocation2 + $0xa0] sm:$0xff] %v493
          %519 = vst [vmem:[#allocation2 + $0xa8] sm:$0xff] %v494
          %520 = vst [vmem:[#allocation2 + $0xb0] sm:$0xff] %v495
          %521 = vst [vmem:[#allocation2 + $0xb8] sm:$0xff] %v496
          %522 = vst [vmem:[#allocation2 + $0xc0] sm:$0xff] %v497
          %523 = vst [vmem:[#allocation2 + $0xc8] sm:$0xff] %v498
          %524 = vst [vmem:[#allocation2 + $0xd0] sm:$0xff] %v499
        $region84: #{forward.1} parent=51 // pred_fallthru
          _
        %v525 = vld [vmem:[#allocation2 + $0x5] sm:$0xff]
        %v526 = vld [vmem:[#allocation2 + $0xd] sm:$0xff]
        %v527 = vld [vmem:[#allocation2 + $0x15] sm:$0xff]
        %v528 = vld [vmem:[#allocation2 + $0x1d] sm:$0xff]
        %v529 = vld [vmem:[#allocation2 + $0x25] sm:$0xff]
        %v530 = vld [vmem:[#allocation2 + $0x2d] sm:$0xff]
        %v531 = vld [vmem:[#allocation2 + $0x35] sm:$0xff]
        %v532 = vld [vmem:[#allocation2 + $0x3d] sm:$0xff]
        %v533 = vld [vmem:[#allocation2 + $0x45] sm:$0xff]
        %v534 = vld [vmem:[#allocation2 + $0x4d] sm:$0xff]
        %v535 = vld [vmem:[#allocation2 + $0x55] sm:$0xff]
        %v536 = vld [vmem:[#allocation2 + $0x5d] sm:$0xff]
        %v537 = vld [vmem:[#allocation2 + $0x65] sm:$0xff]
        %v538 = vld [vmem:[#allocation2 + $0x6d] sm:$0xff]
        %v539 = vld [vmem:[#allocation2 + $0x75] sm:$0xff]
        %v540 = vld [vmem:[#allocation2 + $0x7d] sm:$0xff]
        %v541 = vld [vmem:[#allocation2 + $0x85] sm:$0xff]
        %v542 = vld [vmem:[#allocation2 + $0x8d] sm:$0xff]
        %v543 = vld [vmem:[#allocation2 + $0x95] sm:$0xff]
        %v544 = vld [vmem:[#allocation2 + $0x9d] sm:$0xff]
        %v545 = vld [vmem:[#allocation2 + $0xa5] sm:$0xff]
        %v546 = vld [vmem:[#allocation2 + $0xad] sm:$0xff]
        %v547 = vld [vmem:[#allocation2 + $0xb5] sm:$0xff]
        %v548 = vld [vmem:[#allocation2 + $0xbd] sm:$0xff]
        %v549 = vld [vmem:[#allocation2 + $0xc5] sm:$0xff]
        %v550 = vld [vmem:[%s389] sm:$0xff]
        %v551 = vld [vmem:[%s389 + $0x8] sm:$0xff]
        %v552 = vld [vmem:[%s389 + $0x10] sm:$0xff]
        %v553 = vld [vmem:[%s389 + $0x18] sm:$0xff]
        %v554 = vld [vmem:[%s389 + $0x20] sm:$0xff]
        %v555 = vld [vmem:[%s389 + $0x28] sm:$0xff]
        %v556 = vld [vmem:[%s389 + $0x30] sm:$0xff]
        %v557 = vld [vmem:[%s389 + $0x38] sm:$0xff]
        %v558 = vld [vmem:[%s389 + $0x40] sm:$0xff]
        %v559 = vld [vmem:[%s389 + $0x48] sm:$0xff]
        %v560 = vld [vmem:[%s389 + $0x50] sm:$0xff]
        %v561 = vld [vmem:[%s389 + $0x58] sm:$0xff]
        %v562 = vld [vmem:[%s389 + $0x60] sm:$0xff]
        %v563 = vld [vmem:[%s389 + $0x68] sm:$0xff]
        %v564 = vld [vmem:[%s389 + $0x70] sm:$0xff]
        %v565 = vld [vmem:[%s389 + $0x78] sm:$0xff]
        %v566 = vld [vmem:[#allocation2 + $0x6] sm:$0xff]
        %v567 = vld [vmem:[#allocation2 + $0xe] sm:$0xff]
        %v568 = vld [vmem:[#allocation2 + $0x16] sm:$0xff]
        %v569 = vld [vmem:[#allocation2 + $0x1e] sm:$0xff]
        %v570 = vld [vmem:[#allocation2 + $0x26] sm:$0xff]
        %v571 = vld [vmem:[#allocation2 + $0x2e] sm:$0xff]
        %v572 = vld [vmem:[#allocation2 + $0x36] sm:$0xff]
        %v573 = vld [vmem:[#allocation2 + $0x3e] sm:$0xff]
        %v574 = vld [vmem:[#allocation2 + $0x46] sm:$0xff]
        %v575 = vld [vmem:[#allocation2 + $0x4e] sm:$0xff]
        %v576 = vld [vmem:[#allocation2 + $0x56] sm:$0xff]
        %v577 = vld [vmem:[#allocation2 + $0x5e] sm:$0xff]
        %v578 = vld [vmem:[#allocation2 + $0x66] sm:$0xff]
        %v579 = vld [vmem:[#allocation2 + $0x6e] sm:$0xff]
        %v580 = vld [vmem:[#allocation2 + $0x76] sm:$0xff]
        %v581 = vld [vmem:[#allocation2 + $0x7e] sm:$0xff]
        %v582 = vld [vmem:[#allocation2 + $0x86] sm:$0xff]
        %v583 = vld [vmem:[#allocation2 + $0x8e] sm:$0xff]
        %v584 = vld [vmem:[#allocation2 + $0x96] sm:$0xff]
        %v585 = vld [vmem:[#allocation2 + $0x9e] sm:$0xff]
        %v586 = vld [vmem:[#allocation2 + $0xa6] sm:$0xff]
        %v587 = vld [vmem:[#allocation2 + $0xae] sm:$0xff]
        %v588 = vld [vmem:[#allocation2 + $0xb6] sm:$0xff]
        %v589 = vld [vmem:[#allocation2 + $0xbe] sm:$0xff]
        %v590 = vld [vmem:[#allocation2 + $0xc6] sm:$0xff]
        %s591 = scalar_lea.vmem %s389, 128 [#allocation5]
        %v592 = vld [vmem:[%s591] sm:$0xff]
        %v593 = vld [vmem:[%s591 + $0x8] sm:$0xff]
        %v594 = vld [vmem:[%s591 + $0x10] sm:$0xff]
        %v595 = vld [vmem:[%s591 + $0x18] sm:$0xff]
        %v596 = vld [vmem:[%s591 + $0x20] sm:$0xff]
        %v597 = vld [vmem:[%s591 + $0x28] sm:$0xff]
        %v598 = vld [vmem:[%s591 + $0x30] sm:$0xff]
        %v599 = vld [vmem:[%s591 + $0x38] sm:$0xff]
        %v600 = vld [vmem:[%s591 + $0x40] sm:$0xff]
        %v601 = vld [vmem:[%s591 + $0x48] sm:$0xff]
        %v602 = vld [vmem:[%s591 + $0x50] sm:$0xff]
        %v603 = vld [vmem:[%s591 + $0x58] sm:$0xff]
        %v604 = vld [vmem:[%s591 + $0x60] sm:$0xff]
        %v605 = vld [vmem:[%s591 + $0x68] sm:$0xff]
        %v606 = vld [vmem:[%s591 + $0x70] sm:$0xff]
        %v607 = vld [vmem:[%s591 + $0x78] sm:$0xff]
        %608 = vmatprep.subr.mxu0 0.0
        %609 = vmatpush1.msra.mxu0 %v592
        %610 = vmatprep.subr.mxu0 0.0
        %611 = vmatpush1.msra.mxu0 %v593
        %612 = vmatprep.subr.mxu0 0.0
        %613 = vmatpush1.msra.mxu0 %v594
        %614 = vmatprep.subr.mxu0 0.0
        %615 = vmatpush1.msra.mxu0 %v595
        %616 = vmatprep.subr.mxu0 0.0
        %617 = vmatpush1.msra.mxu0 %v596
        %618 = vmatprep.subr.mxu0 0.0
        %619 = vmatpush1.msra.mxu0 %v597
        %620 = vmatprep.subr.mxu0 0.0
        %621 = vmatpush1.msra.mxu0 %v598
        %622 = vmatprep.subr.mxu0 0.0
        %623 = vmatpush1.msra.mxu0 %v599
        %624 = vmatprep.subr.mxu0 0.0
        %625 = vmatpush1.msra.mxu0 %v600
        %626 = vmatprep.subr.mxu0 0.0
        %627 = vmatpush1.msra.mxu0 %v601
        %628 = vmatprep.subr.mxu0 0.0
        %629 = vmatpush1.msra.mxu0 %v602
        %630 = vmatprep.subr.mxu0 0.0
        %631 = vmatpush1.msra.mxu0 %v603
        %632 = vmatprep.subr.mxu0 0.0
        %633 = vmatpush1.msra.mxu0 %v604
        %634 = vmatprep.subr.mxu0 0.0
        %635 = vmatpush1.msra.mxu0 %v605
        %636 = vmatprep.subr.mxu0 0.0
        %637 = vmatpush1.msra.mxu0 %v606
        %638 = vmatprep.subr.mxu0 0.0
        %639 = vmatpush1.msra.mxu0 %v607
        %640 = vmatprep.subr.mxu0 0.0
        %641 = vmatpush1.msra.mxu0 0.0
        %642 = vmatprep.subr.mxu0 0.0
        %643 = vmatpush1.msra.mxu0 0.0
        %644 = vmatprep.subr.mxu0 0.0
        %645 = vmatpush1.msra.mxu0 0.0
        %646 = vmatprep.subr.mxu0 0.0
        %647 = vmatpush1.msra.mxu0 0.0
        %648 = vmatprep.subr.mxu0 0.0
        %649 = vmatpush1.msra.mxu0 0.0
        %650 = vmatprep.subr.mxu0 0.0
        %651 = vmatpush1.msra.mxu0 0.0
        %652 = vmatprep.subr.mxu0 0.0
        %653 = vmatpush1.msra.mxu0 0.0
        %654 = vmatprep.subr.mxu0 0.0
        %655 = vmatpush1.msra.mxu0 0.0
        %656 = vmatprep.subr.mxu0 0.0
        %657 = vmatpush1.msra.mxu0 0.0
        %658 = vmatprep.subr.mxu0 0.0
        %659 = vmatpush1.msra.mxu0 0.0
        %660 = vmatprep.subr.mxu0 0.0
        %661 = vmatpush1.msra.mxu0 0.0
        %662 = vmatprep.subr.mxu0 0.0
        %663 = vmatpush1.msra.mxu0 0.0
        %664 = vmatprep.subr.mxu0 0.0
        %665 = vmatpush1.msra.mxu0 0.0
        %666 = vmatprep.subr.mxu0 0.0
        %667 = vmatpush1.msra.mxu0 0.0
        %668 = vmatprep.subr.mxu0 0.0
        %669 = vmatpush1.msra.mxu0 0.0
        %670 = vmatprep.subr.mxu0 0.0
        %671 = vmatpush1.msra.mxu0 0.0
        %672 = vmatprep.mubr.f32.mxu0 0.0
        %673 = vmatmul.mubr.f32.gmra.mrb[0].mxu0 %v566
        %v674 = vpop.f32.mrb[0].mxu0
        %v675 = vadd.f32 0.0, %v674
        %v676 = vpop.f32.mrb[0].mxu0
        %677 = vmatprep.mubr.f32.mxu0 0.0
        %678 = vmatmul.mubr.f32.gmra.mrb[0].mxu0 %v567
        %v679 = vpop.f32.mrb[0].mxu0
        %v680 = vadd.f32 0.0, %v679
        %v681 = vpop.f32.mrb[0].mxu0
        %682 = vmatprep.mubr.f32.mxu0 0.0
        %683 = vmatmul.mubr.f32.gmra.mrb[0].mxu0 %v568
        %v684 = vpop.f32.mrb[0].mxu0
        %v685 = vadd.f32 0.0, %v684
        %v686 = vpop.f32.mrb[0].mxu0
        %687 = vmatprep.mubr.f32.mxu0 0.0
        %688 = vmatmul.mubr.f32.gmra.mrb[0].mxu0 %v569
        %v689 = vpop.f32.mrb[0].mxu0
        %v690 = vadd.f32 0.0, %v689
        %v691 = vpop.f32.mrb[0].mxu0
        %692 = vmatprep.mubr.f32.mxu0 0.0
        %693 = vmatmul.mubr.f32.gmra.mrb[0].mxu0 %v570
        %v694 = vpop.f32.mrb[0].mxu0
        %v695 = vadd.f32 0.0, %v694
        %v696 = vpop.f32.mrb[0].mxu0
        %697 = vmatprep.mubr.f32.mxu0 0.0
        %698 = vmatmul.mubr.f32.gmra.mrb[0].mxu0 %v571
        %v699 = vpop.f32.mrb[0].mxu0
        %v700 = vadd.f32 0.0, %v699
        %v701 = vpop.f32.mrb[0].mxu0
        %702 = vmatprep.mubr.f32.mxu0 0.0
        %703 = vmatmul.mubr.f32.gmra.mrb[0].mxu0 %v572
        %v704 = vpop.f32.mrb[0].mxu0
        %v705 = vadd.f32 0.0, %v704
        %v706 = vpop.f32.mrb[0].mxu0
        %707 = vmatprep.mubr.f32.mxu0 0.0
        %708 = vmatmul.mubr.f32.gmra.mrb[0].mxu0 %v573
        %v709 = vpop.f32.mrb[0].mxu0
        %v710 = vadd.f32 0.0, %v709
        %v711 = vpop.f32.mrb[0].mxu0
        %712 = vmatprep.mubr.f32.mxu0 0.0
        %713 = vmatmul.mubr.f32.gmra.mrb[0].mxu0 %v574
        %v714 = vpop.f32.mrb[0].mxu0
        %v715 = vadd.f32 0.0, %v714
        %v716 = vpop.f32.mrb[0].mxu0
        %717 = vmatprep.mubr.f32.mxu0 0.0
        %718 = vmatmul.mubr.f32.gmra.mrb[0].mxu0 %v575
        %v719 = vpop.f32.mrb[0].mxu0
        %v720 = vadd.f32 0.0, %v719
        %v721 = vpop.f32.mrb[0].mxu0
        %722 = vmatprep.mubr.f32.mxu0 0.0
        %723 = vmatmul.mubr.f32.gmra.mrb[0].mxu0 %v576
        %v724 = vpop.f32.mrb[0].mxu0
        %v725 = vadd.f32 0.0, %v724
        %v726 = vpop.f32.mrb[0].mxu0
        %727 = vmatprep.mubr.f32.mxu0 0.0
        %728 = vmatmul.mubr.f32.gmra.mrb[0].mxu0 %v577
        %v729 = vpop.f32.mrb[0].mxu0
        %v730 = vadd.f32 0.0, %v729
        %v731 = vpop.f32.mrb[0].mxu0
        %732 = vmatprep.mubr.f32.mxu0 0.0
        %733 = vmatmul.mubr.f32.gmra.mrb[0].mxu0 %v578
        %v734 = vpop.f32.mrb[0].mxu0
        %v735 = vadd.f32 0.0, %v734
        %v736 = vpop.f32.mrb[0].mxu0
        %737 = vmatprep.mubr.f32.mxu0 0.0
        %738 = vmatmul.mubr.f32.gmra.mrb[0].mxu0 %v579
        %v739 = vpop.f32.mrb[0].mxu0
        %v740 = vadd.f32 0.0, %v739
        %v741 = vpop.f32.mrb[0].mxu0
        %742 = vmatprep.mubr.f32.mxu0 0.0
        %743 = vmatmul.mubr.f32.gmra.mrb[0].mxu0 %v580
        %v744 = vpop.f32.mrb[0].mxu0
        %v745 = vadd.f32 0.0, %v744
        %v746 = vpop.f32.mrb[0].mxu0
        %747 = vmatprep.mubr.f32.mxu0 0.0
        %748 = vmatmul.mubr.f32.gmra.mrb[0].mxu0 %v581
        %v749 = vpop.f32.mrb[0].mxu0
        %v750 = vadd.f32 0.0, %v749
        %v751 = vpop.f32.mrb[0].mxu0
        %752 = vmatprep.mubr.f32.mxu0 0.0
        %753 = vmatmul.mubr.f32.gmra.mrb[0].mxu0 %v582
        %v754 = vpop.f32.mrb[0].mxu0
        %v755 = vadd.f32 0.0, %v754
        %v756 = vpop.f32.mrb[0].mxu0
        %757 = vmatprep.mubr.f32.mxu0 0.0
        %758 = vmatmul.mubr.f32.gmra.mrb[0].mxu0 %v583
        %v759 = vpop.f32.mrb[0].mxu0
        %v760 = vadd.f32 0.0, %v759
        %v761 = vpop.f32.mrb[0].mxu0
        %762 = vmatprep.mubr.f32.mxu0 0.0
        %763 = vmatmul.mubr.f32.gmra.mrb[0].mxu0 %v584
        %v764 = vpop.f32.mrb[0].mxu0
        %v765 = vadd.f32 0.0, %v764
        %v766 = vpop.f32.mrb[0].mxu0
        %767 = vmatprep.mubr.f32.mxu0 0.0
        %768 = vmatmul.mubr.f32.gmra.mrb[0].mxu0 %v585
        %v769 = vpop.f32.mrb[0].mxu0
        %v770 = vadd.f32 0.0, %v769
        %v771 = vpop.f32.mrb[0].mxu0
        %772 = vmatprep.mubr.f32.mxu0 0.0
        %773 = vmatmul.mubr.f32.gmra.mrb[0].mxu0 %v586
        %v774 = vpop.f32.mrb[0].mxu0
        %v775 = vadd.f32 0.0, %v774
        %v776 = vpop.f32.mrb[0].mxu0
        %777 = vmatprep.mubr.f32.mxu0 0.0
        %778 = vmatmul.mubr.f32.gmra.mrb[0].mxu0 %v587
        %v779 = vpop.f32.mrb[0].mxu0
        %v780 = vadd.f32 0.0, %v779
        %v781 = vpop.f32.mrb[0].mxu0
        %782 = vmatprep.mubr.f32.mxu0 0.0
        %783 = vmatmul.mubr.f32.gmra.mrb[0].mxu0 %v588
        %v784 = vpop.f32.mrb[0].mxu0
        %v785 = vadd.f32 0.0, %v784
        %v786 = vpop.f32.mrb[0].mxu0
        %787 = vmatprep.mubr.f32.mxu0 0.0
        %788 = vmatmul.mubr.f32.gmra.mrb[0].mxu0 %v589
        %v789 = vpop.f32.mrb[0].mxu0
        %v790 = vadd.f32 0.0, %v789
        %v791 = vpop.f32.mrb[0].mxu0
        %792 = vmatprep.mubr.f32.mxu0 0.0
        %793 = vmatmul.mubr.f32.gmra.mrb[0].mxu0 %v590
        %v794 = vpop.f32.mrb[0].mxu0
        %v795 = vadd.f32 0.0, %v794
        %v796 = vpop.f32.mrb[0].mxu0
        %797 = vdwg.mxu0
        %798 = vmatprep.subr.mxu0 0.0
        %799 = vmatpush1.msra.mxu0 %v550
        %800 = vmatprep.subr.mxu0 0.0
        %801 = vmatpush1.msra.mxu0 %v551
        %802 = vmatprep.subr.mxu0 0.0
        %803 = vmatpush1.msra.mxu0 %v552
        %804 = vmatprep.subr.mxu0 0.0
        %805 = vmatpush1.msra.mxu0 %v553
        %806 = vmatprep.subr.mxu0 0.0
        %807 = vmatpush1.msra.mxu0 %v554
        %808 = vmatprep.subr.mxu0 0.0
        %809 = vmatpush1.msra.mxu0 %v555
        %810 = vmatprep.subr.mxu0 0.0
        %811 = vmatpush1.msra.mxu0 %v556
        %812 = vmatprep.subr.mxu0 0.0
        %813 = vmatpush1.msra.mxu0 %v557
        %814 = vmatprep.subr.mxu0 0.0
        %815 = vmatpush1.msra.mxu0 %v558
        %816 = vmatprep.subr.mxu0 0.0
        %817 = vmatpush1.msra.mxu0 %v559
        %818 = vmatprep.subr.mxu0 0.0
        %819 = vmatpush1.msra.mxu0 %v560
        %820 = vmatprep.subr.mxu0 0.0
        %821 = vmatpush1.msra.mxu0 %v561
        %822 = vmatprep.subr.mxu0 0.0
        %823 = vmatpush1.msra.mxu0 %v562
        %824 = vmatprep.subr.mxu0 0.0
        %825 = vmatpush1.msra.mxu0 %v563
        %826 = vmatprep.subr.mxu0 0.0
        %827 = vmatpush1.msra.mxu0 %v564
        %828 = vmatprep.subr.mxu0 0.0
        %829 = vmatpush1.msra.mxu0 %v565
        %830 = vmatprep.subr.mxu0 0.0
        %831 = vmatpush1.msra.mxu0 0.0
        %832 = vmatprep.subr.mxu0 0.0
        %833 = vmatpush1.msra.mxu0 0.0
        %834 = vmatprep.subr.mxu0 0.0
        %835 = vmatpush1.msra.mxu0 0.0
        %836 = vmatprep.subr.mxu0 0.0
        %837 = vmatpush1.msra.mxu0 0.0
        %838 = vmatprep.subr.mxu0 0.0
        %839 = vmatpush1.msra.mxu0 0.0
        %840 = vmatprep.subr.mxu0 0.0
        %841 = vmatpush1.msra.mxu0 0.0
        %842 = vmatprep.subr.mxu0 0.0
        %843 = vmatpush1.msra.mxu0 0.0
        %844 = vmatprep.subr.mxu0 0.0
        %845 = vmatpush1.msra.mxu0 0.0
        %846 = vmatprep.subr.mxu0 0.0
        %847 = vmatpush1.msra.mxu0 0.0
        %848 = vmatprep.subr.mxu0 0.0
        %849 = vmatpush1.msra.mxu0 0.0
        %850 = vmatprep.subr.mxu0 0.0
        %851 = vmatpush1.msra.mxu0 0.0
        %852 = vmatprep.subr.mxu0 0.0
        %853 = vmatpush1.msra.mxu0 0.0
        %854 = vmatprep.subr.mxu0 0.0
        %855 = vmatpush1.msra.mxu0 0.0
        %856 = vmatprep.subr.mxu0 0.0
        %857 = vmatpush1.msra.mxu0 0.0
        %858 = vmatprep.subr.mxu0 0.0
        %859 = vmatpush1.msra.mxu0 0.0
        %860 = vmatprep.subr.mxu0 0.0
        %861 = vmatpush1.msra.mxu0 0.0
        %862 = vmatprep.mubr.f32.mxu0 0.0
        %863 = vmatmul.mubr.f32.gmra.mrb[0].mxu0 %v525
        %v864 = vpop.f32.mrb[0].mxu0
        %v865 = vadd.f32 %v675, %v864
        %v866 = vpop.f32.mrb[0].mxu0
        %867 = vmatprep.mubr.f32.mxu0 0.0
        %868 = vmatmul.mubr.f32.gmra.mrb[0].mxu0 %v526
        %v869 = vpop.f32.mrb[0].mxu0
        %v870 = vadd.f32 %v680, %v869
        %v871 = vpop.f32.mrb[0].mxu0
        %872 = vmatprep.mubr.f32.mxu0 0.0
        %873 = vmatmul.mubr.f32.gmra.mrb[0].mxu0 %v527
        %v874 = vpop.f32.mrb[0].mxu0
        %v875 = vadd.f32 %v685, %v874
        %v876 = vpop.f32.mrb[0].mxu0
        %877 = vmatprep.mubr.f32.mxu0 0.0
        %878 = vmatmul.mubr.f32.gmra.mrb[0].mxu0 %v528
        %v879 = vpop.f32.mrb[0].mxu0
        %v880 = vadd.f32 %v690, %v879
        %v881 = vpop.f32.mrb[0].mxu0
        %882 = vmatprep.mubr.f32.mxu0 0.0
        %883 = vmatmul.mubr.f32.gmra.mrb[0].mxu0 %v529
        %v884 = vpop.f32.mrb[0].mxu0
        %v885 = vadd.f32 %v695, %v884
        %v886 = vpop.f32.mrb[0].mxu0
        %887 = vmatprep.mubr.f32.mxu0 0.0
        %888 = vmatmul.mubr.f32.gmra.mrb[0].mxu0 %v530
        %v889 = vpop.f32.mrb[0].mxu0
        %v890 = vadd.f32 %v700, %v889
        %v891 = vpop.f32.mrb[0].mxu0
        %892 = vmatprep.mubr.f32.mxu0 0.0
        %893 = vmatmul.mubr.f32.gmra.mrb[0].mxu0 %v531
        %v894 = vpop.f32.mrb[0].mxu0
        %v895 = vadd.f32 %v705, %v894
        %v896 = vpop.f32.mrb[0].mxu0
        %897 = vmatprep.mubr.f32.mxu0 0.0
        %898 = vmatmul.mubr.f32.gmra.mrb[0].mxu0 %v532
        %v899 = vpop.f32.mrb[0].mxu0
        %v900 = vadd.f32 %v710, %v899
        %v901 = vpop.f32.mrb[0].mxu0
        %902 = vmatprep.mubr.f32.mxu0 0.0
        %903 = vmatmul.mubr.f32.gmra.mrb[0].mxu0 %v533
        %v904 = vpop.f32.mrb[0].mxu0
        %v905 = vadd.f32 %v715, %v904
        %v906 = vpop.f32.mrb[0].mxu0
        %907 = vmatprep.mubr.f32.mxu0 0.0
        %908 = vmatmul.mubr.f32.gmra.mrb[0].mxu0 %v534
        %v909 = vpop.f32.mrb[0].mxu0
        %v910 = vadd.f32 %v720, %v909
        %v911 = vpop.f32.mrb[0].mxu0
        %912 = vmatprep.mubr.f32.mxu0 0.0
        %913 = vmatmul.mubr.f32.gmra.mrb[0].mxu0 %v535
        %v914 = vpop.f32.mrb[0].mxu0
        %v915 = vadd.f32 %v725, %v914
        %v916 = vpop.f32.mrb[0].mxu0
        %917 = vmatprep.mubr.f32.mxu0 0.0
        %918 = vmatmul.mubr.f32.gmra.mrb[0].mxu0 %v536
        %v919 = vpop.f32.mrb[0].mxu0
        %v920 = vadd.f32 %v730, %v919
        %v921 = vpop.f32.mrb[0].mxu0
        %922 = vmatprep.mubr.f32.mxu0 0.0
        %923 = vmatmul.mubr.f32.gmra.mrb[0].mxu0 %v537
        %v924 = vpop.f32.mrb[0].mxu0
        %v925 = vadd.f32 %v735, %v924
        %v926 = vpop.f32.mrb[0].mxu0
        %927 = vmatprep.mubr.f32.mxu0 0.0
        %928 = vmatmul.mubr.f32.gmra.mrb[0].mxu0 %v538
        %v929 = vpop.f32.mrb[0].mxu0
        %v930 = vadd.f32 %v740, %v929
        %v931 = vpop.f32.mrb[0].mxu0
        %932 = vmatprep.mubr.f32.mxu0 0.0
        %933 = vmatmul.mubr.f32.gmra.mrb[0].mxu0 %v539
        %v934 = vpop.f32.mrb[0].mxu0
        %v935 = vadd.f32 %v745, %v934
        %v936 = vpop.f32.mrb[0].mxu0
        %937 = vmatprep.mubr.f32.mxu0 0.0
        %938 = vmatmul.mubr.f32.gmra.mrb[0].mxu0 %v540
        %v939 = vpop.f32.mrb[0].mxu0
        %v940 = vadd.f32 %v750, %v939
        %v941 = vpop.f32.mrb[0].mxu0
        %942 = vmatprep.mubr.f32.mxu0 0.0
        %943 = vmatmul.mubr.f32.gmra.mrb[0].mxu0 %v541
        %v944 = vpop.f32.mrb[0].mxu0
        %v945 = vadd.f32 %v755, %v944
        %v946 = vpop.f32.mrb[0].mxu0
        %947 = vmatprep.mubr.f32.mxu0 0.0
        %948 = vmatmul.mubr.f32.gmra.mrb[0].mxu0 %v542
        %v949 = vpop.f32.mrb[0].mxu0
        %v950 = vadd.f32 %v760, %v949
        %v951 = vpop.f32.mrb[0].mxu0
        %952 = vmatprep.mubr.f32.mxu0 0.0
        %953 = vmatmul.mubr.f32.gmra.mrb[0].mxu0 %v543
        %v954 = vpop.f32.mrb[0].mxu0
        %v955 = vadd.f32 %v765, %v954
        %v956 = vpop.f32.mrb[0].mxu0
        %957 = vmatprep.mubr.f32.mxu0 0.0
        %958 = vmatmul.mubr.f32.gmra.mrb[0].mxu0 %v544
        %v959 = vpop.f32.mrb[0].mxu0
        %v960 = vadd.f32 %v770, %v959
        %v961 = vpop.f32.mrb[0].mxu0
        %962 = vmatprep.mubr.f32.mxu0 0.0
        %963 = vmatmul.mubr.f32.gmra.mrb[0].mxu0 %v545
        %v964 = vpop.f32.mrb[0].mxu0
        %v965 = vadd.f32 %v775, %v964
        %v966 = vpop.f32.mrb[0].mxu0
        %967 = vmatprep.mubr.f32.mxu0 0.0
        %968 = vmatmul.mubr.f32.gmra.mrb[0].mxu0 %v546
        %v969 = vpop.f32.mrb[0].mxu0
        %v970 = vadd.f32 %v780, %v969
        %v971 = vpop.f32.mrb[0].mxu0
        %972 = vmatprep.mubr.f32.mxu0 0.0
        %973 = vmatmul.mubr.f32.gmra.mrb[0].mxu0 %v547
        %v974 = vpop.f32.mrb[0].mxu0
        %v975 = vadd.f32 %v785, %v974
        %v976 = vpop.f32.mrb[0].mxu0
        %977 = vmatprep.mubr.f32.mxu0 0.0
        %978 = vmatmul.mubr.f32.gmra.mrb[0].mxu0 %v548
        %v979 = vpop.f32.mrb[0].mxu0
        %v980 = vadd.f32 %v790, %v979
        %v981 = vpop.f32.mrb[0].mxu0
        %982 = vmatprep.mubr.f32.mxu0 0.0
        %983 = vmatmul.mubr.f32.gmra.mrb[0].mxu0 %v549
        %v984 = vpop.f32.mrb[0].mxu0
        %v985 = vadd.f32 %v795, %v984
        %v986 = vpop.f32.mrb[0].mxu0
        %987 = vdwg.mxu0
        %v988 = vld [vmem:[#allocation2 + $0x7] sm:$0xff]
        %v989 = vld [vmem:[#allocation2 + $0xf] sm:$0xff]
        %v990 = vld [vmem:[#allocation2 + $0x17] sm:$0xff]
        %v991 = vld [vmem:[#allocation2 + $0x1f] sm:$0xff]
        %v992 = vld [vmem:[#allocation2 + $0x27] sm:$0xff]
        %v993 = vld [vmem:[#allocation2 + $0x2f] sm:$0xff]
        %v994 = vld [vmem:[#allocation2 + $0x37] sm:$0xff]
        %v995 = vld [vmem:[#allocation2 + $0x3f] sm:$0xff]
        %v996 = vld [vmem:[#allocation2 + $0x47] sm:$0xff]
        %v997 = vld [vmem:[#allocation2 + $0x4f] sm:$0xff]
        %v998 = vld [vmem:[#allocation2 + $0x57] sm:$0xff]
        %v999 = vld [vmem:[#allocation2 + $0x5f] sm:$0xff]
        %v1000 = vld [vmem:[#allocation2 + $0x67] sm:$0xff]
        %v1001 = vld [vmem:[#allocation2 + $0x6f] sm:$0xff]
        %v1002 = vld [vmem:[#allocation2 + $0x77] sm:$0xff]
        %v1003 = vld [vmem:[#allocation2 + $0x7f] sm:$0xff]
        %v1004 = vld [vmem:[#allocation2 + $0x87] sm:$0xff]
        %v1005 = vld [vmem:[#allocation2 + $0x8f] sm:$0xff]
        %v1006 = vld [vmem:[#allocation2 + $0x97] sm:$0xff]
        %v1007 = vld [vmem:[#allocation2 + $0x9f] sm:$0xff]
        %v1008 = vld [vmem:[#allocation2 + $0xa7] sm:$0xff]
        %v1009 = vld [vmem:[#allocation2 + $0xaf] sm:$0xff]
        %v1010 = vld [vmem:[#allocation2 + $0xb7] sm:$0xff]
        %v1011 = vld [vmem:[#allocation2 + $0xbf] sm:$0xff]
        %v1012 = vld [vmem:[#allocation2 + $0xc7] sm:$0xff]
        %s1013 = scalar_lea.vmem %s389, 256 [#allocation5]
        %v1014 = vld [vmem:[%s1013] sm:$0xff]
        %v1015 = vld [vmem:[%s1013 + $0x8] sm:$0xff]
        %v1016 = vld [vmem:[%s1013 + $0x10] sm:$0xff]
        %v1017 = vld [vmem:[%s1013 + $0x18] sm:$0xff]
        %v1018 = vld [vmem:[%s1013 + $0x20] sm:$0xff]
        %v1019 = vld [vmem:[%s1013 + $0x28] sm:$0xff]
        %v1020 = vld [vmem:[%s1013 + $0x30] sm:$0xff]
        %v1021 = vld [vmem:[%s1013 + $0x38] sm:$0xff]
        %v1022 = vld [vmem:[%s1013 + $0x40] sm:$0xff]
        %v1023 = vld [vmem:[%s1013 + $0x48] sm:$0xff]
        %v1024 = vld [vmem:[%s1013 + $0x50] sm:$0xff]
        %v1025 = vld [vmem:[%s1013 + $0x58] sm:$0xff]
        %v1026 = vld [vmem:[%s1013 + $0x60] sm:$0xff]
        %v1027 = vld [vmem:[%s1013 + $0x68] sm:$0xff]
        %v1028 = vld [vmem:[%s1013 + $0x70] sm:$0xff]
        %v1029 = vld [vmem:[%s1013 + $0x78] sm:$0xff]
        %1030 = vmatprep.subr.mxu0 0.0
        %1031 = vmatpush1.msra.mxu0 %v1014
        %1032 = vmatprep.subr.mxu0 0.0
        %1033 = vmatpush1.msra.mxu0 %v1015
        %1034 = vmatprep.subr.mxu0 0.0
        %1035 = vmatpush1.msra.mxu0 %v1016
        %1036 = vmatprep.subr.mxu0 0.0
        %1037 = vmatpush1.msra.mxu0 %v1017
        %1038 = vmatprep.subr.mxu0 0.0
        %1039 = vmatpush1.msra.mxu0 %v1018
        %1040 = vmatprep.subr.mxu0 0.0
        %1041 = vmatpush1.msra.mxu0 %v1019
        %1042 = vmatprep.subr.mxu0 0.0
        %1043 = vmatpush1.msra.mxu0 %v1020
        %1044 = vmatprep.subr.mxu0 0.0
        %1045 = vmatpush1.msra.mxu0 %v1021
        %1046 = vmatprep.subr.mxu0 0.0
        %1047 = vmatpush1.msra.mxu0 %v1022
        %1048 = vmatprep.subr.mxu0 0.0
        %1049 = vmatpush1.msra.mxu0 %v1023
        %1050 = vmatprep.subr.mxu0 0.0
        %1051 = vmatpush1.msra.mxu0 %v1024
        %1052 = vmatprep.subr.mxu0 0.0
        %1053 = vmatpush1.msra.mxu0 %v1025
        %1054 = vmatprep.subr.mxu0 0.0
        %1055 = vmatpush1.msra.mxu0 %v1026
        %1056 = vmatprep.subr.mxu0 0.0
        %1057 = vmatpush1.msra.mxu0 %v1027
        %1058 = vmatprep.subr.mxu0 0.0
        %1059 = vmatpush1.msra.mxu0 %v1028
        %1060 = vmatprep.subr.mxu0 0.0
        %1061 = vmatpush1.msra.mxu0 %v1029
        %1062 = vmatprep.subr.mxu0 0.0
        %1063 = vmatpush1.msra.mxu0 0.0
        %1064 = vmatprep.subr.mxu0 0.0
        %1065 = vmatpush1.msra.mxu0 0.0
        %1066 = vmatprep.subr.mxu0 0.0
        %1067 = vmatpush1.msra.mxu0 0.0
        %1068 = vmatprep.subr.mxu0 0.0
        %1069 = vmatpush1.msra.mxu0 0.0
        %1070 = vmatprep.subr.mxu0 0.0
        %1071 = vmatpush1.msra.mxu0 0.0
        %1072 = vmatprep.subr.mxu0 0.0
        %1073 = vmatpush1.msra.mxu0 0.0
        %1074 = vmatprep.subr.mxu0 0.0
        %1075 = vmatpush1.msra.mxu0 0.0
        %1076 = vmatprep.subr.mxu0 0.0
        %1077 = vmatpush1.msra.mxu0 0.0
        %1078 = vmatprep.subr.mxu0 0.0
        %1079 = vmatpush1.msra.mxu0 0.0
        %1080 = vmatprep.subr.mxu0 0.0
        %1081 = vmatpush1.msra.mxu0 0.0
        %1082 = vmatprep.subr.mxu0 0.0
        %1083 = vmatpush1.msra.mxu0 0.0
        %1084 = vmatprep.subr.mxu0 0.0
        %1085 = vmatpush1.msra.mxu0 0.0
        %1086 = vmatprep.subr.mxu0 0.0
        %1087 = vmatpush1.msra.mxu0 0.0
        %1088 = vmatprep.subr.mxu0 0.0
        %1089 = vmatpush1.msra.mxu0 0.0
        %1090 = vmatprep.subr.mxu0 0.0
        %1091 = vmatpush1.msra.mxu0 0.0
        %1092 = vmatprep.subr.mxu0 0.0
        %1093 = vmatpush1.msra.mxu0 0.0
        %1094 = vmatprep.mubr.f32.mxu0 0.0
        %1095 = vmatmul.mubr.f32.gmra.mrb[0].mxu0 %v988
        %v1096 = vpop.f32.mrb[0].mxu0
        %v1097 = vadd.f32 0.0, %v1096
        %v1098 = vpop.f32.mrb[0].mxu0
        %1099 = vmatprep.mubr.f32.mxu0 0.0
        %1100 = vmatmul.mubr.f32.gmra.mrb[0].mxu0 %v989
        %v1101 = vpop.f32.mrb[0].mxu0
        %v1102 = vadd.f32 0.0, %v1101
        %v1103 = vpop.f32.mrb[0].mxu0
        %1104 = vmatprep.mubr.f32.mxu0 0.0
        %1105 = vmatmul.mubr.f32.gmra.mrb[0].mxu0 %v990
        %v1106 = vpop.f32.mrb[0].mxu0
        %v1107 = vadd.f32 0.0, %v1106
        %v1108 = vpop.f32.mrb[0].mxu0
        %1109 = vmatprep.mubr.f32.mxu0 0.0
        %1110 = vmatmul.mubr.f32.gmra.mrb[0].mxu0 %v991
        %v1111 = vpop.f32.mrb[0].mxu0
        %v1112 = vadd.f32 0.0, %v1111
        %v1113 = vpop.f32.mrb[0].mxu0
        %1114 = vmatprep.mubr.f32.mxu0 0.0
        %1115 = vmatmul.mubr.f32.gmra.mrb[0].mxu0 %v992
        %v1116 = vpop.f32.mrb[0].mxu0
        %v1117 = vadd.f32 0.0, %v1116
        %v1118 = vpop.f32.mrb[0].mxu0
        %1119 = vmatprep.mubr.f32.mxu0 0.0
        %1120 = vmatmul.mubr.f32.gmra.mrb[0].mxu0 %v993
        %v1121 = vpop.f32.mrb[0].mxu0
        %v1122 = vadd.f32 0.0, %v1121
        %v1123 = vpop.f32.mrb[0].mxu0
        %1124 = vmatprep.mubr.f32.mxu0 0.0
        %1125 = vmatmul.mubr.f32.gmra.mrb[0].mxu0 %v994
        %v1126 = vpop.f32.mrb[0].mxu0
        %v1127 = vadd.f32 0.0, %v1126
        %v1128 = vpop.f32.mrb[0].mxu0
        %1129 = vmatprep.mubr.f32.mxu0 0.0
        %1130 = vmatmul.mubr.f32.gmra.mrb[0].mxu0 %v995
        %v1131 = vpop.f32.mrb[0].mxu0
        %v1132 = vadd.f32 0.0, %v1131
        %v1133 = vpop.f32.mrb[0].mxu0
        %1134 = vmatprep.mubr.f32.mxu0 0.0
        %1135 = vmatmul.mubr.f32.gmra.mrb[0].mxu0 %v996
        %v1136 = vpop.f32.mrb[0].mxu0
        %v1137 = vadd.f32 0.0, %v1136
        %v1138 = vpop.f32.mrb[0].mxu0
        %1139 = vmatprep.mubr.f32.mxu0 0.0
        %1140 = vmatmul.mubr.f32.gmra.mrb[0].mxu0 %v997
        %v1141 = vpop.f32.mrb[0].mxu0
        %v1142 = vadd.f32 0.0, %v1141
        %v1143 = vpop.f32.mrb[0].mxu0
        %1144 = vmatprep.mubr.f32.mxu0 0.0
        %1145 = vmatmul.mubr.f32.gmra.mrb[0].mxu0 %v998
        %v1146 = vpop.f32.mrb[0].mxu0
        %v1147 = vadd.f32 0.0, %v1146
        %v1148 = vpop.f32.mrb[0].mxu0
        %1149 = vmatprep.mubr.f32.mxu0 0.0
        %1150 = vmatmul.mubr.f32.gmra.mrb[0].mxu0 %v999
        %v1151 = vpop.f32.mrb[0].mxu0
        %v1152 = vadd.f32 0.0, %v1151
        %v1153 = vpop.f32.mrb[0].mxu0
        %1154 = vmatprep.mubr.f32.mxu0 0.0
        %1155 = vmatmul.mubr.f32.gmra.mrb[0].mxu0 %v1000
        %v1156 = vpop.f32.mrb[0].mxu0
        %v1157 = vadd.f32 0.0, %v1156
        %v1158 = vpop.f32.mrb[0].mxu0
        %1159 = vmatprep.mubr.f32.mxu0 0.0
        %1160 = vmatmul.mubr.f32.gmra.mrb[0].mxu0 %v1001
        %v1161 = vpop.f32.mrb[0].mxu0
        %v1162 = vadd.f32 0.0, %v1161
        %v1163 = vpop.f32.mrb[0].mxu0
        %1164 = vmatprep.mubr.f32.mxu0 0.0
        %1165 = vmatmul.mubr.f32.gmra.mrb[0].mxu0 %v1002
        %v1166 = vpop.f32.mrb[0].mxu0
        %v1167 = vadd.f32 0.0, %v1166
        %v1168 = vpop.f32.mrb[0].mxu0
        %1169 = vmatprep.mubr.f32.mxu0 0.0
        %1170 = vmatmul.mubr.f32.gmra.mrb[0].mxu0 %v1003
        %v1171 = vpop.f32.mrb[0].mxu0
        %v1172 = vadd.f32 0.0, %v1171
        %v1173 = vpop.f32.mrb[0].mxu0
        %1174 = vmatprep.mubr.f32.mxu0 0.0
        %1175 = vmatmul.mubr.f32.gmra.mrb[0].mxu0 %v1004
        %v1176 = vpop.f32.mrb[0].mxu0
        %v1177 = vadd.f32 0.0, %v1176
        %v1178 = vpop.f32.mrb[0].mxu0
        %1179 = vmatprep.mubr.f32.mxu0 0.0
        %1180 = vmatmul.mubr.f32.gmra.mrb[0].mxu0 %v1005
        %v1181 = vpop.f32.mrb[0].mxu0
        %v1182 = vadd.f32 0.0, %v1181
        %v1183 = vpop.f32.mrb[0].mxu0
        %1184 = vmatprep.mubr.f32.mxu0 0.0
        %1185 = vmatmul.mubr.f32.gmra.mrb[0].mxu0 %v1006
        %v1186 = vpop.f32.mrb[0].mxu0
        %v1187 = vadd.f32 0.0, %v1186
        %v1188 = vpop.f32.mrb[0].mxu0
        %1189 = vmatprep.mubr.f32.mxu0 0.0
        %1190 = vmatmul.mubr.f32.gmra.mrb[0].mxu0 %v1007
        %v1191 = vpop.f32.mrb[0].mxu0
        %v1192 = vadd.f32 0.0, %v1191
        %v1193 = vpop.f32.mrb[0].mxu0
        %1194 = vmatprep.mubr.f32.mxu0 0.0
        %1195 = vmatmul.mubr.f32.gmra.mrb[0].mxu0 %v1008
        %v1196 = vpop.f32.mrb[0].mxu0
        %v1197 = vadd.f32 0.0, %v1196
        %v1198 = vpop.f32.mrb[0].mxu0
        %1199 = vmatprep.mubr.f32.mxu0 0.0
        %1200 = vmatmul.mubr.f32.gmra.mrb[0].mxu0 %v1009
        %v1201 = vpop.f32.mrb[0].mxu0
        %v1202 = vadd.f32 0.0, %v1201
        %v1203 = vpop.f32.mrb[0].mxu0
        %1204 = vmatprep.mubr.f32.mxu0 0.0
        %1205 = vmatmul.mubr.f32.gmra.mrb[0].mxu0 %v1010
        %v1206 = vpop.f32.mrb[0].mxu0
        %v1207 = vadd.f32 0.0, %v1206
        %v1208 = vpop.f32.mrb[0].mxu0
        %1209 = vmatprep.mubr.f32.mxu0 0.0
        %1210 = vmatmul.mubr.f32.gmra.mrb[0].mxu0 %v1011
        %v1211 = vpop.f32.mrb[0].mxu0
        %v1212 = vadd.f32 0.0, %v1211
        %v1213 = vpop.f32.mrb[0].mxu0
        %1214 = vmatprep.mubr.f32.mxu0 0.0
        %1215 = vmatmul.mubr.f32.gmra.mrb[0].mxu0 %v1012
        %v1216 = vpop.f32.mrb[0].mxu0
        %v1217 = vadd.f32 0.0, %v1216
        %v1218 = vpop.f32.mrb[0].mxu0
        %1219 = vdwg.mxu0
        %v1220 = vadd.f32 %v865, %v1097
        %v1221 = vadd.f32 %v870, %v1102
        %v1222 = vadd.f32 %v875, %v1107
        %v1223 = vadd.f32 %v880, %v1112
        %v1224 = vadd.f32 %v885, %v1117
        %v1225 = vadd.f32 %v890, %v1122
        %v1226 = vadd.f32 %v895, %v1127
        %v1227 = vadd.f32 %v900, %v1132
        %v1228 = vadd.f32 %v905, %v1137
        %v1229 = vadd.f32 %v910, %v1142
        %v1230 = vadd.f32 %v915, %v1147
        %v1231 = vadd.f32 %v920, %v1152
        %v1232 = vadd.f32 %v925, %v1157
        %v1233 = vadd.f32 %v930, %v1162
        %v1234 = vadd.f32 %v935, %v1167
        %v1235 = vadd.f32 %v940, %v1172
        %v1236 = vadd.f32 %v945, %v1177
        %v1237 = vadd.f32 %v950, %v1182
        %v1238 = vadd.f32 %v955, %v1187
        %v1239 = vadd.f32 %v960, %v1192
        %v1240 = vadd.f32 %v965, %v1197
        %v1241 = vadd.f32 %v970, %v1202
        %v1242 = vadd.f32 %v975, %v1207
        %v1243 = vadd.f32 %v980, %v1212
        %v1244 = vadd.f32 %v985, %v1217
        %v1245 = vld [vmem:[#allocation2 + $0xa] sm:$0xff]
        %v1246 = vld [vmem:[#allocation2 + $0x12] sm:$0xff]
        %v1247 = vld [vmem:[#allocation2 + $0x1a] sm:$0xff]
        %v1248 = vld [vmem:[#allocation2 + $0x22] sm:$0xff]
        %v1249 = vld [vmem:[#allocation2 + $0x2a] sm:$0xff]
        %v1250 = vld [vmem:[#allocation2 + $0x32] sm:$0xff]
        %v1251 = vld [vmem:[#allocation2 + $0x3a] sm:$0xff]
        %v1252 = vld [vmem:[#allocation2 + $0x42] sm:$0xff]
        %v1253 = vld [vmem:[#allocation2 + $0x4a] sm:$0xff]
        %v1254 = vld [vmem:[#allocation2 + $0x52] sm:$0xff]
        %v1255 = vld [vmem:[#allocation2 + $0x5a] sm:$0xff]
        %v1256 = vld [vmem:[#allocation2 + $0x62] sm:$0xff]
        %v1257 = vld [vmem:[#allocation2 + $0x6a] sm:$0xff]
        %v1258 = vld [vmem:[#allocation2 + $0x72] sm:$0xff]
        %v1259 = vld [vmem:[#allocation2 + $0x7a] sm:$0xff]
        %v1260 = vld [vmem:[#allocation2 + $0x82] sm:$0xff]
        %v1261 = vld [vmem:[#allocation2 + $0x8a] sm:$0xff]
        %v1262 = vld [vmem:[#allocation2 + $0x92] sm:$0xff]
        %v1263 = vld [vmem:[#allocation2 + $0x9a] sm:$0xff]
        %v1264 = vld [vmem:[#allocation2 + $0xa2] sm:$0xff]
        %v1265 = vld [vmem:[#allocation2 + $0xaa] sm:$0xff]
        %v1266 = vld [vmem:[#allocation2 + $0xb2] sm:$0xff]
        %v1267 = vld [vmem:[#allocation2 + $0xba] sm:$0xff]
        %v1268 = vld [vmem:[#allocation2 + $0xc2] sm:$0xff]
        %v1269 = vld [vmem:[#allocation2 + $0xca] sm:$0xff]
        %s1270 = scalar_lea.vmem %s389, 384 [#allocation5]
        %v1271 = vld [vmem:[%s1270] sm:$0xff]
        %v1272 = vld [vmem:[%s1270 + $0x8] sm:$0xff]
        %v1273 = vld [vmem:[%s1270 + $0x10] sm:$0xff]
        %v1274 = vld [vmem:[%s1270 + $0x18] sm:$0xff]
        %v1275 = vld [vmem:[%s1270 + $0x20] sm:$0xff]
        %v1276 = vld [vmem:[%s1270 + $0x28] sm:$0xff]
        %v1277 = vld [vmem:[%s1270 + $0x30] sm:$0xff]
        %v1278 = vld [vmem:[%s1270 + $0x38] sm:$0xff]
        %v1279 = vld [vmem:[%s1270 + $0x40] sm:$0xff]
        %v1280 = vld [vmem:[%s1270 + $0x48] sm:$0xff]
        %v1281 = vld [vmem:[%s1270 + $0x50] sm:$0xff]
        %v1282 = vld [vmem:[%s1270 + $0x58] sm:$0xff]
        %v1283 = vld [vmem:[%s1270 + $0x60] sm:$0xff]
        %v1284 = vld [vmem:[%s1270 + $0x68] sm:$0xff]
        %v1285 = vld [vmem:[%s1270 + $0x70] sm:$0xff]
        %v1286 = vld [vmem:[%s1270 + $0x78] sm:$0xff]
        %1287 = vmatprep.subr.mxu0 0.0
        %1288 = vmatpush1.msra.mxu0 %v1271
        %1289 = vmatprep.subr.mxu0 0.0
        %1290 = vmatpush1.msra.mxu0 %v1272
        %1291 = vmatprep.subr.mxu0 0.0
        %1292 = vmatpush1.msra.mxu0 %v1273
        %1293 = vmatprep.subr.mxu0 0.0
        %1294 = vmatpush1.msra.mxu0 %v1274
        %1295 = vmatprep.subr.mxu0 0.0
        %1296 = vmatpush1.msra.mxu0 %v1275
        %1297 = vmatprep.subr.mxu0 0.0
        %1298 = vmatpush1.msra.mxu0 %v1276
        %1299 = vmatprep.subr.mxu0 0.0
        %1300 = vmatpush1.msra.mxu0 %v1277
        %1301 = vmatprep.subr.mxu0 0.0
        %1302 = vmatpush1.msra.mxu0 %v1278
        %1303 = vmatprep.subr.mxu0 0.0
        %1304 = vmatpush1.msra.mxu0 %v1279
        %1305 = vmatprep.subr.mxu0 0.0
        %1306 = vmatpush1.msra.mxu0 %v1280
        %1307 = vmatprep.subr.mxu0 0.0
        %1308 = vmatpush1.msra.mxu0 %v1281
        %1309 = vmatprep.subr.mxu0 0.0
        %1310 = vmatpush1.msra.mxu0 %v1282
        %1311 = vmatprep.subr.mxu0 0.0
        %1312 = vmatpush1.msra.mxu0 %v1283
        %1313 = vmatprep.subr.mxu0 0.0
        %1314 = vmatpush1.msra.mxu0 %v1284
        %1315 = vmatprep.subr.mxu0 0.0
        %1316 = vmatpush1.msra.mxu0 %v1285
        %1317 = vmatprep.subr.mxu0 0.0
        %1318 = vmatpush1.msra.mxu0 %v1286
        %1319 = vmatprep.subr.mxu0 0.0
        %1320 = vmatpush1.msra.mxu0 0.0
        %1321 = vmatprep.subr.mxu0 0.0
        %1322 = vmatpush1.msra.mxu0 0.0
        %1323 = vmatprep.subr.mxu0 0.0
        %1324 = vmatpush1.msra.mxu0 0.0
        %1325 = vmatprep.subr.mxu0 0.0
        %1326 = vmatpush1.msra.mxu0 0.0
        %1327 = vmatprep.subr.mxu0 0.0
        %1328 = vmatpush1.msra.mxu0 0.0
        %1329 = vmatprep.subr.mxu0 0.0
        %1330 = vmatpush1.msra.mxu0 0.0
        %1331 = vmatprep.subr.mxu0 0.0
        %1332 = vmatpush1.msra.mxu0 0.0
        %1333 = vmatprep.subr.mxu0 0.0
        %1334 = vmatpush1.msra.mxu0 0.0
        %1335 = vmatprep.subr.mxu0 0.0
        %1336 = vmatpush1.msra.mxu0 0.0
        %1337 = vmatprep.subr.mxu0 0.0
        %1338 = vmatpush1.msra.mxu0 0.0
        %1339 = vmatprep.subr.mxu0 0.0
        %1340 = vmatpush1.msra.mxu0 0.0
        %1341 = vmatprep.subr.mxu0 0.0
        %1342 = vmatpush1.msra.mxu0 0.0
        %1343 = vmatprep.subr.mxu0 0.0
        %1344 = vmatpush1.msra.mxu0 0.0
        %1345 = vmatprep.subr.mxu0 0.0
        %1346 = vmatpush1.msra.mxu0 0.0
        %1347 = vmatprep.subr.mxu0 0.0
        %1348 = vmatpush1.msra.mxu0 0.0
        %1349 = vmatprep.subr.mxu0 0.0
        %1350 = vmatpush1.msra.mxu0 0.0
        %1351 = vmatprep.mubr.f32.mxu0 0.0
        %1352 = vmatmul.mubr.f32.gmra.mrb[0].mxu0 %v1245
        %v1353 = vpop.f32.mrb[0].mxu0
        %v1354 = vadd.f32 0.0, %v1353
        %v1355 = vpop.f32.mrb[0].mxu0
        %1356 = vmatprep.mubr.f32.mxu0 0.0
        %1357 = vmatmul.mubr.f32.gmra.mrb[0].mxu0 %v1246
        %v1358 = vpop.f32.mrb[0].mxu0
        %v1359 = vadd.f32 0.0, %v1358
        %v1360 = vpop.f32.mrb[0].mxu0
        %1361 = vmatprep.mubr.f32.mxu0 0.0
        %1362 = vmatmul.mubr.f32.gmra.mrb[0].mxu0 %v1247
        %v1363 = vpop.f32.mrb[0].mxu0
        %v1364 = vadd.f32 0.0, %v1363
        %v1365 = vpop.f32.mrb[0].mxu0
        %1366 = vmatprep.mubr.f32.mxu0 0.0
        %1367 = vmatmul.mubr.f32.gmra.mrb[0].mxu0 %v1248
        %v1368 = vpop.f32.mrb[0].mxu0
        %v1369 = vadd.f32 0.0, %v1368
        %v1370 = vpop.f32.mrb[0].mxu0
        %1371 = vmatprep.mubr.f32.mxu0 0.0
        %1372 = vmatmul.mubr.f32.gmra.mrb[0].mxu0 %v1249
        %v1373 = vpop.f32.mrb[0].mxu0
        %v1374 = vadd.f32 0.0, %v1373
        %v1375 = vpop.f32.mrb[0].mxu0
        %1376 = vmatprep.mubr.f32.mxu0 0.0
        %1377 = vmatmul.mubr.f32.gmra.mrb[0].mxu0 %v1250
        %v1378 = vpop.f32.mrb[0].mxu0
        %v1379 = vadd.f32 0.0, %v1378
        %v1380 = vpop.f32.mrb[0].mxu0
        %1381 = vmatprep.mubr.f32.mxu0 0.0
        %1382 = vmatmul.mubr.f32.gmra.mrb[0].mxu0 %v1251
        %v1383 = vpop.f32.mrb[0].mxu0
        %v1384 = vadd.f32 0.0, %v1383
        %v1385 = vpop.f32.mrb[0].mxu0
        %1386 = vmatprep.mubr.f32.mxu0 0.0
        %1387 = vmatmul.mubr.f32.gmra.mrb[0].mxu0 %v1252
        %v1388 = vpop.f32.mrb[0].mxu0
        %v1389 = vadd.f32 0.0, %v1388
        %v1390 = vpop.f32.mrb[0].mxu0
        %1391 = vmatprep.mubr.f32.mxu0 0.0
        %1392 = vmatmul.mubr.f32.gmra.mrb[0].mxu0 %v1253
        %v1393 = vpop.f32.mrb[0].mxu0
        %v1394 = vadd.f32 0.0, %v1393
        %v1395 = vpop.f32.mrb[0].mxu0
        %1396 = vmatprep.mubr.f32.mxu0 0.0
        %1397 = vmatmul.mubr.f32.gmra.mrb[0].mxu0 %v1254
        %v1398 = vpop.f32.mrb[0].mxu0
        %v1399 = vadd.f32 0.0, %v1398
        %v1400 = vpop.f32.mrb[0].mxu0
        %1401 = vmatprep.mubr.f32.mxu0 0.0
        %1402 = vmatmul.mubr.f32.gmra.mrb[0].mxu0 %v1255
        %v1403 = vpop.f32.mrb[0].mxu0
        %v1404 = vadd.f32 0.0, %v1403
        %v1405 = vpop.f32.mrb[0].mxu0
        %1406 = vmatprep.mubr.f32.mxu0 0.0
        %1407 = vmatmul.mubr.f32.gmra.mrb[0].mxu0 %v1256
        %v1408 = vpop.f32.mrb[0].mxu0
        %v1409 = vadd.f32 0.0, %v1408
        %v1410 = vpop.f32.mrb[0].mxu0
        %1411 = vmatprep.mubr.f32.mxu0 0.0
        %1412 = vmatmul.mubr.f32.gmra.mrb[0].mxu0 %v1257
        %v1413 = vpop.f32.mrb[0].mxu0
        %v1414 = vadd.f32 0.0, %v1413
        %v1415 = vpop.f32.mrb[0].mxu0
        %1416 = vmatprep.mubr.f32.mxu0 0.0
        %1417 = vmatmul.mubr.f32.gmra.mrb[0].mxu0 %v1258
        %v1418 = vpop.f32.mrb[0].mxu0
        %v1419 = vadd.f32 0.0, %v1418
        %v1420 = vpop.f32.mrb[0].mxu0
        %1421 = vmatprep.mubr.f32.mxu0 0.0
        %1422 = vmatmul.mubr.f32.gmra.mrb[0].mxu0 %v1259
        %v1423 = vpop.f32.mrb[0].mxu0
        %v1424 = vadd.f32 0.0, %v1423
        %v1425 = vpop.f32.mrb[0].mxu0
        %1426 = vmatprep.mubr.f32.mxu0 0.0
        %1427 = vmatmul.mubr.f32.gmra.mrb[0].mxu0 %v1260
        %v1428 = vpop.f32.mrb[0].mxu0
        %v1429 = vadd.f32 0.0, %v1428
        %v1430 = vpop.f32.mrb[0].mxu0
        %1431 = vmatprep.mubr.f32.mxu0 0.0
        %1432 = vmatmul.mubr.f32.gmra.mrb[0].mxu0 %v1261
        %v1433 = vpop.f32.mrb[0].mxu0
        %v1434 = vadd.f32 0.0, %v1433
        %v1435 = vpop.f32.mrb[0].mxu0
        %1436 = vmatprep.mubr.f32.mxu0 0.0
        %1437 = vmatmul.mubr.f32.gmra.mrb[0].mxu0 %v1262
        %v1438 = vpop.f32.mrb[0].mxu0
        %v1439 = vadd.f32 0.0, %v1438
        %v1440 = vpop.f32.mrb[0].mxu0
        %1441 = vmatprep.mubr.f32.mxu0 0.0
        %1442 = vmatmul.mubr.f32.gmra.mrb[0].mxu0 %v1263
        %v1443 = vpop.f32.mrb[0].mxu0
        %v1444 = vadd.f32 0.0, %v1443
        %v1445 = vpop.f32.mrb[0].mxu0
        %1446 = vmatprep.mubr.f32.mxu0 0.0
        %1447 = vmatmul.mubr.f32.gmra.mrb[0].mxu0 %v1264
        %v1448 = vpop.f32.mrb[0].mxu0
        %v1449 = vadd.f32 0.0, %v1448
        %v1450 = vpop.f32.mrb[0].mxu0
        %1451 = vmatprep.mubr.f32.mxu0 0.0
        %1452 = vmatmul.mubr.f32.gmra.mrb[0].mxu0 %v1265
        %v1453 = vpop.f32.mrb[0].mxu0
        %v1454 = vadd.f32 0.0, %v1453
        %v1455 = vpop.f32.mrb[0].mxu0
        %1456 = vmatprep.mubr.f32.mxu0 0.0
        %1457 = vmatmul.mubr.f32.gmra.mrb[0].mxu0 %v1266
        %v1458 = vpop.f32.mrb[0].mxu0
        %v1459 = vadd.f32 0.0, %v1458
        %v1460 = vpop.f32.mrb[0].mxu0
        %1461 = vmatprep.mubr.f32.mxu0 0.0
        %1462 = vmatmul.mubr.f32.gmra.mrb[0].mxu0 %v1267
        %v1463 = vpop.f32.mrb[0].mxu0
        %v1464 = vadd.f32 0.0, %v1463
        %v1465 = vpop.f32.mrb[0].mxu0
        %1466 = vmatprep.mubr.f32.mxu0 0.0
        %1467 = vmatmul.mubr.f32.gmra.mrb[0].mxu0 %v1268
        %v1468 = vpop.f32.mrb[0].mxu0
        %v1469 = vadd.f32 0.0, %v1468
        %v1470 = vpop.f32.mrb[0].mxu0
        %1471 = vmatprep.mubr.f32.mxu0 0.0
        %1472 = vmatmul.mubr.f32.gmra.mrb[0].mxu0 %v1269
        %v1473 = vpop.f32.mrb[0].mxu0
        %v1474 = vadd.f32 0.0, %v1473
        %v1475 = vpop.f32.mrb[0].mxu0
        %1476 = vdwg.mxu0
        %v1477 = vadd.f32 %v1220, %v1354
        %v1478 = vadd.f32 %v1221, %v1359
        %v1479 = vadd.f32 %v1222, %v1364
        %v1480 = vadd.f32 %v1223, %v1369
        %v1481 = vadd.f32 %v1224, %v1374
        %v1482 = vadd.f32 %v1225, %v1379
        %v1483 = vadd.f32 %v1226, %v1384
        %v1484 = vadd.f32 %v1227, %v1389
        %v1485 = vadd.f32 %v1228, %v1394
        %v1486 = vadd.f32 %v1229, %v1399
        %v1487 = vadd.f32 %v1230, %v1404
        %v1488 = vadd.f32 %v1231, %v1409
        %v1489 = vadd.f32 %v1232, %v1414
        %v1490 = vadd.f32 %v1233, %v1419
        %v1491 = vadd.f32 %v1234, %v1424
        %v1492 = vadd.f32 %v1235, %v1429
        %v1493 = vadd.f32 %v1236, %v1434
        %v1494 = vadd.f32 %v1237, %v1439
        %v1495 = vadd.f32 %v1238, %v1444
        %v1496 = vadd.f32 %v1239, %v1449
        %v1497 = vadd.f32 %v1240, %v1454
        %v1498 = vadd.f32 %v1241, %v1459
        %v1499 = vadd.f32 %v1242, %v1464
        %v1500 = vadd.f32 %v1243, %v1469
        %v1501 = vadd.f32 %v1244, %v1474
        %v1502 = vld [vmem:[#allocation2 + $0xb] sm:$0xff]
        %v1503 = vld [vmem:[#allocation2 + $0x13] sm:$0xff]
        %v1504 = vld [vmem:[#allocation2 + $0x1b] sm:$0xff]
        %v1505 = vld [vmem:[#allocation2 + $0x23] sm:$0xff]
        %v1506 = vld [vmem:[#allocation2 + $0x2b] sm:$0xff]
        %v1507 = vld [vmem:[#allocation2 + $0x33] sm:$0xff]
        %v1508 = vld [vmem:[#allocation2 + $0x3b] sm:$0xff]
        %v1509 = vld [vmem:[#allocation2 + $0x43] sm:$0xff]
        %v1510 = vld [vmem:[#allocation2 + $0x4b] sm:$0xff]
        %v1511 = vld [vmem:[#allocation2 + $0x53] sm:$0xff]
        %v1512 = vld [vmem:[#allocation2 + $0x5b] sm:$0xff]
        %v1513 = vld [vmem:[#allocation2 + $0x63] sm:$0xff]
        %v1514 = vld [vmem:[#allocation2 + $0x6b] sm:$0xff]
        %v1515 = vld [vmem:[#allocation2 + $0x73] sm:$0xff]
        %v1516 = vld [vmem:[#allocation2 + $0x7b] sm:$0xff]
        %v1517 = vld [vmem:[#allocation2 + $0x83] sm:$0xff]
        %v1518 = vld [vmem:[#allocation2 + $0x8b] sm:$0xff]
        %v1519 = vld [vmem:[#allocation2 + $0x93] sm:$0xff]
        %v1520 = vld [vmem:[#allocation2 + $0x9b] sm:$0xff]
        %v1521 = vld [vmem:[#allocation2 + $0xa3] sm:$0xff]
        %v1522 = vld [vmem:[#allocation2 + $0xab] sm:$0xff]
        %v1523 = vld [vmem:[#allocation2 + $0xb3] sm:$0xff]
        %v1524 = vld [vmem:[#allocation2 + $0xbb] sm:$0xff]
        %v1525 = vld [vmem:[#allocation2 + $0xc3] sm:$0xff]
        %v1526 = vld [vmem:[#allocation2 + $0xcb] sm:$0xff]
        %s1527 = scalar_lea.vmem %s389, 512 [#allocation5]
        %v1528 = vld [vmem:[%s1527] sm:$0xff]
        %v1529 = vld [vmem:[%s1527 + $0x8] sm:$0xff]
        %v1530 = vld [vmem:[%s1527 + $0x10] sm:$0xff]
        %v1531 = vld [vmem:[%s1527 + $0x18] sm:$0xff]
        %v1532 = vld [vmem:[%s1527 + $0x20] sm:$0xff]
        %v1533 = vld [vmem:[%s1527 + $0x28] sm:$0xff]
        %v1534 = vld [vmem:[%s1527 + $0x30] sm:$0xff]
        %v1535 = vld [vmem:[%s1527 + $0x38] sm:$0xff]
        %v1536 = vld [vmem:[%s1527 + $0x40] sm:$0xff]
        %v1537 = vld [vmem:[%s1527 + $0x48] sm:$0xff]
        %v1538 = vld [vmem:[%s1527 + $0x50] sm:$0xff]
        %v1539 = vld [vmem:[%s1527 + $0x58] sm:$0xff]
        %v1540 = vld [vmem:[%s1527 + $0x60] sm:$0xff]
        %v1541 = vld [vmem:[%s1527 + $0x68] sm:$0xff]
        %v1542 = vld [vmem:[%s1527 + $0x70] sm:$0xff]
        %v1543 = vld [vmem:[%s1527 + $0x78] sm:$0xff]
        %1544 = vmatprep.subr.mxu0 0.0
        %1545 = vmatpush1.msra.mxu0 %v1528
        %1546 = vmatprep.subr.mxu0 0.0
        %1547 = vmatpush1.msra.mxu0 %v1529
        %1548 = vmatprep.subr.mxu0 0.0
        %1549 = vmatpush1.msra.mxu0 %v1530
        %1550 = vmatprep.subr.mxu0 0.0
        %1551 = vmatpush1.msra.mxu0 %v1531
        %1552 = vmatprep.subr.mxu0 0.0
        %1553 = vmatpush1.msra.mxu0 %v1532
        %1554 = vmatprep.subr.mxu0 0.0
        %1555 = vmatpush1.msra.mxu0 %v1533
        %1556 = vmatprep.subr.mxu0 0.0
        %1557 = vmatpush1.msra.mxu0 %v1534
        %1558 = vmatprep.subr.mxu0 0.0
        %1559 = vmatpush1.msra.mxu0 %v1535
        %1560 = vmatprep.subr.mxu0 0.0
        %1561 = vmatpush1.msra.mxu0 %v1536
        %1562 = vmatprep.subr.mxu0 0.0
        %1563 = vmatpush1.msra.mxu0 %v1537
        %1564 = vmatprep.subr.mxu0 0.0
        %1565 = vmatpush1.msra.mxu0 %v1538
        %1566 = vmatprep.subr.mxu0 0.0
        %1567 = vmatpush1.msra.mxu0 %v1539
        %1568 = vmatprep.subr.mxu0 0.0
        %1569 = vmatpush1.msra.mxu0 %v1540
        %1570 = vmatprep.subr.mxu0 0.0
        %1571 = vmatpush1.msra.mxu0 %v1541
        %1572 = vmatprep.subr.mxu0 0.0
        %1573 = vmatpush1.msra.mxu0 %v1542
        %1574 = vmatprep.subr.mxu0 0.0
        %1575 = vmatpush1.msra.mxu0 %v1543
        %1576 = vmatprep.subr.mxu0 0.0
        %1577 = vmatpush1.msra.mxu0 0.0
        %1578 = vmatprep.subr.mxu0 0.0
        %1579 = vmatpush1.msra.mxu0 0.0
        %1580 = vmatprep.subr.mxu0 0.0
        %1581 = vmatpush1.msra.mxu0 0.0
        %1582 = vmatprep.subr.mxu0 0.0
        %1583 = vmatpush1.msra.mxu0 0.0
        %1584 = vmatprep.subr.mxu0 0.0
        %1585 = vmatpush1.msra.mxu0 0.0
        %1586 = vmatprep.subr.mxu0 0.0
        %1587 = vmatpush1.msra.mxu0 0.0
        %1588 = vmatprep.subr.mxu0 0.0
        %1589 = vmatpush1.msra.mxu0 0.0
        %1590 = vmatprep.subr.mxu0 0.0
        %1591 = vmatpush1.msra.mxu0 0.0
        %1592 = vmatprep.subr.mxu0 0.0
        %1593 = vmatpush1.msra.mxu0 0.0
        %1594 = vmatprep.subr.mxu0 0.0
        %1595 = vmatpush1.msra.mxu0 0.0
        %1596 = vmatprep.subr.mxu0 0.0
        %1597 = vmatpush1.msra.mxu0 0.0
        %1598 = vmatprep.subr.mxu0 0.0
        %1599 = vmatpush1.msra.mxu0 0.0
        %1600 = vmatprep.subr.mxu0 0.0
        %1601 = vmatpush1.msra.mxu0 0.0
        %1602 = vmatprep.subr.mxu0 0.0
        %1603 = vmatpush1.msra.mxu0 0.0
        %1604 = vmatprep.subr.mxu0 0.0
        %1605 = vmatpush1.msra.mxu0 0.0
        %1606 = vmatprep.subr.mxu0 0.0
        %1607 = vmatpush1.msra.mxu0 0.0
        %1608 = vmatprep.mubr.f32.mxu0 0.0
        %1609 = vmatmul.mubr.f32.gmra.mrb[0].mxu0 %v1502
        %v1610 = vpop.f32.mrb[0].mxu0
        %v1611 = vadd.f32 0.0, %v1610
        %v1612 = vpop.f32.mrb[0].mxu0
        %1613 = vmatprep.mubr.f32.mxu0 0.0
        %1614 = vmatmul.mubr.f32.gmra.mrb[0].mxu0 %v1503
        %v1615 = vpop.f32.mrb[0].mxu0
        %v1616 = vadd.f32 0.0, %v1615
        %v1617 = vpop.f32.mrb[0].mxu0
        %1618 = vmatprep.mubr.f32.mxu0 0.0
        %1619 = vmatmul.mubr.f32.gmra.mrb[0].mxu0 %v1504
        %v1620 = vpop.f32.mrb[0].mxu0
        %v1621 = vadd.f32 0.0, %v1620
        %v1622 = vpop.f32.mrb[0].mxu0
        %1623 = vmatprep.mubr.f32.mxu0 0.0
        %1624 = vmatmul.mubr.f32.gmra.mrb[0].mxu0 %v1505
        %v1625 = vpop.f32.mrb[0].mxu0
        %v1626 = vadd.f32 0.0, %v1625
        %v1627 = vpop.f32.mrb[0].mxu0
        %1628 = vmatprep.mubr.f32.mxu0 0.0
        %1629 = vmatmul.mubr.f32.gmra.mrb[0].mxu0 %v1506
        %v1630 = vpop.f32.mrb[0].mxu0
        %v1631 = vadd.f32 0.0, %v1630
        %v1632 = vpop.f32.mrb[0].mxu0
        %1633 = vmatprep.mubr.f32.mxu0 0.0
        %1634 = vmatmul.mubr.f32.gmra.mrb[0].mxu0 %v1507
        %v1635 = vpop.f32.mrb[0].mxu0
        %v1636 = vadd.f32 0.0, %v1635
        %v1637 = vpop.f32.mrb[0].mxu0
        %1638 = vmatprep.mubr.f32.mxu0 0.0
        %1639 = vmatmul.mubr.f32.gmra.mrb[0].mxu0 %v1508
        %v1640 = vpop.f32.mrb[0].mxu0
        %v1641 = vadd.f32 0.0, %v1640
        %v1642 = vpop.f32.mrb[0].mxu0
        %1643 = vmatprep.mubr.f32.mxu0 0.0
        %1644 = vmatmul.mubr.f32.gmra.mrb[0].mxu0 %v1509
        %v1645 = vpop.f32.mrb[0].mxu0
        %v1646 = vadd.f32 0.0, %v1645
        %v1647 = vpop.f32.mrb[0].mxu0
        %1648 = vmatprep.mubr.f32.mxu0 0.0
        %1649 = vmatmul.mubr.f32.gmra.mrb[0].mxu0 %v1510
        %v1650 = vpop.f32.mrb[0].mxu0
        %v1651 = vadd.f32 0.0, %v1650
        %v1652 = vpop.f32.mrb[0].mxu0
        %1653 = vmatprep.mubr.f32.mxu0 0.0
        %1654 = vmatmul.mubr.f32.gmra.mrb[0].mxu0 %v1511
        %v1655 = vpop.f32.mrb[0].mxu0
        %v1656 = vadd.f32 0.0, %v1655
        %v1657 = vpop.f32.mrb[0].mxu0
        %1658 = vmatprep.mubr.f32.mxu0 0.0
        %1659 = vmatmul.mubr.f32.gmra.mrb[0].mxu0 %v1512
        %v1660 = vpop.f32.mrb[0].mxu0
        %v1661 = vadd.f32 0.0, %v1660
        %v1662 = vpop.f32.mrb[0].mxu0
        %1663 = vmatprep.mubr.f32.mxu0 0.0
        %1664 = vmatmul.mubr.f32.gmra.mrb[0].mxu0 %v1513
        %v1665 = vpop.f32.mrb[0].mxu0
        %v1666 = vadd.f32 0.0, %v1665
        %v1667 = vpop.f32.mrb[0].mxu0
        %1668 = vmatprep.mubr.f32.mxu0 0.0
        %1669 = vmatmul.mubr.f32.gmra.mrb[0].mxu0 %v1514
        %v1670 = vpop.f32.mrb[0].mxu0
        %v1671 = vadd.f32 0.0, %v1670
        %v1672 = vpop.f32.mrb[0].mxu0
        %1673 = vmatprep.mubr.f32.mxu0 0.0
        %1674 = vmatmul.mubr.f32.gmra.mrb[0].mxu0 %v1515
        %v1675 = vpop.f32.mrb[0].mxu0
        %v1676 = vadd.f32 0.0, %v1675
        %v1677 = vpop.f32.mrb[0].mxu0
        %1678 = vmatprep.mubr.f32.mxu0 0.0
        %1679 = vmatmul.mubr.f32.gmra.mrb[0].mxu0 %v1516
        %v1680 = vpop.f32.mrb[0].mxu0
        %v1681 = vadd.f32 0.0, %v1680
        %v1682 = vpop.f32.mrb[0].mxu0
        %1683 = vmatprep.mubr.f32.mxu0 0.0
        %1684 = vmatmul.mubr.f32.gmra.mrb[0].mxu0 %v1517
        %v1685 = vpop.f32.mrb[0].mxu0
        %v1686 = vadd.f32 0.0, %v1685
        %v1687 = vpop.f32.mrb[0].mxu0
        %1688 = vmatprep.mubr.f32.mxu0 0.0
        %1689 = vmatmul.mubr.f32.gmra.mrb[0].mxu0 %v1518
        %v1690 = vpop.f32.mrb[0].mxu0
        %v1691 = vadd.f32 0.0, %v1690
        %v1692 = vpop.f32.mrb[0].mxu0
        %1693 = vmatprep.mubr.f32.mxu0 0.0
        %1694 = vmatmul.mubr.f32.gmra.mrb[0].mxu0 %v1519
        %v1695 = vpop.f32.mrb[0].mxu0
        %v1696 = vadd.f32 0.0, %v1695
        %v1697 = vpop.f32.mrb[0].mxu0
        %1698 = vmatprep.mubr.f32.mxu0 0.0
        %1699 = vmatmul.mubr.f32.gmra.mrb[0].mxu0 %v1520
        %v1700 = vpop.f32.mrb[0].mxu0
        %v1701 = vadd.f32 0.0, %v1700
        %v1702 = vpop.f32.mrb[0].mxu0
        %1703 = vmatprep.mubr.f32.mxu0 0.0
        %1704 = vmatmul.mubr.f32.gmra.mrb[0].mxu0 %v1521
        %v1705 = vpop.f32.mrb[0].mxu0
        %v1706 = vadd.f32 0.0, %v1705
        %v1707 = vpop.f32.mrb[0].mxu0
        %1708 = vmatprep.mubr.f32.mxu0 0.0
        %1709 = vmatmul.mubr.f32.gmra.mrb[0].mxu0 %v1522
        %v1710 = vpop.f32.mrb[0].mxu0
        %v1711 = vadd.f32 0.0, %v1710
        %v1712 = vpop.f32.mrb[0].mxu0
        %1713 = vmatprep.mubr.f32.mxu0 0.0
        %1714 = vmatmul.mubr.f32.gmra.mrb[0].mxu0 %v1523
        %v1715 = vpop.f32.mrb[0].mxu0
        %v1716 = vadd.f32 0.0, %v1715
        %v1717 = vpop.f32.mrb[0].mxu0
        %1718 = vmatprep.mubr.f32.mxu0 0.0
        %1719 = vmatmul.mubr.f32.gmra.mrb[0].mxu0 %v1524
        %v1720 = vpop.f32.mrb[0].mxu0
        %v1721 = vadd.f32 0.0, %v1720
        %v1722 = vpop.f32.mrb[0].mxu0
        %1723 = vmatprep.mubr.f32.mxu0 0.0
        %1724 = vmatmul.mubr.f32.gmra.mrb[0].mxu0 %v1525
        %v1725 = vpop.f32.mrb[0].mxu0
        %v1726 = vadd.f32 0.0, %v1725
        %v1727 = vpop.f32.mrb[0].mxu0
        %1728 = vmatprep.mubr.f32.mxu0 0.0
        %1729 = vmatmul.mubr.f32.gmra.mrb[0].mxu0 %v1526
        %v1730 = vpop.f32.mrb[0].mxu0
        %v1731 = vadd.f32 0.0, %v1730
        %v1732 = vpop.f32.mrb[0].mxu0
        %1733 = vdwg.mxu0
        %v1734 = vadd.f32 %v1477, %v1611
        %v1735 = vadd.f32 %v1478, %v1616
        %v1736 = vadd.f32 %v1479, %v1621
        %v1737 = vadd.f32 %v1480, %v1626
        %v1738 = vadd.f32 %v1481, %v1631
        %v1739 = vadd.f32 %v1482, %v1636
        %v1740 = vadd.f32 %v1483, %v1641
        %v1741 = vadd.f32 %v1484, %v1646
        %v1742 = vadd.f32 %v1485, %v1651
        %v1743 = vadd.f32 %v1486, %v1656
        %v1744 = vadd.f32 %v1487, %v1661
        %v1745 = vadd.f32 %v1488, %v1666
        %v1746 = vadd.f32 %v1489, %v1671
        %v1747 = vadd.f32 %v1490, %v1676
        %v1748 = vadd.f32 %v1491, %v1681
        %v1749 = vadd.f32 %v1492, %v1686
        %v1750 = vadd.f32 %v1493, %v1691
        %v1751 = vadd.f32 %v1494, %v1696
        %v1752 = vadd.f32 %v1495, %v1701
        %v1753 = vadd.f32 %v1496, %v1706
        %v1754 = vadd.f32 %v1497, %v1711
        %v1755 = vadd.f32 %v1498, %v1716
        %v1756 = vadd.f32 %v1499, %v1721
        %v1757 = vadd.f32 %v1500, %v1726
        %v1758 = vadd.f32 %v1501, %v1731
        %v1759 = vld [vmem:[#allocation2 + $0xc] sm:$0xff]
        %v1760 = vld [vmem:[#allocation2 + $0x14] sm:$0xff]
        %v1761 = vld [vmem:[#allocation2 + $0x1c] sm:$0xff]
        %v1762 = vld [vmem:[#allocation2 + $0x24] sm:$0xff]
        %v1763 = vld [vmem:[#allocation2 + $0x2c] sm:$0xff]
        %v1764 = vld [vmem:[#allocation2 + $0x34] sm:$0xff]
        %v1765 = vld [vmem:[#allocation2 + $0x3c] sm:$0xff]
        %v1766 = vld [vmem:[#allocation2 + $0x44] sm:$0xff]
        %v1767 = vld [vmem:[#allocation2 + $0x4c] sm:$0xff]
        %v1768 = vld [vmem:[#allocation2 + $0x54] sm:$0xff]
        %v1769 = vld [vmem:[#allocation2 + $0x5c] sm:$0xff]
        %v1770 = vld [vmem:[#allocation2 + $0x64] sm:$0xff]
        %v1771 = vld [vmem:[#allocation2 + $0x6c] sm:$0xff]
        %v1772 = vld [vmem:[#allocation2 + $0x74] sm:$0xff]
        %v1773 = vld [vmem:[#allocation2 + $0x7c] sm:$0xff]
        %v1774 = vld [vmem:[#allocation2 + $0x84] sm:$0xff]
        %v1775 = vld [vmem:[#allocation2 + $0x8c] sm:$0xff]
        %v1776 = vld [vmem:[#allocation2 + $0x94] sm:$0xff]
        %v1777 = vld [vmem:[#allocation2 + $0x9c] sm:$0xff]
        %v1778 = vld [vmem:[#allocation2 + $0xa4] sm:$0xff]
        %v1779 = vld [vmem:[#allocation2 + $0xac] sm:$0xff]
        %v1780 = vld [vmem:[#allocation2 + $0xb4] sm:$0xff]
        %v1781 = vld [vmem:[#allocation2 + $0xbc] sm:$0xff]
        %v1782 = vld [vmem:[#allocation2 + $0xc4] sm:$0xff]
        %v1783 = vld [vmem:[#allocation2 + $0xcc] sm:$0xff]
        %s1784 = scalar_lea.vmem %s389, 640 [#allocation5]
        %v1785 = vld [vmem:[%s1784] sm:$0xff]
        %v1786 = vld [vmem:[%s1784 + $0x8] sm:$0xff]
        %v1787 = vld [vmem:[%s1784 + $0x10] sm:$0xff]
        %v1788 = vld [vmem:[%s1784 + $0x18] sm:$0xff]
        %v1789 = vld [vmem:[%s1784 + $0x20] sm:$0xff]
        %v1790 = vld [vmem:[%s1784 + $0x28] sm:$0xff]
        %v1791 = vld [vmem:[%s1784 + $0x30] sm:$0xff]
        %v1792 = vld [vmem:[%s1784 + $0x38] sm:$0xff]
        %v1793 = vld [vmem:[%s1784 + $0x40] sm:$0xff]
        %v1794 = vld [vmem:[%s1784 + $0x48] sm:$0xff]
        %v1795 = vld [vmem:[%s1784 + $0x50] sm:$0xff]
        %v1796 = vld [vmem:[%s1784 + $0x58] sm:$0xff]
        %v1797 = vld [vmem:[%s1784 + $0x60] sm:$0xff]
        %v1798 = vld [vmem:[%s1784 + $0x68] sm:$0xff]
        %v1799 = vld [vmem:[%s1784 + $0x70] sm:$0xff]
        %v1800 = vld [vmem:[%s1784 + $0x78] sm:$0xff]
        %1801 = vmatprep.subr.mxu0 0.0
        %1802 = vmatpush1.msra.mxu0 %v1785
        %1803 = vmatprep.subr.mxu0 0.0
        %1804 = vmatpush1.msra.mxu0 %v1786
        %1805 = vmatprep.subr.mxu0 0.0
        %1806 = vmatpush1.msra.mxu0 %v1787
        %1807 = vmatprep.subr.mxu0 0.0
        %1808 = vmatpush1.msra.mxu0 %v1788
        %1809 = vmatprep.subr.mxu0 0.0
        %1810 = vmatpush1.msra.mxu0 %v1789
        %1811 = vmatprep.subr.mxu0 0.0
        %1812 = vmatpush1.msra.mxu0 %v1790
        %1813 = vmatprep.subr.mxu0 0.0
        %1814 = vmatpush1.msra.mxu0 %v1791
        %1815 = vmatprep.subr.mxu0 0.0
        %1816 = vmatpush1.msra.mxu0 %v1792
        %1817 = vmatprep.subr.mxu0 0.0
        %1818 = vmatpush1.msra.mxu0 %v1793
        %1819 = vmatprep.subr.mxu0 0.0
        %1820 = vmatpush1.msra.mxu0 %v1794
        %1821 = vmatprep.subr.mxu0 0.0
        %1822 = vmatpush1.msra.mxu0 %v1795
        %1823 = vmatprep.subr.mxu0 0.0
        %1824 = vmatpush1.msra.mxu0 %v1796
        %1825 = vmatprep.subr.mxu0 0.0
        %1826 = vmatpush1.msra.mxu0 %v1797
        %1827 = vmatprep.subr.mxu0 0.0
        %1828 = vmatpush1.msra.mxu0 %v1798
        %1829 = vmatprep.subr.mxu0 0.0
        %1830 = vmatpush1.msra.mxu0 %v1799
        %1831 = vmatprep.subr.mxu0 0.0
        %1832 = vmatpush1.msra.mxu0 %v1800
        %1833 = vmatprep.subr.mxu0 0.0
        %1834 = vmatpush1.msra.mxu0 0.0
        %1835 = vmatprep.subr.mxu0 0.0
        %1836 = vmatpush1.msra.mxu0 0.0
        %1837 = vmatprep.subr.mxu0 0.0
        %1838 = vmatpush1.msra.mxu0 0.0
        %1839 = vmatprep.subr.mxu0 0.0
        %1840 = vmatpush1.msra.mxu0 0.0
        %1841 = vmatprep.subr.mxu0 0.0
        %1842 = vmatpush1.msra.mxu0 0.0
        %1843 = vmatprep.subr.mxu0 0.0
        %1844 = vmatpush1.msra.mxu0 0.0
        %1845 = vmatprep.subr.mxu0 0.0
        %1846 = vmatpush1.msra.mxu0 0.0
        %1847 = vmatprep.subr.mxu0 0.0
        %1848 = vmatpush1.msra.mxu0 0.0
        %1849 = vmatprep.subr.mxu0 0.0
        %1850 = vmatpush1.msra.mxu0 0.0
        %1851 = vmatprep.subr.mxu0 0.0
        %1852 = vmatpush1.msra.mxu0 0.0
        %1853 = vmatprep.subr.mxu0 0.0
        %1854 = vmatpush1.msra.mxu0 0.0
        %1855 = vmatprep.subr.mxu0 0.0
        %1856 = vmatpush1.msra.mxu0 0.0
        %1857 = vmatprep.subr.mxu0 0.0
        %1858 = vmatpush1.msra.mxu0 0.0
        %1859 = vmatprep.subr.mxu0 0.0
        %1860 = vmatpush1.msra.mxu0 0.0
        %1861 = vmatprep.subr.mxu0 0.0
        %1862 = vmatpush1.msra.mxu0 0.0
        %1863 = vmatprep.subr.mxu0 0.0
        %1864 = vmatpush1.msra.mxu0 0.0
        %1865 = vmatprep.mubr.f32.mxu0 0.0
        %1866 = vmatmul.mubr.f32.gmra.mrb[0].mxu0 %v1759
        %v1867 = vpop.f32.mrb[0].mxu0
        %v1868 = vadd.f32 0.0, %v1867
        %v1869 = vpop.f32.mrb[0].mxu0
        %1870 = vmatprep.mubr.f32.mxu0 0.0
        %1871 = vmatmul.mubr.f32.gmra.mrb[0].mxu0 %v1760
        %v1872 = vpop.f32.mrb[0].mxu0
        %v1873 = vadd.f32 0.0, %v1872
        %v1874 = vpop.f32.mrb[0].mxu0
        %1875 = vmatprep.mubr.f32.mxu0 0.0
        %1876 = vmatmul.mubr.f32.gmra.mrb[0].mxu0 %v1761
        %v1877 = vpop.f32.mrb[0].mxu0
        %v1878 = vadd.f32 0.0, %v1877
        %v1879 = vpop.f32.mrb[0].mxu0
        %1880 = vmatprep.mubr.f32.mxu0 0.0
        %1881 = vmatmul.mubr.f32.gmra.mrb[0].mxu0 %v1762
        %v1882 = vpop.f32.mrb[0].mxu0
        %v1883 = vadd.f32 0.0, %v1882
        %v1884 = vpop.f32.mrb[0].mxu0
        %1885 = vmatprep.mubr.f32.mxu0 0.0
        %1886 = vmatmul.mubr.f32.gmra.mrb[0].mxu0 %v1763
        %v1887 = vpop.f32.mrb[0].mxu0
        %v1888 = vadd.f32 0.0, %v1887
        %v1889 = vpop.f32.mrb[0].mxu0
        %1890 = vmatprep.mubr.f32.mxu0 0.0
        %1891 = vmatmul.mubr.f32.gmra.mrb[0].mxu0 %v1764
        %v1892 = vpop.f32.mrb[0].mxu0
        %v1893 = vadd.f32 0.0, %v1892
        %v1894 = vpop.f32.mrb[0].mxu0
        %1895 = vmatprep.mubr.f32.mxu0 0.0
        %1896 = vmatmul.mubr.f32.gmra.mrb[0].mxu0 %v1765
        %v1897 = vpop.f32.mrb[0].mxu0
        %v1898 = vadd.f32 0.0, %v1897
        %v1899 = vpop.f32.mrb[0].mxu0
        %1900 = vmatprep.mubr.f32.mxu0 0.0
        %1901 = vmatmul.mubr.f32.gmra.mrb[0].mxu0 %v1766
        %v1902 = vpop.f32.mrb[0].mxu0
        %v1903 = vadd.f32 0.0, %v1902
        %v1904 = vpop.f32.mrb[0].mxu0
        %1905 = vmatprep.mubr.f32.mxu0 0.0
        %1906 = vmatmul.mubr.f32.gmra.mrb[0].mxu0 %v1767
        %v1907 = vpop.f32.mrb[0].mxu0
        %v1908 = vadd.f32 0.0, %v1907
        %v1909 = vpop.f32.mrb[0].mxu0
        %1910 = vmatprep.mubr.f32.mxu0 0.0
        %1911 = vmatmul.mubr.f32.gmra.mrb[0].mxu0 %v1768
        %v1912 = vpop.f32.mrb[0].mxu0
        %v1913 = vadd.f32 0.0, %v1912
        %v1914 = vpop.f32.mrb[0].mxu0
        %1915 = vmatprep.mubr.f32.mxu0 0.0
        %1916 = vmatmul.mubr.f32.gmra.mrb[0].mxu0 %v1769
        %v1917 = vpop.f32.mrb[0].mxu0
        %v1918 = vadd.f32 0.0, %v1917
        %v1919 = vpop.f32.mrb[0].mxu0
        %1920 = vmatprep.mubr.f32.mxu0 0.0
        %1921 = vmatmul.mubr.f32.gmra.mrb[0].mxu0 %v1770
        %v1922 = vpop.f32.mrb[0].mxu0
        %v1923 = vadd.f32 0.0, %v1922
        %v1924 = vpop.f32.mrb[0].mxu0
        %1925 = vmatprep.mubr.f32.mxu0 0.0
        %1926 = vmatmul.mubr.f32.gmra.mrb[0].mxu0 %v1771
        %v1927 = vpop.f32.mrb[0].mxu0
        %v1928 = vadd.f32 0.0, %v1927
        %v1929 = vpop.f32.mrb[0].mxu0
        %1930 = vmatprep.mubr.f32.mxu0 0.0
        %1931 = vmatmul.mubr.f32.gmra.mrb[0].mxu0 %v1772
        %v1932 = vpop.f32.mrb[0].mxu0
        %v1933 = vadd.f32 0.0, %v1932
        %v1934 = vpop.f32.mrb[0].mxu0
        %1935 = vmatprep.mubr.f32.mxu0 0.0
        %1936 = vmatmul.mubr.f32.gmra.mrb[0].mxu0 %v1773
        %v1937 = vpop.f32.mrb[0].mxu0
        %v1938 = vadd.f32 0.0, %v1937
        %v1939 = vpop.f32.mrb[0].mxu0
        %1940 = vmatprep.mubr.f32.mxu0 0.0
        %1941 = vmatmul.mubr.f32.gmra.mrb[0].mxu0 %v1774
        %v1942 = vpop.f32.mrb[0].mxu0
        %v1943 = vadd.f32 0.0, %v1942
        %v1944 = vpop.f32.mrb[0].mxu0
        %1945 = vmatprep.mubr.f32.mxu0 0.0
        %1946 = vmatmul.mubr.f32.gmra.mrb[0].mxu0 %v1775
        %v1947 = vpop.f32.mrb[0].mxu0
        %v1948 = vadd.f32 0.0, %v1947
        %v1949 = vpop.f32.mrb[0].mxu0
        %1950 = vmatprep.mubr.f32.mxu0 0.0
        %1951 = vmatmul.mubr.f32.gmra.mrb[0].mxu0 %v1776
        %v1952 = vpop.f32.mrb[0].mxu0
        %v1953 = vadd.f32 0.0, %v1952
        %v1954 = vpop.f32.mrb[0].mxu0
        %1955 = vmatprep.mubr.f32.mxu0 0.0
        %1956 = vmatmul.mubr.f32.gmra.mrb[0].mxu0 %v1777
        %v1957 = vpop.f32.mrb[0].mxu0
        %v1958 = vadd.f32 0.0, %v1957
        %v1959 = vpop.f32.mrb[0].mxu0
        %1960 = vmatprep.mubr.f32.mxu0 0.0
        %1961 = vmatmul.mubr.f32.gmra.mrb[0].mxu0 %v1778
        %v1962 = vpop.f32.mrb[0].mxu0
        %v1963 = vadd.f32 0.0, %v1962
        %v1964 = vpop.f32.mrb[0].mxu0
        %1965 = vmatprep.mubr.f32.mxu0 0.0
        %1966 = vmatmul.mubr.f32.gmra.mrb[0].mxu0 %v1779
        %v1967 = vpop.f32.mrb[0].mxu0
        %v1968 = vadd.f32 0.0, %v1967
        %v1969 = vpop.f32.mrb[0].mxu0
        %1970 = vmatprep.mubr.f32.mxu0 0.0
        %1971 = vmatmul.mubr.f32.gmra.mrb[0].mxu0 %v1780
        %v1972 = vpop.f32.mrb[0].mxu0
        %v1973 = vadd.f32 0.0, %v1972
        %v1974 = vpop.f32.mrb[0].mxu0
        %1975 = vmatprep.mubr.f32.mxu0 0.0
        %1976 = vmatmul.mubr.f32.gmra.mrb[0].mxu0 %v1781
        %v1977 = vpop.f32.mrb[0].mxu0
        %v1978 = vadd.f32 0.0, %v1977
        %v1979 = vpop.f32.mrb[0].mxu0
        %1980 = vmatprep.mubr.f32.mxu0 0.0
        %1981 = vmatmul.mubr.f32.gmra.mrb[0].mxu0 %v1782
        %v1982 = vpop.f32.mrb[0].mxu0
        %v1983 = vadd.f32 0.0, %v1982
        %v1984 = vpop.f32.mrb[0].mxu0
        %1985 = vmatprep.mubr.f32.mxu0 0.0
        %1986 = vmatmul.mubr.f32.gmra.mrb[0].mxu0 %v1783
        %v1987 = vpop.f32.mrb[0].mxu0
        %v1988 = vadd.f32 0.0, %v1987
        %v1989 = vpop.f32.mrb[0].mxu0
        %1990 = vdwg.mxu0
        %v1991 = vadd.f32 %v1734, %v1868
        %v1992 = vadd.f32 %v1735, %v1873
        %v1993 = vadd.f32 %v1736, %v1878
        %v1994 = vadd.f32 %v1737, %v1883
        %v1995 = vadd.f32 %v1738, %v1888
        %v1996 = vadd.f32 %v1739, %v1893
        %v1997 = vadd.f32 %v1740, %v1898
        %v1998 = vadd.f32 %v1741, %v1903
        %v1999 = vadd.f32 %v1742, %v1908
        %v2000 = vadd.f32 %v1743, %v1913
        %v2001 = vadd.f32 %v1744, %v1918
        %v2002 = vadd.f32 %v1745, %v1923
        %v2003 = vadd.f32 %v1746, %v1928
        %v2004 = vadd.f32 %v1747, %v1933
        %v2005 = vadd.f32 %v1748, %v1938
        %v2006 = vadd.f32 %v1749, %v1943
        %v2007 = vadd.f32 %v1750, %v1948
        %v2008 = vadd.f32 %v1751, %v1953
        %v2009 = vadd.f32 %v1752, %v1958
        %v2010 = vadd.f32 %v1753, %v1963
        %v2011 = vadd.f32 %v1754, %v1968
        %v2012 = vadd.f32 %v1755, %v1973
        %v2013 = vadd.f32 %v1756, %v1978
        %v2014 = vadd.f32 %v1757, %v1983
        %v2015 = vadd.f32 %v1758, %v1988
        %v2016 = vld [vmem:[#allocation2 + $0xf] sm:$0xff]
        %v2017 = vld [vmem:[#allocation2 + $0x17] sm:$0xff]
        %v2018 = vld [vmem:[#allocation2 + $0x1f] sm:$0xff]
        %v2019 = vld [vmem:[#allocation2 + $0x27] sm:$0xff]
        %v2020 = vld [vmem:[#allocation2 + $0x2f] sm:$0xff]
        %v2021 = vld [vmem:[#allocation2 + $0x37] sm:$0xff]
        %v2022 = vld [vmem:[#allocation2 + $0x3f] sm:$0xff]
        %v2023 = vld [vmem:[#allocation2 + $0x47] sm:$0xff]
        %v2024 = vld [vmem:[#allocation2 + $0x4f] sm:$0xff]
        %v2025 = vld [vmem:[#allocation2 + $0x57] sm:$0xff]
        %v2026 = vld [vmem:[#allocation2 + $0x5f] sm:$0xff]
        %v2027 = vld [vmem:[#allocation2 + $0x67] sm:$0xff]
        %v2028 = vld [vmem:[#allocation2 + $0x6f] sm:$0xff]
        %v2029 = vld [vmem:[#allocation2 + $0x77] sm:$0xff]
        %v2030 = vld [vmem:[#allocation2 + $0x7f] sm:$0xff]
        %v2031 = vld [vmem:[#allocation2 + $0x87] sm:$0xff]
        %v2032 = vld [vmem:[#allocation2 + $0x8f] sm:$0xff]
        %v2033 = vld [vmem:[#allocation2 + $0x97] sm:$0xff]
        %v2034 = vld [vmem:[#allocation2 + $0x9f] sm:$0xff]
        %v2035 = vld [vmem:[#allocation2 + $0xa7] sm:$0xff]
        %v2036 = vld [vmem:[#allocation2 + $0xaf] sm:$0xff]
        %v2037 = vld [vmem:[#allocation2 + $0xb7] sm:$0xff]
        %v2038 = vld [vmem:[#allocation2 + $0xbf] sm:$0xff]
        %v2039 = vld [vmem:[#allocation2 + $0xc7] sm:$0xff]
        %v2040 = vld [vmem:[#allocation2 + $0xcf] sm:$0xff]
        %s2041 = scalar_lea.vmem %s389, 768 [#allocation5]
        %v2042 = vld [vmem:[%s2041] sm:$0xff]
        %v2043 = vld [vmem:[%s2041 + $0x8] sm:$0xff]
        %v2044 = vld [vmem:[%s2041 + $0x10] sm:$0xff]
        %v2045 = vld [vmem:[%s2041 + $0x18] sm:$0xff]
        %v2046 = vld [vmem:[%s2041 + $0x20] sm:$0xff]
        %v2047 = vld [vmem:[%s2041 + $0x28] sm:$0xff]
        %v2048 = vld [vmem:[%s2041 + $0x30] sm:$0xff]
        %v2049 = vld [vmem:[%s2041 + $0x38] sm:$0xff]
        %v2050 = vld [vmem:[%s2041 + $0x40] sm:$0xff]
        %v2051 = vld [vmem:[%s2041 + $0x48] sm:$0xff]
        %v2052 = vld [vmem:[%s2041 + $0x50] sm:$0xff]
        %v2053 = vld [vmem:[%s2041 + $0x58] sm:$0xff]
        %v2054 = vld [vmem:[%s2041 + $0x60] sm:$0xff]
        %v2055 = vld [vmem:[%s2041 + $0x68] sm:$0xff]
        %v2056 = vld [vmem:[%s2041 + $0x70] sm:$0xff]
        %v2057 = vld [vmem:[%s2041 + $0x78] sm:$0xff]
        %2058 = vmatprep.subr.mxu0 0.0
        %2059 = vmatpush1.msra.mxu0 %v2042
        %2060 = vmatprep.subr.mxu0 0.0
        %2061 = vmatpush1.msra.mxu0 %v2043
        %2062 = vmatprep.subr.mxu0 0.0
        %2063 = vmatpush1.msra.mxu0 %v2044
        %2064 = vmatprep.subr.mxu0 0.0
        %2065 = vmatpush1.msra.mxu0 %v2045
        %2066 = vmatprep.subr.mxu0 0.0
        %2067 = vmatpush1.msra.mxu0 %v2046
        %2068 = vmatprep.subr.mxu0 0.0
        %2069 = vmatpush1.msra.mxu0 %v2047
        %2070 = vmatprep.subr.mxu0 0.0
        %2071 = vmatpush1.msra.mxu0 %v2048
        %2072 = vmatprep.subr.mxu0 0.0
        %2073 = vmatpush1.msra.mxu0 %v2049
        %2074 = vmatprep.subr.mxu0 0.0
        %2075 = vmatpush1.msra.mxu0 %v2050
        %2076 = vmatprep.subr.mxu0 0.0
        %2077 = vmatpush1.msra.mxu0 %v2051
        %2078 = vmatprep.subr.mxu0 0.0
        %2079 = vmatpush1.msra.mxu0 %v2052
        %2080 = vmatprep.subr.mxu0 0.0
        %2081 = vmatpush1.msra.mxu0 %v2053
        %2082 = vmatprep.subr.mxu0 0.0
        %2083 = vmatpush1.msra.mxu0 %v2054
        %2084 = vmatprep.subr.mxu0 0.0
        %2085 = vmatpush1.msra.mxu0 %v2055
        %2086 = vmatprep.subr.mxu0 0.0
        %2087 = vmatpush1.msra.mxu0 %v2056
        %2088 = vmatprep.subr.mxu0 0.0
        %2089 = vmatpush1.msra.mxu0 %v2057
        %2090 = vmatprep.subr.mxu0 0.0
        %2091 = vmatpush1.msra.mxu0 0.0
        %2092 = vmatprep.subr.mxu0 0.0
        %2093 = vmatpush1.msra.mxu0 0.0
        %2094 = vmatprep.subr.mxu0 0.0
        %2095 = vmatpush1.msra.mxu0 0.0
        %2096 = vmatprep.subr.mxu0 0.0
        %2097 = vmatpush1.msra.mxu0 0.0
        %2098 = vmatprep.subr.mxu0 0.0
        %2099 = vmatpush1.msra.mxu0 0.0
        %2100 = vmatprep.subr.mxu0 0.0
        %2101 = vmatpush1.msra.mxu0 0.0
        %2102 = vmatprep.subr.mxu0 0.0
        %2103 = vmatpush1.msra.mxu0 0.0
        %2104 = vmatprep.subr.mxu0 0.0
        %2105 = vmatpush1.msra.mxu0 0.0
        %2106 = vmatprep.subr.mxu0 0.0
        %2107 = vmatpush1.msra.mxu0 0.0
        %2108 = vmatprep.subr.mxu0 0.0
        %2109 = vmatpush1.msra.mxu0 0.0
        %2110 = vmatprep.subr.mxu0 0.0
        %2111 = vmatpush1.msra.mxu0 0.0
        %2112 = vmatprep.subr.mxu0 0.0
        %2113 = vmatpush1.msra.mxu0 0.0
        %2114 = vmatprep.subr.mxu0 0.0
        %2115 = vmatpush1.msra.mxu0 0.0
        %2116 = vmatprep.subr.mxu0 0.0
        %2117 = vmatpush1.msra.mxu0 0.0
        %2118 = vmatprep.subr.mxu0 0.0
        %2119 = vmatpush1.msra.mxu0 0.0
        %2120 = vmatprep.subr.mxu0 0.0
        %2121 = vmatpush1.msra.mxu0 0.0
        %2122 = vmatprep.mubr.f32.mxu0 0.0
        %2123 = vmatmul.mubr.f32.gmra.mrb[0].mxu0 %v2016
        %v2124 = vpop.f32.mrb[0].mxu0
        %v2125 = vadd.f32 0.0, %v2124
        %v2126 = vpop.f32.mrb[0].mxu0
        %2127 = vmatprep.mubr.f32.mxu0 0.0
        %2128 = vmatmul.mubr.f32.gmra.mrb[0].mxu0 %v2017
        %v2129 = vpop.f32.mrb[0].mxu0
        %v2130 = vadd.f32 0.0, %v2129
        %v2131 = vpop.f32.mrb[0].mxu0
        %2132 = vmatprep.mubr.f32.mxu0 0.0
        %2133 = vmatmul.mubr.f32.gmra.mrb[0].mxu0 %v2018
        %v2134 = vpop.f32.mrb[0].mxu0
        %v2135 = vadd.f32 0.0, %v2134
        %v2136 = vpop.f32.mrb[0].mxu0
        %2137 = vmatprep.mubr.f32.mxu0 0.0
        %2138 = vmatmul.mubr.f32.gmra.mrb[0].mxu0 %v2019
        %v2139 = vpop.f32.mrb[0].mxu0
        %v2140 = vadd.f32 0.0, %v2139
        %v2141 = vpop.f32.mrb[0].mxu0
        %2142 = vmatprep.mubr.f32.mxu0 0.0
        %2143 = vmatmul.mubr.f32.gmra.mrb[0].mxu0 %v2020
        %v2144 = vpop.f32.mrb[0].mxu0
        %v2145 = vadd.f32 0.0, %v2144
        %v2146 = vpop.f32.mrb[0].mxu0
        %2147 = vmatprep.mubr.f32.mxu0 0.0
        %2148 = vmatmul.mubr.f32.gmra.mrb[0].mxu0 %v2021
        %v2149 = vpop.f32.mrb[0].mxu0
        %v2150 = vadd.f32 0.0, %v2149
        %v2151 = vpop.f32.mrb[0].mxu0
        %2152 = vmatprep.mubr.f32.mxu0 0.0
        %2153 = vmatmul.mubr.f32.gmra.mrb[0].mxu0 %v2022
        %v2154 = vpop.f32.mrb[0].mxu0
        %v2155 = vadd.f32 0.0, %v2154
        %v2156 = vpop.f32.mrb[0].mxu0
        %2157 = vmatprep.mubr.f32.mxu0 0.0
        %2158 = vmatmul.mubr.f32.gmra.mrb[0].mxu0 %v2023
        %v2159 = vpop.f32.mrb[0].mxu0
        %v2160 = vadd.f32 0.0, %v2159
        %v2161 = vpop.f32.mrb[0].mxu0
        %2162 = vmatprep.mubr.f32.mxu0 0.0
        %2163 = vmatmul.mubr.f32.gmra.mrb[0].mxu0 %v2024
        %v2164 = vpop.f32.mrb[0].mxu0
        %v2165 = vadd.f32 0.0, %v2164
        %v2166 = vpop.f32.mrb[0].mxu0
        %2167 = vmatprep.mubr.f32.mxu0 0.0
        %2168 = vmatmul.mubr.f32.gmra.mrb[0].mxu0 %v2025
        %v2169 = vpop.f32.mrb[0].mxu0
        %v2170 = vadd.f32 0.0, %v2169
        %v2171 = vpop.f32.mrb[0].mxu0
        %2172 = vmatprep.mubr.f32.mxu0 0.0
        %2173 = vmatmul.mubr.f32.gmra.mrb[0].mxu0 %v2026
        %v2174 = vpop.f32.mrb[0].mxu0
        %v2175 = vadd.f32 0.0, %v2174
        %v2176 = vpop.f32.mrb[0].mxu0
        %2177 = vmatprep.mubr.f32.mxu0 0.0
        %2178 = vmatmul.mubr.f32.gmra.mrb[0].mxu0 %v2027
        %v2179 = vpop.f32.mrb[0].mxu0
        %v2180 = vadd.f32 0.0, %v2179
        %v2181 = vpop.f32.mrb[0].mxu0
        %2182 = vmatprep.mubr.f32.mxu0 0.0
        %2183 = vmatmul.mubr.f32.gmra.mrb[0].mxu0 %v2028
        %v2184 = vpop.f32.mrb[0].mxu0
        %v2185 = vadd.f32 0.0, %v2184
        %v2186 = vpop.f32.mrb[0].mxu0
        %2187 = vmatprep.mubr.f32.mxu0 0.0
        %2188 = vmatmul.mubr.f32.gmra.mrb[0].mxu0 %v2029
        %v2189 = vpop.f32.mrb[0].mxu0
        %v2190 = vadd.f32 0.0, %v2189
        %v2191 = vpop.f32.mrb[0].mxu0
        %2192 = vmatprep.mubr.f32.mxu0 0.0
        %2193 = vmatmul.mubr.f32.gmra.mrb[0].mxu0 %v2030
        %v2194 = vpop.f32.mrb[0].mxu0
        %v2195 = vadd.f32 0.0, %v2194
        %v2196 = vpop.f32.mrb[0].mxu0
        %2197 = vmatprep.mubr.f32.mxu0 0.0
        %2198 = vmatmul.mubr.f32.gmra.mrb[0].mxu0 %v2031
        %v2199 = vpop.f32.mrb[0].mxu0
        %v2200 = vadd.f32 0.0, %v2199
        %v2201 = vpop.f32.mrb[0].mxu0
        %2202 = vmatprep.mubr.f32.mxu0 0.0
        %2203 = vmatmul.mubr.f32.gmra.mrb[0].mxu0 %v2032
        %v2204 = vpop.f32.mrb[0].mxu0
        %v2205 = vadd.f32 0.0, %v2204
        %v2206 = vpop.f32.mrb[0].mxu0
        %2207 = vmatprep.mubr.f32.mxu0 0.0
        %2208 = vmatmul.mubr.f32.gmra.mrb[0].mxu0 %v2033
        %v2209 = vpop.f32.mrb[0].mxu0
        %v2210 = vadd.f32 0.0, %v2209
        %v2211 = vpop.f32.mrb[0].mxu0
        %2212 = vmatprep.mubr.f32.mxu0 0.0
        %2213 = vmatmul.mubr.f32.gmra.mrb[0].mxu0 %v2034
        %v2214 = vpop.f32.mrb[0].mxu0
        %v2215 = vadd.f32 0.0, %v2214
        %v2216 = vpop.f32.mrb[0].mxu0
        %2217 = vmatprep.mubr.f32.mxu0 0.0
        %2218 = vmatmul.mubr.f32.gmra.mrb[0].mxu0 %v2035
        %v2219 = vpop.f32.mrb[0].mxu0
        %v2220 = vadd.f32 0.0, %v2219
        %v2221 = vpop.f32.mrb[0].mxu0
        %2222 = vmatprep.mubr.f32.mxu0 0.0
        %2223 = vmatmul.mubr.f32.gmra.mrb[0].mxu0 %v2036
        %v2224 = vpop.f32.mrb[0].mxu0
        %v2225 = vadd.f32 0.0, %v2224
        %v2226 = vpop.f32.mrb[0].mxu0
        %2227 = vmatprep.mubr.f32.mxu0 0.0
        %2228 = vmatmul.mubr.f32.gmra.mrb[0].mxu0 %v2037
        %v2229 = vpop.f32.mrb[0].mxu0
        %v2230 = vadd.f32 0.0, %v2229
        %v2231 = vpop.f32.mrb[0].mxu0
        %2232 = vmatprep.mubr.f32.mxu0 0.0
        %2233 = vmatmul.mubr.f32.gmra.mrb[0].mxu0 %v2038
        %v2234 = vpop.f32.mrb[0].mxu0
        %v2235 = vadd.f32 0.0, %v2234
        %v2236 = vpop.f32.mrb[0].mxu0
        %2237 = vmatprep.mubr.f32.mxu0 0.0
        %2238 = vmatmul.mubr.f32.gmra.mrb[0].mxu0 %v2039
        %v2239 = vpop.f32.mrb[0].mxu0
        %v2240 = vadd.f32 0.0, %v2239
        %v2241 = vpop.f32.mrb[0].mxu0
        %2242 = vmatprep.mubr.f32.mxu0 0.0
        %2243 = vmatmul.mubr.f32.gmra.mrb[0].mxu0 %v2040
        %v2244 = vpop.f32.mrb[0].mxu0
        %v2245 = vadd.f32 0.0, %v2244
        %v2246 = vpop.f32.mrb[0].mxu0
        %2247 = vdwg.mxu0
        %v2248 = vadd.f32 %v1991, %v2125
        %v2249 = vadd.f32 %v1992, %v2130
        %v2250 = vadd.f32 %v1993, %v2135
        %v2251 = vadd.f32 %v1994, %v2140
        %v2252 = vadd.f32 %v1995, %v2145
        %v2253 = vadd.f32 %v1996, %v2150
        %v2254 = vadd.f32 %v1997, %v2155
        %v2255 = vadd.f32 %v1998, %v2160
        %v2256 = vadd.f32 %v1999, %v2165
        %v2257 = vadd.f32 %v2000, %v2170
        %v2258 = vadd.f32 %v2001, %v2175
        %v2259 = vadd.f32 %v2002, %v2180
        %v2260 = vadd.f32 %v2003, %v2185
        %v2261 = vadd.f32 %v2004, %v2190
        %v2262 = vadd.f32 %v2005, %v2195
        %v2263 = vadd.f32 %v2006, %v2200
        %v2264 = vadd.f32 %v2007, %v2205
        %v2265 = vadd.f32 %v2008, %v2210
        %v2266 = vadd.f32 %v2009, %v2215
        %v2267 = vadd.f32 %v2010, %v2220
        %v2268 = vadd.f32 %v2011, %v2225
        %v2269 = vadd.f32 %v2012, %v2230
        %v2270 = vadd.f32 %v2013, %v2235
        %v2271 = vadd.f32 %v2014, %v2240
        %v2272 = vadd.f32 %v2015, %v2245
        %v2273 = vld [vmem:[#allocation2 + $0x10] sm:$0xff]
        %v2274 = vld [vmem:[#allocation2 + $0x18] sm:$0xff]
        %v2275 = vld [vmem:[#allocation2 + $0x20] sm:$0xff]
        %v2276 = vld [vmem:[#allocation2 + $0x28] sm:$0xff]
        %v2277 = vld [vmem:[#allocation2 + $0x30] sm:$0xff]
        %v2278 = vld [vmem:[#allocation2 + $0x38] sm:$0xff]
        %v2279 = vld [vmem:[#allocation2 + $0x40] sm:$0xff]
        %v2280 = vld [vmem:[#allocation2 + $0x48] sm:$0xff]
        %v2281 = vld [vmem:[#allocation2 + $0x50] sm:$0xff]
        %v2282 = vld [vmem:[#allocation2 + $0x58] sm:$0xff]
        %v2283 = vld [vmem:[#allocation2 + $0x60] sm:$0xff]
        %v2284 = vld [vmem:[#allocation2 + $0x68] sm:$0xff]
        %v2285 = vld [vmem:[#allocation2 + $0x70] sm:$0xff]
        %v2286 = vld [vmem:[#allocation2 + $0x78] sm:$0xff]
        %v2287 = vld [vmem:[#allocation2 + $0x80] sm:$0xff]
        %v2288 = vld [vmem:[#allocation2 + $0x88] sm:$0xff]
        %v2289 = vld [vmem:[#allocation2 + $0x90] sm:$0xff]
        %v2290 = vld [vmem:[#allocation2 + $0x98] sm:$0xff]
        %v2291 = vld [vmem:[#allocation2 + $0xa0] sm:$0xff]
        %v2292 = vld [vmem:[#allocation2 + $0xa8] sm:$0xff]
        %v2293 = vld [vmem:[#allocation2 + $0xb0] sm:$0xff]
        %v2294 = vld [vmem:[#allocation2 + $0xb8] sm:$0xff]
        %v2295 = vld [vmem:[#allocation2 + $0xc0] sm:$0xff]
        %v2296 = vld [vmem:[#allocation2 + $0xc8] sm:$0xff]
        %v2297 = vld [vmem:[#allocation2 + $0xd0] sm:$0xff]
        %s2298 = scalar_lea.vmem %s389, 896 [#allocation5]
        %v2299 = vld [vmem:[%s2298] sm:$0xff]
        %v2300 = vld [vmem:[%s2298 + $0x8] sm:$0xff]
        %v2301 = vld [vmem:[%s2298 + $0x10] sm:$0xff]
        %v2302 = vld [vmem:[%s2298 + $0x18] sm:$0xff]
        %v2303 = vld [vmem:[%s2298 + $0x20] sm:$0xff]
        %v2304 = vld [vmem:[%s2298 + $0x28] sm:$0xff]
        %v2305 = vld [vmem:[%s2298 + $0x30] sm:$0xff]
        %v2306 = vld [vmem:[%s2298 + $0x38] sm:$0xff]
        %v2307 = vld [vmem:[%s2298 + $0x40] sm:$0xff]
        %v2308 = vld [vmem:[%s2298 + $0x48] sm:$0xff]
        %v2309 = vld [vmem:[%s2298 + $0x50] sm:$0xff]
        %v2310 = vld [vmem:[%s2298 + $0x58] sm:$0xff]
        %v2311 = vld [vmem:[%s2298 + $0x60] sm:$0xff]
        %v2312 = vld [vmem:[%s2298 + $0x68] sm:$0xff]
        %v2313 = vld [vmem:[%s2298 + $0x70] sm:$0xff]
        %v2314 = vld [vmem:[%s2298 + $0x78] sm:$0xff]
        %2315 = vmatprep.subr.mxu0 0.0
        %2316 = vmatpush1.msra.mxu0 %v2299
        %2317 = vmatprep.subr.mxu0 0.0
        %2318 = vmatpush1.msra.mxu0 %v2300
        %2319 = vmatprep.subr.mxu0 0.0
        %2320 = vmatpush1.msra.mxu0 %v2301
        %2321 = vmatprep.subr.mxu0 0.0
        %2322 = vmatpush1.msra.mxu0 %v2302
        %2323 = vmatprep.subr.mxu0 0.0
        %2324 = vmatpush1.msra.mxu0 %v2303
        %2325 = vmatprep.subr.mxu0 0.0
        %2326 = vmatpush1.msra.mxu0 %v2304
        %2327 = vmatprep.subr.mxu0 0.0
        %2328 = vmatpush1.msra.mxu0 %v2305
        %2329 = vmatprep.subr.mxu0 0.0
        %2330 = vmatpush1.msra.mxu0 %v2306
        %2331 = vmatprep.subr.mxu0 0.0
        %2332 = vmatpush1.msra.mxu0 %v2307
        %2333 = vmatprep.subr.mxu0 0.0
        %2334 = vmatpush1.msra.mxu0 %v2308
        %2335 = vmatprep.subr.mxu0 0.0
        %2336 = vmatpush1.msra.mxu0 %v2309
        %2337 = vmatprep.subr.mxu0 0.0
        %2338 = vmatpush1.msra.mxu0 %v2310
        %2339 = vmatprep.subr.mxu0 0.0
        %2340 = vmatpush1.msra.mxu0 %v2311
        %2341 = vmatprep.subr.mxu0 0.0
        %2342 = vmatpush1.msra.mxu0 %v2312
        %2343 = vmatprep.subr.mxu0 0.0
        %2344 = vmatpush1.msra.mxu0 %v2313
        %2345 = vmatprep.subr.mxu0 0.0
        %2346 = vmatpush1.msra.mxu0 %v2314
        %2347 = vmatprep.subr.mxu0 0.0
        %2348 = vmatpush1.msra.mxu0 0.0
        %2349 = vmatprep.subr.mxu0 0.0
        %2350 = vmatpush1.msra.mxu0 0.0
        %2351 = vmatprep.subr.mxu0 0.0
        %2352 = vmatpush1.msra.mxu0 0.0
        %2353 = vmatprep.subr.mxu0 0.0
        %2354 = vmatpush1.msra.mxu0 0.0
        %2355 = vmatprep.subr.mxu0 0.0
        %2356 = vmatpush1.msra.mxu0 0.0
        %2357 = vmatprep.subr.mxu0 0.0
        %2358 = vmatpush1.msra.mxu0 0.0
        %2359 = vmatprep.subr.mxu0 0.0
        %2360 = vmatpush1.msra.mxu0 0.0
        %2361 = vmatprep.subr.mxu0 0.0
        %2362 = vmatpush1.msra.mxu0 0.0
        %2363 = vmatprep.subr.mxu0 0.0
        %2364 = vmatpush1.msra.mxu0 0.0
        %2365 = vmatprep.subr.mxu0 0.0
        %2366 = vmatpush1.msra.mxu0 0.0
        %2367 = vmatprep.subr.mxu0 0.0
        %2368 = vmatpush1.msra.mxu0 0.0
        %2369 = vmatprep.subr.mxu0 0.0
        %2370 = vmatpush1.msra.mxu0 0.0
        %2371 = vmatprep.subr.mxu0 0.0
        %2372 = vmatpush1.msra.mxu0 0.0
        %2373 = vmatprep.subr.mxu0 0.0
        %2374 = vmatpush1.msra.mxu0 0.0
        %2375 = vmatprep.subr.mxu0 0.0
        %2376 = vmatpush1.msra.mxu0 0.0
        %2377 = vmatprep.subr.mxu0 0.0
        %2378 = vmatpush1.msra.mxu0 0.0
        %2379 = vmatprep.mubr.f32.mxu0 0.0
        %2380 = vmatmul.mubr.f32.gmra.mrb[0].mxu0 %v2273
        %v2381 = vpop.f32.mrb[0].mxu0
        %v2382 = vadd.f32 0.0, %v2381
        %v2383 = vpop.f32.mrb[0].mxu0
        %2384 = vmatprep.mubr.f32.mxu0 0.0
        %2385 = vmatmul.mubr.f32.gmra.mrb[0].mxu0 %v2274
        %v2386 = vpop.f32.mrb[0].mxu0
        %v2387 = vadd.f32 0.0, %v2386
        %v2388 = vpop.f32.mrb[0].mxu0
        %2389 = vmatprep.mubr.f32.mxu0 0.0
        %2390 = vmatmul.mubr.f32.gmra.mrb[0].mxu0 %v2275
        %v2391 = vpop.f32.mrb[0].mxu0
        %v2392 = vadd.f32 0.0, %v2391
        %v2393 = vpop.f32.mrb[0].mxu0
        %2394 = vmatprep.mubr.f32.mxu0 0.0
        %2395 = vmatmul.mubr.f32.gmra.mrb[0].mxu0 %v2276
        %v2396 = vpop.f32.mrb[0].mxu0
        %v2397 = vadd.f32 0.0, %v2396
        %v2398 = vpop.f32.mrb[0].mxu0
        %2399 = vmatprep.mubr.f32.mxu0 0.0
        %2400 = vmatmul.mubr.f32.gmra.mrb[0].mxu0 %v2277
        %v2401 = vpop.f32.mrb[0].mxu0
        %v2402 = vadd.f32 0.0, %v2401
        %v2403 = vpop.f32.mrb[0].mxu0
        %2404 = vmatprep.mubr.f32.mxu0 0.0
        %2405 = vmatmul.mubr.f32.gmra.mrb[0].mxu0 %v2278
        %v2406 = vpop.f32.mrb[0].mxu0
        %v2407 = vadd.f32 0.0, %v2406
        %v2408 = vpop.f32.mrb[0].mxu0
        %2409 = vmatprep.mubr.f32.mxu0 0.0
        %2410 = vmatmul.mubr.f32.gmra.mrb[0].mxu0 %v2279
        %v2411 = vpop.f32.mrb[0].mxu0
        %v2412 = vadd.f32 0.0, %v2411
        %v2413 = vpop.f32.mrb[0].mxu0
        %2414 = vmatprep.mubr.f32.mxu0 0.0
        %2415 = vmatmul.mubr.f32.gmra.mrb[0].mxu0 %v2280
        %v2416 = vpop.f32.mrb[0].mxu0
        %v2417 = vadd.f32 0.0, %v2416
        %v2418 = vpop.f32.mrb[0].mxu0
        %2419 = vmatprep.mubr.f32.mxu0 0.0
        %2420 = vmatmul.mubr.f32.gmra.mrb[0].mxu0 %v2281
        %v2421 = vpop.f32.mrb[0].mxu0
        %v2422 = vadd.f32 0.0, %v2421
        %v2423 = vpop.f32.mrb[0].mxu0
        %2424 = vmatprep.mubr.f32.mxu0 0.0
        %2425 = vmatmul.mubr.f32.gmra.mrb[0].mxu0 %v2282
        %v2426 = vpop.f32.mrb[0].mxu0
        %v2427 = vadd.f32 0.0, %v2426
        %v2428 = vpop.f32.mrb[0].mxu0
        %2429 = vmatprep.mubr.f32.mxu0 0.0
        %2430 = vmatmul.mubr.f32.gmra.mrb[0].mxu0 %v2283
        %v2431 = vpop.f32.mrb[0].mxu0
        %v2432 = vadd.f32 0.0, %v2431
        %v2433 = vpop.f32.mrb[0].mxu0
        %2434 = vmatprep.mubr.f32.mxu0 0.0
        %2435 = vmatmul.mubr.f32.gmra.mrb[0].mxu0 %v2284
        %v2436 = vpop.f32.mrb[0].mxu0
        %v2437 = vadd.f32 0.0, %v2436
        %v2438 = vpop.f32.mrb[0].mxu0
        %2439 = vmatprep.mubr.f32.mxu0 0.0
        %2440 = vmatmul.mubr.f32.gmra.mrb[0].mxu0 %v2285
        %v2441 = vpop.f32.mrb[0].mxu0
        %v2442 = vadd.f32 0.0, %v2441
        %v2443 = vpop.f32.mrb[0].mxu0
        %2444 = vmatprep.mubr.f32.mxu0 0.0
        %2445 = vmatmul.mubr.f32.gmra.mrb[0].mxu0 %v2286
        %v2446 = vpop.f32.mrb[0].mxu0
        %v2447 = vadd.f32 0.0, %v2446
        %v2448 = vpop.f32.mrb[0].mxu0
        %2449 = vmatprep.mubr.f32.mxu0 0.0
        %2450 = vmatmul.mubr.f32.gmra.mrb[0].mxu0 %v2287
        %v2451 = vpop.f32.mrb[0].mxu0
        %v2452 = vadd.f32 0.0, %v2451
        %v2453 = vpop.f32.mrb[0].mxu0
        %2454 = vmatprep.mubr.f32.mxu0 0.0
        %2455 = vmatmul.mubr.f32.gmra.mrb[0].mxu0 %v2288
        %v2456 = vpop.f32.mrb[0].mxu0
        %v2457 = vadd.f32 0.0, %v2456
        %v2458 = vpop.f32.mrb[0].mxu0
        %2459 = vmatprep.mubr.f32.mxu0 0.0
        %2460 = vmatmul.mubr.f32.gmra.mrb[0].mxu0 %v2289
        %v2461 = vpop.f32.mrb[0].mxu0
        %v2462 = vadd.f32 0.0, %v2461
        %v2463 = vpop.f32.mrb[0].mxu0
        %2464 = vmatprep.mubr.f32.mxu0 0.0
        %2465 = vmatmul.mubr.f32.gmra.mrb[0].mxu0 %v2290
        %v2466 = vpop.f32.mrb[0].mxu0
        %v2467 = vadd.f32 0.0, %v2466
        %v2468 = vpop.f32.mrb[0].mxu0
        %2469 = vmatprep.mubr.f32.mxu0 0.0
        %2470 = vmatmul.mubr.f32.gmra.mrb[0].mxu0 %v2291
        %v2471 = vpop.f32.mrb[0].mxu0
        %v2472 = vadd.f32 0.0, %v2471
        %v2473 = vpop.f32.mrb[0].mxu0
        %2474 = vmatprep.mubr.f32.mxu0 0.0
        %2475 = vmatmul.mubr.f32.gmra.mrb[0].mxu0 %v2292
        %v2476 = vpop.f32.mrb[0].mxu0
        %v2477 = vadd.f32 0.0, %v2476
        %v2478 = vpop.f32.mrb[0].mxu0
        %2479 = vmatprep.mubr.f32.mxu0 0.0
        %2480 = vmatmul.mubr.f32.gmra.mrb[0].mxu0 %v2293
        %v2481 = vpop.f32.mrb[0].mxu0
        %v2482 = vadd.f32 0.0, %v2481
        %v2483 = vpop.f32.mrb[0].mxu0
        %2484 = vmatprep.mubr.f32.mxu0 0.0
        %2485 = vmatmul.mubr.f32.gmra.mrb[0].mxu0 %v2294
        %v2486 = vpop.f32.mrb[0].mxu0
        %v2487 = vadd.f32 0.0, %v2486
        %v2488 = vpop.f32.mrb[0].mxu0
        %2489 = vmatprep.mubr.f32.mxu0 0.0
        %2490 = vmatmul.mubr.f32.gmra.mrb[0].mxu0 %v2295
        %v2491 = vpop.f32.mrb[0].mxu0
        %v2492 = vadd.f32 0.0, %v2491
        %v2493 = vpop.f32.mrb[0].mxu0
        %2494 = vmatprep.mubr.f32.mxu0 0.0
        %2495 = vmatmul.mubr.f32.gmra.mrb[0].mxu0 %v2296
        %v2496 = vpop.f32.mrb[0].mxu0
        %v2497 = vadd.f32 0.0, %v2496
        %v2498 = vpop.f32.mrb[0].mxu0
        %2499 = vmatprep.mubr.f32.mxu0 0.0
        %2500 = vmatmul.mubr.f32.gmra.mrb[0].mxu0 %v2297
        %v2501 = vpop.f32.mrb[0].mxu0
        %v2502 = vadd.f32 0.0, %v2501
        %v2503 = vpop.f32.mrb[0].mxu0
        %2504 = vdwg.mxu0
        %v2505 = vadd.f32 %v2248, %v2382
        %v2506 = vadd.f32 %v2249, %v2387
        %v2507 = vadd.f32 %v2250, %v2392
        %v2508 = vadd.f32 %v2251, %v2397
        %v2509 = vadd.f32 %v2252, %v2402
        %v2510 = vadd.f32 %v2253, %v2407
        %v2511 = vadd.f32 %v2254, %v2412
        %v2512 = vadd.f32 %v2255, %v2417
        %v2513 = vadd.f32 %v2256, %v2422
        %v2514 = vadd.f32 %v2257, %v2427
        %v2515 = vadd.f32 %v2258, %v2432
        %v2516 = vadd.f32 %v2259, %v2437
        %v2517 = vadd.f32 %v2260, %v2442
        %v2518 = vadd.f32 %v2261, %v2447
        %v2519 = vadd.f32 %v2262, %v2452
        %v2520 = vadd.f32 %v2263, %v2457
        %v2521 = vadd.f32 %v2264, %v2462
        %v2522 = vadd.f32 %v2265, %v2467
        %v2523 = vadd.f32 %v2266, %v2472
        %v2524 = vadd.f32 %v2267, %v2477
        %v2525 = vadd.f32 %v2268, %v2482
        %v2526 = vadd.f32 %v2269, %v2487
        %v2527 = vadd.f32 %v2270, %v2492
        %v2528 = vadd.f32 %v2271, %v2497
        %v2529 = vadd.f32 %v2272, %v2502
        %v2530 = vld [vmem:[#allocation2 + $0x11] sm:$0xff]
        %v2531 = vld [vmem:[#allocation2 + $0x19] sm:$0xff]
        %v2532 = vld [vmem:[#allocation2 + $0x21] sm:$0xff]
        %v2533 = vld [vmem:[#allocation2 + $0x29] sm:$0xff]
        %v2534 = vld [vmem:[#allocation2 + $0x31] sm:$0xff]
        %v2535 = vld [vmem:[#allocation2 + $0x39] sm:$0xff]
        %v2536 = vld [vmem:[#allocation2 + $0x41] sm:$0xff]
        %v2537 = vld [vmem:[#allocation2 + $0x49] sm:$0xff]
        %v2538 = vld [vmem:[#allocation2 + $0x51] sm:$0xff]
        %v2539 = vld [vmem:[#allocation2 + $0x59] sm:$0xff]
        %v2540 = vld [vmem:[#allocation2 + $0x61] sm:$0xff]
        %v2541 = vld [vmem:[#allocation2 + $0x69] sm:$0xff]
        %v2542 = vld [vmem:[#allocation2 + $0x71] sm:$0xff]
        %v2543 = vld [vmem:[#allocation2 + $0x79] sm:$0xff]
        %v2544 = vld [vmem:[#allocation2 + $0x81] sm:$0xff]
        %v2545 = vld [vmem:[#allocation2 + $0x89] sm:$0xff]
        %v2546 = vld [vmem:[#allocation2 + $0x91] sm:$0xff]
        %v2547 = vld [vmem:[#allocation2 + $0x99] sm:$0xff]
        %v2548 = vld [vmem:[#allocation2 + $0xa1] sm:$0xff]
        %v2549 = vld [vmem:[#allocation2 + $0xa9] sm:$0xff]
        %v2550 = vld [vmem:[#allocation2 + $0xb1] sm:$0xff]
        %v2551 = vld [vmem:[#allocation2 + $0xb9] sm:$0xff]
        %v2552 = vld [vmem:[#allocation2 + $0xc1] sm:$0xff]
        %v2553 = vld [vmem:[#allocation2 + $0xc9] sm:$0xff]
        %v2554 = vld [vmem:[#allocation2 + $0xd1] sm:$0xff]
        %s2555 = scalar_lea.vmem %s389, 1024 [#allocation5]
        %v2556 = vld [vmem:[%s2555] sm:$0xff]
        %v2557 = vld [vmem:[%s2555 + $0x8] sm:$0xff]
        %v2558 = vld [vmem:[%s2555 + $0x10] sm:$0xff]
        %v2559 = vld [vmem:[%s2555 + $0x18] sm:$0xff]
        %v2560 = vld [vmem:[%s2555 + $0x20] sm:$0xff]
        %v2561 = vld [vmem:[%s2555 + $0x28] sm:$0xff]
        %v2562 = vld [vmem:[%s2555 + $0x30] sm:$0xff]
        %v2563 = vld [vmem:[%s2555 + $0x38] sm:$0xff]
        %v2564 = vld [vmem:[%s2555 + $0x40] sm:$0xff]
        %v2565 = vld [vmem:[%s2555 + $0x48] sm:$0xff]
        %v2566 = vld [vmem:[%s2555 + $0x50] sm:$0xff]
        %v2567 = vld [vmem:[%s2555 + $0x58] sm:$0xff]
        %v2568 = vld [vmem:[%s2555 + $0x60] sm:$0xff]
        %v2569 = vld [vmem:[%s2555 + $0x68] sm:$0xff]
        %v2570 = vld [vmem:[%s2555 + $0x70] sm:$0xff]
        %v2571 = vld [vmem:[%s2555 + $0x78] sm:$0xff]
        %2572 = vmatprep.subr.mxu0 0.0
        %2573 = vmatpush1.msra.mxu0 %v2556
        %2574 = vmatprep.subr.mxu0 0.0
        %2575 = vmatpush1.msra.mxu0 %v2557
        %2576 = vmatprep.subr.mxu0 0.0
        %2577 = vmatpush1.msra.mxu0 %v2558
        %2578 = vmatprep.subr.mxu0 0.0
        %2579 = vmatpush1.msra.mxu0 %v2559
        %2580 = vmatprep.subr.mxu0 0.0
        %2581 = vmatpush1.msra.mxu0 %v2560
        %2582 = vmatprep.subr.mxu0 0.0
        %2583 = vmatpush1.msra.mxu0 %v2561
        %2584 = vmatprep.subr.mxu0 0.0
        %2585 = vmatpush1.msra.mxu0 %v2562
        %2586 = vmatprep.subr.mxu0 0.0
        %2587 = vmatpush1.msra.mxu0 %v2563
        %2588 = vmatprep.subr.mxu0 0.0
        %2589 = vmatpush1.msra.mxu0 %v2564
        %2590 = vmatprep.subr.mxu0 0.0
        %2591 = vmatpush1.msra.mxu0 %v2565
        %2592 = vmatprep.subr.mxu0 0.0
        %2593 = vmatpush1.msra.mxu0 %v2566
        %2594 = vmatprep.subr.mxu0 0.0
        %2595 = vmatpush1.msra.mxu0 %v2567
        %2596 = vmatprep.subr.mxu0 0.0
        %2597 = vmatpush1.msra.mxu0 %v2568
        %2598 = vmatprep.subr.mxu0 0.0
        %2599 = vmatpush1.msra.mxu0 %v2569
        %2600 = vmatprep.subr.mxu0 0.0
        %2601 = vmatpush1.msra.mxu0 %v2570
        %2602 = vmatprep.subr.mxu0 0.0
        %2603 = vmatpush1.msra.mxu0 %v2571
        %2604 = vmatprep.subr.mxu0 0.0
        %2605 = vmatpush1.msra.mxu0 0.0
        %2606 = vmatprep.subr.mxu0 0.0
        %2607 = vmatpush1.msra.mxu0 0.0
        %2608 = vmatprep.subr.mxu0 0.0
        %2609 = vmatpush1.msra.mxu0 0.0
        %2610 = vmatprep.subr.mxu0 0.0
        %2611 = vmatpush1.msra.mxu0 0.0
        %2612 = vmatprep.subr.mxu0 0.0
        %2613 = vmatpush1.msra.mxu0 0.0
        %2614 = vmatprep.subr.mxu0 0.0
        %2615 = vmatpush1.msra.mxu0 0.0
        %2616 = vmatprep.subr.mxu0 0.0
        %2617 = vmatpush1.msra.mxu0 0.0
        %2618 = vmatprep.subr.mxu0 0.0
        %2619 = vmatpush1.msra.mxu0 0.0
        %2620 = vmatprep.subr.mxu0 0.0
        %2621 = vmatpush1.msra.mxu0 0.0
        %2622 = vmatprep.subr.mxu0 0.0
        %2623 = vmatpush1.msra.mxu0 0.0
        %2624 = vmatprep.subr.mxu0 0.0
        %2625 = vmatpush1.msra.mxu0 0.0
        %2626 = vmatprep.subr.mxu0 0.0
        %2627 = vmatpush1.msra.mxu0 0.0
        %2628 = vmatprep.subr.mxu0 0.0
        %2629 = vmatpush1.msra.mxu0 0.0
        %2630 = vmatprep.subr.mxu0 0.0
        %2631 = vmatpush1.msra.mxu0 0.0
        %2632 = vmatprep.subr.mxu0 0.0
        %2633 = vmatpush1.msra.mxu0 0.0
        %2634 = vmatprep.subr.mxu0 0.0
        %2635 = vmatpush1.msra.mxu0 0.0
        %2636 = vmatprep.mubr.f32.mxu0 0.0
        %2637 = vmatmul.mubr.f32.gmra.mrb[0].mxu0 %v2530
        %v2638 = vpop.f32.mrb[0].mxu0
        %v2639 = vadd.f32 0.0, %v2638
        %v2640 = vpop.f32.mrb[0].mxu0
        %2641 = vmatprep.mubr.f32.mxu0 0.0
        %2642 = vmatmul.mubr.f32.gmra.mrb[0].mxu0 %v2531
        %v2643 = vpop.f32.mrb[0].mxu0
        %v2644 = vadd.f32 0.0, %v2643
        %v2645 = vpop.f32.mrb[0].mxu0
        %2646 = vmatprep.mubr.f32.mxu0 0.0
        %2647 = vmatmul.mubr.f32.gmra.mrb[0].mxu0 %v2532
        %v2648 = vpop.f32.mrb[0].mxu0
        %v2649 = vadd.f32 0.0, %v2648
        %v2650 = vpop.f32.mrb[0].mxu0
        %2651 = vmatprep.mubr.f32.mxu0 0.0
        %2652 = vmatmul.mubr.f32.gmra.mrb[0].mxu0 %v2533
        %v2653 = vpop.f32.mrb[0].mxu0
        %v2654 = vadd.f32 0.0, %v2653
        %v2655 = vpop.f32.mrb[0].mxu0
        %2656 = vmatprep.mubr.f32.mxu0 0.0
        %2657 = vmatmul.mubr.f32.gmra.mrb[0].mxu0 %v2534
        %v2658 = vpop.f32.mrb[0].mxu0
        %v2659 = vadd.f32 0.0, %v2658
        %v2660 = vpop.f32.mrb[0].mxu0
        %2661 = vmatprep.mubr.f32.mxu0 0.0
        %2662 = vmatmul.mubr.f32.gmra.mrb[0].mxu0 %v2535
        %v2663 = vpop.f32.mrb[0].mxu0
        %v2664 = vadd.f32 0.0, %v2663
        %v2665 = vpop.f32.mrb[0].mxu0
        %2666 = vmatprep.mubr.f32.mxu0 0.0
        %2667 = vmatmul.mubr.f32.gmra.mrb[0].mxu0 %v2536
        %v2668 = vpop.f32.mrb[0].mxu0
        %v2669 = vadd.f32 0.0, %v2668
        %v2670 = vpop.f32.mrb[0].mxu0
        %2671 = vmatprep.mubr.f32.mxu0 0.0
        %2672 = vmatmul.mubr.f32.gmra.mrb[0].mxu0 %v2537
        %v2673 = vpop.f32.mrb[0].mxu0
        %v2674 = vadd.f32 0.0, %v2673
        %v2675 = vpop.f32.mrb[0].mxu0
        %2676 = vmatprep.mubr.f32.mxu0 0.0
        %2677 = vmatmul.mubr.f32.gmra.mrb[0].mxu0 %v2538
        %v2678 = vpop.f32.mrb[0].mxu0
        %v2679 = vadd.f32 0.0, %v2678
        %v2680 = vpop.f32.mrb[0].mxu0
        %2681 = vmatprep.mubr.f32.mxu0 0.0
        %2682 = vmatmul.mubr.f32.gmra.mrb[0].mxu0 %v2539
        %v2683 = vpop.f32.mrb[0].mxu0
        %v2684 = vadd.f32 0.0, %v2683
        %v2685 = vpop.f32.mrb[0].mxu0
        %2686 = vmatprep.mubr.f32.mxu0 0.0
        %2687 = vmatmul.mubr.f32.gmra.mrb[0].mxu0 %v2540
        %v2688 = vpop.f32.mrb[0].mxu0
        %v2689 = vadd.f32 0.0, %v2688
        %v2690 = vpop.f32.mrb[0].mxu0
        %2691 = vmatprep.mubr.f32.mxu0 0.0
        %2692 = vmatmul.mubr.f32.gmra.mrb[0].mxu0 %v2541
        %v2693 = vpop.f32.mrb[0].mxu0
        %v2694 = vadd.f32 0.0, %v2693
        %v2695 = vpop.f32.mrb[0].mxu0
        %2696 = vmatprep.mubr.f32.mxu0 0.0
        %2697 = vmatmul.mubr.f32.gmra.mrb[0].mxu0 %v2542
        %v2698 = vpop.f32.mrb[0].mxu0
        %v2699 = vadd.f32 0.0, %v2698
        %v2700 = vpop.f32.mrb[0].mxu0
        %2701 = vmatprep.mubr.f32.mxu0 0.0
        %2702 = vmatmul.mubr.f32.gmra.mrb[0].mxu0 %v2543
        %v2703 = vpop.f32.mrb[0].mxu0
        %v2704 = vadd.f32 0.0, %v2703
        %v2705 = vpop.f32.mrb[0].mxu0
        %2706 = vmatprep.mubr.f32.mxu0 0.0
        %2707 = vmatmul.mubr.f32.gmra.mrb[0].mxu0 %v2544
        %v2708 = vpop.f32.mrb[0].mxu0
        %v2709 = vadd.f32 0.0, %v2708
        %v2710 = vpop.f32.mrb[0].mxu0
        %2711 = vmatprep.mubr.f32.mxu0 0.0
        %2712 = vmatmul.mubr.f32.gmra.mrb[0].mxu0 %v2545
        %v2713 = vpop.f32.mrb[0].mxu0
        %v2714 = vadd.f32 0.0, %v2713
        %v2715 = vpop.f32.mrb[0].mxu0
        %2716 = vmatprep.mubr.f32.mxu0 0.0
        %2717 = vmatmul.mubr.f32.gmra.mrb[0].mxu0 %v2546
        %v2718 = vpop.f32.mrb[0].mxu0
        %v2719 = vadd.f32 0.0, %v2718
        %v2720 = vpop.f32.mrb[0].mxu0
        %2721 = vmatprep.mubr.f32.mxu0 0.0
        %2722 = vmatmul.mubr.f32.gmra.mrb[0].mxu0 %v2547
        %v2723 = vpop.f32.mrb[0].mxu0
        %v2724 = vadd.f32 0.0, %v2723
        %v2725 = vpop.f32.mrb[0].mxu0
        %2726 = vmatprep.mubr.f32.mxu0 0.0
        %2727 = vmatmul.mubr.f32.gmra.mrb[0].mxu0 %v2548
        %v2728 = vpop.f32.mrb[0].mxu0
        %v2729 = vadd.f32 0.0, %v2728
        %v2730 = vpop.f32.mrb[0].mxu0
        %2731 = vmatprep.mubr.f32.mxu0 0.0
        %2732 = vmatmul.mubr.f32.gmra.mrb[0].mxu0 %v2549
        %v2733 = vpop.f32.mrb[0].mxu0
        %v2734 = vadd.f32 0.0, %v2733
        %v2735 = vpop.f32.mrb[0].mxu0
        %2736 = vmatprep.mubr.f32.mxu0 0.0
        %2737 = vmatmul.mubr.f32.gmra.mrb[0].mxu0 %v2550
        %v2738 = vpop.f32.mrb[0].mxu0
        %v2739 = vadd.f32 0.0, %v2738
        %v2740 = vpop.f32.mrb[0].mxu0
        %2741 = vmatprep.mubr.f32.mxu0 0.0
        %2742 = vmatmul.mubr.f32.gmra.mrb[0].mxu0 %v2551
        %v2743 = vpop.f32.mrb[0].mxu0
        %v2744 = vadd.f32 0.0, %v2743
        %v2745 = vpop.f32.mrb[0].mxu0
        %2746 = vmatprep.mubr.f32.mxu0 0.0
        %2747 = vmatmul.mubr.f32.gmra.mrb[0].mxu0 %v2552
        %v2748 = vpop.f32.mrb[0].mxu0
        %v2749 = vadd.f32 0.0, %v2748
        %v2750 = vpop.f32.mrb[0].mxu0
        %2751 = vmatprep.mubr.f32.mxu0 0.0
        %2752 = vmatmul.mubr.f32.gmra.mrb[0].mxu0 %v2553
        %v2753 = vpop.f32.mrb[0].mxu0
        %v2754 = vadd.f32 0.0, %v2753
        %v2755 = vpop.f32.mrb[0].mxu0
        %2756 = vmatprep.mubr.f32.mxu0 0.0
        %2757 = vmatmul.mubr.f32.gmra.mrb[0].mxu0 %v2554
        %v2758 = vpop.f32.mrb[0].mxu0
        %v2759 = vadd.f32 0.0, %v2758
        %v2760 = vpop.f32.mrb[0].mxu0
        %2761 = vdwg.mxu0
        %v2762 = vadd.f32 %v2505, %v2639
        %v2763 = vadd.f32 %v2506, %v2644
        %v2764 = vadd.f32 %v2507, %v2649
        %v2765 = vadd.f32 %v2508, %v2654
        %v2766 = vadd.f32 %v2509, %v2659
        %v2767 = vadd.f32 %v2510, %v2664
        %v2768 = vadd.f32 %v2511, %v2669
        %v2769 = vadd.f32 %v2512, %v2674
        %v2770 = vadd.f32 %v2513, %v2679
        %v2771 = vadd.f32 %v2514, %v2684
        %v2772 = vadd.f32 %v2515, %v2689
        %v2773 = vadd.f32 %v2516, %v2694
        %v2774 = vadd.f32 %v2517, %v2699
        %v2775 = vadd.f32 %v2518, %v2704
        %v2776 = vadd.f32 %v2519, %v2709
        %v2777 = vadd.f32 %v2520, %v2714
        %v2778 = vadd.f32 %v2521, %v2719
        %v2779 = vadd.f32 %v2522, %v2724
        %v2780 = vadd.f32 %v2523, %v2729
        %v2781 = vadd.f32 %v2524, %v2734
        %v2782 = vadd.f32 %v2525, %v2739
        %v2783 = vadd.f32 %v2526, %v2744
        %v2784 = vadd.f32 %v2527, %v2749
        %v2785 = vadd.f32 %v2528, %v2754
        %v2786 = vadd.f32 %v2529, %v2759
        %v2787 = vld [vmem:[#allocation2 + $0x14] sm:$0xff]
        %v2788 = vld [vmem:[#allocation2 + $0x1c] sm:$0xff]
        %v2789 = vld [vmem:[#allocation2 + $0x24] sm:$0xff]
        %v2790 = vld [vmem:[#allocation2 + $0x2c] sm:$0xff]
        %v2791 = vld [vmem:[#allocation2 + $0x34] sm:$0xff]
        %v2792 = vld [vmem:[#allocation2 + $0x3c] sm:$0xff]
        %v2793 = vld [vmem:[#allocation2 + $0x44] sm:$0xff]
        %v2794 = vld [vmem:[#allocation2 + $0x4c] sm:$0xff]
        %v2795 = vld [vmem:[#allocation2 + $0x54] sm:$0xff]
        %v2796 = vld [vmem:[#allocation2 + $0x5c] sm:$0xff]
        %v2797 = vld [vmem:[#allocation2 + $0x64] sm:$0xff]
        %v2798 = vld [vmem:[#allocation2 + $0x6c] sm:$0xff]
        %v2799 = vld [vmem:[#allocation2 + $0x74] sm:$0xff]
        %v2800 = vld [vmem:[#allocation2 + $0x7c] sm:$0xff]
        %v2801 = vld [vmem:[#allocation2 + $0x84] sm:$0xff]
        %v2802 = vld [vmem:[#allocation2 + $0x8c] sm:$0xff]
        %v2803 = vld [vmem:[#allocation2 + $0x94] sm:$0xff]
        %v2804 = vld [vmem:[#allocation2 + $0x9c] sm:$0xff]
        %v2805 = vld [vmem:[#allocation2 + $0xa4] sm:$0xff]
        %v2806 = vld [vmem:[#allocation2 + $0xac] sm:$0xff]
        %v2807 = vld [vmem:[#allocation2 + $0xb4] sm:$0xff]
        %v2808 = vld [vmem:[#allocation2 + $0xbc] sm:$0xff]
        %v2809 = vld [vmem:[#allocation2 + $0xc4] sm:$0xff]
        %v2810 = vld [vmem:[#allocation2 + $0xcc] sm:$0xff]
        %v2811 = vld [vmem:[#allocation2 + $0xd4] sm:$0xff]
        %s2812 = scalar_lea.vmem %s389, 1152 [#allocation5]
        %v2813 = vld [vmem:[%s2812] sm:$0xff]
        %v2814 = vld [vmem:[%s2812 + $0x8] sm:$0xff]
        %v2815 = vld [vmem:[%s2812 + $0x10] sm:$0xff]
        %v2816 = vld [vmem:[%s2812 + $0x18] sm:$0xff]
        %v2817 = vld [vmem:[%s2812 + $0x20] sm:$0xff]
        %v2818 = vld [vmem:[%s2812 + $0x28] sm:$0xff]
        %v2819 = vld [vmem:[%s2812 + $0x30] sm:$0xff]
        %v2820 = vld [vmem:[%s2812 + $0x38] sm:$0xff]
        %v2821 = vld [vmem:[%s2812 + $0x40] sm:$0xff]
        %v2822 = vld [vmem:[%s2812 + $0x48] sm:$0xff]
        %v2823 = vld [vmem:[%s2812 + $0x50] sm:$0xff]
        %v2824 = vld [vmem:[%s2812 + $0x58] sm:$0xff]
        %v2825 = vld [vmem:[%s2812 + $0x60] sm:$0xff]
        %v2826 = vld [vmem:[%s2812 + $0x68] sm:$0xff]
        %v2827 = vld [vmem:[%s2812 + $0x70] sm:$0xff]
        %v2828 = vld [vmem:[%s2812 + $0x78] sm:$0xff]
        %2829 = vmatprep.subr.mxu0 0.0
        %2830 = vmatpush1.msra.mxu0 %v2813
        %2831 = vmatprep.subr.mxu0 0.0
        %2832 = vmatpush1.msra.mxu0 %v2814
        %2833 = vmatprep.subr.mxu0 0.0
        %2834 = vmatpush1.msra.mxu0 %v2815
        %2835 = vmatprep.subr.mxu0 0.0
        %2836 = vmatpush1.msra.mxu0 %v2816
        %2837 = vmatprep.subr.mxu0 0.0
        %2838 = vmatpush1.msra.mxu0 %v2817
        %2839 = vmatprep.subr.mxu0 0.0
        %2840 = vmatpush1.msra.mxu0 %v2818
        %2841 = vmatprep.subr.mxu0 0.0
        %2842 = vmatpush1.msra.mxu0 %v2819
        %2843 = vmatprep.subr.mxu0 0.0
        %2844 = vmatpush1.msra.mxu0 %v2820
        %2845 = vmatprep.subr.mxu0 0.0
        %2846 = vmatpush1.msra.mxu0 %v2821
        %2847 = vmatprep.subr.mxu0 0.0
        %2848 = vmatpush1.msra.mxu0 %v2822
        %2849 = vmatprep.subr.mxu0 0.0
        %2850 = vmatpush1.msra.mxu0 %v2823
        %2851 = vmatprep.subr.mxu0 0.0
        %2852 = vmatpush1.msra.mxu0 %v2824
        %2853 = vmatprep.subr.mxu0 0.0
        %2854 = vmatpush1.msra.mxu0 %v2825
        %2855 = vmatprep.subr.mxu0 0.0
        %2856 = vmatpush1.msra.mxu0 %v2826
        %2857 = vmatprep.subr.mxu0 0.0
        %2858 = vmatpush1.msra.mxu0 %v2827
        %2859 = vmatprep.subr.mxu0 0.0
        %2860 = vmatpush1.msra.mxu0 %v2828
        %2861 = vmatprep.subr.mxu0 0.0
        %2862 = vmatpush1.msra.mxu0 0.0
        %2863 = vmatprep.subr.mxu0 0.0
        %2864 = vmatpush1.msra.mxu0 0.0
        %2865 = vmatprep.subr.mxu0 0.0
        %2866 = vmatpush1.msra.mxu0 0.0
        %2867 = vmatprep.subr.mxu0 0.0
        %2868 = vmatpush1.msra.mxu0 0.0
        %2869 = vmatprep.subr.mxu0 0.0
        %2870 = vmatpush1.msra.mxu0 0.0
        %2871 = vmatprep.subr.mxu0 0.0
        %2872 = vmatpush1.msra.mxu0 0.0
        %2873 = vmatprep.subr.mxu0 0.0
        %2874 = vmatpush1.msra.mxu0 0.0
        %2875 = vmatprep.subr.mxu0 0.0
        %2876 = vmatpush1.msra.mxu0 0.0
        %2877 = vmatprep.subr.mxu0 0.0
        %2878 = vmatpush1.msra.mxu0 0.0
        %2879 = vmatprep.subr.mxu0 0.0
        %2880 = vmatpush1.msra.mxu0 0.0
        %2881 = vmatprep.subr.mxu0 0.0
        %2882 = vmatpush1.msra.mxu0 0.0
        %2883 = vmatprep.subr.mxu0 0.0
        %2884 = vmatpush1.msra.mxu0 0.0
        %2885 = vmatprep.subr.mxu0 0.0
        %2886 = vmatpush1.msra.mxu0 0.0
        %2887 = vmatprep.subr.mxu0 0.0
        %2888 = vmatpush1.msra.mxu0 0.0
        %2889 = vmatprep.subr.mxu0 0.0
        %2890 = vmatpush1.msra.mxu0 0.0
        %2891 = vmatprep.subr.mxu0 0.0
        %2892 = vmatpush1.msra.mxu0 0.0
        %2893 = vmatprep.mubr.f32.mxu0 0.0
        %2894 = vmatmul.mubr.f32.gmra.mrb[0].mxu0 %v2787
        %v2895 = vpop.f32.mrb[0].mxu0
        %v2896 = vadd.f32 0.0, %v2895
        %v2897 = vpop.f32.mrb[0].mxu0
        %2898 = vmatprep.mubr.f32.mxu0 0.0
        %2899 = vmatmul.mubr.f32.gmra.mrb[0].mxu0 %v2788
        %v2900 = vpop.f32.mrb[0].mxu0
        %v2901 = vadd.f32 0.0, %v2900
        %v2902 = vpop.f32.mrb[0].mxu0
        %2903 = vmatprep.mubr.f32.mxu0 0.0
        %2904 = vmatmul.mubr.f32.gmra.mrb[0].mxu0 %v2789
        %v2905 = vpop.f32.mrb[0].mxu0
        %v2906 = vadd.f32 0.0, %v2905
        %v2907 = vpop.f32.mrb[0].mxu0
        %2908 = vmatprep.mubr.f32.mxu0 0.0
        %2909 = vmatmul.mubr.f32.gmra.mrb[0].mxu0 %v2790
        %v2910 = vpop.f32.mrb[0].mxu0
        %v2911 = vadd.f32 0.0, %v2910
        %v2912 = vpop.f32.mrb[0].mxu0
        %2913 = vmatprep.mubr.f32.mxu0 0.0
        %2914 = vmatmul.mubr.f32.gmra.mrb[0].mxu0 %v2791
        %v2915 = vpop.f32.mrb[0].mxu0
        %v2916 = vadd.f32 0.0, %v2915
        %v2917 = vpop.f32.mrb[0].mxu0
        %2918 = vmatprep.mubr.f32.mxu0 0.0
        %2919 = vmatmul.mubr.f32.gmra.mrb[0].mxu0 %v2792
        %v2920 = vpop.f32.mrb[0].mxu0
        %v2921 = vadd.f32 0.0, %v2920
        %v2922 = vpop.f32.mrb[0].mxu0
        %2923 = vmatprep.mubr.f32.mxu0 0.0
        %2924 = vmatmul.mubr.f32.gmra.mrb[0].mxu0 %v2793
        %v2925 = vpop.f32.mrb[0].mxu0
        %v2926 = vadd.f32 0.0, %v2925
        %v2927 = vpop.f32.mrb[0].mxu0
        %2928 = vmatprep.mubr.f32.mxu0 0.0
        %2929 = vmatmul.mubr.f32.gmra.mrb[0].mxu0 %v2794
        %v2930 = vpop.f32.mrb[0].mxu0
        %v2931 = vadd.f32 0.0, %v2930
        %v2932 = vpop.f32.mrb[0].mxu0
        %2933 = vmatprep.mubr.f32.mxu0 0.0
        %2934 = vmatmul.mubr.f32.gmra.mrb[0].mxu0 %v2795
        %v2935 = vpop.f32.mrb[0].mxu0
        %v2936 = vadd.f32 0.0, %v2935
        %v2937 = vpop.f32.mrb[0].mxu0
        %2938 = vmatprep.mubr.f32.mxu0 0.0
        %2939 = vmatmul.mubr.f32.gmra.mrb[0].mxu0 %v2796
        %v2940 = vpop.f32.mrb[0].mxu0
        %v2941 = vadd.f32 0.0, %v2940
        %v2942 = vpop.f32.mrb[0].mxu0
        %2943 = vmatprep.mubr.f32.mxu0 0.0
        %2944 = vmatmul.mubr.f32.gmra.mrb[0].mxu0 %v2797
        %v2945 = vpop.f32.mrb[0].mxu0
        %v2946 = vadd.f32 0.0, %v2945
        %v2947 = vpop.f32.mrb[0].mxu0
        %2948 = vmatprep.mubr.f32.mxu0 0.0
        %2949 = vmatmul.mubr.f32.gmra.mrb[0].mxu0 %v2798
        %v2950 = vpop.f32.mrb[0].mxu0
        %v2951 = vadd.f32 0.0, %v2950
        %v2952 = vpop.f32.mrb[0].mxu0
        %2953 = vmatprep.mubr.f32.mxu0 0.0
        %2954 = vmatmul.mubr.f32.gmra.mrb[0].mxu0 %v2799
        %v2955 = vpop.f32.mrb[0].mxu0
        %v2956 = vadd.f32 0.0, %v2955
        %v2957 = vpop.f32.mrb[0].mxu0
        %2958 = vmatprep.mubr.f32.mxu0 0.0
        %2959 = vmatmul.mubr.f32.gmra.mrb[0].mxu0 %v2800
        %v2960 = vpop.f32.mrb[0].mxu0
        %v2961 = vadd.f32 0.0, %v2960
        %v2962 = vpop.f32.mrb[0].mxu0
        %2963 = vmatprep.mubr.f32.mxu0 0.0
        %2964 = vmatmul.mubr.f32.gmra.mrb[0].mxu0 %v2801
        %v2965 = vpop.f32.mrb[0].mxu0
        %v2966 = vadd.f32 0.0, %v2965
        %v2967 = vpop.f32.mrb[0].mxu0
        %2968 = vmatprep.mubr.f32.mxu0 0.0
        %2969 = vmatmul.mubr.f32.gmra.mrb[0].mxu0 %v2802
        %v2970 = vpop.f32.mrb[0].mxu0
        %v2971 = vadd.f32 0.0, %v2970
        %v2972 = vpop.f32.mrb[0].mxu0
        %2973 = vmatprep.mubr.f32.mxu0 0.0
        %2974 = vmatmul.mubr.f32.gmra.mrb[0].mxu0 %v2803
        %v2975 = vpop.f32.mrb[0].mxu0
        %v2976 = vadd.f32 0.0, %v2975
        %v2977 = vpop.f32.mrb[0].mxu0
        %2978 = vmatprep.mubr.f32.mxu0 0.0
        %2979 = vmatmul.mubr.f32.gmra.mrb[0].mxu0 %v2804
        %v2980 = vpop.f32.mrb[0].mxu0
        %v2981 = vadd.f32 0.0, %v2980
        %v2982 = vpop.f32.mrb[0].mxu0
        %2983 = vmatprep.mubr.f32.mxu0 0.0
        %2984 = vmatmul.mubr.f32.gmra.mrb[0].mxu0 %v2805
        %v2985 = vpop.f32.mrb[0].mxu0
        %v2986 = vadd.f32 0.0, %v2985
        %v2987 = vpop.f32.mrb[0].mxu0
        %2988 = vmatprep.mubr.f32.mxu0 0.0
        %2989 = vmatmul.mubr.f32.gmra.mrb[0].mxu0 %v2806
        %v2990 = vpop.f32.mrb[0].mxu0
        %v2991 = vadd.f32 0.0, %v2990
        %v2992 = vpop.f32.mrb[0].mxu0
        %2993 = vmatprep.mubr.f32.mxu0 0.0
        %2994 = vmatmul.mubr.f32.gmra.mrb[0].mxu0 %v2807
        %v2995 = vpop.f32.mrb[0].mxu0
        %v2996 = vadd.f32 0.0, %v2995
        %v2997 = vpop.f32.mrb[0].mxu0
        %2998 = vmatprep.mubr.f32.mxu0 0.0
        %2999 = vmatmul.mubr.f32.gmra.mrb[0].mxu0 %v2808
        %v3000 = vpop.f32.mrb[0].mxu0
        %v3001 = vadd.f32 0.0, %v3000
        %v3002 = vpop.f32.mrb[0].mxu0
        %3003 = vmatprep.mubr.f32.mxu0 0.0
        %3004 = vmatmul.mubr.f32.gmra.mrb[0].mxu0 %v2809
        %v3005 = vpop.f32.mrb[0].mxu0
        %v3006 = vadd.f32 0.0, %v3005
        %v3007 = vpop.f32.mrb[0].mxu0
        %3008 = vmatprep.mubr.f32.mxu0 0.0
        %3009 = vmatmul.mubr.f32.gmra.mrb[0].mxu0 %v2810
        %v3010 = vpop.f32.mrb[0].mxu0
        %v3011 = vadd.f32 0.0, %v3010
        %v3012 = vpop.f32.mrb[0].mxu0
        %3013 = vmatprep.mubr.f32.mxu0 0.0
        %3014 = vmatmul.mubr.f32.gmra.mrb[0].mxu0 %v2811
        %v3015 = vpop.f32.mrb[0].mxu0
        %v3016 = vadd.f32 0.0, %v3015
        %v3017 = vpop.f32.mrb[0].mxu0
        %3018 = vdwg.mxu0
        %v3019 = vadd.f32 %v2762, %v2896
        %v3020 = vadd.f32 %v2763, %v2901
        %v3021 = vadd.f32 %v2764, %v2906
        %v3022 = vadd.f32 %v2765, %v2911
        %v3023 = vadd.f32 %v2766, %v2916
        %v3024 = vadd.f32 %v2767, %v2921
        %v3025 = vadd.f32 %v2768, %v2926
        %v3026 = vadd.f32 %v2769, %v2931
        %v3027 = vadd.f32 %v2770, %v2936
        %v3028 = vadd.f32 %v2771, %v2941
        %v3029 = vadd.f32 %v2772, %v2946
        %v3030 = vadd.f32 %v2773, %v2951
        %v3031 = vadd.f32 %v2774, %v2956
        %v3032 = vadd.f32 %v2775, %v2961
        %v3033 = vadd.f32 %v2776, %v2966
        %v3034 = vadd.f32 %v2777, %v2971
        %v3035 = vadd.f32 %v2778, %v2976
        %v3036 = vadd.f32 %v2779, %v2981
        %v3037 = vadd.f32 %v2780, %v2986
        %v3038 = vadd.f32 %v2781, %v2991
        %v3039 = vadd.f32 %v2782, %v2996
        %v3040 = vadd.f32 %v2783, %v3001
        %v3041 = vadd.f32 %v2784, %v3006
        %v3042 = vadd.f32 %v2785, %v3011
        %v3043 = vadd.f32 %v2786, %v3016
        %v3044 = vld [vmem:[#allocation2 + $0x15] sm:$0xff]
        %v3045 = vld [vmem:[#allocation2 + $0x1d] sm:$0xff]
        %v3046 = vld [vmem:[#allocation2 + $0x25] sm:$0xff]
        %v3047 = vld [vmem:[#allocation2 + $0x2d] sm:$0xff]
        %v3048 = vld [vmem:[#allocation2 + $0x35] sm:$0xff]
        %v3049 = vld [vmem:[#allocation2 + $0x3d] sm:$0xff]
        %v3050 = vld [vmem:[#allocation2 + $0x45] sm:$0xff]
        %v3051 = vld [vmem:[#allocation2 + $0x4d] sm:$0xff]
        %v3052 = vld [vmem:[#allocation2 + $0x55] sm:$0xff]
        %v3053 = vld [vmem:[#allocation2 + $0x5d] sm:$0xff]
        %v3054 = vld [vmem:[#allocation2 + $0x65] sm:$0xff]
        %v3055 = vld [vmem:[#allocation2 + $0x6d] sm:$0xff]
        %v3056 = vld [vmem:[#allocation2 + $0x75] sm:$0xff]
        %v3057 = vld [vmem:[#allocation2 + $0x7d] sm:$0xff]
        %v3058 = vld [vmem:[#allocation2 + $0x85] sm:$0xff]
        %v3059 = vld [vmem:[#allocation2 + $0x8d] sm:$0xff]
        %v3060 = vld [vmem:[#allocation2 + $0x95] sm:$0xff]
        %v3061 = vld [vmem:[#allocation2 + $0x9d] sm:$0xff]
        %v3062 = vld [vmem:[#allocation2 + $0xa5] sm:$0xff]
        %v3063 = vld [vmem:[#allocation2 + $0xad] sm:$0xff]
        %v3064 = vld [vmem:[#allocation2 + $0xb5] sm:$0xff]
        %v3065 = vld [vmem:[#allocation2 + $0xbd] sm:$0xff]
        %v3066 = vld [vmem:[#allocation2 + $0xc5] sm:$0xff]
        %v3067 = vld [vmem:[#allocation2 + $0xcd] sm:$0xff]
        %v3068 = vld [vmem:[#allocation2 + $0xd5] sm:$0xff]
        %s3069 = scalar_lea.vmem %s389, 1280 [#allocation5]
        %v3070 = vld [vmem:[%s3069] sm:$0xff]
        %v3071 = vld [vmem:[%s3069 + $0x8] sm:$0xff]
        %v3072 = vld [vmem:[%s3069 + $0x10] sm:$0xff]
        %v3073 = vld [vmem:[%s3069 + $0x18] sm:$0xff]
        %v3074 = vld [vmem:[%s3069 + $0x20] sm:$0xff]
        %v3075 = vld [vmem:[%s3069 + $0x28] sm:$0xff]
        %v3076 = vld [vmem:[%s3069 + $0x30] sm:$0xff]
        %v3077 = vld [vmem:[%s3069 + $0x38] sm:$0xff]
        %v3078 = vld [vmem:[%s3069 + $0x40] sm:$0xff]
        %v3079 = vld [vmem:[%s3069 + $0x48] sm:$0xff]
        %v3080 = vld [vmem:[%s3069 + $0x50] sm:$0xff]
        %v3081 = vld [vmem:[%s3069 + $0x58] sm:$0xff]
        %v3082 = vld [vmem:[%s3069 + $0x60] sm:$0xff]
        %v3083 = vld [vmem:[%s3069 + $0x68] sm:$0xff]
        %v3084 = vld [vmem:[%s3069 + $0x70] sm:$0xff]
        %v3085 = vld [vmem:[%s3069 + $0x78] sm:$0xff]
        %3086 = vmatprep.subr.mxu0 0.0
        %3087 = vmatpush1.msra.mxu0 %v3070
        %3088 = vmatprep.subr.mxu0 0.0
        %3089 = vmatpush1.msra.mxu0 %v3071
        %3090 = vmatprep.subr.mxu0 0.0
        %3091 = vmatpush1.msra.mxu0 %v3072
        %3092 = vmatprep.subr.mxu0 0.0
        %3093 = vmatpush1.msra.mxu0 %v3073
        %3094 = vmatprep.subr.mxu0 0.0
        %3095 = vmatpush1.msra.mxu0 %v3074
        %3096 = vmatprep.subr.mxu0 0.0
        %3097 = vmatpush1.msra.mxu0 %v3075
        %3098 = vmatprep.subr.mxu0 0.0
        %3099 = vmatpush1.msra.mxu0 %v3076
        %3100 = vmatprep.subr.mxu0 0.0
        %3101 = vmatpush1.msra.mxu0 %v3077
        %3102 = vmatprep.subr.mxu0 0.0
        %3103 = vmatpush1.msra.mxu0 %v3078
        %3104 = vmatprep.subr.mxu0 0.0
        %3105 = vmatpush1.msra.mxu0 %v3079
        %3106 = vmatprep.subr.mxu0 0.0
        %3107 = vmatpush1.msra.mxu0 %v3080
        %3108 = vmatprep.subr.mxu0 0.0
        %3109 = vmatpush1.msra.mxu0 %v3081
        %3110 = vmatprep.subr.mxu0 0.0
        %3111 = vmatpush1.msra.mxu0 %v3082
        %3112 = vmatprep.subr.mxu0 0.0
        %3113 = vmatpush1.msra.mxu0 %v3083
        %3114 = vmatprep.subr.mxu0 0.0
        %3115 = vmatpush1.msra.mxu0 %v3084
        %3116 = vmatprep.subr.mxu0 0.0
        %3117 = vmatpush1.msra.mxu0 %v3085
        %3118 = vmatprep.subr.mxu0 0.0
        %3119 = vmatpush1.msra.mxu0 0.0
        %3120 = vmatprep.subr.mxu0 0.0
        %3121 = vmatpush1.msra.mxu0 0.0
        %3122 = vmatprep.subr.mxu0 0.0
        %3123 = vmatpush1.msra.mxu0 0.0
        %3124 = vmatprep.subr.mxu0 0.0
        %3125 = vmatpush1.msra.mxu0 0.0
        %3126 = vmatprep.subr.mxu0 0.0
        %3127 = vmatpush1.msra.mxu0 0.0
        %3128 = vmatprep.subr.mxu0 0.0
        %3129 = vmatpush1.msra.mxu0 0.0
        %3130 = vmatprep.subr.mxu0 0.0
        %3131 = vmatpush1.msra.mxu0 0.0
        %3132 = vmatprep.subr.mxu0 0.0
        %3133 = vmatpush1.msra.mxu0 0.0
        %3134 = vmatprep.subr.mxu0 0.0
        %3135 = vmatpush1.msra.mxu0 0.0
        %3136 = vmatprep.subr.mxu0 0.0
        %3137 = vmatpush1.msra.mxu0 0.0
        %3138 = vmatprep.subr.mxu0 0.0
        %3139 = vmatpush1.msra.mxu0 0.0
        %3140 = vmatprep.subr.mxu0 0.0
        %3141 = vmatpush1.msra.mxu0 0.0
        %3142 = vmatprep.subr.mxu0 0.0
        %3143 = vmatpush1.msra.mxu0 0.0
        %3144 = vmatprep.subr.mxu0 0.0
        %3145 = vmatpush1.msra.mxu0 0.0
        %3146 = vmatprep.subr.mxu0 0.0
        %3147 = vmatpush1.msra.mxu0 0.0
        %3148 = vmatprep.subr.mxu0 0.0
        %3149 = vmatpush1.msra.mxu0 0.0
        %3150 = vmatprep.mubr.f32.mxu0 0.0
        %3151 = vmatmul.mubr.f32.gmra.mrb[0].mxu0 %v3044
        %v3152 = vpop.f32.mrb[0].mxu0
        %v3153 = vadd.f32 0.0, %v3152
        %v3154 = vpop.f32.mrb[0].mxu0
        %3155 = vmatprep.mubr.f32.mxu0 0.0
        %3156 = vmatmul.mubr.f32.gmra.mrb[0].mxu0 %v3045
        %v3157 = vpop.f32.mrb[0].mxu0
        %v3158 = vadd.f32 0.0, %v3157
        %v3159 = vpop.f32.mrb[0].mxu0
        %3160 = vmatprep.mubr.f32.mxu0 0.0
        %3161 = vmatmul.mubr.f32.gmra.mrb[0].mxu0 %v3046
        %v3162 = vpop.f32.mrb[0].mxu0
        %v3163 = vadd.f32 0.0, %v3162
        %v3164 = vpop.f32.mrb[0].mxu0
        %3165 = vmatprep.mubr.f32.mxu0 0.0
        %3166 = vmatmul.mubr.f32.gmra.mrb[0].mxu0 %v3047
        %v3167 = vpop.f32.mrb[0].mxu0
        %v3168 = vadd.f32 0.0, %v3167
        %v3169 = vpop.f32.mrb[0].mxu0
        %3170 = vmatprep.mubr.f32.mxu0 0.0
        %3171 = vmatmul.mubr.f32.gmra.mrb[0].mxu0 %v3048
        %v3172 = vpop.f32.mrb[0].mxu0
        %v3173 = vadd.f32 0.0, %v3172
        %v3174 = vpop.f32.mrb[0].mxu0
        %3175 = vmatprep.mubr.f32.mxu0 0.0
        %3176 = vmatmul.mubr.f32.gmra.mrb[0].mxu0 %v3049
        %v3177 = vpop.f32.mrb[0].mxu0
        %v3178 = vadd.f32 0.0, %v3177
        %v3179 = vpop.f32.mrb[0].mxu0
        %3180 = vmatprep.mubr.f32.mxu0 0.0
        %3181 = vmatmul.mubr.f32.gmra.mrb[0].mxu0 %v3050
        %v3182 = vpop.f32.mrb[0].mxu0
        %v3183 = vadd.f32 0.0, %v3182
        %v3184 = vpop.f32.mrb[0].mxu0
        %3185 = vmatprep.mubr.f32.mxu0 0.0
        %3186 = vmatmul.mubr.f32.gmra.mrb[0].mxu0 %v3051
        %v3187 = vpop.f32.mrb[0].mxu0
        %v3188 = vadd.f32 0.0, %v3187
        %v3189 = vpop.f32.mrb[0].mxu0
        %3190 = vmatprep.mubr.f32.mxu0 0.0
        %3191 = vmatmul.mubr.f32.gmra.mrb[0].mxu0 %v3052
        %v3192 = vpop.f32.mrb[0].mxu0
        %v3193 = vadd.f32 0.0, %v3192
        %v3194 = vpop.f32.mrb[0].mxu0
        %3195 = vmatprep.mubr.f32.mxu0 0.0
        %3196 = vmatmul.mubr.f32.gmra.mrb[0].mxu0 %v3053
        %v3197 = vpop.f32.mrb[0].mxu0
        %v3198 = vadd.f32 0.0, %v3197
        %v3199 = vpop.f32.mrb[0].mxu0
        %3200 = vmatprep.mubr.f32.mxu0 0.0
        %3201 = vmatmul.mubr.f32.gmra.mrb[0].mxu0 %v3054
        %v3202 = vpop.f32.mrb[0].mxu0
        %v3203 = vadd.f32 0.0, %v3202
        %v3204 = vpop.f32.mrb[0].mxu0
        %3205 = vmatprep.mubr.f32.mxu0 0.0
        %3206 = vmatmul.mubr.f32.gmra.mrb[0].mxu0 %v3055
        %v3207 = vpop.f32.mrb[0].mxu0
        %v3208 = vadd.f32 0.0, %v3207
        %v3209 = vpop.f32.mrb[0].mxu0
        %3210 = vmatprep.mubr.f32.mxu0 0.0
        %3211 = vmatmul.mubr.f32.gmra.mrb[0].mxu0 %v3056
        %v3212 = vpop.f32.mrb[0].mxu0
        %v3213 = vadd.f32 0.0, %v3212
        %v3214 = vpop.f32.mrb[0].mxu0
        %3215 = vmatprep.mubr.f32.mxu0 0.0
        %3216 = vmatmul.mubr.f32.gmra.mrb[0].mxu0 %v3057
        %v3217 = vpop.f32.mrb[0].mxu0
        %v3218 = vadd.f32 0.0, %v3217
        %v3219 = vpop.f32.mrb[0].mxu0
        %3220 = vmatprep.mubr.f32.mxu0 0.0
        %3221 = vmatmul.mubr.f32.gmra.mrb[0].mxu0 %v3058
        %v3222 = vpop.f32.mrb[0].mxu0
        %v3223 = vadd.f32 0.0, %v3222
        %v3224 = vpop.f32.mrb[0].mxu0
        %3225 = vmatprep.mubr.f32.mxu0 0.0
        %3226 = vmatmul.mubr.f32.gmra.mrb[0].mxu0 %v3059
        %v3227 = vpop.f32.mrb[0].mxu0
        %v3228 = vadd.f32 0.0, %v3227
        %v3229 = vpop.f32.mrb[0].mxu0
        %3230 = vmatprep.mubr.f32.mxu0 0.0
        %3231 = vmatmul.mubr.f32.gmra.mrb[0].mxu0 %v3060
        %v3232 = vpop.f32.mrb[0].mxu0
        %v3233 = vadd.f32 0.0, %v3232
        %v3234 = vpop.f32.mrb[0].mxu0
        %3235 = vmatprep.mubr.f32.mxu0 0.0
        %3236 = vmatmul.mubr.f32.gmra.mrb[0].mxu0 %v3061
        %v3237 = vpop.f32.mrb[0].mxu0
        %v3238 = vadd.f32 0.0, %v3237
        %v3239 = vpop.f32.mrb[0].mxu0
        %3240 = vmatprep.mubr.f32.mxu0 0.0
        %3241 = vmatmul.mubr.f32.gmra.mrb[0].mxu0 %v3062
        %v3242 = vpop.f32.mrb[0].mxu0
        %v3243 = vadd.f32 0.0, %v3242
        %v3244 = vpop.f32.mrb[0].mxu0
        %3245 = vmatprep.mubr.f32.mxu0 0.0
        %3246 = vmatmul.mubr.f32.gmra.mrb[0].mxu0 %v3063
        %v3247 = vpop.f32.mrb[0].mxu0
        %v3248 = vadd.f32 0.0, %v3247
        %v3249 = vpop.f32.mrb[0].mxu0
        %3250 = vmatprep.mubr.f32.mxu0 0.0
        %3251 = vmatmul.mubr.f32.gmra.mrb[0].mxu0 %v3064
        %v3252 = vpop.f32.mrb[0].mxu0
        %v3253 = vadd.f32 0.0, %v3252
        %v3254 = vpop.f32.mrb[0].mxu0
        %3255 = vmatprep.mubr.f32.mxu0 0.0
        %3256 = vmatmul.mubr.f32.gmra.mrb[0].mxu0 %v3065
        %v3257 = vpop.f32.mrb[0].mxu0
        %v3258 = vadd.f32 0.0, %v3257
        %v3259 = vpop.f32.mrb[0].mxu0
        %3260 = vmatprep.mubr.f32.mxu0 0.0
        %3261 = vmatmul.mubr.f32.gmra.mrb[0].mxu0 %v3066
        %v3262 = vpop.f32.mrb[0].mxu0
        %v3263 = vadd.f32 0.0, %v3262
        %v3264 = vpop.f32.mrb[0].mxu0
        %3265 = vmatprep.mubr.f32.mxu0 0.0
        %3266 = vmatmul.mubr.f32.gmra.mrb[0].mxu0 %v3067
        %v3267 = vpop.f32.mrb[0].mxu0
        %v3268 = vadd.f32 0.0, %v3267
        %v3269 = vpop.f32.mrb[0].mxu0
        %3270 = vmatprep.mubr.f32.mxu0 0.0
        %3271 = vmatmul.mubr.f32.gmra.mrb[0].mxu0 %v3068
        %v3272 = vpop.f32.mrb[0].mxu0
        %v3273 = vadd.f32 0.0, %v3272
        %v3274 = vpop.f32.mrb[0].mxu0
        %3275 = vdwg.mxu0
        %v3276 = vadd.f32 %v3019, %v3153
        %v3277 = vadd.f32 %v3020, %v3158
        %v3278 = vadd.f32 %v3021, %v3163
        %v3279 = vadd.f32 %v3022, %v3168
        %v3280 = vadd.f32 %v3023, %v3173
        %v3281 = vadd.f32 %v3024, %v3178
        %v3282 = vadd.f32 %v3025, %v3183
        %v3283 = vadd.f32 %v3026, %v3188
        %v3284 = vadd.f32 %v3027, %v3193
        %v3285 = vadd.f32 %v3028, %v3198
        %v3286 = vadd.f32 %v3029, %v3203
        %v3287 = vadd.f32 %v3030, %v3208
        %v3288 = vadd.f32 %v3031, %v3213
        %v3289 = vadd.f32 %v3032, %v3218
        %v3290 = vadd.f32 %v3033, %v3223
        %v3291 = vadd.f32 %v3034, %v3228
        %v3292 = vadd.f32 %v3035, %v3233
        %v3293 = vadd.f32 %v3036, %v3238
        %v3294 = vadd.f32 %v3037, %v3243
        %v3295 = vadd.f32 %v3038, %v3248
        %v3296 = vadd.f32 %v3039, %v3253
        %v3297 = vadd.f32 %v3040, %v3258
        %v3298 = vadd.f32 %v3041, %v3263
        %v3299 = vadd.f32 %v3042, %v3268
        %v3300 = vadd.f32 %v3043, %v3273
        %v3301 = vld [vmem:[#allocation2 + $0x16] sm:$0xff]
        %v3302 = vld [vmem:[#allocation2 + $0x1e] sm:$0xff]
        %v3303 = vld [vmem:[#allocation2 + $0x26] sm:$0xff]
        %v3304 = vld [vmem:[#allocation2 + $0x2e] sm:$0xff]
        %v3305 = vld [vmem:[#allocation2 + $0x36] sm:$0xff]
        %v3306 = vld [vmem:[#allocation2 + $0x3e] sm:$0xff]
        %v3307 = vld [vmem:[#allocation2 + $0x46] sm:$0xff]
        %v3308 = vld [vmem:[#allocation2 + $0x4e] sm:$0xff]
        %v3309 = vld [vmem:[#allocation2 + $0x56] sm:$0xff]
        %v3310 = vld [vmem:[#allocation2 + $0x5e] sm:$0xff]
        %v3311 = vld [vmem:[#allocation2 + $0x66] sm:$0xff]
        %v3312 = vld [vmem:[#allocation2 + $0x6e] sm:$0xff]
        %v3313 = vld [vmem:[#allocation2 + $0x76] sm:$0xff]
        %v3314 = vld [vmem:[#allocation2 + $0x7e] sm:$0xff]
        %v3315 = vld [vmem:[#allocation2 + $0x86] sm:$0xff]
        %v3316 = vld [vmem:[#allocation2 + $0x8e] sm:$0xff]
        %v3317 = vld [vmem:[#allocation2 + $0x96] sm:$0xff]
        %v3318 = vld [vmem:[#allocation2 + $0x9e] sm:$0xff]
        %v3319 = vld [vmem:[#allocation2 + $0xa6] sm:$0xff]
        %v3320 = vld [vmem:[#allocation2 + $0xae] sm:$0xff]
        %v3321 = vld [vmem:[#allocation2 + $0xb6] sm:$0xff]
        %v3322 = vld [vmem:[#allocation2 + $0xbe] sm:$0xff]
        %v3323 = vld [vmem:[#allocation2 + $0xc6] sm:$0xff]
        %v3324 = vld [vmem:[#allocation2 + $0xce] sm:$0xff]
        %v3325 = vld [vmem:[#allocation2 + $0xd6] sm:$0xff]
        %s3326 = scalar_lea.vmem %s389, 1408 [#allocation5]
        %v3327 = vld [vmem:[%s3326] sm:$0xff]
        %v3328 = vld [vmem:[%s3326 + $0x8] sm:$0xff]
        %v3329 = vld [vmem:[%s3326 + $0x10] sm:$0xff]
        %v3330 = vld [vmem:[%s3326 + $0x18] sm:$0xff]
        %v3331 = vld [vmem:[%s3326 + $0x20] sm:$0xff]
        %v3332 = vld [vmem:[%s3326 + $0x28] sm:$0xff]
        %v3333 = vld [vmem:[%s3326 + $0x30] sm:$0xff]
        %v3334 = vld [vmem:[%s3326 + $0x38] sm:$0xff]
        %v3335 = vld [vmem:[%s3326 + $0x40] sm:$0xff]
        %v3336 = vld [vmem:[%s3326 + $0x48] sm:$0xff]
        %v3337 = vld [vmem:[%s3326 + $0x50] sm:$0xff]
        %v3338 = vld [vmem:[%s3326 + $0x58] sm:$0xff]
        %v3339 = vld [vmem:[%s3326 + $0x60] sm:$0xff]
        %v3340 = vld [vmem:[%s3326 + $0x68] sm:$0xff]
        %v3341 = vld [vmem:[%s3326 + $0x70] sm:$0xff]
        %v3342 = vld [vmem:[%s3326 + $0x78] sm:$0xff]
        %3343 = vmatprep.subr.mxu0 0.0
        %3344 = vmatpush1.msra.mxu0 %v3327
        %3345 = vmatprep.subr.mxu0 0.0
        %3346 = vmatpush1.msra.mxu0 %v3328
        %3347 = vmatprep.subr.mxu0 0.0
        %3348 = vmatpush1.msra.mxu0 %v3329
        %3349 = vmatprep.subr.mxu0 0.0
        %3350 = vmatpush1.msra.mxu0 %v3330
        %3351 = vmatprep.subr.mxu0 0.0
        %3352 = vmatpush1.msra.mxu0 %v3331
        %3353 = vmatprep.subr.mxu0 0.0
        %3354 = vmatpush1.msra.mxu0 %v3332
        %3355 = vmatprep.subr.mxu0 0.0
        %3356 = vmatpush1.msra.mxu0 %v3333
        %3357 = vmatprep.subr.mxu0 0.0
        %3358 = vmatpush1.msra.mxu0 %v3334
        %3359 = vmatprep.subr.mxu0 0.0
        %3360 = vmatpush1.msra.mxu0 %v3335
        %3361 = vmatprep.subr.mxu0 0.0
        %3362 = vmatpush1.msra.mxu0 %v3336
        %3363 = vmatprep.subr.mxu0 0.0
        %3364 = vmatpush1.msra.mxu0 %v3337
        %3365 = vmatprep.subr.mxu0 0.0
        %3366 = vmatpush1.msra.mxu0 %v3338
        %3367 = vmatprep.subr.mxu0 0.0
        %3368 = vmatpush1.msra.mxu0 %v3339
        %3369 = vmatprep.subr.mxu0 0.0
        %3370 = vmatpush1.msra.mxu0 %v3340
        %3371 = vmatprep.subr.mxu0 0.0
        %3372 = vmatpush1.msra.mxu0 %v3341
        %3373 = vmatprep.subr.mxu0 0.0
        %3374 = vmatpush1.msra.mxu0 %v3342
        %3375 = vmatprep.subr.mxu0 0.0
        %3376 = vmatpush1.msra.mxu0 0.0
        %3377 = vmatprep.subr.mxu0 0.0
        %3378 = vmatpush1.msra.mxu0 0.0
        %3379 = vmatprep.subr.mxu0 0.0
        %3380 = vmatpush1.msra.mxu0 0.0
        %3381 = vmatprep.subr.mxu0 0.0
        %3382 = vmatpush1.msra.mxu0 0.0
        %3383 = vmatprep.subr.mxu0 0.0
        %3384 = vmatpush1.msra.mxu0 0.0
        %3385 = vmatprep.subr.mxu0 0.0
        %3386 = vmatpush1.msra.mxu0 0.0
        %3387 = vmatprep.subr.mxu0 0.0
        %3388 = vmatpush1.msra.mxu0 0.0
        %3389 = vmatprep.subr.mxu0 0.0
        %3390 = vmatpush1.msra.mxu0 0.0
        %3391 = vmatprep.subr.mxu0 0.0
        %3392 = vmatpush1.msra.mxu0 0.0
        %3393 = vmatprep.subr.mxu0 0.0
        %3394 = vmatpush1.msra.mxu0 0.0
        %3395 = vmatprep.subr.mxu0 0.0
        %3396 = vmatpush1.msra.mxu0 0.0
        %3397 = vmatprep.subr.mxu0 0.0
        %3398 = vmatpush1.msra.mxu0 0.0
        %3399 = vmatprep.subr.mxu0 0.0
        %3400 = vmatpush1.msra.mxu0 0.0
        %3401 = vmatprep.subr.mxu0 0.0
        %3402 = vmatpush1.msra.mxu0 0.0
        %3403 = vmatprep.subr.mxu0 0.0
        %3404 = vmatpush1.msra.mxu0 0.0
        %3405 = vmatprep.subr.mxu0 0.0
        %3406 = vmatpush1.msra.mxu0 0.0
        %3407 = vmatprep.mubr.f32.mxu0 0.0
        %3408 = vmatmul.mubr.f32.gmra.mrb[0].mxu0 %v3301
        %v3409 = vpop.f32.mrb[0].mxu0
        %v3410 = vadd.f32 0.0, %v3409
        %v3411 = vpop.f32.mrb[0].mxu0
        %3412 = vmatprep.mubr.f32.mxu0 0.0
        %3413 = vmatmul.mubr.f32.gmra.mrb[0].mxu0 %v3302
        %v3414 = vpop.f32.mrb[0].mxu0
        %v3415 = vadd.f32 0.0, %v3414
        %v3416 = vpop.f32.mrb[0].mxu0
        %3417 = vmatprep.mubr.f32.mxu0 0.0
        %3418 = vmatmul.mubr.f32.gmra.mrb[0].mxu0 %v3303
        %v3419 = vpop.f32.mrb[0].mxu0
        %v3420 = vadd.f32 0.0, %v3419
        %v3421 = vpop.f32.mrb[0].mxu0
        %3422 = vmatprep.mubr.f32.mxu0 0.0
        %3423 = vmatmul.mubr.f32.gmra.mrb[0].mxu0 %v3304
        %v3424 = vpop.f32.mrb[0].mxu0
        %v3425 = vadd.f32 0.0, %v3424
        %v3426 = vpop.f32.mrb[0].mxu0
        %3427 = vmatprep.mubr.f32.mxu0 0.0
        %3428 = vmatmul.mubr.f32.gmra.mrb[0].mxu0 %v3305
        %v3429 = vpop.f32.mrb[0].mxu0
        %v3430 = vadd.f32 0.0, %v3429
        %v3431 = vpop.f32.mrb[0].mxu0
        %3432 = vmatprep.mubr.f32.mxu0 0.0
        %3433 = vmatmul.mubr.f32.gmra.mrb[0].mxu0 %v3306
        %v3434 = vpop.f32.mrb[0].mxu0
        %v3435 = vadd.f32 0.0, %v3434
        %v3436 = vpop.f32.mrb[0].mxu0
        %3437 = vmatprep.mubr.f32.mxu0 0.0
        %3438 = vmatmul.mubr.f32.gmra.mrb[0].mxu0 %v3307
        %v3439 = vpop.f32.mrb[0].mxu0
        %v3440 = vadd.f32 0.0, %v3439
        %v3441 = vpop.f32.mrb[0].mxu0
        %3442 = vmatprep.mubr.f32.mxu0 0.0
        %3443 = vmatmul.mubr.f32.gmra.mrb[0].mxu0 %v3308
        %v3444 = vpop.f32.mrb[0].mxu0
        %v3445 = vadd.f32 0.0, %v3444
        %v3446 = vpop.f32.mrb[0].mxu0
        %3447 = vmatprep.mubr.f32.mxu0 0.0
        %3448 = vmatmul.mubr.f32.gmra.mrb[0].mxu0 %v3309
        %v3449 = vpop.f32.mrb[0].mxu0
        %v3450 = vadd.f32 0.0, %v3449
        %v3451 = vpop.f32.mrb[0].mxu0
        %3452 = vmatprep.mubr.f32.mxu0 0.0
        %3453 = vmatmul.mubr.f32.gmra.mrb[0].mxu0 %v3310
        %v3454 = vpop.f32.mrb[0].mxu0
        %v3455 = vadd.f32 0.0, %v3454
        %v3456 = vpop.f32.mrb[0].mxu0
        %3457 = vmatprep.mubr.f32.mxu0 0.0
        %3458 = vmatmul.mubr.f32.gmra.mrb[0].mxu0 %v3311
        %v3459 = vpop.f32.mrb[0].mxu0
        %v3460 = vadd.f32 0.0, %v3459
        %v3461 = vpop.f32.mrb[0].mxu0
        %3462 = vmatprep.mubr.f32.mxu0 0.0
        %3463 = vmatmul.mubr.f32.gmra.mrb[0].mxu0 %v3312
        %v3464 = vpop.f32.mrb[0].mxu0
        %v3465 = vadd.f32 0.0, %v3464
        %v3466 = vpop.f32.mrb[0].mxu0
        %3467 = vmatprep.mubr.f32.mxu0 0.0
        %3468 = vmatmul.mubr.f32.gmra.mrb[0].mxu0 %v3313
        %v3469 = vpop.f32.mrb[0].mxu0
        %v3470 = vadd.f32 0.0, %v3469
        %v3471 = vpop.f32.mrb[0].mxu0
        %3472 = vmatprep.mubr.f32.mxu0 0.0
        %3473 = vmatmul.mubr.f32.gmra.mrb[0].mxu0 %v3314
        %v3474 = vpop.f32.mrb[0].mxu0
        %v3475 = vadd.f32 0.0, %v3474
        %v3476 = vpop.f32.mrb[0].mxu0
        %3477 = vmatprep.mubr.f32.mxu0 0.0
        %3478 = vmatmul.mubr.f32.gmra.mrb[0].mxu0 %v3315
        %v3479 = vpop.f32.mrb[0].mxu0
        %v3480 = vadd.f32 0.0, %v3479
        %v3481 = vpop.f32.mrb[0].mxu0
        %3482 = vmatprep.mubr.f32.mxu0 0.0
        %3483 = vmatmul.mubr.f32.gmra.mrb[0].mxu0 %v3316
        %v3484 = vpop.f32.mrb[0].mxu0
        %v3485 = vadd.f32 0.0, %v3484
        %v3486 = vpop.f32.mrb[0].mxu0
        %3487 = vmatprep.mubr.f32.mxu0 0.0
        %3488 = vmatmul.mubr.f32.gmra.mrb[0].mxu0 %v3317
        %v3489 = vpop.f32.mrb[0].mxu0
        %v3490 = vadd.f32 0.0, %v3489
        %v3491 = vpop.f32.mrb[0].mxu0
        %3492 = vmatprep.mubr.f32.mxu0 0.0
        %3493 = vmatmul.mubr.f32.gmra.mrb[0].mxu0 %v3318
        %v3494 = vpop.f32.mrb[0].mxu0
        %v3495 = vadd.f32 0.0, %v3494
        %v3496 = vpop.f32.mrb[0].mxu0
        %3497 = vmatprep.mubr.f32.mxu0 0.0
        %3498 = vmatmul.mubr.f32.gmra.mrb[0].mxu0 %v3319
        %v3499 = vpop.f32.mrb[0].mxu0
        %v3500 = vadd.f32 0.0, %v3499
        %v3501 = vpop.f32.mrb[0].mxu0
        %3502 = vmatprep.mubr.f32.mxu0 0.0
        %3503 = vmatmul.mubr.f32.gmra.mrb[0].mxu0 %v3320
        %v3504 = vpop.f32.mrb[0].mxu0
        %v3505 = vadd.f32 0.0, %v3504
        %v3506 = vpop.f32.mrb[0].mxu0
        %3507 = vmatprep.mubr.f32.mxu0 0.0
        %3508 = vmatmul.mubr.f32.gmra.mrb[0].mxu0 %v3321
        %v3509 = vpop.f32.mrb[0].mxu0
        %v3510 = vadd.f32 0.0, %v3509
        %v3511 = vpop.f32.mrb[0].mxu0
        %3512 = vmatprep.mubr.f32.mxu0 0.0
        %3513 = vmatmul.mubr.f32.gmra.mrb[0].mxu0 %v3322
        %v3514 = vpop.f32.mrb[0].mxu0
        %v3515 = vadd.f32 0.0, %v3514
        %v3516 = vpop.f32.mrb[0].mxu0
        %3517 = vmatprep.mubr.f32.mxu0 0.0
        %3518 = vmatmul.mubr.f32.gmra.mrb[0].mxu0 %v3323
        %v3519 = vpop.f32.mrb[0].mxu0
        %v3520 = vadd.f32 0.0, %v3519
        %v3521 = vpop.f32.mrb[0].mxu0
        %3522 = vmatprep.mubr.f32.mxu0 0.0
        %3523 = vmatmul.mubr.f32.gmra.mrb[0].mxu0 %v3324
        %v3524 = vpop.f32.mrb[0].mxu0
        %v3525 = vadd.f32 0.0, %v3524
        %v3526 = vpop.f32.mrb[0].mxu0
        %3527 = vmatprep.mubr.f32.mxu0 0.0
        %3528 = vmatmul.mubr.f32.gmra.mrb[0].mxu0 %v3325
        %v3529 = vpop.f32.mrb[0].mxu0
        %v3530 = vadd.f32 0.0, %v3529
        %v3531 = vpop.f32.mrb[0].mxu0
        %3532 = vdwg.mxu0
        %v3533 = vadd.f32 %v3276, %v3410
        %v3534 = vadd.f32 %v3277, %v3415
        %v3535 = vadd.f32 %v3278, %v3420
        %v3536 = vadd.f32 %v3279, %v3425
        %v3537 = vadd.f32 %v3280, %v3430
        %v3538 = vadd.f32 %v3281, %v3435
        %v3539 = vadd.f32 %v3282, %v3440
        %v3540 = vadd.f32 %v3283, %v3445
        %v3541 = vadd.f32 %v3284, %v3450
        %v3542 = vadd.f32 %v3285, %v3455
        %v3543 = vadd.f32 %v3286, %v3460
        %v3544 = vadd.f32 %v3287, %v3465
        %v3545 = vadd.f32 %v3288, %v3470
        %v3546 = vadd.f32 %v3289, %v3475
        %v3547 = vadd.f32 %v3290, %v3480
        %v3548 = vadd.f32 %v3291, %v3485
        %v3549 = vadd.f32 %v3292, %v3490
        %v3550 = vadd.f32 %v3293, %v3495
        %v3551 = vadd.f32 %v3294, %v3500
        %v3552 = vadd.f32 %v3295, %v3505
        %v3553 = vadd.f32 %v3296, %v3510
        %v3554 = vadd.f32 %v3297, %v3515
        %v3555 = vadd.f32 %v3298, %v3520
        %v3556 = vadd.f32 %v3299, %v3525
        %v3557 = vadd.f32 %v3300, %v3530
        %v3558 = vld [vmem:[#allocation2 + $0x19] sm:$0xff]
        %v3559 = vld [vmem:[#allocation2 + $0x21] sm:$0xff]
        %v3560 = vld [vmem:[#allocation2 + $0x29] sm:$0xff]
        %v3561 = vld [vmem:[#allocation2 + $0x31] sm:$0xff]
        %v3562 = vld [vmem:[#allocation2 + $0x39] sm:$0xff]
        %v3563 = vld [vmem:[#allocation2 + $0x41] sm:$0xff]
        %v3564 = vld [vmem:[#allocation2 + $0x49] sm:$0xff]
        %v3565 = vld [vmem:[#allocation2 + $0x51] sm:$0xff]
        %v3566 = vld [vmem:[#allocation2 + $0x59] sm:$0xff]
        %v3567 = vld [vmem:[#allocation2 + $0x61] sm:$0xff]
        %v3568 = vld [vmem:[#allocation2 + $0x69] sm:$0xff]
        %v3569 = vld [vmem:[#allocation2 + $0x71] sm:$0xff]
        %v3570 = vld [vmem:[#allocation2 + $0x79] sm:$0xff]
        %v3571 = vld [vmem:[#allocation2 + $0x81] sm:$0xff]
        %v3572 = vld [vmem:[#allocation2 + $0x89] sm:$0xff]
        %v3573 = vld [vmem:[#allocation2 + $0x91] sm:$0xff]
        %v3574 = vld [vmem:[#allocation2 + $0x99] sm:$0xff]
        %v3575 = vld [vmem:[#allocation2 + $0xa1] sm:$0xff]
        %v3576 = vld [vmem:[#allocation2 + $0xa9] sm:$0xff]
        %v3577 = vld [vmem:[#allocation2 + $0xb1] sm:$0xff]
        %v3578 = vld [vmem:[#allocation2 + $0xb9] sm:$0xff]
        %v3579 = vld [vmem:[#allocation2 + $0xc1] sm:$0xff]
        %v3580 = vld [vmem:[#allocation2 + $0xc9] sm:$0xff]
        %v3581 = vld [vmem:[#allocation2 + $0xd1] sm:$0xff]
        %v3582 = vld [vmem:[#allocation2 + $0xd9] sm:$0xff]
        %s3583 = scalar_lea.vmem %s389, 1536 [#allocation5]
        %v3584 = vld [vmem:[%s3583] sm:$0xff]
        %v3585 = vld [vmem:[%s3583 + $0x8] sm:$0xff]
        %v3586 = vld [vmem:[%s3583 + $0x10] sm:$0xff]
        %v3587 = vld [vmem:[%s3583 + $0x18] sm:$0xff]
        %v3588 = vld [vmem:[%s3583 + $0x20] sm:$0xff]
        %v3589 = vld [vmem:[%s3583 + $0x28] sm:$0xff]
        %v3590 = vld [vmem:[%s3583 + $0x30] sm:$0xff]
        %v3591 = vld [vmem:[%s3583 + $0x38] sm:$0xff]
        %v3592 = vld [vmem:[%s3583 + $0x40] sm:$0xff]
        %v3593 = vld [vmem:[%s3583 + $0x48] sm:$0xff]
        %v3594 = vld [vmem:[%s3583 + $0x50] sm:$0xff]
        %v3595 = vld [vmem:[%s3583 + $0x58] sm:$0xff]
        %v3596 = vld [vmem:[%s3583 + $0x60] sm:$0xff]
        %v3597 = vld [vmem:[%s3583 + $0x68] sm:$0xff]
        %v3598 = vld [vmem:[%s3583 + $0x70] sm:$0xff]
        %v3599 = vld [vmem:[%s3583 + $0x78] sm:$0xff]
        %3600 = vmatprep.subr.mxu0 0.0
        %3601 = vmatpush1.msra.mxu0 %v3584
        %3602 = vmatprep.subr.mxu0 0.0
        %3603 = vmatpush1.msra.mxu0 %v3585
        %3604 = vmatprep.subr.mxu0 0.0
        %3605 = vmatpush1.msra.mxu0 %v3586
        %3606 = vmatprep.subr.mxu0 0.0
        %3607 = vmatpush1.msra.mxu0 %v3587
        %3608 = vmatprep.subr.mxu0 0.0
        %3609 = vmatpush1.msra.mxu0 %v3588
        %3610 = vmatprep.subr.mxu0 0.0
        %3611 = vmatpush1.msra.mxu0 %v3589
        %3612 = vmatprep.subr.mxu0 0.0
        %3613 = vmatpush1.msra.mxu0 %v3590
        %3614 = vmatprep.subr.mxu0 0.0
        %3615 = vmatpush1.msra.mxu0 %v3591
        %3616 = vmatprep.subr.mxu0 0.0
        %3617 = vmatpush1.msra.mxu0 %v3592
        %3618 = vmatprep.subr.mxu0 0.0
        %3619 = vmatpush1.msra.mxu0 %v3593
        %3620 = vmatprep.subr.mxu0 0.0
        %3621 = vmatpush1.msra.mxu0 %v3594
        %3622 = vmatprep.subr.mxu0 0.0
        %3623 = vmatpush1.msra.mxu0 %v3595
        %3624 = vmatprep.subr.mxu0 0.0
        %3625 = vmatpush1.msra.mxu0 %v3596
        %3626 = vmatprep.subr.mxu0 0.0
        %3627 = vmatpush1.msra.mxu0 %v3597
        %3628 = vmatprep.subr.mxu0 0.0
        %3629 = vmatpush1.msra.mxu0 %v3598
        %3630 = vmatprep.subr.mxu0 0.0
        %3631 = vmatpush1.msra.mxu0 %v3599
        %3632 = vmatprep.subr.mxu0 0.0
        %3633 = vmatpush1.msra.mxu0 0.0
        %3634 = vmatprep.subr.mxu0 0.0
        %3635 = vmatpush1.msra.mxu0 0.0
        %3636 = vmatprep.subr.mxu0 0.0
        %3637 = vmatpush1.msra.mxu0 0.0
        %3638 = vmatprep.subr.mxu0 0.0
        %3639 = vmatpush1.msra.mxu0 0.0
        %3640 = vmatprep.subr.mxu0 0.0
        %3641 = vmatpush1.msra.mxu0 0.0
        %3642 = vmatprep.subr.mxu0 0.0
        %3643 = vmatpush1.msra.mxu0 0.0
        %3644 = vmatprep.subr.mxu0 0.0
        %3645 = vmatpush1.msra.mxu0 0.0
        %3646 = vmatprep.subr.mxu0 0.0
        %3647 = vmatpush1.msra.mxu0 0.0
        %3648 = vmatprep.subr.mxu0 0.0
        %3649 = vmatpush1.msra.mxu0 0.0
        %3650 = vmatprep.subr.mxu0 0.0
        %3651 = vmatpush1.msra.mxu0 0.0
        %3652 = vmatprep.subr.mxu0 0.0
        %3653 = vmatpush1.msra.mxu0 0.0
        %3654 = vmatprep.subr.mxu0 0.0
        %3655 = vmatpush1.msra.mxu0 0.0
        %3656 = vmatprep.subr.mxu0 0.0
        %3657 = vmatpush1.msra.mxu0 0.0
        %3658 = vmatprep.subr.mxu0 0.0
        %3659 = vmatpush1.msra.mxu0 0.0
        %3660 = vmatprep.subr.mxu0 0.0
        %3661 = vmatpush1.msra.mxu0 0.0
        %3662 = vmatprep.subr.mxu0 0.0
        %3663 = vmatpush1.msra.mxu0 0.0
        %3664 = vmatprep.mubr.f32.mxu0 0.0
        %3665 = vmatmul.mubr.f32.gmra.mrb[0].mxu0 %v3558
        %v3666 = vpop.f32.mrb[0].mxu0
        %v3667 = vadd.f32 0.0, %v3666
        %v3668 = vpop.f32.mrb[0].mxu0
        %3669 = vmatprep.mubr.f32.mxu0 0.0
        %3670 = vmatmul.mubr.f32.gmra.mrb[0].mxu0 %v3559
        %v3671 = vpop.f32.mrb[0].mxu0
        %v3672 = vadd.f32 0.0, %v3671
        %v3673 = vpop.f32.mrb[0].mxu0
        %3674 = vmatprep.mubr.f32.mxu0 0.0
        %3675 = vmatmul.mubr.f32.gmra.mrb[0].mxu0 %v3560
        %v3676 = vpop.f32.mrb[0].mxu0
        %v3677 = vadd.f32 0.0, %v3676
        %v3678 = vpop.f32.mrb[0].mxu0
        %3679 = vmatprep.mubr.f32.mxu0 0.0
        %3680 = vmatmul.mubr.f32.gmra.mrb[0].mxu0 %v3561
        %v3681 = vpop.f32.mrb[0].mxu0
        %v3682 = vadd.f32 0.0, %v3681
        %v3683 = vpop.f32.mrb[0].mxu0
        %3684 = vmatprep.mubr.f32.mxu0 0.0
        %3685 = vmatmul.mubr.f32.gmra.mrb[0].mxu0 %v3562
        %v3686 = vpop.f32.mrb[0].mxu0
        %v3687 = vadd.f32 0.0, %v3686
        %v3688 = vpop.f32.mrb[0].mxu0
        %3689 = vmatprep.mubr.f32.mxu0 0.0
        %3690 = vmatmul.mubr.f32.gmra.mrb[0].mxu0 %v3563
        %v3691 = vpop.f32.mrb[0].mxu0
        %v3692 = vadd.f32 0.0, %v3691
        %v3693 = vpop.f32.mrb[0].mxu0
        %3694 = vmatprep.mubr.f32.mxu0 0.0
        %3695 = vmatmul.mubr.f32.gmra.mrb[0].mxu0 %v3564
        %v3696 = vpop.f32.mrb[0].mxu0
        %v3697 = vadd.f32 0.0, %v3696
        %v3698 = vpop.f32.mrb[0].mxu0
        %3699 = vmatprep.mubr.f32.mxu0 0.0
        %3700 = vmatmul.mubr.f32.gmra.mrb[0].mxu0 %v3565
        %v3701 = vpop.f32.mrb[0].mxu0
        %v3702 = vadd.f32 0.0, %v3701
        %v3703 = vpop.f32.mrb[0].mxu0
        %3704 = vmatprep.mubr.f32.mxu0 0.0
        %3705 = vmatmul.mubr.f32.gmra.mrb[0].mxu0 %v3566
        %v3706 = vpop.f32.mrb[0].mxu0
        %v3707 = vadd.f32 0.0, %v3706
        %v3708 = vpop.f32.mrb[0].mxu0
        %3709 = vmatprep.mubr.f32.mxu0 0.0
        %3710 = vmatmul.mubr.f32.gmra.mrb[0].mxu0 %v3567
        %v3711 = vpop.f32.mrb[0].mxu0
        %v3712 = vadd.f32 0.0, %v3711
        %v3713 = vpop.f32.mrb[0].mxu0
        %3714 = vmatprep.mubr.f32.mxu0 0.0
        %3715 = vmatmul.mubr.f32.gmra.mrb[0].mxu0 %v3568
        %v3716 = vpop.f32.mrb[0].mxu0
        %v3717 = vadd.f32 0.0, %v3716
        %v3718 = vpop.f32.mrb[0].mxu0
        %3719 = vmatprep.mubr.f32.mxu0 0.0
        %3720 = vmatmul.mubr.f32.gmra.mrb[0].mxu0 %v3569
        %v3721 = vpop.f32.mrb[0].mxu0
        %v3722 = vadd.f32 0.0, %v3721
        %v3723 = vpop.f32.mrb[0].mxu0
        %3724 = vmatprep.mubr.f32.mxu0 0.0
        %3725 = vmatmul.mubr.f32.gmra.mrb[0].mxu0 %v3570
        %v3726 = vpop.f32.mrb[0].mxu0
        %v3727 = vadd.f32 0.0, %v3726
        %v3728 = vpop.f32.mrb[0].mxu0
        %3729 = vmatprep.mubr.f32.mxu0 0.0
        %3730 = vmatmul.mubr.f32.gmra.mrb[0].mxu0 %v3571
        %v3731 = vpop.f32.mrb[0].mxu0
        %v3732 = vadd.f32 0.0, %v3731
        %v3733 = vpop.f32.mrb[0].mxu0
        %3734 = vmatprep.mubr.f32.mxu0 0.0
        %3735 = vmatmul.mubr.f32.gmra.mrb[0].mxu0 %v3572
        %v3736 = vpop.f32.mrb[0].mxu0
        %v3737 = vadd.f32 0.0, %v3736
        %v3738 = vpop.f32.mrb[0].mxu0
        %3739 = vmatprep.mubr.f32.mxu0 0.0
        %3740 = vmatmul.mubr.f32.gmra.mrb[0].mxu0 %v3573
        %v3741 = vpop.f32.mrb[0].mxu0
        %v3742 = vadd.f32 0.0, %v3741
        %v3743 = vpop.f32.mrb[0].mxu0
        %3744 = vmatprep.mubr.f32.mxu0 0.0
        %3745 = vmatmul.mubr.f32.gmra.mrb[0].mxu0 %v3574
        %v3746 = vpop.f32.mrb[0].mxu0
        %v3747 = vadd.f32 0.0, %v3746
        %v3748 = vpop.f32.mrb[0].mxu0
        %3749 = vmatprep.mubr.f32.mxu0 0.0
        %3750 = vmatmul.mubr.f32.gmra.mrb[0].mxu0 %v3575
        %v3751 = vpop.f32.mrb[0].mxu0
        %v3752 = vadd.f32 0.0, %v3751
        %v3753 = vpop.f32.mrb[0].mxu0
        %3754 = vmatprep.mubr.f32.mxu0 0.0
        %3755 = vmatmul.mubr.f32.gmra.mrb[0].mxu0 %v3576
        %v3756 = vpop.f32.mrb[0].mxu0
        %v3757 = vadd.f32 0.0, %v3756
        %v3758 = vpop.f32.mrb[0].mxu0
        %3759 = vmatprep.mubr.f32.mxu0 0.0
        %3760 = vmatmul.mubr.f32.gmra.mrb[0].mxu0 %v3577
        %v3761 = vpop.f32.mrb[0].mxu0
        %v3762 = vadd.f32 0.0, %v3761
        %v3763 = vpop.f32.mrb[0].mxu0
        %3764 = vmatprep.mubr.f32.mxu0 0.0
        %3765 = vmatmul.mubr.f32.gmra.mrb[0].mxu0 %v3578
        %v3766 = vpop.f32.mrb[0].mxu0
        %v3767 = vadd.f32 0.0, %v3766
        %v3768 = vpop.f32.mrb[0].mxu0
        %3769 = vmatprep.mubr.f32.mxu0 0.0
        %3770 = vmatmul.mubr.f32.gmra.mrb[0].mxu0 %v3579
        %v3771 = vpop.f32.mrb[0].mxu0
        %v3772 = vadd.f32 0.0, %v3771
        %v3773 = vpop.f32.mrb[0].mxu0
        %3774 = vmatprep.mubr.f32.mxu0 0.0
        %3775 = vmatmul.mubr.f32.gmra.mrb[0].mxu0 %v3580
        %v3776 = vpop.f32.mrb[0].mxu0
        %v3777 = vadd.f32 0.0, %v3776
        %v3778 = vpop.f32.mrb[0].mxu0
        %3779 = vmatprep.mubr.f32.mxu0 0.0
        %3780 = vmatmul.mubr.f32.gmra.mrb[0].mxu0 %v3581
        %v3781 = vpop.f32.mrb[0].mxu0
        %v3782 = vadd.f32 0.0, %v3781
        %v3783 = vpop.f32.mrb[0].mxu0
        %3784 = vmatprep.mubr.f32.mxu0 0.0
        %3785 = vmatmul.mubr.f32.gmra.mrb[0].mxu0 %v3582
        %v3786 = vpop.f32.mrb[0].mxu0
        %v3787 = vadd.f32 0.0, %v3786
        %v3788 = vpop.f32.mrb[0].mxu0
        %3789 = vdwg.mxu0
        %v3790 = vadd.f32 %v3533, %v3667
        %v3791 = vadd.f32 %v3534, %v3672
        %v3792 = vadd.f32 %v3535, %v3677
        %v3793 = vadd.f32 %v3536, %v3682
        %v3794 = vadd.f32 %v3537, %v3687
        %v3795 = vadd.f32 %v3538, %v3692
        %v3796 = vadd.f32 %v3539, %v3697
        %v3797 = vadd.f32 %v3540, %v3702
        %v3798 = vadd.f32 %v3541, %v3707
        %v3799 = vadd.f32 %v3542, %v3712
        %v3800 = vadd.f32 %v3543, %v3717
        %v3801 = vadd.f32 %v3544, %v3722
        %v3802 = vadd.f32 %v3545, %v3727
        %v3803 = vadd.f32 %v3546, %v3732
        %v3804 = vadd.f32 %v3547, %v3737
        %v3805 = vadd.f32 %v3548, %v3742
        %v3806 = vadd.f32 %v3549, %v3747
        %v3807 = vadd.f32 %v3550, %v3752
        %v3808 = vadd.f32 %v3551, %v3757
        %v3809 = vadd.f32 %v3552, %v3762
        %v3810 = vadd.f32 %v3553, %v3767
        %v3811 = vadd.f32 %v3554, %v3772
        %v3812 = vadd.f32 %v3555, %v3777
        %v3813 = vadd.f32 %v3556, %v3782
        %v3814 = vadd.f32 %v3557, %v3787
        %v3815 = vld [vmem:[#allocation2 + $0x1a] sm:$0xff]
        %v3816 = vld [vmem:[#allocation2 + $0x22] sm:$0xff]
        %v3817 = vld [vmem:[#allocation2 + $0x2a] sm:$0xff]
        %v3818 = vld [vmem:[#allocation2 + $0x32] sm:$0xff]
        %v3819 = vld [vmem:[#allocation2 + $0x3a] sm:$0xff]
        %v3820 = vld [vmem:[#allocation2 + $0x42] sm:$0xff]
        %v3821 = vld [vmem:[#allocation2 + $0x4a] sm:$0xff]
        %v3822 = vld [vmem:[#allocation2 + $0x52] sm:$0xff]
        %v3823 = vld [vmem:[#allocation2 + $0x5a] sm:$0xff]
        %v3824 = vld [vmem:[#allocation2 + $0x62] sm:$0xff]
        %v3825 = vld [vmem:[#allocation2 + $0x6a] sm:$0xff]
        %v3826 = vld [vmem:[#allocation2 + $0x72] sm:$0xff]
        %v3827 = vld [vmem:[#allocation2 + $0x7a] sm:$0xff]
        %v3828 = vld [vmem:[#allocation2 + $0x82] sm:$0xff]
        %v3829 = vld [vmem:[#allocation2 + $0x8a] sm:$0xff]
        %v3830 = vld [vmem:[#allocation2 + $0x92] sm:$0xff]
        %v3831 = vld [vmem:[#allocation2 + $0x9a] sm:$0xff]
        %v3832 = vld [vmem:[#allocation2 + $0xa2] sm:$0xff]
        %v3833 = vld [vmem:[#allocation2 + $0xaa] sm:$0xff]
        %v3834 = vld [vmem:[#allocation2 + $0xb2] sm:$0xff]
        %v3835 = vld [vmem:[#allocation2 + $0xba] sm:$0xff]
        %v3836 = vld [vmem:[#allocation2 + $0xc2] sm:$0xff]
        %v3837 = vld [vmem:[#allocation2 + $0xca] sm:$0xff]
        %v3838 = vld [vmem:[#allocation2 + $0xd2] sm:$0xff]
        %v3839 = vld [vmem:[#allocation2 + $0xda] sm:$0xff]
        %s3840 = scalar_lea.vmem %s389, 1664 [#allocation5]
        %v3841 = vld [vmem:[%s3840] sm:$0xff]
        %v3842 = vld [vmem:[%s3840 + $0x8] sm:$0xff]
        %v3843 = vld [vmem:[%s3840 + $0x10] sm:$0xff]
        %v3844 = vld [vmem:[%s3840 + $0x18] sm:$0xff]
        %v3845 = vld [vmem:[%s3840 + $0x20] sm:$0xff]
        %v3846 = vld [vmem:[%s3840 + $0x28] sm:$0xff]
        %v3847 = vld [vmem:[%s3840 + $0x30] sm:$0xff]
        %v3848 = vld [vmem:[%s3840 + $0x38] sm:$0xff]
        %v3849 = vld [vmem:[%s3840 + $0x40] sm:$0xff]
        %v3850 = vld [vmem:[%s3840 + $0x48] sm:$0xff]
        %v3851 = vld [vmem:[%s3840 + $0x50] sm:$0xff]
        %v3852 = vld [vmem:[%s3840 + $0x58] sm:$0xff]
        %v3853 = vld [vmem:[%s3840 + $0x60] sm:$0xff]
        %v3854 = vld [vmem:[%s3840 + $0x68] sm:$0xff]
        %v3855 = vld [vmem:[%s3840 + $0x70] sm:$0xff]
        %v3856 = vld [vmem:[%s3840 + $0x78] sm:$0xff]
        %3857 = vmatprep.subr.mxu0 0.0
        %3858 = vmatpush1.msra.mxu0 %v3841
        %3859 = vmatprep.subr.mxu0 0.0
        %3860 = vmatpush1.msra.mxu0 %v3842
        %3861 = vmatprep.subr.mxu0 0.0
        %3862 = vmatpush1.msra.mxu0 %v3843
        %3863 = vmatprep.subr.mxu0 0.0
        %3864 = vmatpush1.msra.mxu0 %v3844
        %3865 = vmatprep.subr.mxu0 0.0
        %3866 = vmatpush1.msra.mxu0 %v3845
        %3867 = vmatprep.subr.mxu0 0.0
        %3868 = vmatpush1.msra.mxu0 %v3846
        %3869 = vmatprep.subr.mxu0 0.0
        %3870 = vmatpush1.msra.mxu0 %v3847
        %3871 = vmatprep.subr.mxu0 0.0
        %3872 = vmatpush1.msra.mxu0 %v3848
        %3873 = vmatprep.subr.mxu0 0.0
        %3874 = vmatpush1.msra.mxu0 %v3849
        %3875 = vmatprep.subr.mxu0 0.0
        %3876 = vmatpush1.msra.mxu0 %v3850
        %3877 = vmatprep.subr.mxu0 0.0
        %3878 = vmatpush1.msra.mxu0 %v3851
        %3879 = vmatprep.subr.mxu0 0.0
        %3880 = vmatpush1.msra.mxu0 %v3852
        %3881 = vmatprep.subr.mxu0 0.0
        %3882 = vmatpush1.msra.mxu0 %v3853
        %3883 = vmatprep.subr.mxu0 0.0
        %3884 = vmatpush1.msra.mxu0 %v3854
        %3885 = vmatprep.subr.mxu0 0.0
        %3886 = vmatpush1.msra.mxu0 %v3855
        %3887 = vmatprep.subr.mxu0 0.0
        %3888 = vmatpush1.msra.mxu0 %v3856
        %3889 = vmatprep.subr.mxu0 0.0
        %3890 = vmatpush1.msra.mxu0 0.0
        %3891 = vmatprep.subr.mxu0 0.0
        %3892 = vmatpush1.msra.mxu0 0.0
        %3893 = vmatprep.subr.mxu0 0.0
        %3894 = vmatpush1.msra.mxu0 0.0
        %3895 = vmatprep.subr.mxu0 0.0
        %3896 = vmatpush1.msra.mxu0 0.0
        %3897 = vmatprep.subr.mxu0 0.0
        %3898 = vmatpush1.msra.mxu0 0.0
        %3899 = vmatprep.subr.mxu0 0.0
        %3900 = vmatpush1.msra.mxu0 0.0
        %3901 = vmatprep.subr.mxu0 0.0
        %3902 = vmatpush1.msra.mxu0 0.0
        %3903 = vmatprep.subr.mxu0 0.0
        %3904 = vmatpush1.msra.mxu0 0.0
        %3905 = vmatprep.subr.mxu0 0.0
        %3906 = vmatpush1.msra.mxu0 0.0
        %3907 = vmatprep.subr.mxu0 0.0
        %3908 = vmatpush1.msra.mxu0 0.0
        %3909 = vmatprep.subr.mxu0 0.0
        %3910 = vmatpush1.msra.mxu0 0.0
        %3911 = vmatprep.subr.mxu0 0.0
        %3912 = vmatpush1.msra.mxu0 0.0
        %3913 = vmatprep.subr.mxu0 0.0
        %3914 = vmatpush1.msra.mxu0 0.0
        %3915 = vmatprep.subr.mxu0 0.0
        %3916 = vmatpush1.msra.mxu0 0.0
        %3917 = vmatprep.subr.mxu0 0.0
        %3918 = vmatpush1.msra.mxu0 0.0
        %3919 = vmatprep.subr.mxu0 0.0
        %3920 = vmatpush1.msra.mxu0 0.0
        %3921 = vmatprep.mubr.f32.mxu0 0.0
        %3922 = vmatmul.mubr.f32.gmra.mrb[0].mxu0 %v3815
        %v3923 = vpop.f32.mrb[0].mxu0
        %v3924 = vadd.f32 0.0, %v3923
        %v3925 = vpop.f32.mrb[0].mxu0
        %3926 = vmatprep.mubr.f32.mxu0 0.0
        %3927 = vmatmul.mubr.f32.gmra.mrb[0].mxu0 %v3816
        %v3928 = vpop.f32.mrb[0].mxu0
        %v3929 = vadd.f32 0.0, %v3928
        %v3930 = vpop.f32.mrb[0].mxu0
        %3931 = vmatprep.mubr.f32.mxu0 0.0
        %3932 = vmatmul.mubr.f32.gmra.mrb[0].mxu0 %v3817
        %v3933 = vpop.f32.mrb[0].mxu0
        %v3934 = vadd.f32 0.0, %v3933
        %v3935 = vpop.f32.mrb[0].mxu0
        %3936 = vmatprep.mubr.f32.mxu0 0.0
        %3937 = vmatmul.mubr.f32.gmra.mrb[0].mxu0 %v3818
        %v3938 = vpop.f32.mrb[0].mxu0
        %v3939 = vadd.f32 0.0, %v3938
        %v3940 = vpop.f32.mrb[0].mxu0
        %3941 = vmatprep.mubr.f32.mxu0 0.0
        %3942 = vmatmul.mubr.f32.gmra.mrb[0].mxu0 %v3819
        %v3943 = vpop.f32.mrb[0].mxu0
        %v3944 = vadd.f32 0.0, %v3943
        %v3945 = vpop.f32.mrb[0].mxu0
        %3946 = vmatprep.mubr.f32.mxu0 0.0
        %3947 = vmatmul.mubr.f32.gmra.mrb[0].mxu0 %v3820
        %v3948 = vpop.f32.mrb[0].mxu0
        %v3949 = vadd.f32 0.0, %v3948
        %v3950 = vpop.f32.mrb[0].mxu0
        %3951 = vmatprep.mubr.f32.mxu0 0.0
        %3952 = vmatmul.mubr.f32.gmra.mrb[0].mxu0 %v3821
        %v3953 = vpop.f32.mrb[0].mxu0
        %v3954 = vadd.f32 0.0, %v3953
        %v3955 = vpop.f32.mrb[0].mxu0
        %3956 = vmatprep.mubr.f32.mxu0 0.0
        %3957 = vmatmul.mubr.f32.gmra.mrb[0].mxu0 %v3822
        %v3958 = vpop.f32.mrb[0].mxu0
        %v3959 = vadd.f32 0.0, %v3958
        %v3960 = vpop.f32.mrb[0].mxu0
        %3961 = vmatprep.mubr.f32.mxu0 0.0
        %3962 = vmatmul.mubr.f32.gmra.mrb[0].mxu0 %v3823
        %v3963 = vpop.f32.mrb[0].mxu0
        %v3964 = vadd.f32 0.0, %v3963
        %v3965 = vpop.f32.mrb[0].mxu0
        %3966 = vmatprep.mubr.f32.mxu0 0.0
        %3967 = vmatmul.mubr.f32.gmra.mrb[0].mxu0 %v3824
        %v3968 = vpop.f32.mrb[0].mxu0
        %v3969 = vadd.f32 0.0, %v3968
        %v3970 = vpop.f32.mrb[0].mxu0
        %3971 = vmatprep.mubr.f32.mxu0 0.0
        %3972 = vmatmul.mubr.f32.gmra.mrb[0].mxu0 %v3825
        %v3973 = vpop.f32.mrb[0].mxu0
        %v3974 = vadd.f32 0.0, %v3973
        %v3975 = vpop.f32.mrb[0].mxu0
        %3976 = vmatprep.mubr.f32.mxu0 0.0
        %3977 = vmatmul.mubr.f32.gmra.mrb[0].mxu0 %v3826
        %v3978 = vpop.f32.mrb[0].mxu0
        %v3979 = vadd.f32 0.0, %v3978
        %v3980 = vpop.f32.mrb[0].mxu0
        %3981 = vmatprep.mubr.f32.mxu0 0.0
        %3982 = vmatmul.mubr.f32.gmra.mrb[0].mxu0 %v3827
        %v3983 = vpop.f32.mrb[0].mxu0
        %v3984 = vadd.f32 0.0, %v3983
        %v3985 = vpop.f32.mrb[0].mxu0
        %3986 = vmatprep.mubr.f32.mxu0 0.0
        %3987 = vmatmul.mubr.f32.gmra.mrb[0].mxu0 %v3828
        %v3988 = vpop.f32.mrb[0].mxu0
        %v3989 = vadd.f32 0.0, %v3988
        %v3990 = vpop.f32.mrb[0].mxu0
        %3991 = vmatprep.mubr.f32.mxu0 0.0
        %3992 = vmatmul.mubr.f32.gmra.mrb[0].mxu0 %v3829
        %v3993 = vpop.f32.mrb[0].mxu0
        %v3994 = vadd.f32 0.0, %v3993
        %v3995 = vpop.f32.mrb[0].mxu0
        %3996 = vmatprep.mubr.f32.mxu0 0.0
        %3997 = vmatmul.mubr.f32.gmra.mrb[0].mxu0 %v3830
        %v3998 = vpop.f32.mrb[0].mxu0
        %v3999 = vadd.f32 0.0, %v3998
        %v4000 = vpop.f32.mrb[0].mxu0
        %4001 = vmatprep.mubr.f32.mxu0 0.0
        %4002 = vmatmul.mubr.f32.gmra.mrb[0].mxu0 %v3831
        %v4003 = vpop.f32.mrb[0].mxu0
        %v4004 = vadd.f32 0.0, %v4003
        %v4005 = vpop.f32.mrb[0].mxu0
        %4006 = vmatprep.mubr.f32.mxu0 0.0
        %4007 = vmatmul.mubr.f32.gmra.mrb[0].mxu0 %v3832
        %v4008 = vpop.f32.mrb[0].mxu0
        %v4009 = vadd.f32 0.0, %v4008
        %v4010 = vpop.f32.mrb[0].mxu0
        %4011 = vmatprep.mubr.f32.mxu0 0.0
        %4012 = vmatmul.mubr.f32.gmra.mrb[0].mxu0 %v3833
        %v4013 = vpop.f32.mrb[0].mxu0
        %v4014 = vadd.f32 0.0, %v4013
        %v4015 = vpop.f32.mrb[0].mxu0
        %4016 = vmatprep.mubr.f32.mxu0 0.0
        %4017 = vmatmul.mubr.f32.gmra.mrb[0].mxu0 %v3834
        %v4018 = vpop.f32.mrb[0].mxu0
        %v4019 = vadd.f32 0.0, %v4018
        %v4020 = vpop.f32.mrb[0].mxu0
        %4021 = vmatprep.mubr.f32.mxu0 0.0
        %4022 = vmatmul.mubr.f32.gmra.mrb[0].mxu0 %v3835
        %v4023 = vpop.f32.mrb[0].mxu0
        %v4024 = vadd.f32 0.0, %v4023
        %v4025 = vpop.f32.mrb[0].mxu0
        %4026 = vmatprep.mubr.f32.mxu0 0.0
        %4027 = vmatmul.mubr.f32.gmra.mrb[0].mxu0 %v3836
        %v4028 = vpop.f32.mrb[0].mxu0
        %v4029 = vadd.f32 0.0, %v4028
        %v4030 = vpop.f32.mrb[0].mxu0
        %4031 = vmatprep.mubr.f32.mxu0 0.0
        %4032 = vmatmul.mubr.f32.gmra.mrb[0].mxu0 %v3837
        %v4033 = vpop.f32.mrb[0].mxu0
        %v4034 = vadd.f32 0.0, %v4033
        %v4035 = vpop.f32.mrb[0].mxu0
        %4036 = vmatprep.mubr.f32.mxu0 0.0
        %4037 = vmatmul.mubr.f32.gmra.mrb[0].mxu0 %v3838
        %v4038 = vpop.f32.mrb[0].mxu0
        %v4039 = vadd.f32 0.0, %v4038
        %v4040 = vpop.f32.mrb[0].mxu0
        %4041 = vmatprep.mubr.f32.mxu0 0.0
        %4042 = vmatmul.mubr.f32.gmra.mrb[0].mxu0 %v3839
        %v4043 = vpop.f32.mrb[0].mxu0
        %v4044 = vadd.f32 0.0, %v4043
        %v4045 = vpop.f32.mrb[0].mxu0
        %4046 = vdwg.mxu0
        %v4047 = vadd.f32 %v3790, %v3924
        %v4048 = vadd.f32 %v3791, %v3929
        %v4049 = vadd.f32 %v3792, %v3934
        %v4050 = vadd.f32 %v3793, %v3939
        %v4051 = vadd.f32 %v3794, %v3944
        %v4052 = vadd.f32 %v3795, %v3949
        %v4053 = vadd.f32 %v3796, %v3954
        %v4054 = vadd.f32 %v3797, %v3959
        %v4055 = vadd.f32 %v3798, %v3964
        %v4056 = vadd.f32 %v3799, %v3969
        %v4057 = vadd.f32 %v3800, %v3974
        %v4058 = vadd.f32 %v3801, %v3979
        %v4059 = vadd.f32 %v3802, %v3984
        %v4060 = vadd.f32 %v3803, %v3989
        %v4061 = vadd.f32 %v3804, %v3994
        %v4062 = vadd.f32 %v3805, %v3999
        %v4063 = vadd.f32 %v3806, %v4004
        %v4064 = vadd.f32 %v3807, %v4009
        %v4065 = vadd.f32 %v3808, %v4014
        %v4066 = vadd.f32 %v3809, %v4019
        %v4067 = vadd.f32 %v3810, %v4024
        %v4068 = vadd.f32 %v3811, %v4029
        %v4069 = vadd.f32 %v3812, %v4034
        %v4070 = vadd.f32 %v3813, %v4039
        %v4071 = vadd.f32 %v3814, %v4044
        %v4072 = vld [vmem:[#allocation2 + $0x1b] sm:$0xff]
        %v4073 = vld [vmem:[#allocation2 + $0x23] sm:$0xff]
        %v4074 = vld [vmem:[#allocation2 + $0x2b] sm:$0xff]
        %v4075 = vld [vmem:[#allocation2 + $0x33] sm:$0xff]
        %v4076 = vld [vmem:[#allocation2 + $0x3b] sm:$0xff]
        %v4077 = vld [vmem:[#allocation2 + $0x43] sm:$0xff]
        %v4078 = vld [vmem:[#allocation2 + $0x4b] sm:$0xff]
        %v4079 = vld [vmem:[#allocation2 + $0x53] sm:$0xff]
        %v4080 = vld [vmem:[#allocation2 + $0x5b] sm:$0xff]
        %v4081 = vld [vmem:[#allocation2 + $0x63] sm:$0xff]
        %v4082 = vld [vmem:[#allocation2 + $0x6b] sm:$0xff]
        %v4083 = vld [vmem:[#allocation2 + $0x73] sm:$0xff]
        %v4084 = vld [vmem:[#allocation2 + $0x7b] sm:$0xff]
        %v4085 = vld [vmem:[#allocation2 + $0x83] sm:$0xff]
        %v4086 = vld [vmem:[#allocation2 + $0x8b] sm:$0xff]
        %v4087 = vld [vmem:[#allocation2 + $0x93] sm:$0xff]
        %v4088 = vld [vmem:[#allocation2 + $0x9b] sm:$0xff]
        %v4089 = vld [vmem:[#allocation2 + $0xa3] sm:$0xff]
        %v4090 = vld [vmem:[#allocation2 + $0xab] sm:$0xff]
        %v4091 = vld [vmem:[#allocation2 + $0xb3] sm:$0xff]
        %v4092 = vld [vmem:[#allocation2 + $0xbb] sm:$0xff]
        %v4093 = vld [vmem:[#allocation2 + $0xc3] sm:$0xff]
        %v4094 = vld [vmem:[#allocation2 + $0xcb] sm:$0xff]
        %v4095 = vld [vmem:[#allocation2 + $0xd3] sm:$0xff]
        %v4096 = vld [vmem:[#allocation2 + $0xdb] sm:$0xff]
        %s4097 = scalar_lea.vmem %s389, 1792 [#allocation5]
        %v4098 = vld [vmem:[%s4097] sm:$0xff]
        %v4099 = vld [vmem:[%s4097 + $0x8] sm:$0xff]
        %v4100 = vld [vmem:[%s4097 + $0x10] sm:$0xff]
        %v4101 = vld [vmem:[%s4097 + $0x18] sm:$0xff]
        %v4102 = vld [vmem:[%s4097 + $0x20] sm:$0xff]
        %v4103 = vld [vmem:[%s4097 + $0x28] sm:$0xff]
        %v4104 = vld [vmem:[%s4097 + $0x30] sm:$0xff]
        %v4105 = vld [vmem:[%s4097 + $0x38] sm:$0xff]
        %v4106 = vld [vmem:[%s4097 + $0x40] sm:$0xff]
        %v4107 = vld [vmem:[%s4097 + $0x48] sm:$0xff]
        %v4108 = vld [vmem:[%s4097 + $0x50] sm:$0xff]
        %v4109 = vld [vmem:[%s4097 + $0x58] sm:$0xff]
        %v4110 = vld [vmem:[%s4097 + $0x60] sm:$0xff]
        %v4111 = vld [vmem:[%s4097 + $0x68] sm:$0xff]
        %v4112 = vld [vmem:[%s4097 + $0x70] sm:$0xff]
        %v4113 = vld [vmem:[%s4097 + $0x78] sm:$0xff]
        %4114 = vmatprep.subr.mxu0 0.0
        %4115 = vmatpush1.msra.mxu0 %v4098
        %4116 = vmatprep.subr.mxu0 0.0
        %4117 = vmatpush1.msra.mxu0 %v4099
        %4118 = vmatprep.subr.mxu0 0.0
        %4119 = vmatpush1.msra.mxu0 %v4100
        %4120 = vmatprep.subr.mxu0 0.0
        %4121 = vmatpush1.msra.mxu0 %v4101
        %4122 = vmatprep.subr.mxu0 0.0
        %4123 = vmatpush1.msra.mxu0 %v4102
        %4124 = vmatprep.subr.mxu0 0.0
        %4125 = vmatpush1.msra.mxu0 %v4103
        %4126 = vmatprep.subr.mxu0 0.0
        %4127 = vmatpush1.msra.mxu0 %v4104
        %4128 = vmatprep.subr.mxu0 0.0
        %4129 = vmatpush1.msra.mxu0 %v4105
        %4130 = vmatprep.subr.mxu0 0.0
        %4131 = vmatpush1.msra.mxu0 %v4106
        %4132 = vmatprep.subr.mxu0 0.0
        %4133 = vmatpush1.msra.mxu0 %v4107
        %4134 = vmatprep.subr.mxu0 0.0
        %4135 = vmatpush1.msra.mxu0 %v4108
        %4136 = vmatprep.subr.mxu0 0.0
        %4137 = vmatpush1.msra.mxu0 %v4109
        %4138 = vmatprep.subr.mxu0 0.0
        %4139 = vmatpush1.msra.mxu0 %v4110
        %4140 = vmatprep.subr.mxu0 0.0
        %4141 = vmatpush1.msra.mxu0 %v4111
        %4142 = vmatprep.subr.mxu0 0.0
        %4143 = vmatpush1.msra.mxu0 %v4112
        %4144 = vmatprep.subr.mxu0 0.0
        %4145 = vmatpush1.msra.mxu0 %v4113
        %4146 = vmatprep.subr.mxu0 0.0
        %4147 = vmatpush1.msra.mxu0 0.0
        %4148 = vmatprep.subr.mxu0 0.0
        %4149 = vmatpush1.msra.mxu0 0.0
        %4150 = vmatprep.subr.mxu0 0.0
        %4151 = vmatpush1.msra.mxu0 0.0
        %4152 = vmatprep.subr.mxu0 0.0
        %4153 = vmatpush1.msra.mxu0 0.0
        %4154 = vmatprep.subr.mxu0 0.0
        %4155 = vmatpush1.msra.mxu0 0.0
        %4156 = vmatprep.subr.mxu0 0.0
        %4157 = vmatpush1.msra.mxu0 0.0
        %4158 = vmatprep.subr.mxu0 0.0
        %4159 = vmatpush1.msra.mxu0 0.0
        %4160 = vmatprep.subr.mxu0 0.0
        %4161 = vmatpush1.msra.mxu0 0.0
        %4162 = vmatprep.subr.mxu0 0.0
        %4163 = vmatpush1.msra.mxu0 0.0
        %4164 = vmatprep.subr.mxu0 0.0
        %4165 = vmatpush1.msra.mxu0 0.0
        %4166 = vmatprep.subr.mxu0 0.0
        %4167 = vmatpush1.msra.mxu0 0.0
        %4168 = vmatprep.subr.mxu0 0.0
        %4169 = vmatpush1.msra.mxu0 0.0
        %4170 = vmatprep.subr.mxu0 0.0
        %4171 = vmatpush1.msra.mxu0 0.0
        %4172 = vmatprep.subr.mxu0 0.0
        %4173 = vmatpush1.msra.mxu0 0.0
        %4174 = vmatprep.subr.mxu0 0.0
        %4175 = vmatpush1.msra.mxu0 0.0
        %4176 = vmatprep.subr.mxu0 0.0
        %4177 = vmatpush1.msra.mxu0 0.0
        %4178 = vmatprep.mubr.f32.mxu0 0.0
        %4179 = vmatmul.mubr.f32.gmra.mrb[0].mxu0 %v4072
        %v4180 = vpop.f32.mrb[0].mxu0
        %v4181 = vadd.f32 0.0, %v4180
        %v4182 = vpop.f32.mrb[0].mxu0
        %4183 = vmatprep.mubr.f32.mxu0 0.0
        %4184 = vmatmul.mubr.f32.gmra.mrb[0].mxu0 %v4073
        %v4185 = vpop.f32.mrb[0].mxu0
        %v4186 = vadd.f32 0.0, %v4185
        %v4187 = vpop.f32.mrb[0].mxu0
        %4188 = vmatprep.mubr.f32.mxu0 0.0
        %4189 = vmatmul.mubr.f32.gmra.mrb[0].mxu0 %v4074
        %v4190 = vpop.f32.mrb[0].mxu0
        %v4191 = vadd.f32 0.0, %v4190
        %v4192 = vpop.f32.mrb[0].mxu0
        %4193 = vmatprep.mubr.f32.mxu0 0.0
        %4194 = vmatmul.mubr.f32.gmra.mrb[0].mxu0 %v4075
        %v4195 = vpop.f32.mrb[0].mxu0
        %v4196 = vadd.f32 0.0, %v4195
        %v4197 = vpop.f32.mrb[0].mxu0
        %4198 = vmatprep.mubr.f32.mxu0 0.0
        %4199 = vmatmul.mubr.f32.gmra.mrb[0].mxu0 %v4076
        %v4200 = vpop.f32.mrb[0].mxu0
        %v4201 = vadd.f32 0.0, %v4200
        %v4202 = vpop.f32.mrb[0].mxu0
        %4203 = vmatprep.mubr.f32.mxu0 0.0
        %4204 = vmatmul.mubr.f32.gmra.mrb[0].mxu0 %v4077
        %v4205 = vpop.f32.mrb[0].mxu0
        %v4206 = vadd.f32 0.0, %v4205
        %v4207 = vpop.f32.mrb[0].mxu0
        %4208 = vmatprep.mubr.f32.mxu0 0.0
        %4209 = vmatmul.mubr.f32.gmra.mrb[0].mxu0 %v4078
        %v4210 = vpop.f32.mrb[0].mxu0
        %v4211 = vadd.f32 0.0, %v4210
        %v4212 = vpop.f32.mrb[0].mxu0
        %4213 = vmatprep.mubr.f32.mxu0 0.0
        %4214 = vmatmul.mubr.f32.gmra.mrb[0].mxu0 %v4079
        %v4215 = vpop.f32.mrb[0].mxu0
        %v4216 = vadd.f32 0.0, %v4215
        %v4217 = vpop.f32.mrb[0].mxu0
        %4218 = vmatprep.mubr.f32.mxu0 0.0
        %4219 = vmatmul.mubr.f32.gmra.mrb[0].mxu0 %v4080
        %v4220 = vpop.f32.mrb[0].mxu0
        %v4221 = vadd.f32 0.0, %v4220
        %v4222 = vpop.f32.mrb[0].mxu0
        %4223 = vmatprep.mubr.f32.mxu0 0.0
        %4224 = vmatmul.mubr.f32.gmra.mrb[0].mxu0 %v4081
        %v4225 = vpop.f32.mrb[0].mxu0
        %v4226 = vadd.f32 0.0, %v4225
        %v4227 = vpop.f32.mrb[0].mxu0
        %4228 = vmatprep.mubr.f32.mxu0 0.0
        %4229 = vmatmul.mubr.f32.gmra.mrb[0].mxu0 %v4082
        %v4230 = vpop.f32.mrb[0].mxu0
        %v4231 = vadd.f32 0.0, %v4230
        %v4232 = vpop.f32.mrb[0].mxu0
        %4233 = vmatprep.mubr.f32.mxu0 0.0
        %4234 = vmatmul.mubr.f32.gmra.mrb[0].mxu0 %v4083
        %v4235 = vpop.f32.mrb[0].mxu0
        %v4236 = vadd.f32 0.0, %v4235
        %v4237 = vpop.f32.mrb[0].mxu0
        %4238 = vmatprep.mubr.f32.mxu0 0.0
        %4239 = vmatmul.mubr.f32.gmra.mrb[0].mxu0 %v4084
        %v4240 = vpop.f32.mrb[0].mxu0
        %v4241 = vadd.f32 0.0, %v4240
        %v4242 = vpop.f32.mrb[0].mxu0
        %4243 = vmatprep.mubr.f32.mxu0 0.0
        %4244 = vmatmul.mubr.f32.gmra.mrb[0].mxu0 %v4085
        %v4245 = vpop.f32.mrb[0].mxu0
        %v4246 = vadd.f32 0.0, %v4245
        %v4247 = vpop.f32.mrb[0].mxu0
        %4248 = vmatprep.mubr.f32.mxu0 0.0
        %4249 = vmatmul.mubr.f32.gmra.mrb[0].mxu0 %v4086
        %v4250 = vpop.f32.mrb[0].mxu0
        %v4251 = vadd.f32 0.0, %v4250
        %v4252 = vpop.f32.mrb[0].mxu0
        %4253 = vmatprep.mubr.f32.mxu0 0.0
        %4254 = vmatmul.mubr.f32.gmra.mrb[0].mxu0 %v4087
        %v4255 = vpop.f32.mrb[0].mxu0
        %v4256 = vadd.f32 0.0, %v4255
        %v4257 = vpop.f32.mrb[0].mxu0
        %4258 = vmatprep.mubr.f32.mxu0 0.0
        %4259 = vmatmul.mubr.f32.gmra.mrb[0].mxu0 %v4088
        %v4260 = vpop.f32.mrb[0].mxu0
        %v4261 = vadd.f32 0.0, %v4260
        %v4262 = vpop.f32.mrb[0].mxu0
        %4263 = vmatprep.mubr.f32.mxu0 0.0
        %4264 = vmatmul.mubr.f32.gmra.mrb[0].mxu0 %v4089
        %v4265 = vpop.f32.mrb[0].mxu0
        %v4266 = vadd.f32 0.0, %v4265
        %v4267 = vpop.f32.mrb[0].mxu0
        %4268 = vmatprep.mubr.f32.mxu0 0.0
        %4269 = vmatmul.mubr.f32.gmra.mrb[0].mxu0 %v4090
        %v4270 = vpop.f32.mrb[0].mxu0
        %v4271 = vadd.f32 0.0, %v4270
        %v4272 = vpop.f32.mrb[0].mxu0
        %4273 = vmatprep.mubr.f32.mxu0 0.0
        %4274 = vmatmul.mubr.f32.gmra.mrb[0].mxu0 %v4091
        %v4275 = vpop.f32.mrb[0].mxu0
        %v4276 = vadd.f32 0.0, %v4275
        %v4277 = vpop.f32.mrb[0].mxu0
        %4278 = vmatprep.mubr.f32.mxu0 0.0
        %4279 = vmatmul.mubr.f32.gmra.mrb[0].mxu0 %v4092
        %v4280 = vpop.f32.mrb[0].mxu0
        %v4281 = vadd.f32 0.0, %v4280
        %v4282 = vpop.f32.mrb[0].mxu0
        %4283 = vmatprep.mubr.f32.mxu0 0.0
        %4284 = vmatmul.mubr.f32.gmra.mrb[0].mxu0 %v4093
        %v4285 = vpop.f32.mrb[0].mxu0
        %v4286 = vadd.f32 0.0, %v4285
        %v4287 = vpop.f32.mrb[0].mxu0
        %4288 = vmatprep.mubr.f32.mxu0 0.0
        %4289 = vmatmul.mubr.f32.gmra.mrb[0].mxu0 %v4094
        %v4290 = vpop.f32.mrb[0].mxu0
        %v4291 = vadd.f32 0.0, %v4290
        %v4292 = vpop.f32.mrb[0].mxu0
        %4293 = vmatprep.mubr.f32.mxu0 0.0
        %4294 = vmatmul.mubr.f32.gmra.mrb[0].mxu0 %v4095
        %v4295 = vpop.f32.mrb[0].mxu0
        %v4296 = vadd.f32 0.0, %v4295
        %v4297 = vpop.f32.mrb[0].mxu0
        %4298 = vmatprep.mubr.f32.mxu0 0.0
        %4299 = vmatmul.mubr.f32.gmra.mrb[0].mxu0 %v4096
        %v4300 = vpop.f32.mrb[0].mxu0
        %v4301 = vadd.f32 0.0, %v4300
        %v4302 = vpop.f32.mrb[0].mxu0
        %4303 = vdwg.mxu0
        %v4304 = vadd.f32 %v4047, %v4181
        %v4305 = vadd.f32 %v4048, %v4186
        %v4306 = vadd.f32 %v4049, %v4191
        %v4307 = vadd.f32 %v4050, %v4196
        %v4308 = vadd.f32 %v4051, %v4201
        %v4309 = vadd.f32 %v4052, %v4206
        %v4310 = vadd.f32 %v4053, %v4211
        %v4311 = vadd.f32 %v4054, %v4216
        %v4312 = vadd.f32 %v4055, %v4221
        %v4313 = vadd.f32 %v4056, %v4226
        %v4314 = vadd.f32 %v4057, %v4231
        %v4315 = vadd.f32 %v4058, %v4236
        %v4316 = vadd.f32 %v4059, %v4241
        %v4317 = vadd.f32 %v4060, %v4246
        %v4318 = vadd.f32 %v4061, %v4251
        %v4319 = vadd.f32 %v4062, %v4256
        %v4320 = vadd.f32 %v4063, %v4261
        %v4321 = vadd.f32 %v4064, %v4266
        %v4322 = vadd.f32 %v4065, %v4271
        %v4323 = vadd.f32 %v4066, %v4276
        %v4324 = vadd.f32 %v4067, %v4281
        %v4325 = vadd.f32 %v4068, %v4286
        %v4326 = vadd.f32 %v4069, %v4291
        %v4327 = vadd.f32 %v4070, %v4296
        %v4328 = vadd.f32 %v4071, %v4301
        %v4329 = vld [vmem:[%s398] sm:$0xff]
        %v4330 = vadd.f32 %v4304, %v4329
        %v4331 = vadd.f32 %v4305, %v4329
        %v4332 = vadd.f32 %v4306, %v4329
        %v4333 = vadd.f32 %v4307, %v4329
        %v4334 = vadd.f32 %v4308, %v4329
        %v4335 = vadd.f32 %v4309, %v4329
        %v4336 = vadd.f32 %v4310, %v4329
        %v4337 = vadd.f32 %v4311, %v4329
        %v4338 = vadd.f32 %v4312, %v4329
        %v4339 = vadd.f32 %v4313, %v4329
        %v4340 = vadd.f32 %v4314, %v4329
        %v4341 = vadd.f32 %v4315, %v4329
        %v4342 = vadd.f32 %v4316, %v4329
        %v4343 = vadd.f32 %v4317, %v4329
        %v4344 = vadd.f32 %v4318, %v4329
        %v4345 = vadd.f32 %v4319, %v4329
        %v4346 = vadd.f32 %v4320, %v4329
        %v4347 = vadd.f32 %v4321, %v4329
        %v4348 = vadd.f32 %v4322, %v4329
        %v4349 = vadd.f32 %v4323, %v4329
        %v4350 = vadd.f32 %v4324, %v4329
        %v4351 = vadd.f32 %v4325, %v4329
        %v4352 = vadd.f32 %v4326, %v4329
        %v4353 = vadd.f32 %v4327, %v4329
        %v4354 = vadd.f32 %v4328, %v4329
        %v4355 = vmax.f32 %v4330, 0.0
        %v4356 = vmax.f32 %v4331, 0.0
        %v4357 = vmax.f32 %v4332, 0.0
        %v4358 = vmax.f32 %v4333, 0.0
        %v4359 = vmax.f32 %v4334, 0.0
        %v4360 = vmax.f32 %v4335, 0.0
        %v4361 = vmax.f32 %v4336, 0.0
        %v4362 = vmax.f32 %v4337, 0.0
        %v4363 = vmax.f32 %v4338, 0.0
        %v4364 = vmax.f32 %v4339, 0.0
        %v4365 = vmax.f32 %v4340, 0.0
        %v4366 = vmax.f32 %v4341, 0.0
        %v4367 = vmax.f32 %v4342, 0.0
        %v4368 = vmax.f32 %v4343, 0.0
        %v4369 = vmax.f32 %v4344, 0.0
        %v4370 = vmax.f32 %v4345, 0.0
        %v4371 = vmax.f32 %v4346, 0.0
        %v4372 = vmax.f32 %v4347, 0.0
        %v4373 = vmax.f32 %v4348, 0.0
        %v4374 = vmax.f32 %v4349, 0.0
        %v4375 = vmax.f32 %v4350, 0.0
        %v4376 = vmax.f32 %v4351, 0.0
        %v4377 = vmax.f32 %v4352, 0.0
        %v4378 = vmax.f32 %v4353, 0.0
        %v4379 = vmax.f32 %v4354, 0.0
        %v4380 = vmin.f32 %v4355, 6.0
        %v4381 = vmin.f32 %v4356, 6.0
        %v4382 = vmin.f32 %v4357, 6.0
        %v4383 = vmin.f32 %v4358, 6.0
        %v4384 = vmin.f32 %v4359, 6.0
        %v4385 = vmin.f32 %v4360, 6.0
        %v4386 = vmin.f32 %v4361, 6.0
        %v4387 = vmin.f32 %v4362, 6.0
        %v4388 = vmin.f32 %v4363, 6.0
        %v4389 = vmin.f32 %v4364, 6.0
        %v4390 = vmin.f32 %v4365, 6.0
        %v4391 = vmin.f32 %v4366, 6.0
        %v4392 = vmin.f32 %v4367, 6.0
        %v4393 = vmin.f32 %v4368, 6.0
        %v4394 = vmin.f32 %v4369, 6.0
        %v4395 = vmin.f32 %v4370, 6.0
        %v4396 = vmin.f32 %v4371, 6.0
        %v4397 = vmin.f32 %v4372, 6.0
        %v4398 = vmin.f32 %v4373, 6.0
        %v4399 = vmin.f32 %v4374, 6.0
        %v4400 = vmin.f32 %v4375, 6.0
        %v4401 = vmin.f32 %v4376, 6.0
        %v4402 = vmin.f32 %v4377, 6.0
        %v4403 = vmin.f32 %v4378, 6.0
        %v4404 = vmin.f32 %v4379, 6.0
        %v4405 = vld [vmem:[%s407] sm:$0xff]
        %v4406 = vld [vmem:[%s407 + $0x8] sm:$0xff]
        %v4407 = vld [vmem:[%s407 + $0x10] sm:$0xff]
        %v4408 = vld [vmem:[%s407 + $0x18] sm:$0xff]
        %v4409 = vld [vmem:[%s407 + $0x20] sm:$0xff]
        %v4410 = vld [vmem:[%s407 + $0x28] sm:$0xff]
        %v4411 = vld [vmem:[%s407 + $0x30] sm:$0xff]
        %v4412 = vld [vmem:[%s407 + $0x38] sm:$0xff]
        %v4413 = vld [vmem:[%s407 + $0x40] sm:$0xff]
        %v4414 = vld [vmem:[%s407 + $0x48] sm:$0xff]
        %v4415 = vld [vmem:[%s407 + $0x50] sm:$0xff]
        %v4416 = vld [vmem:[%s407 + $0x58] sm:$0xff]
        %v4417 = vld [vmem:[%s407 + $0x60] sm:$0xff]
        %v4418 = vld [vmem:[%s407 + $0x68] sm:$0xff]
        %v4419 = vld [vmem:[%s407 + $0x70] sm:$0xff]
        %v4420 = vld [vmem:[%s407 + $0x78] sm:$0xff]
        %4421 = vmatprep.subr.mxu0 0.0
        %4422 = vmatpush1.msra.mxu0 %v4405
        %4423 = vmatprep.subr.mxu0 0.0
        %4424 = vmatpush1.msra.mxu0 %v4406
        %4425 = vmatprep.subr.mxu0 0.0
        %4426 = vmatpush1.msra.mxu0 %v4407
        %4427 = vmatprep.subr.mxu0 0.0
        %4428 = vmatpush1.msra.mxu0 %v4408
        %4429 = vmatprep.subr.mxu0 0.0
        %4430 = vmatpush1.msra.mxu0 %v4409
        %4431 = vmatprep.subr.mxu0 0.0
        %4432 = vmatpush1.msra.mxu0 %v4410
        %4433 = vmatprep.subr.mxu0 0.0
        %4434 = vmatpush1.msra.mxu0 %v4411
        %4435 = vmatprep.subr.mxu0 0.0
        %4436 = vmatpush1.msra.mxu0 %v4412
        %4437 = vmatprep.subr.mxu0 0.0
        %4438 = vmatpush1.msra.mxu0 %v4413
        %4439 = vmatprep.subr.mxu0 0.0
        %4440 = vmatpush1.msra.mxu0 %v4414
        %4441 = vmatprep.subr.mxu0 0.0
        %4442 = vmatpush1.msra.mxu0 %v4415
        %4443 = vmatprep.subr.mxu0 0.0
        %4444 = vmatpush1.msra.mxu0 %v4416
        %4445 = vmatprep.subr.mxu0 0.0
        %4446 = vmatpush1.msra.mxu0 %v4417
        %4447 = vmatprep.subr.mxu0 0.0
        %4448 = vmatpush1.msra.mxu0 %v4418
        %4449 = vmatprep.subr.mxu0 0.0
        %4450 = vmatpush1.msra.mxu0 %v4419
        %4451 = vmatprep.subr.mxu0 0.0
        %4452 = vmatpush1.msra.mxu0 %v4420
        %4453 = vmatprep.subr.mxu0 0.0
        %4454 = vmatpush1.msra.mxu0 0.0
        %4455 = vmatprep.subr.mxu0 0.0
        %4456 = vmatpush1.msra.mxu0 0.0
        %4457 = vmatprep.subr.mxu0 0.0
        %4458 = vmatpush1.msra.mxu0 0.0
        %4459 = vmatprep.subr.mxu0 0.0
        %4460 = vmatpush1.msra.mxu0 0.0
        %4461 = vmatprep.subr.mxu0 0.0
        %4462 = vmatpush1.msra.mxu0 0.0
        %4463 = vmatprep.subr.mxu0 0.0
        %4464 = vmatpush1.msra.mxu0 0.0
        %4465 = vmatprep.subr.mxu0 0.0
        %4466 = vmatpush1.msra.mxu0 0.0
        %4467 = vmatprep.subr.mxu0 0.0
        %4468 = vmatpush1.msra.mxu0 0.0
        %4469 = vmatprep.subr.mxu0 0.0
        %4470 = vmatpush1.msra.mxu0 0.0
        %4471 = vmatprep.subr.mxu0 0.0
        %4472 = vmatpush1.msra.mxu0 0.0
        %4473 = vmatprep.subr.mxu0 0.0
        %4474 = vmatpush1.msra.mxu0 0.0
        %4475 = vmatprep.subr.mxu0 0.0
        %4476 = vmatpush1.msra.mxu0 0.0
        %4477 = vmatprep.subr.mxu0 0.0
        %4478 = vmatpush1.msra.mxu0 0.0
        %4479 = vmatprep.subr.mxu0 0.0
        %4480 = vmatpush1.msra.mxu0 0.0
        %4481 = vmatprep.subr.mxu0 0.0
        %4482 = vmatpush1.msra.mxu0 0.0
        %4483 = vmatprep.subr.mxu0 0.0
        %4484 = vmatpush1.msra.mxu0 0.0
        %4485 = vmatprep.mubr.f32.mxu0 0.0
        %4486 = vmatmul.mubr.f32.gmra.mrb[0].mxu0 %v4380
        %v4487 = vpop.f32.mrb[0].mxu0
        %v4488 = vadd.f32 0.0, %v4487
        %v4489 = vpop.f32.mrb[0].mxu0
        %4490 = vmatprep.mubr.f32.mxu0 0.0
        %4491 = vmatmul.mubr.f32.gmra.mrb[0].mxu0 %v4381
        %v4492 = vpop.f32.mrb[0].mxu0
        %v4493 = vadd.f32 0.0, %v4492
        %v4494 = vpop.f32.mrb[0].mxu0
        %4495 = vmatprep.mubr.f32.mxu0 0.0
        %4496 = vmatmul.mubr.f32.gmra.mrb[0].mxu0 %v4382
        %v4497 = vpop.f32.mrb[0].mxu0
        %v4498 = vadd.f32 0.0, %v4497
        %v4499 = vpop.f32.mrb[0].mxu0
        %4500 = vmatprep.mubr.f32.mxu0 0.0
        %4501 = vmatmul.mubr.f32.gmra.mrb[0].mxu0 %v4383
        %v4502 = vpop.f32.mrb[0].mxu0
        %v4503 = vadd.f32 0.0, %v4502
        %v4504 = vpop.f32.mrb[0].mxu0
        %4505 = vmatprep.mubr.f32.mxu0 0.0
        %4506 = vmatmul.mubr.f32.gmra.mrb[0].mxu0 %v4384
        %v4507 = vpop.f32.mrb[0].mxu0
        %v4508 = vadd.f32 0.0, %v4507
        %v4509 = vpop.f32.mrb[0].mxu0
        %4510 = vmatprep.mubr.f32.mxu0 0.0
        %4511 = vmatmul.mubr.f32.gmra.mrb[0].mxu0 %v4385
        %v4512 = vpop.f32.mrb[0].mxu0
        %v4513 = vadd.f32 0.0, %v4512
        %v4514 = vpop.f32.mrb[0].mxu0
        %4515 = vmatprep.mubr.f32.mxu0 0.0
        %4516 = vmatmul.mubr.f32.gmra.mrb[0].mxu0 %v4386
        %v4517 = vpop.f32.mrb[0].mxu0
        %v4518 = vadd.f32 0.0, %v4517
        %v4519 = vpop.f32.mrb[0].mxu0
        %4520 = vmatprep.mubr.f32.mxu0 0.0
        %4521 = vmatmul.mubr.f32.gmra.mrb[0].mxu0 %v4387
        %v4522 = vpop.f32.mrb[0].mxu0
        %v4523 = vadd.f32 0.0, %v4522
        %v4524 = vpop.f32.mrb[0].mxu0
        %4525 = vmatprep.mubr.f32.mxu0 0.0
        %4526 = vmatmul.mubr.f32.gmra.mrb[0].mxu0 %v4388
        %v4527 = vpop.f32.mrb[0].mxu0
        %v4528 = vadd.f32 0.0, %v4527
        %v4529 = vpop.f32.mrb[0].mxu0
        %4530 = vmatprep.mubr.f32.mxu0 0.0
        %4531 = vmatmul.mubr.f32.gmra.mrb[0].mxu0 %v4389
        %v4532 = vpop.f32.mrb[0].mxu0
        %v4533 = vadd.f32 0.0, %v4532
        %v4534 = vpop.f32.mrb[0].mxu0
        %4535 = vmatprep.mubr.f32.mxu0 0.0
        %4536 = vmatmul.mubr.f32.gmra.mrb[0].mxu0 %v4390
        %v4537 = vpop.f32.mrb[0].mxu0
        %v4538 = vadd.f32 0.0, %v4537
        %v4539 = vpop.f32.mrb[0].mxu0
        %4540 = vmatprep.mubr.f32.mxu0 0.0
        %4541 = vmatmul.mubr.f32.gmra.mrb[0].mxu0 %v4391
        %v4542 = vpop.f32.mrb[0].mxu0
        %v4543 = vadd.f32 0.0, %v4542
        %v4544 = vpop.f32.mrb[0].mxu0
        %4545 = vmatprep.mubr.f32.mxu0 0.0
        %4546 = vmatmul.mubr.f32.gmra.mrb[0].mxu0 %v4392
        %v4547 = vpop.f32.mrb[0].mxu0
        %v4548 = vadd.f32 0.0, %v4547
        %v4549 = vpop.f32.mrb[0].mxu0
        %4550 = vmatprep.mubr.f32.mxu0 0.0
        %4551 = vmatmul.mubr.f32.gmra.mrb[0].mxu0 %v4393
        %v4552 = vpop.f32.mrb[0].mxu0
        %v4553 = vadd.f32 0.0, %v4552
        %v4554 = vpop.f32.mrb[0].mxu0
        %4555 = vmatprep.mubr.f32.mxu0 0.0
        %4556 = vmatmul.mubr.f32.gmra.mrb[0].mxu0 %v4394
        %v4557 = vpop.f32.mrb[0].mxu0
        %v4558 = vadd.f32 0.0, %v4557
        %v4559 = vpop.f32.mrb[0].mxu0
        %4560 = vmatprep.mubr.f32.mxu0 0.0
        %4561 = vmatmul.mubr.f32.gmra.mrb[0].mxu0 %v4395
        %v4562 = vpop.f32.mrb[0].mxu0
        %v4563 = vadd.f32 0.0, %v4562
        %v4564 = vpop.f32.mrb[0].mxu0
        %4565 = vmatprep.mubr.f32.mxu0 0.0
        %4566 = vmatmul.mubr.f32.gmra.mrb[0].mxu0 %v4396
        %v4567 = vpop.f32.mrb[0].mxu0
        %v4568 = vadd.f32 0.0, %v4567
        %v4569 = vpop.f32.mrb[0].mxu0
        %4570 = vmatprep.mubr.f32.mxu0 0.0
        %4571 = vmatmul.mubr.f32.gmra.mrb[0].mxu0 %v4397
        %v4572 = vpop.f32.mrb[0].mxu0
        %v4573 = vadd.f32 0.0, %v4572
        %v4574 = vpop.f32.mrb[0].mxu0
        %4575 = vmatprep.mubr.f32.mxu0 0.0
        %4576 = vmatmul.mubr.f32.gmra.mrb[0].mxu0 %v4398
        %v4577 = vpop.f32.mrb[0].mxu0
        %v4578 = vadd.f32 0.0, %v4577
        %v4579 = vpop.f32.mrb[0].mxu0
        %4580 = vmatprep.mubr.f32.mxu0 0.0
        %4581 = vmatmul.mubr.f32.gmra.mrb[0].mxu0 %v4399
        %v4582 = vpop.f32.mrb[0].mxu0
        %v4583 = vadd.f32 0.0, %v4582
        %v4584 = vpop.f32.mrb[0].mxu0
        %4585 = vmatprep.mubr.f32.mxu0 0.0
        %4586 = vmatmul.mubr.f32.gmra.mrb[0].mxu0 %v4400
        %v4587 = vpop.f32.mrb[0].mxu0
        %v4588 = vadd.f32 0.0, %v4587
        %v4589 = vpop.f32.mrb[0].mxu0
        %4590 = vmatprep.mubr.f32.mxu0 0.0
        %4591 = vmatmul.mubr.f32.gmra.mrb[0].mxu0 %v4401
        %v4592 = vpop.f32.mrb[0].mxu0
        %v4593 = vadd.f32 0.0, %v4592
        %v4594 = vpop.f32.mrb[0].mxu0
        %4595 = vmatprep.mubr.f32.mxu0 0.0
        %4596 = vmatmul.mubr.f32.gmra.mrb[0].mxu0 %v4402
        %v4597 = vpop.f32.mrb[0].mxu0
        %v4598 = vadd.f32 0.0, %v4597
        %v4599 = vpop.f32.mrb[0].mxu0
        %4600 = vmatprep.mubr.f32.mxu0 0.0
        %4601 = vmatmul.mubr.f32.gmra.mrb[0].mxu0 %v4403
        %v4602 = vpop.f32.mrb[0].mxu0
        %v4603 = vadd.f32 0.0, %v4602
        %v4604 = vpop.f32.mrb[0].mxu0
        %4605 = vmatprep.mubr.f32.mxu0 0.0
        %4606 = vmatmul.mubr.f32.gmra.mrb[0].mxu0 %v4404
        %v4607 = vpop.f32.mrb[0].mxu0
        %v4608 = vadd.f32 0.0, %v4607
        %v4609 = vpop.f32.mrb[0].mxu0
        %4610 = vdwg.mxu0
        %v4611 = vld [vmem:[%s416] sm:$0xff]
        %v4612 = vadd.f32 %v4488, %v4611
        %v4613 = vadd.f32 %v4493, %v4611
        %v4614 = vadd.f32 %v4498, %v4611
        %v4615 = vadd.f32 %v4503, %v4611
        %v4616 = vadd.f32 %v4508, %v4611
        %v4617 = vadd.f32 %v4513, %v4611
        %v4618 = vadd.f32 %v4518, %v4611
        %v4619 = vadd.f32 %v4523, %v4611
        %v4620 = vadd.f32 %v4528, %v4611
        %v4621 = vadd.f32 %v4533, %v4611
        %v4622 = vadd.f32 %v4538, %v4611
        %v4623 = vadd.f32 %v4543, %v4611
        %v4624 = vadd.f32 %v4548, %v4611
        %v4625 = vadd.f32 %v4553, %v4611
        %v4626 = vadd.f32 %v4558, %v4611
        %v4627 = vadd.f32 %v4563, %v4611
        %v4628 = vadd.f32 %v4568, %v4611
        %v4629 = vadd.f32 %v4573, %v4611
        %v4630 = vadd.f32 %v4578, %v4611
        %v4631 = vadd.f32 %v4583, %v4611
        %v4632 = vadd.f32 %v4588, %v4611
        %v4633 = vadd.f32 %v4593, %v4611
        %v4634 = vadd.f32 %v4598, %v4611
        %v4635 = vadd.f32 %v4603, %v4611
        %v4636 = vadd.f32 %v4608, %v4611
        %v4637 = vmax.f32 %v4612, 0.0
        %v4638 = vmax.f32 %v4613, 0.0
        %v4639 = vmax.f32 %v4614, 0.0
        %v4640 = vmax.f32 %v4615, 0.0
        %v4641 = vmax.f32 %v4616, 0.0
        %v4642 = vmax.f32 %v4617, 0.0
        %v4643 = vmax.f32 %v4618, 0.0
        %v4644 = vmax.f32 %v4619, 0.0
        %v4645 = vmax.f32 %v4620, 0.0
        %v4646 = vmax.f32 %v4621, 0.0
        %v4647 = vmax.f32 %v4622, 0.0
        %v4648 = vmax.f32 %v4623, 0.0
        %v4649 = vmax.f32 %v4624, 0.0
        %v4650 = vmax.f32 %v4625, 0.0
        %v4651 = vmax.f32 %v4626, 0.0
        %v4652 = vmax.f32 %v4627, 0.0
        %v4653 = vmax.f32 %v4628, 0.0
        %v4654 = vmax.f32 %v4629, 0.0
        %v4655 = vmax.f32 %v4630, 0.0
        %v4656 = vmax.f32 %v4631, 0.0
        %v4657 = vmax.f32 %v4632, 0.0
        %v4658 = vmax.f32 %v4633, 0.0
        %v4659 = vmax.f32 %v4634, 0.0
        %v4660 = vmax.f32 %v4635, 0.0
        %v4661 = vmax.f32 %v4636, 0.0
        %v4662 = vmin.f32 %v4637, 6.0
        %v4663 = vmin.f32 %v4638, 6.0
        %v4664 = vmin.f32 %v4639, 6.0
        %v4665 = vmin.f32 %v4640, 6.0
        %v4666 = vmin.f32 %v4641, 6.0
        %v4667 = vmin.f32 %v4642, 6.0
        %v4668 = vmin.f32 %v4643, 6.0
        %v4669 = vmin.f32 %v4644, 6.0
        %v4670 = vmin.f32 %v4645, 6.0
        %v4671 = vmin.f32 %v4646, 6.0
        %v4672 = vmin.f32 %v4647, 6.0
        %v4673 = vmin.f32 %v4648, 6.0
        %v4674 = vmin.f32 %v4649, 6.0
        %v4675 = vmin.f32 %v4650, 6.0
        %v4676 = vmin.f32 %v4651, 6.0
        %v4677 = vmin.f32 %v4652, 6.0
        %v4678 = vmin.f32 %v4653, 6.0
        %v4679 = vmin.f32 %v4654, 6.0
        %v4680 = vmin.f32 %v4655, 6.0
        %v4681 = vmin.f32 %v4656, 6.0
        %v4682 = vmin.f32 %v4657, 6.0
        %v4683 = vmin.f32 %v4658, 6.0
        %v4684 = vmin.f32 %v4659, 6.0
        %v4685 = vmin.f32 %v4660, 6.0
        %v4686 = vmin.f32 %v4661, 6.0
        %s4687 = scalar_lea.vmem %s407, 128 [#allocation8]
        %v4688 = vld [vmem:[%s4687] sm:$0xff]
        %v4689 = vld [vmem:[%s4687 + $0x8] sm:$0xff]
        %v4690 = vld [vmem:[%s4687 + $0x10] sm:$0xff]
        %v4691 = vld [vmem:[%s4687 + $0x18] sm:$0xff]
        %v4692 = vld [vmem:[%s4687 + $0x20] sm:$0xff]
        %v4693 = vld [vmem:[%s4687 + $0x28] sm:$0xff]
        %v4694 = vld [vmem:[%s4687 + $0x30] sm:$0xff]
        %v4695 = vld [vmem:[%s4687 + $0x38] sm:$0xff]
        %v4696 = vld [vmem:[%s4687 + $0x40] sm:$0xff]
        %v4697 = vld [vmem:[%s4687 + $0x48] sm:$0xff]
        %v4698 = vld [vmem:[%s4687 + $0x50] sm:$0xff]
        %v4699 = vld [vmem:[%s4687 + $0x58] sm:$0xff]
        %v4700 = vld [vmem:[%s4687 + $0x60] sm:$0xff]
        %v4701 = vld [vmem:[%s4687 + $0x68] sm:$0xff]
        %v4702 = vld [vmem:[%s4687 + $0x70] sm:$0xff]
        %v4703 = vld [vmem:[%s4687 + $0x78] sm:$0xff]
        %4704 = vmatprep.subr.mxu0 0.0
        %4705 = vmatpush1.msra.mxu0 %v4688
        %4706 = vmatprep.subr.mxu0 0.0
        %4707 = vmatpush1.msra.mxu0 %v4689
        %4708 = vmatprep.subr.mxu0 0.0
        %4709 = vmatpush1.msra.mxu0 %v4690
        %4710 = vmatprep.subr.mxu0 0.0
        %4711 = vmatpush1.msra.mxu0 %v4691
        %4712 = vmatprep.subr.mxu0 0.0
        %4713 = vmatpush1.msra.mxu0 %v4692
        %4714 = vmatprep.subr.mxu0 0.0
        %4715 = vmatpush1.msra.mxu0 %v4693
        %4716 = vmatprep.subr.mxu0 0.0
        %4717 = vmatpush1.msra.mxu0 %v4694
        %4718 = vmatprep.subr.mxu0 0.0
        %4719 = vmatpush1.msra.mxu0 %v4695
        %4720 = vmatprep.subr.mxu0 0.0
        %4721 = vmatpush1.msra.mxu0 %v4696
        %4722 = vmatprep.subr.mxu0 0.0
        %4723 = vmatpush1.msra.mxu0 %v4697
        %4724 = vmatprep.subr.mxu0 0.0
        %4725 = vmatpush1.msra.mxu0 %v4698
        %4726 = vmatprep.subr.mxu0 0.0
        %4727 = vmatpush1.msra.mxu0 %v4699
        %4728 = vmatprep.subr.mxu0 0.0
        %4729 = vmatpush1.msra.mxu0 %v4700
        %4730 = vmatprep.subr.mxu0 0.0
        %4731 = vmatpush1.msra.mxu0 %v4701
        %4732 = vmatprep.subr.mxu0 0.0
        %4733 = vmatpush1.msra.mxu0 %v4702
        %4734 = vmatprep.subr.mxu0 0.0
        %4735 = vmatpush1.msra.mxu0 %v4703
        %4736 = vmatprep.subr.mxu0 0.0
        %4737 = vmatpush1.msra.mxu0 0.0
        %4738 = vmatprep.subr.mxu0 0.0
        %4739 = vmatpush1.msra.mxu0 0.0
        %4740 = vmatprep.subr.mxu0 0.0
        %4741 = vmatpush1.msra.mxu0 0.0
        %4742 = vmatprep.subr.mxu0 0.0
        %4743 = vmatpush1.msra.mxu0 0.0
        %4744 = vmatprep.subr.mxu0 0.0
        %4745 = vmatpush1.msra.mxu0 0.0
        %4746 = vmatprep.subr.mxu0 0.0
        %4747 = vmatpush1.msra.mxu0 0.0
        %4748 = vmatprep.subr.mxu0 0.0
        %4749 = vmatpush1.msra.mxu0 0.0
        %4750 = vmatprep.subr.mxu0 0.0
        %4751 = vmatpush1.msra.mxu0 0.0
        %4752 = vmatprep.subr.mxu0 0.0
        %4753 = vmatpush1.msra.mxu0 0.0
        %4754 = vmatprep.subr.mxu0 0.0
        %4755 = vmatpush1.msra.mxu0 0.0
        %4756 = vmatprep.subr.mxu0 0.0
        %4757 = vmatpush1.msra.mxu0 0.0
        %4758 = vmatprep.subr.mxu0 0.0
        %4759 = vmatpush1.msra.mxu0 0.0
        %4760 = vmatprep.subr.mxu0 0.0
        %4761 = vmatpush1.msra.mxu0 0.0
        %4762 = vmatprep.subr.mxu0 0.0
        %4763 = vmatpush1.msra.mxu0 0.0
        %4764 = vmatprep.subr.mxu0 0.0
        %4765 = vmatpush1.msra.mxu0 0.0
        %4766 = vmatprep.subr.mxu0 0.0
        %4767 = vmatpush1.msra.mxu0 0.0
        %4768 = vmatprep.mubr.f32.mxu0 0.0
        %4769 = vmatmul.mubr.f32.gmra.mrb[0].mxu0 %v4662
        %v4770 = vpop.f32.mrb[0].mxu0
        %v4771 = vadd.f32 0.0, %v4770
        %v4772 = vpop.f32.mrb[0].mxu0
        %4773 = vmatprep.mubr.f32.mxu0 0.0
        %4774 = vmatmul.mubr.f32.gmra.mrb[0].mxu0 %v4663
        %v4775 = vpop.f32.mrb[0].mxu0
        %v4776 = vadd.f32 0.0, %v4775
        %v4777 = vpop.f32.mrb[0].mxu0
        %4778 = vmatprep.mubr.f32.mxu0 0.0
        %4779 = vmatmul.mubr.f32.gmra.mrb[0].mxu0 %v4664
        %v4780 = vpop.f32.mrb[0].mxu0
        %v4781 = vadd.f32 0.0, %v4780
        %v4782 = vpop.f32.mrb[0].mxu0
        %4783 = vmatprep.mubr.f32.mxu0 0.0
        %4784 = vmatmul.mubr.f32.gmra.mrb[0].mxu0 %v4665
        %v4785 = vpop.f32.mrb[0].mxu0
        %v4786 = vadd.f32 0.0, %v4785
        %v4787 = vpop.f32.mrb[0].mxu0
        %4788 = vmatprep.mubr.f32.mxu0 0.0
        %4789 = vmatmul.mubr.f32.gmra.mrb[0].mxu0 %v4666
        %v4790 = vpop.f32.mrb[0].mxu0
        %v4791 = vadd.f32 0.0, %v4790
        %v4792 = vpop.f32.mrb[0].mxu0
        %4793 = vmatprep.mubr.f32.mxu0 0.0
        %4794 = vmatmul.mubr.f32.gmra.mrb[0].mxu0 %v4667
        %v4795 = vpop.f32.mrb[0].mxu0
        %v4796 = vadd.f32 0.0, %v4795
        %v4797 = vpop.f32.mrb[0].mxu0
        %4798 = vmatprep.mubr.f32.mxu0 0.0
        %4799 = vmatmul.mubr.f32.gmra.mrb[0].mxu0 %v4668
        %v4800 = vpop.f32.mrb[0].mxu0
        %v4801 = vadd.f32 0.0, %v4800
        %v4802 = vpop.f32.mrb[0].mxu0
        %4803 = vmatprep.mubr.f32.mxu0 0.0
        %4804 = vmatmul.mubr.f32.gmra.mrb[0].mxu0 %v4669
        %v4805 = vpop.f32.mrb[0].mxu0
        %v4806 = vadd.f32 0.0, %v4805
        %v4807 = vpop.f32.mrb[0].mxu0
        %4808 = vmatprep.mubr.f32.mxu0 0.0
        %4809 = vmatmul.mubr.f32.gmra.mrb[0].mxu0 %v4670
        %v4810 = vpop.f32.mrb[0].mxu0
        %v4811 = vadd.f32 0.0, %v4810
        %v4812 = vpop.f32.mrb[0].mxu0
        %4813 = vmatprep.mubr.f32.mxu0 0.0
        %4814 = vmatmul.mubr.f32.gmra.mrb[0].mxu0 %v4671
        %v4815 = vpop.f32.mrb[0].mxu0
        %v4816 = vadd.f32 0.0, %v4815
        %v4817 = vpop.f32.mrb[0].mxu0
        %4818 = vmatprep.mubr.f32.mxu0 0.0
        %4819 = vmatmul.mubr.f32.gmra.mrb[0].mxu0 %v4672
        %v4820 = vpop.f32.mrb[0].mxu0
        %v4821 = vadd.f32 0.0, %v4820
        %v4822 = vpop.f32.mrb[0].mxu0
        %4823 = vmatprep.mubr.f32.mxu0 0.0
        %4824 = vmatmul.mubr.f32.gmra.mrb[0].mxu0 %v4673
        %v4825 = vpop.f32.mrb[0].mxu0
        %v4826 = vadd.f32 0.0, %v4825
        %v4827 = vpop.f32.mrb[0].mxu0
        %4828 = vmatprep.mubr.f32.mxu0 0.0
        %4829 = vmatmul.mubr.f32.gmra.mrb[0].mxu0 %v4674
        %v4830 = vpop.f32.mrb[0].mxu0
        %v4831 = vadd.f32 0.0, %v4830
        %v4832 = vpop.f32.mrb[0].mxu0
        %4833 = vmatprep.mubr.f32.mxu0 0.0
        %4834 = vmatmul.mubr.f32.gmra.mrb[0].mxu0 %v4675
        %v4835 = vpop.f32.mrb[0].mxu0
        %v4836 = vadd.f32 0.0, %v4835
        %v4837 = vpop.f32.mrb[0].mxu0
        %4838 = vmatprep.mubr.f32.mxu0 0.0
        %4839 = vmatmul.mubr.f32.gmra.mrb[0].mxu0 %v4676
        %v4840 = vpop.f32.mrb[0].mxu0
        %v4841 = vadd.f32 0.0, %v4840
        %v4842 = vpop.f32.mrb[0].mxu0
        %4843 = vmatprep.mubr.f32.mxu0 0.0
        %4844 = vmatmul.mubr.f32.gmra.mrb[0].mxu0 %v4677
        %v4845 = vpop.f32.mrb[0].mxu0
        %v4846 = vadd.f32 0.0, %v4845
        %v4847 = vpop.f32.mrb[0].mxu0
        %4848 = vmatprep.mubr.f32.mxu0 0.0
        %4849 = vmatmul.mubr.f32.gmra.mrb[0].mxu0 %v4678
        %v4850 = vpop.f32.mrb[0].mxu0
        %v4851 = vadd.f32 0.0, %v4850
        %v4852 = vpop.f32.mrb[0].mxu0
        %4853 = vmatprep.mubr.f32.mxu0 0.0
        %4854 = vmatmul.mubr.f32.gmra.mrb[0].mxu0 %v4679
        %v4855 = vpop.f32.mrb[0].mxu0
        %v4856 = vadd.f32 0.0, %v4855
        %v4857 = vpop.f32.mrb[0].mxu0
        %4858 = vmatprep.mubr.f32.mxu0 0.0
        %4859 = vmatmul.mubr.f32.gmra.mrb[0].mxu0 %v4680
        %v4860 = vpop.f32.mrb[0].mxu0
        %v4861 = vadd.f32 0.0, %v4860
        %v4862 = vpop.f32.mrb[0].mxu0
        %4863 = vmatprep.mubr.f32.mxu0 0.0
        %4864 = vmatmul.mubr.f32.gmra.mrb[0].mxu0 %v4681
        %v4865 = vpop.f32.mrb[0].mxu0
        %v4866 = vadd.f32 0.0, %v4865
        %v4867 = vpop.f32.mrb[0].mxu0
        %4868 = vmatprep.mubr.f32.mxu0 0.0
        %4869 = vmatmul.mubr.f32.gmra.mrb[0].mxu0 %v4682
        %v4870 = vpop.f32.mrb[0].mxu0
        %v4871 = vadd.f32 0.0, %v4870
        %v4872 = vpop.f32.mrb[0].mxu0
        %4873 = vmatprep.mubr.f32.mxu0 0.0
        %4874 = vmatmul.mubr.f32.gmra.mrb[0].mxu0 %v4683
        %v4875 = vpop.f32.mrb[0].mxu0
        %v4876 = vadd.f32 0.0, %v4875
        %v4877 = vpop.f32.mrb[0].mxu0
        %4878 = vmatprep.mubr.f32.mxu0 0.0
        %4879 = vmatmul.mubr.f32.gmra.mrb[0].mxu0 %v4684
        %v4880 = vpop.f32.mrb[0].mxu0
        %v4881 = vadd.f32 0.0, %v4880
        %v4882 = vpop.f32.mrb[0].mxu0
        %4883 = vmatprep.mubr.f32.mxu0 0.0
        %4884 = vmatmul.mubr.f32.gmra.mrb[0].mxu0 %v4685
        %v4885 = vpop.f32.mrb[0].mxu0
        %v4886 = vadd.f32 0.0, %v4885
        %v4887 = vpop.f32.mrb[0].mxu0
        %4888 = vmatprep.mubr.f32.mxu0 0.0
        %4889 = vmatmul.mubr.f32.gmra.mrb[0].mxu0 %v4686
        %v4890 = vpop.f32.mrb[0].mxu0
        %v4891 = vadd.f32 0.0, %v4890
        %v4892 = vpop.f32.mrb[0].mxu0
        %4893 = vdwg.mxu0
        %s4894 = scalar_lea.vmem %s416, 8 [#allocation10]
        %v4895 = vld [vmem:[%s4894] sm:$0xff]
        %v4896 = vadd.f32 %v4771, %v4895
        %v4897 = vadd.f32 %v4776, %v4895
        %v4898 = vadd.f32 %v4781, %v4895
        %v4899 = vadd.f32 %v4786, %v4895
        %v4900 = vadd.f32 %v4791, %v4895
        %v4901 = vadd.f32 %v4796, %v4895
        %v4902 = vadd.f32 %v4801, %v4895
        %v4903 = vadd.f32 %v4806, %v4895
        %v4904 = vadd.f32 %v4811, %v4895
        %v4905 = vadd.f32 %v4816, %v4895
        %v4906 = vadd.f32 %v4821, %v4895
        %v4907 = vadd.f32 %v4826, %v4895
        %v4908 = vadd.f32 %v4831, %v4895
        %v4909 = vadd.f32 %v4836, %v4895
        %v4910 = vadd.f32 %v4841, %v4895
        %v4911 = vadd.f32 %v4846, %v4895
        %v4912 = vadd.f32 %v4851, %v4895
        %v4913 = vadd.f32 %v4856, %v4895
        %v4914 = vadd.f32 %v4861, %v4895
        %v4915 = vadd.f32 %v4866, %v4895
        %v4916 = vadd.f32 %v4871, %v4895
        %v4917 = vadd.f32 %v4876, %v4895
        %v4918 = vadd.f32 %v4881, %v4895
        %v4919 = vadd.f32 %v4886, %v4895
        %v4920 = vadd.f32 %v4891, %v4895
        %v4921 = vmax.f32 %v4896, 0.0
        %v4922 = vmax.f32 %v4897, 0.0
        %v4923 = vmax.f32 %v4898, 0.0
        %v4924 = vmax.f32 %v4899, 0.0
        %v4925 = vmax.f32 %v4900, 0.0
        %v4926 = vmax.f32 %v4901, 0.0
        %v4927 = vmax.f32 %v4902, 0.0
        %v4928 = vmax.f32 %v4903, 0.0
        %v4929 = vmax.f32 %v4904, 0.0
        %v4930 = vmax.f32 %v4905, 0.0
        %v4931 = vmax.f32 %v4906, 0.0
        %v4932 = vmax.f32 %v4907, 0.0
        %v4933 = vmax.f32 %v4908, 0.0
        %v4934 = vmax.f32 %v4909, 0.0
        %v4935 = vmax.f32 %v4910, 0.0
        %v4936 = vmax.f32 %v4911, 0.0
        %v4937 = vmax.f32 %v4912, 0.0
        %v4938 = vmax.f32 %v4913, 0.0
        %v4939 = vmax.f32 %v4914, 0.0
        %v4940 = vmax.f32 %v4915, 0.0
        %v4941 = vmax.f32 %v4916, 0.0
        %v4942 = vmax.f32 %v4917, 0.0
        %v4943 = vmax.f32 %v4918, 0.0
        %v4944 = vmax.f32 %v4919, 0.0
        %v4945 = vmax.f32 %v4920, 0.0
        %v4946 = vmin.f32 %v4921, 6.0
        %v4947 = vmin.f32 %v4922, 6.0
        %v4948 = vmin.f32 %v4923, 6.0
        %v4949 = vmin.f32 %v4924, 6.0
        %v4950 = vmin.f32 %v4925, 6.0
        %v4951 = vmin.f32 %v4926, 6.0
        %v4952 = vmin.f32 %v4927, 6.0
        %v4953 = vmin.f32 %v4928, 6.0
        %v4954 = vmin.f32 %v4929, 6.0
        %v4955 = vmin.f32 %v4930, 6.0
        %v4956 = vmin.f32 %v4931, 6.0
        %v4957 = vmin.f32 %v4932, 6.0
        %v4958 = vmin.f32 %v4933, 6.0
        %v4959 = vmin.f32 %v4934, 6.0
        %v4960 = vmin.f32 %v4935, 6.0
        %v4961 = vmin.f32 %v4936, 6.0
        %v4962 = vmin.f32 %v4937, 6.0
        %v4963 = vmin.f32 %v4938, 6.0
        %v4964 = vmin.f32 %v4939, 6.0
        %v4965 = vmin.f32 %v4940, 6.0
        %v4966 = vmin.f32 %v4941, 6.0
        %v4967 = vmin.f32 %v4942, 6.0
        %v4968 = vmin.f32 %v4943, 6.0
        %v4969 = vmin.f32 %v4944, 6.0
        %v4970 = vmin.f32 %v4945, 6.0
        %v4971 = vld [vmem:[#allocation3] sm:$0xff]
        %v4972 = vld [vmem:[#allocation3 + $0x8] sm:$0xff]
        %v4973 = vld [vmem:[#allocation3 + $0x10] sm:$0xff]
        %v4974 = vld [vmem:[#allocation3 + $0x18] sm:$0xff]
        %v4975 = vld [vmem:[#allocation3 + $0x20] sm:$0xff]
        %v4976 = vld [vmem:[#allocation3 + $0x28] sm:$0xff]
        %v4977 = vld [vmem:[#allocation3 + $0x30] sm:$0xff]
        %v4978 = vld [vmem:[#allocation3 + $0x38] sm:$0xff]
        %v4979 = vld [vmem:[#allocation3 + $0x40] sm:$0xff]
        %v4980 = vld [vmem:[#allocation3 + $0x48] sm:$0xff]
        %v4981 = vld [vmem:[#allocation3 + $0x50] sm:$0xff]
        %v4982 = vld [vmem:[#allocation3 + $0x58] sm:$0xff]
        %v4983 = vld [vmem:[#allocation3 + $0x60] sm:$0xff]
        %v4984 = vld [vmem:[#allocation3 + $0x68] sm:$0xff]
        %v4985 = vld [vmem:[#allocation3 + $0x70] sm:$0xff]
        %v4986 = vld [vmem:[#allocation3 + $0x78] sm:$0xff]
        %v4987 = vld [vmem:[#allocation3 + $0x80] sm:$0xff]
        %v4988 = vld [vmem:[#allocation3 + $0x88] sm:$0xff]
        %v4989 = vld [vmem:[#allocation3 + $0x90] sm:$0xff]
        %v4990 = vld [vmem:[#allocation3 + $0x98] sm:$0xff]
        %v4991 = vld [vmem:[#allocation3 + $0xa0] sm:$0xff]
        %v4992 = vld [vmem:[#allocation3 + $0xa8] sm:$0xff]
        %v4993 = vld [vmem:[#allocation3 + $0xb0] sm:$0xff]
        %v4994 = vld [vmem:[#allocation3 + $0xb8] sm:$0xff]
        %v4995 = vld [vmem:[#allocation3 + $0xc0] sm:$0xff]
        %v4996 = vmul.f32 %v4946, %v4971
        %v4997 = vmul.f32 %v4947, %v4972
        %v4998 = vmul.f32 %v4948, %v4973
        %v4999 = vmul.f32 %v4949, %v4974
        %v5000 = vmul.f32 %v4950, %v4975
        %v5001 = vmul.f32 %v4951, %v4976
        %v5002 = vmul.f32 %v4952, %v4977
        %v5003 = vmul.f32 %v4953, %v4978
        %v5004 = vmul.f32 %v4954, %v4979
        %v5005 = vmul.f32 %v4955, %v4980
        %v5006 = vmul.f32 %v4956, %v4981
        %v5007 = vmul.f32 %v4957, %v4982
        %v5008 = vmul.f32 %v4958, %v4983
        %v5009 = vmul.f32 %v4959, %v4984
        %v5010 = vmul.f32 %v4960, %v4985
        %v5011 = vmul.f32 %v4961, %v4986
        %v5012 = vmul.f32 %v4962, %v4987
        %v5013 = vmul.f32 %v4963, %v4988
        %v5014 = vmul.f32 %v4964, %v4989
        %v5015 = vmul.f32 %v4965, %v4990
        %v5016 = vmul.f32 %v4966, %v4991
        %v5017 = vmul.f32 %v4967, %v4992
        %v5018 = vmul.f32 %v4968, %v4993
        %v5019 = vmul.f32 %v4969, %v4994
        %v5020 = vmul.f32 %v4970, %v4995
        %5021 = vst [vmem:[#allocation2 + $0x10] sm:$0xff] %v4996
        %5022 = vst [vmem:[#allocation2 + $0x18] sm:$0xff] %v4997
        %5023 = vst [vmem:[#allocation2 + $0x20] sm:$0xff] %v4998
        %5024 = vst [vmem:[#allocation2 + $0x28] sm:$0xff] %v4999
        %5025 = vst [vmem:[#allocation2 + $0x30] sm:$0xff] %v5000
        %5026 = vst [vmem:[#allocation2 + $0x38] sm:$0xff] %v5001
        %5027 = vst [vmem:[#allocation2 + $0x40] sm:$0xff] %v5002
        %5028 = vst [vmem:[#allocation2 + $0x48] sm:$0xff] %v5003
        %5029 = vst [vmem:[#allocation2 + $0x50] sm:$0xff] %v5004
        %5030 = vst [vmem:[#allocation2 + $0x58] sm:$0xff] %v5005
        %5031 = vst [vmem:[#allocation2 + $0x60] sm:$0xff] %v5006
        %5032 = vst [vmem:[#allocation2 + $0x68] sm:$0xff] %v5007
        %5033 = vst [vmem:[#allocation2 + $0x70] sm:$0xff] %v5008
        %5034 = vst [vmem:[#allocation2 + $0x78] sm:$0xff] %v5009
        %5035 = vst [vmem:[#allocation2 + $0x80] sm:$0xff] %v5010
        %5036 = vst [vmem:[#allocation2 + $0x88] sm:$0xff] %v5011
        %5037 = vst [vmem:[#allocation2 + $0x90] sm:$0xff] %v5012
        %5038 = vst [vmem:[#allocation2 + $0x98] sm:$0xff] %v5013
        %5039 = vst [vmem:[#allocation2 + $0xa0] sm:$0xff] %v5014
        %5040 = vst [vmem:[#allocation2 + $0xa8] sm:$0xff] %v5015
        %5041 = vst [vmem:[#allocation2 + $0xb0] sm:$0xff] %v5016
        %5042 = vst [vmem:[#allocation2 + $0xb8] sm:$0xff] %v5017
        %5043 = vst [vmem:[#allocation2 + $0xc0] sm:$0xff] %v5018
        %5044 = vst [vmem:[#allocation2 + $0xc8] sm:$0xff] %v5019
        %5045 = vst [vmem:[#allocation2 + $0xd0] sm:$0xff] %v5020
        %v5046 = vld [vmem:[#allocation2 + $0x5] sm:$0xff]
        %v5047 = vld [vmem:[#allocation2 + $0xd] sm:$0xff]
        %v5048 = vld [vmem:[#allocation2 + $0x15] sm:$0xff]
        %v5049 = vld [vmem:[#allocation2 + $0x1d] sm:$0xff]
        %v5050 = vld [vmem:[#allocation2 + $0x25] sm:$0xff]
        %v5051 = vld [vmem:[#allocation2 + $0x2d] sm:$0xff]
        %v5052 = vld [vmem:[#allocation2 + $0x35] sm:$0xff]
        %v5053 = vld [vmem:[#allocation2 + $0x3d] sm:$0xff]
        %v5054 = vld [vmem:[#allocation2 + $0x45] sm:$0xff]
        %v5055 = vld [vmem:[#allocation2 + $0x4d] sm:$0xff]
        %v5056 = vld [vmem:[#allocation2 + $0x55] sm:$0xff]
        %v5057 = vld [vmem:[#allocation2 + $0x5d] sm:$0xff]
        %v5058 = vld [vmem:[#allocation2 + $0x65] sm:$0xff]
        %v5059 = vld [vmem:[#allocation2 + $0x6d] sm:$0xff]
        %v5060 = vld [vmem:[#allocation2 + $0x75] sm:$0xff]
        %v5061 = vld [vmem:[#allocation2 + $0x7d] sm:$0xff]
        %v5062 = vld [vmem:[#allocation2 + $0x85] sm:$0xff]
        %v5063 = vld [vmem:[#allocation2 + $0x8d] sm:$0xff]
        %v5064 = vld [vmem:[#allocation2 + $0x95] sm:$0xff]
        %v5065 = vld [vmem:[#allocation2 + $0x9d] sm:$0xff]
        %v5066 = vld [vmem:[#allocation2 + $0xa5] sm:$0xff]
        %v5067 = vld [vmem:[#allocation2 + $0xad] sm:$0xff]
        %v5068 = vld [vmem:[#allocation2 + $0xb5] sm:$0xff]
        %v5069 = vld [vmem:[#allocation2 + $0xbd] sm:$0xff]
        %v5070 = vld [vmem:[#allocation2 + $0xc5] sm:$0xff]
        %s5071 = scalar_lea.vmem %s389, 1920 [#allocation5]
        %v5072 = vld [vmem:[%s5071] sm:$0xff]
        %v5073 = vld [vmem:[%s5071 + $0x8] sm:$0xff]
        %v5074 = vld [vmem:[%s5071 + $0x10] sm:$0xff]
        %v5075 = vld [vmem:[%s5071 + $0x18] sm:$0xff]
        %v5076 = vld [vmem:[%s5071 + $0x20] sm:$0xff]
        %v5077 = vld [vmem:[%s5071 + $0x28] sm:$0xff]
        %v5078 = vld [vmem:[%s5071 + $0x30] sm:$0xff]
        %v5079 = vld [vmem:[%s5071 + $0x38] sm:$0xff]
        %v5080 = vld [vmem:[%s5071 + $0x40] sm:$0xff]
        %v5081 = vld [vmem:[%s5071 + $0x48] sm:$0xff]
        %v5082 = vld [vmem:[%s5071 + $0x50] sm:$0xff]
        %v5083 = vld [vmem:[%s5071 + $0x58] sm:$0xff]
        %v5084 = vld [vmem:[%s5071 + $0x60] sm:$0xff]
        %v5085 = vld [vmem:[%s5071 + $0x68] sm:$0xff]
        %v5086 = vld [vmem:[%s5071 + $0x70] sm:$0xff]
        %v5087 = vld [vmem:[%s5071 + $0x78] sm:$0xff]
        %v5088 = vld [vmem:[#allocation2 + $0x6] sm:$0xff]
        %v5089 = vld [vmem:[#allocation2 + $0xe] sm:$0xff]
        %v5090 = vld [vmem:[#allocation2 + $0x16] sm:$0xff]
        %v5091 = vld [vmem:[#allocation2 + $0x1e] sm:$0xff]
        %v5092 = vld [vmem:[#allocation2 + $0x26] sm:$0xff]
        %v5093 = vld [vmem:[#allocation2 + $0x2e] sm:$0xff]
        %v5094 = vld [vmem:[#allocation2 + $0x36] sm:$0xff]
        %v5095 = vld [vmem:[#allocation2 + $0x3e] sm:$0xff]
        %v5096 = vld [vmem:[#allocation2 + $0x46] sm:$0xff]
        %v5097 = vld [vmem:[#allocation2 + $0x4e] sm:$0xff]
        %v5098 = vld [vmem:[#allocation2 + $0x56] sm:$0xff]
        %v5099 = vld [vmem:[#allocation2 + $0x5e] sm:$0xff]
        %v5100 = vld [vmem:[#allocation2 + $0x66] sm:$0xff]
        %v5101 = vld [vmem:[#allocation2 + $0x6e] sm:$0xff]
        %v5102 = vld [vmem:[#allocation2 + $0x76] sm:$0xff]
        %v5103 = vld [vmem:[#allocation2 + $0x7e] sm:$0xff]
        %v5104 = vld [vmem:[#allocation2 + $0x86] sm:$0xff]
        %v5105 = vld [vmem:[#allocation2 + $0x8e] sm:$0xff]
        %v5106 = vld [vmem:[#allocation2 + $0x96] sm:$0xff]
        %v5107 = vld [vmem:[#allocation2 + $0x9e] sm:$0xff]
        %v5108 = vld [vmem:[#allocation2 + $0xa6] sm:$0xff]
        %v5109 = vld [vmem:[#allocation2 + $0xae] sm:$0xff]
        %v5110 = vld [vmem:[#allocation2 + $0xb6] sm:$0xff]
        %v5111 = vld [vmem:[#allocation2 + $0xbe] sm:$0xff]
        %v5112 = vld [vmem:[#allocation2 + $0xc6] sm:$0xff]
        %s5113 = scalar_lea.vmem %s389, 2048 [#allocation5]
        %v5114 = vld [vmem:[%s5113] sm:$0xff]
        %v5115 = vld [vmem:[%s5113 + $0x8] sm:$0xff]
        %v5116 = vld [vmem:[%s5113 + $0x10] sm:$0xff]
        %v5117 = vld [vmem:[%s5113 + $0x18] sm:$0xff]
        %v5118 = vld [vmem:[%s5113 + $0x20] sm:$0xff]
        %v5119 = vld [vmem:[%s5113 + $0x28] sm:$0xff]
        %v5120 = vld [vmem:[%s5113 + $0x30] sm:$0xff]
        %v5121 = vld [vmem:[%s5113 + $0x38] sm:$0xff]
        %v5122 = vld [vmem:[%s5113 + $0x40] sm:$0xff]
        %v5123 = vld [vmem:[%s5113 + $0x48] sm:$0xff]
        %v5124 = vld [vmem:[%s5113 + $0x50] sm:$0xff]
        %v5125 = vld [vmem:[%s5113 + $0x58] sm:$0xff]
        %v5126 = vld [vmem:[%s5113 + $0x60] sm:$0xff]
        %v5127 = vld [vmem:[%s5113 + $0x68] sm:$0xff]
        %v5128 = vld [vmem:[%s5113 + $0x70] sm:$0xff]
        %v5129 = vld [vmem:[%s5113 + $0x78] sm:$0xff]
        %5130 = vmatprep.subr.mxu0 0.0
        %5131 = vmatpush1.msra.mxu0 %v5114
        %5132 = vmatprep.subr.mxu0 0.0
        %5133 = vmatpush1.msra.mxu0 %v5115
        %5134 = vmatprep.subr.mxu0 0.0
        %5135 = vmatpush1.msra.mxu0 %v5116
        %5136 = vmatprep.subr.mxu0 0.0
        %5137 = vmatpush1.msra.mxu0 %v5117
        %5138 = vmatprep.subr.mxu0 0.0
        %5139 = vmatpush1.msra.mxu0 %v5118
        %5140 = vmatprep.subr.mxu0 0.0
        %5141 = vmatpush1.msra.mxu0 %v5119
        %5142 = vmatprep.subr.mxu0 0.0
        %5143 = vmatpush1.msra.mxu0 %v5120
        %5144 = vmatprep.subr.mxu0 0.0
        %5145 = vmatpush1.msra.mxu0 %v5121
        %5146 = vmatprep.subr.mxu0 0.0
        %5147 = vmatpush1.msra.mxu0 %v5122
        %5148 = vmatprep.subr.mxu0 0.0
        %5149 = vmatpush1.msra.mxu0 %v5123
        %5150 = vmatprep.subr.mxu0 0.0
        %5151 = vmatpush1.msra.mxu0 %v5124
        %5152 = vmatprep.subr.mxu0 0.0
        %5153 = vmatpush1.msra.mxu0 %v5125
        %5154 = vmatprep.subr.mxu0 0.0
        %5155 = vmatpush1.msra.mxu0 %v5126
        %5156 = vmatprep.subr.mxu0 0.0
        %5157 = vmatpush1.msra.mxu0 %v5127
        %5158 = vmatprep.subr.mxu0 0.0
        %5159 = vmatpush1.msra.mxu0 %v5128
        %5160 = vmatprep.subr.mxu0 0.0
        %5161 = vmatpush1.msra.mxu0 %v5129
        %5162 = vmatprep.subr.mxu0 0.0
        %5163 = vmatpush1.msra.mxu0 0.0
        %5164 = vmatprep.subr.mxu0 0.0
        %5165 = vmatpush1.msra.mxu0 0.0
        %5166 = vmatprep.subr.mxu0 0.0
        %5167 = vmatpush1.msra.mxu0 0.0
        %5168 = vmatprep.subr.mxu0 0.0
        %5169 = vmatpush1.msra.mxu0 0.0
        %5170 = vmatprep.subr.mxu0 0.0
        %5171 = vmatpush1.msra.mxu0 0.0
        %5172 = vmatprep.subr.mxu0 0.0
        %5173 = vmatpush1.msra.mxu0 0.0
        %5174 = vmatprep.subr.mxu0 0.0
        %5175 = vmatpush1.msra.mxu0 0.0
        %5176 = vmatprep.subr.mxu0 0.0
        %5177 = vmatpush1.msra.mxu0 0.0
        %5178 = vmatprep.subr.mxu0 0.0
        %5179 = vmatpush1.msra.mxu0 0.0
        %5180 = vmatprep.subr.mxu0 0.0
        %5181 = vmatpush1.msra.mxu0 0.0
        %5182 = vmatprep.subr.mxu0 0.0
        %5183 = vmatpush1.msra.mxu0 0.0
        %5184 = vmatprep.subr.mxu0 0.0
        %5185 = vmatpush1.msra.mxu0 0.0
        %5186 = vmatprep.subr.mxu0 0.0
        %5187 = vmatpush1.msra.mxu0 0.0
        %5188 = vmatprep.subr.mxu0 0.0
        %5189 = vmatpush1.msra.mxu0 0.0
        %5190 = vmatprep.subr.mxu0 0.0
        %5191 = vmatpush1.msra.mxu0 0.0
        %5192 = vmatprep.subr.mxu0 0.0
        %5193 = vmatpush1.msra.mxu0 0.0
        %5194 = vmatprep.mubr.f32.mxu0 0.0
        %5195 = vmatmul.mubr.f32.gmra.mrb[0].mxu0 %v5088
        %v5196 = vpop.f32.mrb[0].mxu0
        %v5197 = vadd.f32 0.0, %v5196
        %v5198 = vpop.f32.mrb[0].mxu0
        %5199 = vmatprep.mubr.f32.mxu0 0.0
        %5200 = vmatmul.mubr.f32.gmra.mrb[0].mxu0 %v5089
        %v5201 = vpop.f32.mrb[0].mxu0
        %v5202 = vadd.f32 0.0, %v5201
        %v5203 = vpop.f32.mrb[0].mxu0
        %5204 = vmatprep.mubr.f32.mxu0 0.0
        %5205 = vmatmul.mubr.f32.gmra.mrb[0].mxu0 %v5090
        %v5206 = vpop.f32.mrb[0].mxu0
        %v5207 = vadd.f32 0.0, %v5206
        %v5208 = vpop.f32.mrb[0].mxu0
        %5209 = vmatprep.mubr.f32.mxu0 0.0
        %5210 = vmatmul.mubr.f32.gmra.mrb[0].mxu0 %v5091
        %v5211 = vpop.f32.mrb[0].mxu0
        %v5212 = vadd.f32 0.0, %v5211
        %v5213 = vpop.f32.mrb[0].mxu0
        %5214 = vmatprep.mubr.f32.mxu0 0.0
        %5215 = vmatmul.mubr.f32.gmra.mrb[0].mxu0 %v5092
        %v5216 = vpop.f32.mrb[0].mxu0
        %v5217 = vadd.f32 0.0, %v5216
        %v5218 = vpop.f32.mrb[0].mxu0
        %5219 = vmatprep.mubr.f32.mxu0 0.0
        %5220 = vmatmul.mubr.f32.gmra.mrb[0].mxu0 %v5093
        %v5221 = vpop.f32.mrb[0].mxu0
        %v5222 = vadd.f32 0.0, %v5221
        %v5223 = vpop.f32.mrb[0].mxu0
        %5224 = vmatprep.mubr.f32.mxu0 0.0
        %5225 = vmatmul.mubr.f32.gmra.mrb[0].mxu0 %v5094
        %v5226 = vpop.f32.mrb[0].mxu0
        %v5227 = vadd.f32 0.0, %v5226
        %v5228 = vpop.f32.mrb[0].mxu0
        %5229 = vmatprep.mubr.f32.mxu0 0.0
        %5230 = vmatmul.mubr.f32.gmra.mrb[0].mxu0 %v5095
        %v5231 = vpop.f32.mrb[0].mxu0
        %v5232 = vadd.f32 0.0, %v5231
        %v5233 = vpop.f32.mrb[0].mxu0
        %5234 = vmatprep.mubr.f32.mxu0 0.0
        %5235 = vmatmul.mubr.f32.gmra.mrb[0].mxu0 %v5096
        %v5236 = vpop.f32.mrb[0].mxu0
        %v5237 = vadd.f32 0.0, %v5236
        %v5238 = vpop.f32.mrb[0].mxu0
        %5239 = vmatprep.mubr.f32.mxu0 0.0
        %5240 = vmatmul.mubr.f32.gmra.mrb[0].mxu0 %v5097
        %v5241 = vpop.f32.mrb[0].mxu0
        %v5242 = vadd.f32 0.0, %v5241
        %v5243 = vpop.f32.mrb[0].mxu0
        %5244 = vmatprep.mubr.f32.mxu0 0.0
        %5245 = vmatmul.mubr.f32.gmra.mrb[0].mxu0 %v5098
        %v5246 = vpop.f32.mrb[0].mxu0
        %v5247 = vadd.f32 0.0, %v5246
        %v5248 = vpop.f32.mrb[0].mxu0
        %5249 = vmatprep.mubr.f32.mxu0 0.0
        %5250 = vmatmul.mubr.f32.gmra.mrb[0].mxu0 %v5099
        %v5251 = vpop.f32.mrb[0].mxu0
        %v5252 = vadd.f32 0.0, %v5251
        %v5253 = vpop.f32.mrb[0].mxu0
        %5254 = vmatprep.mubr.f32.mxu0 0.0
        %5255 = vmatmul.mubr.f32.gmra.mrb[0].mxu0 %v5100
        %v5256 = vpop.f32.mrb[0].mxu0
        %v5257 = vadd.f32 0.0, %v5256
        %v5258 = vpop.f32.mrb[0].mxu0
        %5259 = vmatprep.mubr.f32.mxu0 0.0
        %5260 = vmatmul.mubr.f32.gmra.mrb[0].mxu0 %v5101
        %v5261 = vpop.f32.mrb[0].mxu0
        %v5262 = vadd.f32 0.0, %v5261
        %v5263 = vpop.f32.mrb[0].mxu0
        %5264 = vmatprep.mubr.f32.mxu0 0.0
        %5265 = vmatmul.mubr.f32.gmra.mrb[0].mxu0 %v5102
        %v5266 = vpop.f32.mrb[0].mxu0
        %v5267 = vadd.f32 0.0, %v5266
        %v5268 = vpop.f32.mrb[0].mxu0
        %5269 = vmatprep.mubr.f32.mxu0 0.0
        %5270 = vmatmul.mubr.f32.gmra.mrb[0].mxu0 %v5103
        %v5271 = vpop.f32.mrb[0].mxu0
        %v5272 = vadd.f32 0.0, %v5271
        %v5273 = vpop.f32.mrb[0].mxu0
        %5274 = vmatprep.mubr.f32.mxu0 0.0
        %5275 = vmatmul.mubr.f32.gmra.mrb[0].mxu0 %v5104
        %v5276 = vpop.f32.mrb[0].mxu0
        %v5277 = vadd.f32 0.0, %v5276
        %v5278 = vpop.f32.mrb[0].mxu0
        %5279 = vmatprep.mubr.f32.mxu0 0.0
        %5280 = vmatmul.mubr.f32.gmra.mrb[0].mxu0 %v5105
        %v5281 = vpop.f32.mrb[0].mxu0
        %v5282 = vadd.f32 0.0, %v5281
        %v5283 = vpop.f32.mrb[0].mxu0
        %5284 = vmatprep.mubr.f32.mxu0 0.0
        %5285 = vmatmul.mubr.f32.gmra.mrb[0].mxu0 %v5106
        %v5286 = vpop.f32.mrb[0].mxu0
        %v5287 = vadd.f32 0.0, %v5286
        %v5288 = vpop.f32.mrb[0].mxu0
        %5289 = vmatprep.mubr.f32.mxu0 0.0
        %5290 = vmatmul.mubr.f32.gmra.mrb[0].mxu0 %v5107
        %v5291 = vpop.f32.mrb[0].mxu0
        %v5292 = vadd.f32 0.0, %v5291
        %v5293 = vpop.f32.mrb[0].mxu0
        %5294 = vmatprep.mubr.f32.mxu0 0.0
        %5295 = vmatmul.mubr.f32.gmra.mrb[0].mxu0 %v5108
        %v5296 = vpop.f32.mrb[0].mxu0
        %v5297 = vadd.f32 0.0, %v5296
        %v5298 = vpop.f32.mrb[0].mxu0
        %5299 = vmatprep.mubr.f32.mxu0 0.0
        %5300 = vmatmul.mubr.f32.gmra.mrb[0].mxu0 %v5109
        %v5301 = vpop.f32.mrb[0].mxu0
        %v5302 = vadd.f32 0.0, %v5301
        %v5303 = vpop.f32.mrb[0].mxu0
        %5304 = vmatprep.mubr.f32.mxu0 0.0
        %5305 = vmatmul.mubr.f32.gmra.mrb[0].mxu0 %v5110
        %v5306 = vpop.f32.mrb[0].mxu0
        %v5307 = vadd.f32 0.0, %v5306
        %v5308 = vpop.f32.mrb[0].mxu0
        %5309 = vmatprep.mubr.f32.mxu0 0.0
        %5310 = vmatmul.mubr.f32.gmra.mrb[0].mxu0 %v5111
        %v5311 = vpop.f32.mrb[0].mxu0
        %v5312 = vadd.f32 0.0, %v5311
        %v5313 = vpop.f32.mrb[0].mxu0
        %5314 = vmatprep.mubr.f32.mxu0 0.0
        %5315 = vmatmul.mubr.f32.gmra.mrb[0].mxu0 %v5112
        %v5316 = vpop.f32.mrb[0].mxu0
        %v5317 = vadd.f32 0.0, %v5316
        %v5318 = vpop.f32.mrb[0].mxu0
        %5319 = vdwg.mxu0
        %5320 = vmatprep.subr.mxu0 0.0
        %5321 = vmatpush1.msra.mxu0 %v5072
        %5322 = vmatprep.subr.mxu0 0.0
        %5323 = vmatpush1.msra.mxu0 %v5073
        %5324 = vmatprep.subr.mxu0 0.0
        %5325 = vmatpush1.msra.mxu0 %v5074
        %5326 = vmatprep.subr.mxu0 0.0
        %5327 = vmatpush1.msra.mxu0 %v5075
        %5328 = vmatprep.subr.mxu0 0.0
        %5329 = vmatpush1.msra.mxu0 %v5076
        %5330 = vmatprep.subr.mxu0 0.0
        %5331 = vmatpush1.msra.mxu0 %v5077
        %5332 = vmatprep.subr.mxu0 0.0
        %5333 = vmatpush1.msra.mxu0 %v5078
        %5334 = vmatprep.subr.mxu0 0.0
        %5335 = vmatpush1.msra.mxu0 %v5079
        %5336 = vmatprep.subr.mxu0 0.0
        %5337 = vmatpush1.msra.mxu0 %v5080
        %5338 = vmatprep.subr.mxu0 0.0
        %5339 = vmatpush1.msra.mxu0 %v5081
        %5340 = vmatprep.subr.mxu0 0.0
        %5341 = vmatpush1.msra.mxu0 %v5082
        %5342 = vmatprep.subr.mxu0 0.0
        %5343 = vmatpush1.msra.mxu0 %v5083
        %5344 = vmatprep.subr.mxu0 0.0
        %5345 = vmatpush1.msra.mxu0 %v5084
        %5346 = vmatprep.subr.mxu0 0.0
        %5347 = vmatpush1.msra.mxu0 %v5085
        %5348 = vmatprep.subr.mxu0 0.0
        %5349 = vmatpush1.msra.mxu0 %v5086
        %5350 = vmatprep.subr.mxu0 0.0
        %5351 = vmatpush1.msra.mxu0 %v5087
        %5352 = vmatprep.subr.mxu0 0.0
        %5353 = vmatpush1.msra.mxu0 0.0
        %5354 = vmatprep.subr.mxu0 0.0
        %5355 = vmatpush1.msra.mxu0 0.0
        %5356 = vmatprep.subr.mxu0 0.0
        %5357 = vmatpush1.msra.mxu0 0.0
        %5358 = vmatprep.subr.mxu0 0.0
        %5359 = vmatpush1.msra.mxu0 0.0
        %5360 = vmatprep.subr.mxu0 0.0
        %5361 = vmatpush1.msra.mxu0 0.0
        %5362 = vmatprep.subr.mxu0 0.0
        %5363 = vmatpush1.msra.mxu0 0.0
        %5364 = vmatprep.subr.mxu0 0.0
        %5365 = vmatpush1.msra.mxu0 0.0
        %5366 = vmatprep.subr.mxu0 0.0
        %5367 = vmatpush1.msra.mxu0 0.0
        %5368 = vmatprep.subr.mxu0 0.0
        %5369 = vmatpush1.msra.mxu0 0.0
        %5370 = vmatprep.subr.mxu0 0.0
        %5371 = vmatpush1.msra.mxu0 0.0
        %5372 = vmatprep.subr.mxu0 0.0
        %5373 = vmatpush1.msra.mxu0 0.0
        %5374 = vmatprep.subr.mxu0 0.0
        %5375 = vmatpush1.msra.mxu0 0.0
        %5376 = vmatprep.subr.mxu0 0.0
        %5377 = vmatpush1.msra.mxu0 0.0
        %5378 = vmatprep.subr.mxu0 0.0
        %5379 = vmatpush1.msra.mxu0 0.0
        %5380 = vmatprep.subr.mxu0 0.0
        %5381 = vmatpush1.msra.mxu0 0.0
        %5382 = vmatprep.subr.mxu0 0.0
        %5383 = vmatpush1.msra.mxu0 0.0
        %5384 = vmatprep.mubr.f32.mxu0 0.0
        %5385 = vmatmul.mubr.f32.gmra.mrb[0].mxu0 %v5046
        %v5386 = vpop.f32.mrb[0].mxu0
        %v5387 = vadd.f32 %v5197, %v5386
        %v5388 = vpop.f32.mrb[0].mxu0
        %5389 = vmatprep.mubr.f32.mxu0 0.0
        %5390 = vmatmul.mubr.f32.gmra.mrb[0].mxu0 %v5047
        %v5391 = vpop.f32.mrb[0].mxu0
        %v5392 = vadd.f32 %v5202, %v5391
        %v5393 = vpop.f32.mrb[0].mxu0
        %5394 = vmatprep.mubr.f32.mxu0 0.0
        %5395 = vmatmul.mubr.f32.gmra.mrb[0].mxu0 %v5048
        %v5396 = vpop.f32.mrb[0].mxu0
        %v5397 = vadd.f32 %v5207, %v5396
        %v5398 = vpop.f32.mrb[0].mxu0
        %5399 = vmatprep.mubr.f32.mxu0 0.0
        %5400 = vmatmul.mubr.f32.gmra.mrb[0].mxu0 %v5049
        %v5401 = vpop.f32.mrb[0].mxu0
        %v5402 = vadd.f32 %v5212, %v5401
        %v5403 = vpop.f32.mrb[0].mxu0
        %5404 = vmatprep.mubr.f32.mxu0 0.0
        %5405 = vmatmul.mubr.f32.gmra.mrb[0].mxu0 %v5050
        %v5406 = vpop.f32.mrb[0].mxu0
        %v5407 = vadd.f32 %v5217, %v5406
        %v5408 = vpop.f32.mrb[0].mxu0
        %5409 = vmatprep.mubr.f32.mxu0 0.0
        %5410 = vmatmul.mubr.f32.gmra.mrb[0].mxu0 %v5051
        %v5411 = vpop.f32.mrb[0].mxu0
        %v5412 = vadd.f32 %v5222, %v5411
        %v5413 = vpop.f32.mrb[0].mxu0
        %5414 = vmatprep.mubr.f32.mxu0 0.0
        %5415 = vmatmul.mubr.f32.gmra.mrb[0].mxu0 %v5052
        %v5416 = vpop.f32.mrb[0].mxu0
        %v5417 = vadd.f32 %v5227, %v5416
        %v5418 = vpop.f32.mrb[0].mxu0
        %5419 = vmatprep.mubr.f32.mxu0 0.0
        %5420 = vmatmul.mubr.f32.gmra.mrb[0].mxu0 %v5053
        %v5421 = vpop.f32.mrb[0].mxu0
        %v5422 = vadd.f32 %v5232, %v5421
        %v5423 = vpop.f32.mrb[0].mxu0
        %5424 = vmatprep.mubr.f32.mxu0 0.0
        %5425 = vmatmul.mubr.f32.gmra.mrb[0].mxu0 %v5054
        %v5426 = vpop.f32.mrb[0].mxu0
        %v5427 = vadd.f32 %v5237, %v5426
        %v5428 = vpop.f32.mrb[0].mxu0
        %5429 = vmatprep.mubr.f32.mxu0 0.0
        %5430 = vmatmul.mubr.f32.gmra.mrb[0].mxu0 %v5055
        %v5431 = vpop.f32.mrb[0].mxu0
        %v5432 = vadd.f32 %v5242, %v5431
        %v5433 = vpop.f32.mrb[0].mxu0
        %5434 = vmatprep.mubr.f32.mxu0 0.0
        %5435 = vmatmul.mubr.f32.gmra.mrb[0].mxu0 %v5056
        %v5436 = vpop.f32.mrb[0].mxu0
        %v5437 = vadd.f32 %v5247, %v5436
        %v5438 = vpop.f32.mrb[0].mxu0
        %5439 = vmatprep.mubr.f32.mxu0 0.0
        %5440 = vmatmul.mubr.f32.gmra.mrb[0].mxu0 %v5057
        %v5441 = vpop.f32.mrb[0].mxu0
        %v5442 = vadd.f32 %v5252, %v5441
        %v5443 = vpop.f32.mrb[0].mxu0
        %5444 = vmatprep.mubr.f32.mxu0 0.0
        %5445 = vmatmul.mubr.f32.gmra.mrb[0].mxu0 %v5058
        %v5446 = vpop.f32.mrb[0].mxu0
        %v5447 = vadd.f32 %v5257, %v5446
        %v5448 = vpop.f32.mrb[0].mxu0
        %5449 = vmatprep.mubr.f32.mxu0 0.0
        %5450 = vmatmul.mubr.f32.gmra.mrb[0].mxu0 %v5059
        %v5451 = vpop.f32.mrb[0].mxu0
        %v5452 = vadd.f32 %v5262, %v5451
        %v5453 = vpop.f32.mrb[0].mxu0
        %5454 = vmatprep.mubr.f32.mxu0 0.0
        %5455 = vmatmul.mubr.f32.gmra.mrb[0].mxu0 %v5060
        %v5456 = vpop.f32.mrb[0].mxu0
        %v5457 = vadd.f32 %v5267, %v5456
        %v5458 = vpop.f32.mrb[0].mxu0
        %5459 = vmatprep.mubr.f32.mxu0 0.0
        %5460 = vmatmul.mubr.f32.gmra.mrb[0].mxu0 %v5061
        %v5461 = vpop.f32.mrb[0].mxu0
        %v5462 = vadd.f32 %v5272, %v5461
        %v5463 = vpop.f32.mrb[0].mxu0
        %5464 = vmatprep.mubr.f32.mxu0 0.0
        %5465 = vmatmul.mubr.f32.gmra.mrb[0].mxu0 %v5062
        %v5466 = vpop.f32.mrb[0].mxu0
        %v5467 = vadd.f32 %v5277, %v5466
        %v5468 = vpop.f32.mrb[0].mxu0
        %5469 = vmatprep.mubr.f32.mxu0 0.0
        %5470 = vmatmul.mubr.f32.gmra.mrb[0].mxu0 %v5063
        %v5471 = vpop.f32.mrb[0].mxu0
        %v5472 = vadd.f32 %v5282, %v5471
        %v5473 = vpop.f32.mrb[0].mxu0
        %5474 = vmatprep.mubr.f32.mxu0 0.0
        %5475 = vmatmul.mubr.f32.gmra.mrb[0].mxu0 %v5064
        %v5476 = vpop.f32.mrb[0].mxu0
        %v5477 = vadd.f32 %v5287, %v5476
        %v5478 = vpop.f32.mrb[0].mxu0
        %5479 = vmatprep.mubr.f32.mxu0 0.0
        %5480 = vmatmul.mubr.f32.gmra.mrb[0].mxu0 %v5065
        %v5481 = vpop.f32.mrb[0].mxu0
        %v5482 = vadd.f32 %v5292, %v5481
        %v5483 = vpop.f32.mrb[0].mxu0
        %5484 = vmatprep.mubr.f32.mxu0 0.0
        %5485 = vmatmul.mubr.f32.gmra.mrb[0].mxu0 %v5066
        %v5486 = vpop.f32.mrb[0].mxu0
        %v5487 = vadd.f32 %v5297, %v5486
        %v5488 = vpop.f32.mrb[0].mxu0
        %5489 = vmatprep.mubr.f32.mxu0 0.0
        %5490 = vmatmul.mubr.f32.gmra.mrb[0].mxu0 %v5067
        %v5491 = vpop.f32.mrb[0].mxu0
        %v5492 = vadd.f32 %v5302, %v5491
        %v5493 = vpop.f32.mrb[0].mxu0
        %5494 = vmatprep.mubr.f32.mxu0 0.0
        %5495 = vmatmul.mubr.f32.gmra.mrb[0].mxu0 %v5068
        %v5496 = vpop.f32.mrb[0].mxu0
        %v5497 = vadd.f32 %v5307, %v5496
        %v5498 = vpop.f32.mrb[0].mxu0
        %5499 = vmatprep.mubr.f32.mxu0 0.0
        %5500 = vmatmul.mubr.f32.gmra.mrb[0].mxu0 %v5069
        %v5501 = vpop.f32.mrb[0].mxu0
        %v5502 = vadd.f32 %v5312, %v5501
        %v5503 = vpop.f32.mrb[0].mxu0
        %5504 = vmatprep.mubr.f32.mxu0 0.0
        %5505 = vmatmul.mubr.f32.gmra.mrb[0].mxu0 %v5070
        %v5506 = vpop.f32.mrb[0].mxu0
        %v5507 = vadd.f32 %v5317, %v5506
        %v5508 = vpop.f32.mrb[0].mxu0
        %5509 = vdwg.mxu0
        %v5510 = vld [vmem:[#allocation2 + $0x7] sm:$0xff]
        %v5511 = vld [vmem:[#allocation2 + $0xf] sm:$0xff]
        %v5512 = vld [vmem:[#allocation2 + $0x17] sm:$0xff]
        %v5513 = vld [vmem:[#allocation2 + $0x1f] sm:$0xff]
        %v5514 = vld [vmem:[#allocation2 + $0x27] sm:$0xff]
        %v5515 = vld [vmem:[#allocation2 + $0x2f] sm:$0xff]
        %v5516 = vld [vmem:[#allocation2 + $0x37] sm:$0xff]
        %v5517 = vld [vmem:[#allocation2 + $0x3f] sm:$0xff]
        %v5518 = vld [vmem:[#allocation2 + $0x47] sm:$0xff]
        %v5519 = vld [vmem:[#allocation2 + $0x4f] sm:$0xff]
        %v5520 = vld [vmem:[#allocation2 + $0x57] sm:$0xff]
        %v5521 = vld [vmem:[#allocation2 + $0x5f] sm:$0xff]
        %v5522 = vld [vmem:[#allocation2 + $0x67] sm:$0xff]
        %v5523 = vld [vmem:[#allocation2 + $0x6f] sm:$0xff]
        %v5524 = vld [vmem:[#allocation2 + $0x77] sm:$0xff]
        %v5525 = vld [vmem:[#allocation2 + $0x7f] sm:$0xff]
        %v5526 = vld [vmem:[#allocation2 + $0x87] sm:$0xff]
        %v5527 = vld [vmem:[#allocation2 + $0x8f] sm:$0xff]
        %v5528 = vld [vmem:[#allocation2 + $0x97] sm:$0xff]
        %v5529 = vld [vmem:[#allocation2 + $0x9f] sm:$0xff]
        %v5530 = vld [vmem:[#allocation2 + $0xa7] sm:$0xff]
        %v5531 = vld [vmem:[#allocation2 + $0xaf] sm:$0xff]
        %v5532 = vld [vmem:[#allocation2 + $0xb7] sm:$0xff]
        %v5533 = vld [vmem:[#allocation2 + $0xbf] sm:$0xff]
        %v5534 = vld [vmem:[#allocation2 + $0xc7] sm:$0xff]
        %s5535 = scalar_lea.vmem %s389, 2176 [#allocation5]
        %v5536 = vld [vmem:[%s5535] sm:$0xff]
        %v5537 = vld [vmem:[%s5535 + $0x8] sm:$0xff]
        %v5538 = vld [vmem:[%s5535 + $0x10] sm:$0xff]
        %v5539 = vld [vmem:[%s5535 + $0x18] sm:$0xff]
        %v5540 = vld [vmem:[%s5535 + $0x20] sm:$0xff]
        %v5541 = vld [vmem:[%s5535 + $0x28] sm:$0xff]
        %v5542 = vld [vmem:[%s5535 + $0x30] sm:$0xff]
        %v5543 = vld [vmem:[%s5535 + $0x38] sm:$0xff]
        %v5544 = vld [vmem:[%s5535 + $0x40] sm:$0xff]
        %v5545 = vld [vmem:[%s5535 + $0x48] sm:$0xff]
        %v5546 = vld [vmem:[%s5535 + $0x50] sm:$0xff]
        %v5547 = vld [vmem:[%s5535 + $0x58] sm:$0xff]
        %v5548 = vld [vmem:[%s5535 + $0x60] sm:$0xff]
        %v5549 = vld [vmem:[%s5535 + $0x68] sm:$0xff]
        %v5550 = vld [vmem:[%s5535 + $0x70] sm:$0xff]
        %v5551 = vld [vmem:[%s5535 + $0x78] sm:$0xff]
        %5552 = vmatprep.subr.mxu0 0.0
        %5553 = vmatpush1.msra.mxu0 %v5536
        %5554 = vmatprep.subr.mxu0 0.0
        %5555 = vmatpush1.msra.mxu0 %v5537
        %5556 = vmatprep.subr.mxu0 0.0
        %5557 = vmatpush1.msra.mxu0 %v5538
        %5558 = vmatprep.subr.mxu0 0.0
        %5559 = vmatpush1.msra.mxu0 %v5539
        %5560 = vmatprep.subr.mxu0 0.0
        %5561 = vmatpush1.msra.mxu0 %v5540
        %5562 = vmatprep.subr.mxu0 0.0
        %5563 = vmatpush1.msra.mxu0 %v5541
        %5564 = vmatprep.subr.mxu0 0.0
        %5565 = vmatpush1.msra.mxu0 %v5542
        %5566 = vmatprep.subr.mxu0 0.0
        %5567 = vmatpush1.msra.mxu0 %v5543
        %5568 = vmatprep.subr.mxu0 0.0
        %5569 = vmatpush1.msra.mxu0 %v5544
        %5570 = vmatprep.subr.mxu0 0.0
        %5571 = vmatpush1.msra.mxu0 %v5545
        %5572 = vmatprep.subr.mxu0 0.0
        %5573 = vmatpush1.msra.mxu0 %v5546
        %5574 = vmatprep.subr.mxu0 0.0
        %5575 = vmatpush1.msra.mxu0 %v5547
        %5576 = vmatprep.subr.mxu0 0.0
        %5577 = vmatpush1.msra.mxu0 %v5548
        %5578 = vmatprep.subr.mxu0 0.0
        %5579 = vmatpush1.msra.mxu0 %v5549
        %5580 = vmatprep.subr.mxu0 0.0
        %5581 = vmatpush1.msra.mxu0 %v5550
        %5582 = vmatprep.subr.mxu0 0.0
        %5583 = vmatpush1.msra.mxu0 %v5551
        %5584 = vmatprep.subr.mxu0 0.0
        %5585 = vmatpush1.msra.mxu0 0.0
        %5586 = vmatprep.subr.mxu0 0.0
        %5587 = vmatpush1.msra.mxu0 0.0
        %5588 = vmatprep.subr.mxu0 0.0
        %5589 = vmatpush1.msra.mxu0 0.0
        %5590 = vmatprep.subr.mxu0 0.0
        %5591 = vmatpush1.msra.mxu0 0.0
        %5592 = vmatprep.subr.mxu0 0.0
        %5593 = vmatpush1.msra.mxu0 0.0
        %5594 = vmatprep.subr.mxu0 0.0
        %5595 = vmatpush1.msra.mxu0 0.0
        %5596 = vmatprep.subr.mxu0 0.0
        %5597 = vmatpush1.msra.mxu0 0.0
        %5598 = vmatprep.subr.mxu0 0.0
        %5599 = vmatpush1.msra.mxu0 0.0
        %5600 = vmatprep.subr.mxu0 0.0
        %5601 = vmatpush1.msra.mxu0 0.0
        %5602 = vmatprep.subr.mxu0 0.0
        %5603 = vmatpush1.msra.mxu0 0.0
        %5604 = vmatprep.subr.mxu0 0.0
        %5605 = vmatpush1.msra.mxu0 0.0
        %5606 = vmatprep.subr.mxu0 0.0
        %5607 = vmatpush1.msra.mxu0 0.0
        %5608 = vmatprep.subr.mxu0 0.0
        %5609 = vmatpush1.msra.mxu0 0.0
        %5610 = vmatprep.subr.mxu0 0.0
        %5611 = vmatpush1.msra.mxu0 0.0
        %5612 = vmatprep.subr.mxu0 0.0
        %5613 = vmatpush1.msra.mxu0 0.0
        %5614 = vmatprep.subr.mxu0 0.0
        %5615 = vmatpush1.msra.mxu0 0.0
        %5616 = vmatprep.mubr.f32.mxu0 0.0
        %5617 = vmatmul.mubr.f32.gmra.mrb[0].mxu0 %v5510
        %v5618 = vpop.f32.mrb[0].mxu0
        %v5619 = vadd.f32 0.0, %v5618
        %v5620 = vpop.f32.mrb[0].mxu0
        %5621 = vmatprep.mubr.f32.mxu0 0.0
        %5622 = vmatmul.mubr.f32.gmra.mrb[0].mxu0 %v5511
        %v5623 = vpop.f32.mrb[0].mxu0
        %v5624 = vadd.f32 0.0, %v5623
        %v5625 = vpop.f32.mrb[0].mxu0
        %5626 = vmatprep.mubr.f32.mxu0 0.0
        %5627 = vmatmul.mubr.f32.gmra.mrb[0].mxu0 %v5512
        %v5628 = vpop.f32.mrb[0].mxu0
        %v5629 = vadd.f32 0.0, %v5628
        %v5630 = vpop.f32.mrb[0].mxu0
        %5631 = vmatprep.mubr.f32.mxu0 0.0
        %5632 = vmatmul.mubr.f32.gmra.mrb[0].mxu0 %v5513
        %v5633 = vpop.f32.mrb[0].mxu0
        %v5634 = vadd.f32 0.0, %v5633
        %v5635 = vpop.f32.mrb[0].mxu0
        %5636 = vmatprep.mubr.f32.mxu0 0.0
        %5637 = vmatmul.mubr.f32.gmra.mrb[0].mxu0 %v5514
        %v5638 = vpop.f32.mrb[0].mxu0
        %v5639 = vadd.f32 0.0, %v5638
        %v5640 = vpop.f32.mrb[0].mxu0
        %5641 = vmatprep.mubr.f32.mxu0 0.0
        %5642 = vmatmul.mubr.f32.gmra.mrb[0].mxu0 %v5515
        %v5643 = vpop.f32.mrb[0].mxu0
        %v5644 = vadd.f32 0.0, %v5643
        %v5645 = vpop.f32.mrb[0].mxu0
        %5646 = vmatprep.mubr.f32.mxu0 0.0
        %5647 = vmatmul.mubr.f32.gmra.mrb[0].mxu0 %v5516
        %v5648 = vpop.f32.mrb[0].mxu0
        %v5649 = vadd.f32 0.0, %v5648
        %v5650 = vpop.f32.mrb[0].mxu0
        %5651 = vmatprep.mubr.f32.mxu0 0.0
        %5652 = vmatmul.mubr.f32.gmra.mrb[0].mxu0 %v5517
        %v5653 = vpop.f32.mrb[0].mxu0
        %v5654 = vadd.f32 0.0, %v5653
        %v5655 = vpop.f32.mrb[0].mxu0
        %5656 = vmatprep.mubr.f32.mxu0 0.0
        %5657 = vmatmul.mubr.f32.gmra.mrb[0].mxu0 %v5518
        %v5658 = vpop.f32.mrb[0].mxu0
        %v5659 = vadd.f32 0.0, %v5658
        %v5660 = vpop.f32.mrb[0].mxu0
        %5661 = vmatprep.mubr.f32.mxu0 0.0
        %5662 = vmatmul.mubr.f32.gmra.mrb[0].mxu0 %v5519
        %v5663 = vpop.f32.mrb[0].mxu0
        %v5664 = vadd.f32 0.0, %v5663
        %v5665 = vpop.f32.mrb[0].mxu0
        %5666 = vmatprep.mubr.f32.mxu0 0.0
        %5667 = vmatmul.mubr.f32.gmra.mrb[0].mxu0 %v5520
        %v5668 = vpop.f32.mrb[0].mxu0
        %v5669 = vadd.f32 0.0, %v5668
        %v5670 = vpop.f32.mrb[0].mxu0
        %5671 = vmatprep.mubr.f32.mxu0 0.0
        %5672 = vmatmul.mubr.f32.gmra.mrb[0].mxu0 %v5521
        %v5673 = vpop.f32.mrb[0].mxu0
        %v5674 = vadd.f32 0.0, %v5673
        %v5675 = vpop.f32.mrb[0].mxu0
        %5676 = vmatprep.mubr.f32.mxu0 0.0
        %5677 = vmatmul.mubr.f32.gmra.mrb[0].mxu0 %v5522
        %v5678 = vpop.f32.mrb[0].mxu0
        %v5679 = vadd.f32 0.0, %v5678
        %v5680 = vpop.f32.mrb[0].mxu0
        %5681 = vmatprep.mubr.f32.mxu0 0.0
        %5682 = vmatmul.mubr.f32.gmra.mrb[0].mxu0 %v5523
        %v5683 = vpop.f32.mrb[0].mxu0
        %v5684 = vadd.f32 0.0, %v5683
        %v5685 = vpop.f32.mrb[0].mxu0
        %5686 = vmatprep.mubr.f32.mxu0 0.0
        %5687 = vmatmul.mubr.f32.gmra.mrb[0].mxu0 %v5524
        %v5688 = vpop.f32.mrb[0].mxu0
        %v5689 = vadd.f32 0.0, %v5688
        %v5690 = vpop.f32.mrb[0].mxu0
        %5691 = vmatprep.mubr.f32.mxu0 0.0
        %5692 = vmatmul.mubr.f32.gmra.mrb[0].mxu0 %v5525
        %v5693 = vpop.f32.mrb[0].mxu0
        %v5694 = vadd.f32 0.0, %v5693
        %v5695 = vpop.f32.mrb[0].mxu0
        %5696 = vmatprep.mubr.f32.mxu0 0.0
        %5697 = vmatmul.mubr.f32.gmra.mrb[0].mxu0 %v5526
        %v5698 = vpop.f32.mrb[0].mxu0
        %v5699 = vadd.f32 0.0, %v5698
        %v5700 = vpop.f32.mrb[0].mxu0
        %5701 = vmatprep.mubr.f32.mxu0 0.0
        %5702 = vmatmul.mubr.f32.gmra.mrb[0].mxu0 %v5527
        %v5703 = vpop.f32.mrb[0].mxu0
        %v5704 = vadd.f32 0.0, %v5703
        %v5705 = vpop.f32.mrb[0].mxu0
        %5706 = vmatprep.mubr.f32.mxu0 0.0
        %5707 = vmatmul.mubr.f32.gmra.mrb[0].mxu0 %v5528
        %v5708 = vpop.f32.mrb[0].mxu0
        %v5709 = vadd.f32 0.0, %v5708
        %v5710 = vpop.f32.mrb[0].mxu0
        %5711 = vmatprep.mubr.f32.mxu0 0.0
        %5712 = vmatmul.mubr.f32.gmra.mrb[0].mxu0 %v5529
        %v5713 = vpop.f32.mrb[0].mxu0
        %v5714 = vadd.f32 0.0, %v5713
        %v5715 = vpop.f32.mrb[0].mxu0
        %5716 = vmatprep.mubr.f32.mxu0 0.0
        %5717 = vmatmul.mubr.f32.gmra.mrb[0].mxu0 %v5530
        %v5718 = vpop.f32.mrb[0].mxu0
        %v5719 = vadd.f32 0.0, %v5718
        %v5720 = vpop.f32.mrb[0].mxu0
        %5721 = vmatprep.mubr.f32.mxu0 0.0
        %5722 = vmatmul.mubr.f32.gmra.mrb[0].mxu0 %v5531
        %v5723 = vpop.f32.mrb[0].mxu0
        %v5724 = vadd.f32 0.0, %v5723
        %v5725 = vpop.f32.mrb[0].mxu0
        %5726 = vmatprep.mubr.f32.mxu0 0.0
        %5727 = vmatmul.mubr.f32.gmra.mrb[0].mxu0 %v5532
        %v5728 = vpop.f32.mrb[0].mxu0
        %v5729 = vadd.f32 0.0, %v5728
        %v5730 = vpop.f32.mrb[0].mxu0
        %5731 = vmatprep.mubr.f32.mxu0 0.0
        %5732 = vmatmul.mubr.f32.gmra.mrb[0].mxu0 %v5533
        %v5733 = vpop.f32.mrb[0].mxu0
        %v5734 = vadd.f32 0.0, %v5733
        %v5735 = vpop.f32.mrb[0].mxu0
        %5736 = vmatprep.mubr.f32.mxu0 0.0
        %5737 = vmatmul.mubr.f32.gmra.mrb[0].mxu0 %v5534
        %v5738 = vpop.f32.mrb[0].mxu0
        %v5739 = vadd.f32 0.0, %v5738
        %v5740 = vpop.f32.mrb[0].mxu0
        %5741 = vdwg.mxu0
        %v5742 = vadd.f32 %v5387, %v5619
        %v5743 = vadd.f32 %v5392, %v5624
        %v5744 = vadd.f32 %v5397, %v5629
        %v5745 = vadd.f32 %v5402, %v5634
        %v5746 = vadd.f32 %v5407, %v5639
        %v5747 = vadd.f32 %v5412, %v5644
        %v5748 = vadd.f32 %v5417, %v5649
        %v5749 = vadd.f32 %v5422, %v5654
        %v5750 = vadd.f32 %v5427, %v5659
        %v5751 = vadd.f32 %v5432, %v5664
        %v5752 = vadd.f32 %v5437, %v5669
        %v5753 = vadd.f32 %v5442, %v5674
        %v5754 = vadd.f32 %v5447, %v5679
        %v5755 = vadd.f32 %v5452, %v5684
        %v5756 = vadd.f32 %v5457, %v5689
        %v5757 = vadd.f32 %v5462, %v5694
        %v5758 = vadd.f32 %v5467, %v5699
        %v5759 = vadd.f32 %v5472, %v5704
        %v5760 = vadd.f32 %v5477, %v5709
        %v5761 = vadd.f32 %v5482, %v5714
        %v5762 = vadd.f32 %v5487, %v5719
        %v5763 = vadd.f32 %v5492, %v5724
        %v5764 = vadd.f32 %v5497, %v5729
        %v5765 = vadd.f32 %v5502, %v5734
        %v5766 = vadd.f32 %v5507, %v5739
        %v5767 = vld [vmem:[#allocation2 + $0xa] sm:$0xff]
        %v5768 = vld [vmem:[#allocation2 + $0x12] sm:$0xff]
        %v5769 = vld [vmem:[#allocation2 + $0x1a] sm:$0xff]
        %v5770 = vld [vmem:[#allocation2 + $0x22] sm:$0xff]
        %v5771 = vld [vmem:[#allocation2 + $0x2a] sm:$0xff]
        %v5772 = vld [vmem:[#allocation2 + $0x32] sm:$0xff]
        %v5773 = vld [vmem:[#allocation2 + $0x3a] sm:$0xff]
        %v5774 = vld [vmem:[#allocation2 + $0x42] sm:$0xff]
        %v5775 = vld [vmem:[#allocation2 + $0x4a] sm:$0xff]
        %v5776 = vld [vmem:[#allocation2 + $0x52] sm:$0xff]
        %v5777 = vld [vmem:[#allocation2 + $0x5a] sm:$0xff]
        %v5778 = vld [vmem:[#allocation2 + $0x62] sm:$0xff]
        %v5779 = vld [vmem:[#allocation2 + $0x6a] sm:$0xff]
        %v5780 = vld [vmem:[#allocation2 + $0x72] sm:$0xff]
        %v5781 = vld [vmem:[#allocation2 + $0x7a] sm:$0xff]
        %v5782 = vld [vmem:[#allocation2 + $0x82] sm:$0xff]
        %v5783 = vld [vmem:[#allocation2 + $0x8a] sm:$0xff]
        %v5784 = vld [vmem:[#allocation2 + $0x92] sm:$0xff]
        %v5785 = vld [vmem:[#allocation2 + $0x9a] sm:$0xff]
        %v5786 = vld [vmem:[#allocation2 + $0xa2] sm:$0xff]
        %v5787 = vld [vmem:[#allocation2 + $0xaa] sm:$0xff]
        %v5788 = vld [vmem:[#allocation2 + $0xb2] sm:$0xff]
        %v5789 = vld [vmem:[#allocation2 + $0xba] sm:$0xff]
        %v5790 = vld [vmem:[#allocation2 + $0xc2] sm:$0xff]
        %v5791 = vld [vmem:[#allocation2 + $0xca] sm:$0xff]
        %s5792 = scalar_lea.vmem %s389, 2304 [#allocation5]
        %v5793 = vld [vmem:[%s5792] sm:$0xff]
        %v5794 = vld [vmem:[%s5792 + $0x8] sm:$0xff]
        %v5795 = vld [vmem:[%s5792 + $0x10] sm:$0xff]
        %v5796 = vld [vmem:[%s5792 + $0x18] sm:$0xff]
        %v5797 = vld [vmem:[%s5792 + $0x20] sm:$0xff]
        %v5798 = vld [vmem:[%s5792 + $0x28] sm:$0xff]
        %v5799 = vld [vmem:[%s5792 + $0x30] sm:$0xff]
        %v5800 = vld [vmem:[%s5792 + $0x38] sm:$0xff]
        %v5801 = vld [vmem:[%s5792 + $0x40] sm:$0xff]
        %v5802 = vld [vmem:[%s5792 + $0x48] sm:$0xff]
        %v5803 = vld [vmem:[%s5792 + $0x50] sm:$0xff]
        %v5804 = vld [vmem:[%s5792 + $0x58] sm:$0xff]
        %v5805 = vld [vmem:[%s5792 + $0x60] sm:$0xff]
        %v5806 = vld [vmem:[%s5792 + $0x68] sm:$0xff]
        %v5807 = vld [vmem:[%s5792 + $0x70] sm:$0xff]
        %v5808 = vld [vmem:[%s5792 + $0x78] sm:$0xff]
        %5809 = vmatprep.subr.mxu0 0.0
        %5810 = vmatpush1.msra.mxu0 %v5793
        %5811 = vmatprep.subr.mxu0 0.0
        %5812 = vmatpush1.msra.mxu0 %v5794
        %5813 = vmatprep.subr.mxu0 0.0
        %5814 = vmatpush1.msra.mxu0 %v5795
        %5815 = vmatprep.subr.mxu0 0.0
        %5816 = vmatpush1.msra.mxu0 %v5796
        %5817 = vmatprep.subr.mxu0 0.0
        %5818 = vmatpush1.msra.mxu0 %v5797
        %5819 = vmatprep.subr.mxu0 0.0
        %5820 = vmatpush1.msra.mxu0 %v5798
        %5821 = vmatprep.subr.mxu0 0.0
        %5822 = vmatpush1.msra.mxu0 %v5799
        %5823 = vmatprep.subr.mxu0 0.0
        %5824 = vmatpush1.msra.mxu0 %v5800
        %5825 = vmatprep.subr.mxu0 0.0
        %5826 = vmatpush1.msra.mxu0 %v5801
        %5827 = vmatprep.subr.mxu0 0.0
        %5828 = vmatpush1.msra.mxu0 %v5802
        %5829 = vmatprep.subr.mxu0 0.0
        %5830 = vmatpush1.msra.mxu0 %v5803
        %5831 = vmatprep.subr.mxu0 0.0
        %5832 = vmatpush1.msra.mxu0 %v5804
        %5833 = vmatprep.subr.mxu0 0.0
        %5834 = vmatpush1.msra.mxu0 %v5805
        %5835 = vmatprep.subr.mxu0 0.0
        %5836 = vmatpush1.msra.mxu0 %v5806
        %5837 = vmatprep.subr.mxu0 0.0
        %5838 = vmatpush1.msra.mxu0 %v5807
        %5839 = vmatprep.subr.mxu0 0.0
        %5840 = vmatpush1.msra.mxu0 %v5808
        %5841 = vmatprep.subr.mxu0 0.0
        %5842 = vmatpush1.msra.mxu0 0.0
        %5843 = vmatprep.subr.mxu0 0.0
        %5844 = vmatpush1.msra.mxu0 0.0
        %5845 = vmatprep.subr.mxu0 0.0
        %5846 = vmatpush1.msra.mxu0 0.0
        %5847 = vmatprep.subr.mxu0 0.0
        %5848 = vmatpush1.msra.mxu0 0.0
        %5849 = vmatprep.subr.mxu0 0.0
        %5850 = vmatpush1.msra.mxu0 0.0
        %5851 = vmatprep.subr.mxu0 0.0
        %5852 = vmatpush1.msra.mxu0 0.0
        %5853 = vmatprep.subr.mxu0 0.0
        %5854 = vmatpush1.msra.mxu0 0.0
        %5855 = vmatprep.subr.mxu0 0.0
        %5856 = vmatpush1.msra.mxu0 0.0
        %5857 = vmatprep.subr.mxu0 0.0
        %5858 = vmatpush1.msra.mxu0 0.0
        %5859 = vmatprep.subr.mxu0 0.0
        %5860 = vmatpush1.msra.mxu0 0.0
        %5861 = vmatprep.subr.mxu0 0.0
        %5862 = vmatpush1.msra.mxu0 0.0
        %5863 = vmatprep.subr.mxu0 0.0
        %5864 = vmatpush1.msra.mxu0 0.0
        %5865 = vmatprep.subr.mxu0 0.0
        %5866 = vmatpush1.msra.mxu0 0.0
        %5867 = vmatprep.subr.mxu0 0.0
        %5868 = vmatpush1.msra.mxu0 0.0
        %5869 = vmatprep.subr.mxu0 0.0
        %5870 = vmatpush1.msra.mxu0 0.0
        %5871 = vmatprep.subr.mxu0 0.0
        %5872 = vmatpush1.msra.mxu0 0.0
        %5873 = vmatprep.mubr.f32.mxu0 0.0
        %5874 = vmatmul.mubr.f32.gmra.mrb[0].mxu0 %v5767
        %v5875 = vpop.f32.mrb[0].mxu0
        %v5876 = vadd.f32 0.0, %v5875
        %v5877 = vpop.f32.mrb[0].mxu0
        %5878 = vmatprep.mubr.f32.mxu0 0.0
        %5879 = vmatmul.mubr.f32.gmra.mrb[0].mxu0 %v5768
        %v5880 = vpop.f32.mrb[0].mxu0
        %v5881 = vadd.f32 0.0, %v5880
        %v5882 = vpop.f32.mrb[0].mxu0
        %5883 = vmatprep.mubr.f32.mxu0 0.0
        %5884 = vmatmul.mubr.f32.gmra.mrb[0].mxu0 %v5769
        %v5885 = vpop.f32.mrb[0].mxu0
        %v5886 = vadd.f32 0.0, %v5885
        %v5887 = vpop.f32.mrb[0].mxu0
        %5888 = vmatprep.mubr.f32.mxu0 0.0
        %5889 = vmatmul.mubr.f32.gmra.mrb[0].mxu0 %v5770
        %v5890 = vpop.f32.mrb[0].mxu0
        %v5891 = vadd.f32 0.0, %v5890
        %v5892 = vpop.f32.mrb[0].mxu0
        %5893 = vmatprep.mubr.f32.mxu0 0.0
        %5894 = vmatmul.mubr.f32.gmra.mrb[0].mxu0 %v5771
        %v5895 = vpop.f32.mrb[0].mxu0
        %v5896 = vadd.f32 0.0, %v5895
        %v5897 = vpop.f32.mrb[0].mxu0
        %5898 = vmatprep.mubr.f32.mxu0 0.0
        %5899 = vmatmul.mubr.f32.gmra.mrb[0].mxu0 %v5772
        %v5900 = vpop.f32.mrb[0].mxu0
        %v5901 = vadd.f32 0.0, %v5900
        %v5902 = vpop.f32.mrb[0].mxu0
        %5903 = vmatprep.mubr.f32.mxu0 0.0
        %5904 = vmatmul.mubr.f32.gmra.mrb[0].mxu0 %v5773
        %v5905 = vpop.f32.mrb[0].mxu0
        %v5906 = vadd.f32 0.0, %v5905
        %v5907 = vpop.f32.mrb[0].mxu0
        %5908 = vmatprep.mubr.f32.mxu0 0.0
        %5909 = vmatmul.mubr.f32.gmra.mrb[0].mxu0 %v5774
        %v5910 = vpop.f32.mrb[0].mxu0
        %v5911 = vadd.f32 0.0, %v5910
        %v5912 = vpop.f32.mrb[0].mxu0
        %5913 = vmatprep.mubr.f32.mxu0 0.0
        %5914 = vmatmul.mubr.f32.gmra.mrb[0].mxu0 %v5775
        %v5915 = vpop.f32.mrb[0].mxu0
        %v5916 = vadd.f32 0.0, %v5915
        %v5917 = vpop.f32.mrb[0].mxu0
        %5918 = vmatprep.mubr.f32.mxu0 0.0
        %5919 = vmatmul.mubr.f32.gmra.mrb[0].mxu0 %v5776
        %v5920 = vpop.f32.mrb[0].mxu0
        %v5921 = vadd.f32 0.0, %v5920
        %v5922 = vpop.f32.mrb[0].mxu0
        %5923 = vmatprep.mubr.f32.mxu0 0.0
        %5924 = vmatmul.mubr.f32.gmra.mrb[0].mxu0 %v5777
        %v5925 = vpop.f32.mrb[0].mxu0
        %v5926 = vadd.f32 0.0, %v5925
        %v5927 = vpop.f32.mrb[0].mxu0
        %5928 = vmatprep.mubr.f32.mxu0 0.0
        %5929 = vmatmul.mubr.f32.gmra.mrb[0].mxu0 %v5778
        %v5930 = vpop.f32.mrb[0].mxu0
        %v5931 = vadd.f32 0.0, %v5930
        %v5932 = vpop.f32.mrb[0].mxu0
        %5933 = vmatprep.mubr.f32.mxu0 0.0
        %5934 = vmatmul.mubr.f32.gmra.mrb[0].mxu0 %v5779
        %v5935 = vpop.f32.mrb[0].mxu0
        %v5936 = vadd.f32 0.0, %v5935
        %v5937 = vpop.f32.mrb[0].mxu0
        %5938 = vmatprep.mubr.f32.mxu0 0.0
        %5939 = vmatmul.mubr.f32.gmra.mrb[0].mxu0 %v5780
        %v5940 = vpop.f32.mrb[0].mxu0
        %v5941 = vadd.f32 0.0, %v5940
        %v5942 = vpop.f32.mrb[0].mxu0
        %5943 = vmatprep.mubr.f32.mxu0 0.0
        %5944 = vmatmul.mubr.f32.gmra.mrb[0].mxu0 %v5781
        %v5945 = vpop.f32.mrb[0].mxu0
        %v5946 = vadd.f32 0.0, %v5945
        %v5947 = vpop.f32.mrb[0].mxu0
        %5948 = vmatprep.mubr.f32.mxu0 0.0
        %5949 = vmatmul.mubr.f32.gmra.mrb[0].mxu0 %v5782
        %v5950 = vpop.f32.mrb[0].mxu0
        %v5951 = vadd.f32 0.0, %v5950
        %v5952 = vpop.f32.mrb[0].mxu0
        %5953 = vmatprep.mubr.f32.mxu0 0.0
        %5954 = vmatmul.mubr.f32.gmra.mrb[0].mxu0 %v5783
        %v5955 = vpop.f32.mrb[0].mxu0
        %v5956 = vadd.f32 0.0, %v5955
        %v5957 = vpop.f32.mrb[0].mxu0
        %5958 = vmatprep.mubr.f32.mxu0 0.0
        %5959 = vmatmul.mubr.f32.gmra.mrb[0].mxu0 %v5784
        %v5960 = vpop.f32.mrb[0].mxu0
        %v5961 = vadd.f32 0.0, %v5960
        %v5962 = vpop.f32.mrb[0].mxu0
        %5963 = vmatprep.mubr.f32.mxu0 0.0
        %5964 = vmatmul.mubr.f32.gmra.mrb[0].mxu0 %v5785
        %v5965 = vpop.f32.mrb[0].mxu0
        %v5966 = vadd.f32 0.0, %v5965
        %v5967 = vpop.f32.mrb[0].mxu0
        %5968 = vmatprep.mubr.f32.mxu0 0.0
        %5969 = vmatmul.mubr.f32.gmra.mrb[0].mxu0 %v5786
        %v5970 = vpop.f32.mrb[0].mxu0
        %v5971 = vadd.f32 0.0, %v5970
        %v5972 = vpop.f32.mrb[0].mxu0
        %5973 = vmatprep.mubr.f32.mxu0 0.0
        %5974 = vmatmul.mubr.f32.gmra.mrb[0].mxu0 %v5787
        %v5975 = vpop.f32.mrb[0].mxu0
        %v5976 = vadd.f32 0.0, %v5975
        %v5977 = vpop.f32.mrb[0].mxu0
        %5978 = vmatprep.mubr.f32.mxu0 0.0
        %5979 = vmatmul.mubr.f32.gmra.mrb[0].mxu0 %v5788
        %v5980 = vpop.f32.mrb[0].mxu0
        %v5981 = vadd.f32 0.0, %v5980
        %v5982 = vpop.f32.mrb[0].mxu0
        %5983 = vmatprep.mubr.f32.mxu0 0.0
        %5984 = vmatmul.mubr.f32.gmra.mrb[0].mxu0 %v5789
        %v5985 = vpop.f32.mrb[0].mxu0
        %v5986 = vadd.f32 0.0, %v5985
        %v5987 = vpop.f32.mrb[0].mxu0
        %5988 = vmatprep.mubr.f32.mxu0 0.0
        %5989 = vmatmul.mubr.f32.gmra.mrb[0].mxu0 %v5790
        %v5990 = vpop.f32.mrb[0].mxu0
        %v5991 = vadd.f32 0.0, %v5990
        %v5992 = vpop.f32.mrb[0].mxu0
        %5993 = vmatprep.mubr.f32.mxu0 0.0
        %5994 = vmatmul.mubr.f32.gmra.mrb[0].mxu0 %v5791
        %v5995 = vpop.f32.mrb[0].mxu0
        %v5996 = vadd.f32 0.0, %v5995
        %v5997 = vpop.f32.mrb[0].mxu0
        %5998 = vdwg.mxu0
        %v5999 = vadd.f32 %v5742, %v5876
        %v6000 = vadd.f32 %v5743, %v5881
        %v6001 = vadd.f32 %v5744, %v5886
        %v6002 = vadd.f32 %v5745, %v5891
        %v6003 = vadd.f32 %v5746, %v5896
        %v6004 = vadd.f32 %v5747, %v5901
        %v6005 = vadd.f32 %v5748, %v5906
        %v6006 = vadd.f32 %v5749, %v5911
        %v6007 = vadd.f32 %v5750, %v5916
        %v6008 = vadd.f32 %v5751, %v5921
        %v6009 = vadd.f32 %v5752, %v5926
        %v6010 = vadd.f32 %v5753, %v5931
        %v6011 = vadd.f32 %v5754, %v5936
        %v6012 = vadd.f32 %v5755, %v5941
        %v6013 = vadd.f32 %v5756, %v5946
        %v6014 = vadd.f32 %v5757, %v5951
        %v6015 = vadd.f32 %v5758, %v5956
        %v6016 = vadd.f32 %v5759, %v5961
        %v6017 = vadd.f32 %v5760, %v5966
        %v6018 = vadd.f32 %v5761, %v5971
        %v6019 = vadd.f32 %v5762, %v5976
        %v6020 = vadd.f32 %v5763, %v5981
        %v6021 = vadd.f32 %v5764, %v5986
        %v6022 = vadd.f32 %v5765, %v5991
        %v6023 = vadd.f32 %v5766, %v5996
        %v6024 = vld [vmem:[#allocation2 + $0xb] sm:$0xff]
        %v6025 = vld [vmem:[#allocation2 + $0x13] sm:$0xff]
        %v6026 = vld [vmem:[#allocation2 + $0x1b] sm:$0xff]
        %v6027 = vld [vmem:[#allocation2 + $0x23] sm:$0xff]
        %v6028 = vld [vmem:[#allocation2 + $0x2b] sm:$0xff]
        %v6029 = vld [vmem:[#allocation2 + $0x33] sm:$0xff]
        %v6030 = vld [vmem:[#allocation2 + $0x3b] sm:$0xff]
        %v6031 = vld [vmem:[#allocation2 + $0x43] sm:$0xff]
        %v6032 = vld [vmem:[#allocation2 + $0x4b] sm:$0xff]
        %v6033 = vld [vmem:[#allocation2 + $0x53] sm:$0xff]
        %v6034 = vld [vmem:[#allocation2 + $0x5b] sm:$0xff]
        %v6035 = vld [vmem:[#allocation2 + $0x63] sm:$0xff]
        %v6036 = vld [vmem:[#allocation2 + $0x6b] sm:$0xff]
        %v6037 = vld [vmem:[#allocation2 + $0x73] sm:$0xff]
        %v6038 = vld [vmem:[#allocation2 + $0x7b] sm:$0xff]
        %v6039 = vld [vmem:[#allocation2 + $0x83] sm:$0xff]
        %v6040 = vld [vmem:[#allocation2 + $0x8b] sm:$0xff]
        %v6041 = vld [vmem:[#allocation2 + $0x93] sm:$0xff]
        %v6042 = vld [vmem:[#allocation2 + $0x9b] sm:$0xff]
        %v6043 = vld [vmem:[#allocation2 + $0xa3] sm:$0xff]
        %v6044 = vld [vmem:[#allocation2 + $0xab] sm:$0xff]
        %v6045 = vld [vmem:[#allocation2 + $0xb3] sm:$0xff]
        %v6046 = vld [vmem:[#allocation2 + $0xbb] sm:$0xff]
        %v6047 = vld [vmem:[#allocation2 + $0xc3] sm:$0xff]
        %v6048 = vld [vmem:[#allocation2 + $0xcb] sm:$0xff]
        %s6049 = scalar_lea.vmem %s389, 2432 [#allocation5]
        %v6050 = vld [vmem:[%s6049] sm:$0xff]
        %v6051 = vld [vmem:[%s6049 + $0x8] sm:$0xff]
        %v6052 = vld [vmem:[%s6049 + $0x10] sm:$0xff]
        %v6053 = vld [vmem:[%s6049 + $0x18] sm:$0xff]
        %v6054 = vld [vmem:[%s6049 + $0x20] sm:$0xff]
        %v6055 = vld [vmem:[%s6049 + $0x28] sm:$0xff]
        %v6056 = vld [vmem:[%s6049 + $0x30] sm:$0xff]
        %v6057 = vld [vmem:[%s6049 + $0x38] sm:$0xff]
        %v6058 = vld [vmem:[%s6049 + $0x40] sm:$0xff]
        %v6059 = vld [vmem:[%s6049 + $0x48] sm:$0xff]
        %v6060 = vld [vmem:[%s6049 + $0x50] sm:$0xff]
        %v6061 = vld [vmem:[%s6049 + $0x58] sm:$0xff]
        %v6062 = vld [vmem:[%s6049 + $0x60] sm:$0xff]
        %v6063 = vld [vmem:[%s6049 + $0x68] sm:$0xff]
        %v6064 = vld [vmem:[%s6049 + $0x70] sm:$0xff]
        %v6065 = vld [vmem:[%s6049 + $0x78] sm:$0xff]
        %6066 = vmatprep.subr.mxu0 0.0
        %6067 = vmatpush1.msra.mxu0 %v6050
        %6068 = vmatprep.subr.mxu0 0.0
        %6069 = vmatpush1.msra.mxu0 %v6051
        %6070 = vmatprep.subr.mxu0 0.0
        %6071 = vmatpush1.msra.mxu0 %v6052
        %6072 = vmatprep.subr.mxu0 0.0
        %6073 = vmatpush1.msra.mxu0 %v6053
        %6074 = vmatprep.subr.mxu0 0.0
        %6075 = vmatpush1.msra.mxu0 %v6054
        %6076 = vmatprep.subr.mxu0 0.0
        %6077 = vmatpush1.msra.mxu0 %v6055
        %6078 = vmatprep.subr.mxu0 0.0
        %6079 = vmatpush1.msra.mxu0 %v6056
        %6080 = vmatprep.subr.mxu0 0.0
        %6081 = vmatpush1.msra.mxu0 %v6057
        %6082 = vmatprep.subr.mxu0 0.0
        %6083 = vmatpush1.msra.mxu0 %v6058
        %6084 = vmatprep.subr.mxu0 0.0
        %6085 = vmatpush1.msra.mxu0 %v6059
        %6086 = vmatprep.subr.mxu0 0.0
        %6087 = vmatpush1.msra.mxu0 %v6060
        %6088 = vmatprep.subr.mxu0 0.0
        %6089 = vmatpush1.msra.mxu0 %v6061
        %6090 = vmatprep.subr.mxu0 0.0
        %6091 = vmatpush1.msra.mxu0 %v6062
        %6092 = vmatprep.subr.mxu0 0.0
        %6093 = vmatpush1.msra.mxu0 %v6063
        %6094 = vmatprep.subr.mxu0 0.0
        %6095 = vmatpush1.msra.mxu0 %v6064
        %6096 = vmatprep.subr.mxu0 0.0
        %6097 = vmatpush1.msra.mxu0 %v6065
        %6098 = vmatprep.subr.mxu0 0.0
        %6099 = vmatpush1.msra.mxu0 0.0
        %6100 = vmatprep.subr.mxu0 0.0
        %6101 = vmatpush1.msra.mxu0 0.0
        %6102 = vmatprep.subr.mxu0 0.0
        %6103 = vmatpush1.msra.mxu0 0.0
        %6104 = vmatprep.subr.mxu0 0.0
        %6105 = vmatpush1.msra.mxu0 0.0
        %6106 = vmatprep.subr.mxu0 0.0
        %6107 = vmatpush1.msra.mxu0 0.0
        %6108 = vmatprep.subr.mxu0 0.0
        %6109 = vmatpush1.msra.mxu0 0.0
        %6110 = vmatprep.subr.mxu0 0.0
        %6111 = vmatpush1.msra.mxu0 0.0
        %6112 = vmatprep.subr.mxu0 0.0
        %6113 = vmatpush1.msra.mxu0 0.0
        %6114 = vmatprep.subr.mxu0 0.0
        %6115 = vmatpush1.msra.mxu0 0.0
        %6116 = vmatprep.subr.mxu0 0.0
        %6117 = vmatpush1.msra.mxu0 0.0
        %6118 = vmatprep.subr.mxu0 0.0
        %6119 = vmatpush1.msra.mxu0 0.0
        %6120 = vmatprep.subr.mxu0 0.0
        %6121 = vmatpush1.msra.mxu0 0.0
        %6122 = vmatprep.subr.mxu0 0.0
        %6123 = vmatpush1.msra.mxu0 0.0
        %6124 = vmatprep.subr.mxu0 0.0
        %6125 = vmatpush1.msra.mxu0 0.0
        %6126 = vmatprep.subr.mxu0 0.0
        %6127 = vmatpush1.msra.mxu0 0.0
        %6128 = vmatprep.subr.mxu0 0.0
        %6129 = vmatpush1.msra.mxu0 0.0
        %6130 = vmatprep.mubr.f32.mxu0 0.0
        %6131 = vmatmul.mubr.f32.gmra.mrb[0].mxu0 %v6024
        %v6132 = vpop.f32.mrb[0].mxu0
        %v6133 = vadd.f32 0.0, %v6132
        %v6134 = vpop.f32.mrb[0].mxu0
        %6135 = vmatprep.mubr.f32.mxu0 0.0
        %6136 = vmatmul.mubr.f32.gmra.mrb[0].mxu0 %v6025
        %v6137 = vpop.f32.mrb[0].mxu0
        %v6138 = vadd.f32 0.0, %v6137
        %v6139 = vpop.f32.mrb[0].mxu0
        %6140 = vmatprep.mubr.f32.mxu0 0.0
        %6141 = vmatmul.mubr.f32.gmra.mrb[0].mxu0 %v6026
        %v6142 = vpop.f32.mrb[0].mxu0
        %v6143 = vadd.f32 0.0, %v6142
        %v6144 = vpop.f32.mrb[0].mxu0
        %6145 = vmatprep.mubr.f32.mxu0 0.0
        %6146 = vmatmul.mubr.f32.gmra.mrb[0].mxu0 %v6027
        %v6147 = vpop.f32.mrb[0].mxu0
        %v6148 = vadd.f32 0.0, %v6147
        %v6149 = vpop.f32.mrb[0].mxu0
        %6150 = vmatprep.mubr.f32.mxu0 0.0
        %6151 = vmatmul.mubr.f32.gmra.mrb[0].mxu0 %v6028
        %v6152 = vpop.f32.mrb[0].mxu0
        %v6153 = vadd.f32 0.0, %v6152
        %v6154 = vpop.f32.mrb[0].mxu0
        %6155 = vmatprep.mubr.f32.mxu0 0.0
        %6156 = vmatmul.mubr.f32.gmra.mrb[0].mxu0 %v6029
        %v6157 = vpop.f32.mrb[0].mxu0
        %v6158 = vadd.f32 0.0, %v6157
        %v6159 = vpop.f32.mrb[0].mxu0
        %6160 = vmatprep.mubr.f32.mxu0 0.0
        %6161 = vmatmul.mubr.f32.gmra.mrb[0].mxu0 %v6030
        %v6162 = vpop.f32.mrb[0].mxu0
        %v6163 = vadd.f32 0.0, %v6162
        %v6164 = vpop.f32.mrb[0].mxu0
        %6165 = vmatprep.mubr.f32.mxu0 0.0
        %6166 = vmatmul.mubr.f32.gmra.mrb[0].mxu0 %v6031
        %v6167 = vpop.f32.mrb[0].mxu0
        %v6168 = vadd.f32 0.0, %v6167
        %v6169 = vpop.f32.mrb[0].mxu0
        %6170 = vmatprep.mubr.f32.mxu0 0.0
        %6171 = vmatmul.mubr.f32.gmra.mrb[0].mxu0 %v6032
        %v6172 = vpop.f32.mrb[0].mxu0
        %v6173 = vadd.f32 0.0, %v6172
        %v6174 = vpop.f32.mrb[0].mxu0
        %6175 = vmatprep.mubr.f32.mxu0 0.0
        %6176 = vmatmul.mubr.f32.gmra.mrb[0].mxu0 %v6033
        %v6177 = vpop.f32.mrb[0].mxu0
        %v6178 = vadd.f32 0.0, %v6177
        %v6179 = vpop.f32.mrb[0].mxu0
        %6180 = vmatprep.mubr.f32.mxu0 0.0
        %6181 = vmatmul.mubr.f32.gmra.mrb[0].mxu0 %v6034
        %v6182 = vpop.f32.mrb[0].mxu0
        %v6183 = vadd.f32 0.0, %v6182
        %v6184 = vpop.f32.mrb[0].mxu0
        %6185 = vmatprep.mubr.f32.mxu0 0.0
        %6186 = vmatmul.mubr.f32.gmra.mrb[0].mxu0 %v6035
        %v6187 = vpop.f32.mrb[0].mxu0
        %v6188 = vadd.f32 0.0, %v6187
        %v6189 = vpop.f32.mrb[0].mxu0
        %6190 = vmatprep.mubr.f32.mxu0 0.0
        %6191 = vmatmul.mubr.f32.gmra.mrb[0].mxu0 %v6036
        %v6192 = vpop.f32.mrb[0].mxu0
        %v6193 = vadd.f32 0.0, %v6192
        %v6194 = vpop.f32.mrb[0].mxu0
        %6195 = vmatprep.mubr.f32.mxu0 0.0
        %6196 = vmatmul.mubr.f32.gmra.mrb[0].mxu0 %v6037
        %v6197 = vpop.f32.mrb[0].mxu0
        %v6198 = vadd.f32 0.0, %v6197
        %v6199 = vpop.f32.mrb[0].mxu0
        %6200 = vmatprep.mubr.f32.mxu0 0.0
        %6201 = vmatmul.mubr.f32.gmra.mrb[0].mxu0 %v6038
        %v6202 = vpop.f32.mrb[0].mxu0
        %v6203 = vadd.f32 0.0, %v6202
        %v6204 = vpop.f32.mrb[0].mxu0
        %6205 = vmatprep.mubr.f32.mxu0 0.0
        %6206 = vmatmul.mubr.f32.gmra.mrb[0].mxu0 %v6039
        %v6207 = vpop.f32.mrb[0].mxu0
        %v6208 = vadd.f32 0.0, %v6207
        %v6209 = vpop.f32.mrb[0].mxu0
        %6210 = vmatprep.mubr.f32.mxu0 0.0
        %6211 = vmatmul.mubr.f32.gmra.mrb[0].mxu0 %v6040
        %v6212 = vpop.f32.mrb[0].mxu0
        %v6213 = vadd.f32 0.0, %v6212
        %v6214 = vpop.f32.mrb[0].mxu0
        %6215 = vmatprep.mubr.f32.mxu0 0.0
        %6216 = vmatmul.mubr.f32.gmra.mrb[0].mxu0 %v6041
        %v6217 = vpop.f32.mrb[0].mxu0
        %v6218 = vadd.f32 0.0, %v6217
        %v6219 = vpop.f32.mrb[0].mxu0
        %6220 = vmatprep.mubr.f32.mxu0 0.0
        %6221 = vmatmul.mubr.f32.gmra.mrb[0].mxu0 %v6042
        %v6222 = vpop.f32.mrb[0].mxu0
        %v6223 = vadd.f32 0.0, %v6222
        %v6224 = vpop.f32.mrb[0].mxu0
        %6225 = vmatprep.mubr.f32.mxu0 0.0
        %6226 = vmatmul.mubr.f32.gmra.mrb[0].mxu0 %v6043
        %v6227 = vpop.f32.mrb[0].mxu0
        %v6228 = vadd.f32 0.0, %v6227
        %v6229 = vpop.f32.mrb[0].mxu0
        %6230 = vmatprep.mubr.f32.mxu0 0.0
        %6231 = vmatmul.mubr.f32.gmra.mrb[0].mxu0 %v6044
        %v6232 = vpop.f32.mrb[0].mxu0
        %v6233 = vadd.f32 0.0, %v6232
        %v6234 = vpop.f32.mrb[0].mxu0
        %6235 = vmatprep.mubr.f32.mxu0 0.0
        %6236 = vmatmul.mubr.f32.gmra.mrb[0].mxu0 %v6045
        %v6237 = vpop.f32.mrb[0].mxu0
        %v6238 = vadd.f32 0.0, %v6237
        %v6239 = vpop.f32.mrb[0].mxu0
        %6240 = vmatprep.mubr.f32.mxu0 0.0
        %6241 = vmatmul.mubr.f32.gmra.mrb[0].mxu0 %v6046
        %v6242 = vpop.f32.mrb[0].mxu0
        %v6243 = vadd.f32 0.0, %v6242
        %v6244 = vpop.f32.mrb[0].mxu0
        %6245 = vmatprep.mubr.f32.mxu0 0.0
        %6246 = vmatmul.mubr.f32.gmra.mrb[0].mxu0 %v6047
        %v6247 = vpop.f32.mrb[0].mxu0
        %v6248 = vadd.f32 0.0, %v6247
        %v6249 = vpop.f32.mrb[0].mxu0
        %6250 = vmatprep.mubr.f32.mxu0 0.0
        %6251 = vmatmul.mubr.f32.gmra.mrb[0].mxu0 %v6048
        %v6252 = vpop.f32.mrb[0].mxu0
        %v6253 = vadd.f32 0.0, %v6252
        %v6254 = vpop.f32.mrb[0].mxu0
        %6255 = vdwg.mxu0
        %v6256 = vadd.f32 %v5999, %v6133
        %v6257 = vadd.f32 %v6000, %v6138
        %v6258 = vadd.f32 %v6001, %v6143
        %v6259 = vadd.f32 %v6002, %v6148
        %v6260 = vadd.f32 %v6003, %v6153
        %v6261 = vadd.f32 %v6004, %v6158
        %v6262 = vadd.f32 %v6005, %v6163
        %v6263 = vadd.f32 %v6006, %v6168
        %v6264 = vadd.f32 %v6007, %v6173
        %v6265 = vadd.f32 %v6008, %v6178
        %v6266 = vadd.f32 %v6009, %v6183
        %v6267 = vadd.f32 %v6010, %v6188
        %v6268 = vadd.f32 %v6011, %v6193
        %v6269 = vadd.f32 %v6012, %v6198
        %v6270 = vadd.f32 %v6013, %v6203
        %v6271 = vadd.f32 %v6014, %v6208
        %v6272 = vadd.f32 %v6015, %v6213
        %v6273 = vadd.f32 %v6016, %v6218
        %v6274 = vadd.f32 %v6017, %v6223
        %v6275 = vadd.f32 %v6018, %v6228
        %v6276 = vadd.f32 %v6019, %v6233
        %v6277 = vadd.f32 %v6020, %v6238
        %v6278 = vadd.f32 %v6021, %v6243
        %v6279 = vadd.f32 %v6022, %v6248
        %v6280 = vadd.f32 %v6023, %v6253
        %v6281 = vld [vmem:[#allocation2 + $0xc] sm:$0xff]
        %v6282 = vld [vmem:[#allocation2 + $0x14] sm:$0xff]
        %v6283 = vld [vmem:[#allocation2 + $0x1c] sm:$0xff]
        %v6284 = vld [vmem:[#allocation2 + $0x24] sm:$0xff]
        %v6285 = vld [vmem:[#allocation2 + $0x2c] sm:$0xff]
        %v6286 = vld [vmem:[#allocation2 + $0x34] sm:$0xff]
        %v6287 = vld [vmem:[#allocation2 + $0x3c] sm:$0xff]
        %v6288 = vld [vmem:[#allocation2 + $0x44] sm:$0xff]
        %v6289 = vld [vmem:[#allocation2 + $0x4c] sm:$0xff]
        %v6290 = vld [vmem:[#allocation2 + $0x54] sm:$0xff]
        %v6291 = vld [vmem:[#allocation2 + $0x5c] sm:$0xff]
        %v6292 = vld [vmem:[#allocation2 + $0x64] sm:$0xff]
        %v6293 = vld [vmem:[#allocation2 + $0x6c] sm:$0xff]
        %v6294 = vld [vmem:[#allocation2 + $0x74] sm:$0xff]
        %v6295 = vld [vmem:[#allocation2 + $0x7c] sm:$0xff]
        %v6296 = vld [vmem:[#allocation2 + $0x84] sm:$0xff]
        %v6297 = vld [vmem:[#allocation2 + $0x8c] sm:$0xff]
        %v6298 = vld [vmem:[#allocation2 + $0x94] sm:$0xff]
        %v6299 = vld [vmem:[#allocation2 + $0x9c] sm:$0xff]
        %v6300 = vld [vmem:[#allocation2 + $0xa4] sm:$0xff]
        %v6301 = vld [vmem:[#allocation2 + $0xac] sm:$0xff]
        %v6302 = vld [vmem:[#allocation2 + $0xb4] sm:$0xff]
        %v6303 = vld [vmem:[#allocation2 + $0xbc] sm:$0xff]
        %v6304 = vld [vmem:[#allocation2 + $0xc4] sm:$0xff]
        %v6305 = vld [vmem:[#allocation2 + $0xcc] sm:$0xff]
        %s6306 = scalar_lea.vmem %s389, 2560 [#allocation5]
        %v6307 = vld [vmem:[%s6306] sm:$0xff]
        %v6308 = vld [vmem:[%s6306 + $0x8] sm:$0xff]
        %v6309 = vld [vmem:[%s6306 + $0x10] sm:$0xff]
        %v6310 = vld [vmem:[%s6306 + $0x18] sm:$0xff]
        %v6311 = vld [vmem:[%s6306 + $0x20] sm:$0xff]
        %v6312 = vld [vmem:[%s6306 + $0x28] sm:$0xff]
        %v6313 = vld [vmem:[%s6306 + $0x30] sm:$0xff]
        %v6314 = vld [vmem:[%s6306 + $0x38] sm:$0xff]
        %v6315 = vld [vmem:[%s6306 + $0x40] sm:$0xff]
        %v6316 = vld [vmem:[%s6306 + $0x48] sm:$0xff]
        %v6317 = vld [vmem:[%s6306 + $0x50] sm:$0xff]
        %v6318 = vld [vmem:[%s6306 + $0x58] sm:$0xff]
        %v6319 = vld [vmem:[%s6306 + $0x60] sm:$0xff]
        %v6320 = vld [vmem:[%s6306 + $0x68] sm:$0xff]
        %v6321 = vld [vmem:[%s6306 + $0x70] sm:$0xff]
        %v6322 = vld [vmem:[%s6306 + $0x78] sm:$0xff]
        %6323 = vmatprep.subr.mxu0 0.0
        %6324 = vmatpush1.msra.mxu0 %v6307
        %6325 = vmatprep.subr.mxu0 0.0
        %6326 = vmatpush1.msra.mxu0 %v6308
        %6327 = vmatprep.subr.mxu0 0.0
        %6328 = vmatpush1.msra.mxu0 %v6309
        %6329 = vmatprep.subr.mxu0 0.0
        %6330 = vmatpush1.msra.mxu0 %v6310
        %6331 = vmatprep.subr.mxu0 0.0
        %6332 = vmatpush1.msra.mxu0 %v6311
        %6333 = vmatprep.subr.mxu0 0.0
        %6334 = vmatpush1.msra.mxu0 %v6312
        %6335 = vmatprep.subr.mxu0 0.0
        %6336 = vmatpush1.msra.mxu0 %v6313
        %6337 = vmatprep.subr.mxu0 0.0
        %6338 = vmatpush1.msra.mxu0 %v6314
        %6339 = vmatprep.subr.mxu0 0.0
        %6340 = vmatpush1.msra.mxu0 %v6315
        %6341 = vmatprep.subr.mxu0 0.0
        %6342 = vmatpush1.msra.mxu0 %v6316
        %6343 = vmatprep.subr.mxu0 0.0
        %6344 = vmatpush1.msra.mxu0 %v6317
        %6345 = vmatprep.subr.mxu0 0.0
        %6346 = vmatpush1.msra.mxu0 %v6318
        %6347 = vmatprep.subr.mxu0 0.0
        %6348 = vmatpush1.msra.mxu0 %v6319
        %6349 = vmatprep.subr.mxu0 0.0
        %6350 = vmatpush1.msra.mxu0 %v6320
        %6351 = vmatprep.subr.mxu0 0.0
        %6352 = vmatpush1.msra.mxu0 %v6321
        %6353 = vmatprep.subr.mxu0 0.0
        %6354 = vmatpush1.msra.mxu0 %v6322
        %6355 = vmatprep.subr.mxu0 0.0
        %6356 = vmatpush1.msra.mxu0 0.0
        %6357 = vmatprep.subr.mxu0 0.0
        %6358 = vmatpush1.msra.mxu0 0.0
        %6359 = vmatprep.subr.mxu0 0.0
        %6360 = vmatpush1.msra.mxu0 0.0
        %6361 = vmatprep.subr.mxu0 0.0
        %6362 = vmatpush1.msra.mxu0 0.0
        %6363 = vmatprep.subr.mxu0 0.0
        %6364 = vmatpush1.msra.mxu0 0.0
        %6365 = vmatprep.subr.mxu0 0.0
        %6366 = vmatpush1.msra.mxu0 0.0
        %6367 = vmatprep.subr.mxu0 0.0
        %6368 = vmatpush1.msra.mxu0 0.0
        %6369 = vmatprep.subr.mxu0 0.0
        %6370 = vmatpush1.msra.mxu0 0.0
        %6371 = vmatprep.subr.mxu0 0.0
        %6372 = vmatpush1.msra.mxu0 0.0
        %6373 = vmatprep.subr.mxu0 0.0
        %6374 = vmatpush1.msra.mxu0 0.0
        %6375 = vmatprep.subr.mxu0 0.0
        %6376 = vmatpush1.msra.mxu0 0.0
        %6377 = vmatprep.subr.mxu0 0.0
        %6378 = vmatpush1.msra.mxu0 0.0
        %6379 = vmatprep.subr.mxu0 0.0
        %6380 = vmatpush1.msra.mxu0 0.0
        %6381 = vmatprep.subr.mxu0 0.0
        %6382 = vmatpush1.msra.mxu0 0.0
        %6383 = vmatprep.subr.mxu0 0.0
        %6384 = vmatpush1.msra.mxu0 0.0
        %6385 = vmatprep.subr.mxu0 0.0
        %6386 = vmatpush1.msra.mxu0 0.0
        %6387 = vmatprep.mubr.f32.mxu0 0.0
        %6388 = vmatmul.mubr.f32.gmra.mrb[0].mxu0 %v6281
        %v6389 = vpop.f32.mrb[0].mxu0
        %v6390 = vadd.f32 0.0, %v6389
        %v6391 = vpop.f32.mrb[0].mxu0
        %6392 = vmatprep.mubr.f32.mxu0 0.0
        %6393 = vmatmul.mubr.f32.gmra.mrb[0].mxu0 %v6282
        %v6394 = vpop.f32.mrb[0].mxu0
        %v6395 = vadd.f32 0.0, %v6394
        %v6396 = vpop.f32.mrb[0].mxu0
        %6397 = vmatprep.mubr.f32.mxu0 0.0
        %6398 = vmatmul.mubr.f32.gmra.mrb[0].mxu0 %v6283
        %v6399 = vpop.f32.mrb[0].mxu0
        %v6400 = vadd.f32 0.0, %v6399
        %v6401 = vpop.f32.mrb[0].mxu0
        %6402 = vmatprep.mubr.f32.mxu0 0.0
        %6403 = vmatmul.mubr.f32.gmra.mrb[0].mxu0 %v6284
        %v6404 = vpop.f32.mrb[0].mxu0
        %v6405 = vadd.f32 0.0, %v6404
        %v6406 = vpop.f32.mrb[0].mxu0
        %6407 = vmatprep.mubr.f32.mxu0 0.0
        %6408 = vmatmul.mubr.f32.gmra.mrb[0].mxu0 %v6285
        %v6409 = vpop.f32.mrb[0].mxu0
        %v6410 = vadd.f32 0.0, %v6409
        %v6411 = vpop.f32.mrb[0].mxu0
        %6412 = vmatprep.mubr.f32.mxu0 0.0
        %6413 = vmatmul.mubr.f32.gmra.mrb[0].mxu0 %v6286
        %v6414 = vpop.f32.mrb[0].mxu0
        %v6415 = vadd.f32 0.0, %v6414
        %v6416 = vpop.f32.mrb[0].mxu0
        %6417 = vmatprep.mubr.f32.mxu0 0.0
        %6418 = vmatmul.mubr.f32.gmra.mrb[0].mxu0 %v6287
        %v6419 = vpop.f32.mrb[0].mxu0
        %v6420 = vadd.f32 0.0, %v6419
        %v6421 = vpop.f32.mrb[0].mxu0
        %6422 = vmatprep.mubr.f32.mxu0 0.0
        %6423 = vmatmul.mubr.f32.gmra.mrb[0].mxu0 %v6288
        %v6424 = vpop.f32.mrb[0].mxu0
        %v6425 = vadd.f32 0.0, %v6424
        %v6426 = vpop.f32.mrb[0].mxu0
        %6427 = vmatprep.mubr.f32.mxu0 0.0
        %6428 = vmatmul.mubr.f32.gmra.mrb[0].mxu0 %v6289
        %v6429 = vpop.f32.mrb[0].mxu0
        %v6430 = vadd.f32 0.0, %v6429
        %v6431 = vpop.f32.mrb[0].mxu0
        %6432 = vmatprep.mubr.f32.mxu0 0.0
        %6433 = vmatmul.mubr.f32.gmra.mrb[0].mxu0 %v6290
        %v6434 = vpop.f32.mrb[0].mxu0
        %v6435 = vadd.f32 0.0, %v6434
        %v6436 = vpop.f32.mrb[0].mxu0
        %6437 = vmatprep.mubr.f32.mxu0 0.0
        %6438 = vmatmul.mubr.f32.gmra.mrb[0].mxu0 %v6291
        %v6439 = vpop.f32.mrb[0].mxu0
        %v6440 = vadd.f32 0.0, %v6439
        %v6441 = vpop.f32.mrb[0].mxu0
        %6442 = vmatprep.mubr.f32.mxu0 0.0
        %6443 = vmatmul.mubr.f32.gmra.mrb[0].mxu0 %v6292
        %v6444 = vpop.f32.mrb[0].mxu0
        %v6445 = vadd.f32 0.0, %v6444
        %v6446 = vpop.f32.mrb[0].mxu0
        %6447 = vmatprep.mubr.f32.mxu0 0.0
        %6448 = vmatmul.mubr.f32.gmra.mrb[0].mxu0 %v6293
        %v6449 = vpop.f32.mrb[0].mxu0
        %v6450 = vadd.f32 0.0, %v6449
        %v6451 = vpop.f32.mrb[0].mxu0
        %6452 = vmatprep.mubr.f32.mxu0 0.0
        %6453 = vmatmul.mubr.f32.gmra.mrb[0].mxu0 %v6294
        %v6454 = vpop.f32.mrb[0].mxu0
        %v6455 = vadd.f32 0.0, %v6454
        %v6456 = vpop.f32.mrb[0].mxu0
        %6457 = vmatprep.mubr.f32.mxu0 0.0
        %6458 = vmatmul.mubr.f32.gmra.mrb[0].mxu0 %v6295
        %v6459 = vpop.f32.mrb[0].mxu0
        %v6460 = vadd.f32 0.0, %v6459
        %v6461 = vpop.f32.mrb[0].mxu0
        %6462 = vmatprep.mubr.f32.mxu0 0.0
        %6463 = vmatmul.mubr.f32.gmra.mrb[0].mxu0 %v6296
        %v6464 = vpop.f32.mrb[0].mxu0
        %v6465 = vadd.f32 0.0, %v6464
        %v6466 = vpop.f32.mrb[0].mxu0
        %6467 = vmatprep.mubr.f32.mxu0 0.0
        %6468 = vmatmul.mubr.f32.gmra.mrb[0].mxu0 %v6297
        %v6469 = vpop.f32.mrb[0].mxu0
        %v6470 = vadd.f32 0.0, %v6469
        %v6471 = vpop.f32.mrb[0].mxu0
        %6472 = vmatprep.mubr.f32.mxu0 0.0
        %6473 = vmatmul.mubr.f32.gmra.mrb[0].mxu0 %v6298
        %v6474 = vpop.f32.mrb[0].mxu0
        %v6475 = vadd.f32 0.0, %v6474
        %v6476 = vpop.f32.mrb[0].mxu0
        %6477 = vmatprep.mubr.f32.mxu0 0.0
        %6478 = vmatmul.mubr.f32.gmra.mrb[0].mxu0 %v6299
        %v6479 = vpop.f32.mrb[0].mxu0
        %v6480 = vadd.f32 0.0, %v6479
        %v6481 = vpop.f32.mrb[0].mxu0
        %6482 = vmatprep.mubr.f32.mxu0 0.0
        %6483 = vmatmul.mubr.f32.gmra.mrb[0].mxu0 %v6300
        %v6484 = vpop.f32.mrb[0].mxu0
        %v6485 = vadd.f32 0.0, %v6484
        %v6486 = vpop.f32.mrb[0].mxu0
        %6487 = vmatprep.mubr.f32.mxu0 0.0
        %6488 = vmatmul.mubr.f32.gmra.mrb[0].mxu0 %v6301
        %v6489 = vpop.f32.mrb[0].mxu0
        %v6490 = vadd.f32 0.0, %v6489
        %v6491 = vpop.f32.mrb[0].mxu0
        %6492 = vmatprep.mubr.f32.mxu0 0.0
        %6493 = vmatmul.mubr.f32.gmra.mrb[0].mxu0 %v6302
        %v6494 = vpop.f32.mrb[0].mxu0
        %v6495 = vadd.f32 0.0, %v6494
        %v6496 = vpop.f32.mrb[0].mxu0
        %6497 = vmatprep.mubr.f32.mxu0 0.0
        %6498 = vmatmul.mubr.f32.gmra.mrb[0].mxu0 %v6303
        %v6499 = vpop.f32.mrb[0].mxu0
        %v6500 = vadd.f32 0.0, %v6499
        %v6501 = vpop.f32.mrb[0].mxu0
        %6502 = vmatprep.mubr.f32.mxu0 0.0
        %6503 = vmatmul.mubr.f32.gmra.mrb[0].mxu0 %v6304
        %v6504 = vpop.f32.mrb[0].mxu0
        %v6505 = vadd.f32 0.0, %v6504
        %v6506 = vpop.f32.mrb[0].mxu0
        %6507 = vmatprep.mubr.f32.mxu0 0.0
        %6508 = vmatmul.mubr.f32.gmra.mrb[0].mxu0 %v6305
        %v6509 = vpop.f32.mrb[0].mxu0
        %v6510 = vadd.f32 0.0, %v6509
        %v6511 = vpop.f32.mrb[0].mxu0
        %6512 = vdwg.mxu0
        %v6513 = vadd.f32 %v6256, %v6390
        %v6514 = vadd.f32 %v6257, %v6395
        %v6515 = vadd.f32 %v6258, %v6400
        %v6516 = vadd.f32 %v6259, %v6405
        %v6517 = vadd.f32 %v6260, %v6410
        %v6518 = vadd.f32 %v6261, %v6415
        %v6519 = vadd.f32 %v6262, %v6420
        %v6520 = vadd.f32 %v6263, %v6425
        %v6521 = vadd.f32 %v6264, %v6430
        %v6522 = vadd.f32 %v6265, %v6435
        %v6523 = vadd.f32 %v6266, %v6440
        %v6524 = vadd.f32 %v6267, %v6445
        %v6525 = vadd.f32 %v6268, %v6450
        %v6526 = vadd.f32 %v6269, %v6455
        %v6527 = vadd.f32 %v6270, %v6460
        %v6528 = vadd.f32 %v6271, %v6465
        %v6529 = vadd.f32 %v6272, %v6470
        %v6530 = vadd.f32 %v6273, %v6475
        %v6531 = vadd.f32 %v6274, %v6480
        %v6532 = vadd.f32 %v6275, %v6485
        %v6533 = vadd.f32 %v6276, %v6490
        %v6534 = vadd.f32 %v6277, %v6495
        %v6535 = vadd.f32 %v6278, %v6500
        %v6536 = vadd.f32 %v6279, %v6505
        %v6537 = vadd.f32 %v6280, %v6510
        %v6538 = vld [vmem:[#allocation2 + $0xf] sm:$0xff]
        %v6539 = vld [vmem:[#allocation2 + $0x17] sm:$0xff]
        %v6540 = vld [vmem:[#allocation2 + $0x1f] sm:$0xff]
        %v6541 = vld [vmem:[#allocation2 + $0x27] sm:$0xff]
        %v6542 = vld [vmem:[#allocation2 + $0x2f] sm:$0xff]
        %v6543 = vld [vmem:[#allocation2 + $0x37] sm:$0xff]
        %v6544 = vld [vmem:[#allocation2 + $0x3f] sm:$0xff]
        %v6545 = vld [vmem:[#allocation2 + $0x47] sm:$0xff]
        %v6546 = vld [vmem:[#allocation2 + $0x4f] sm:$0xff]
        %v6547 = vld [vmem:[#allocation2 + $0x57] sm:$0xff]
        %v6548 = vld [vmem:[#allocation2 + $0x5f] sm:$0xff]
        %v6549 = vld [vmem:[#allocation2 + $0x67] sm:$0xff]
        %v6550 = vld [vmem:[#allocation2 + $0x6f] sm:$0xff]
        %v6551 = vld [vmem:[#allocation2 + $0x77] sm:$0xff]
        %v6552 = vld [vmem:[#allocation2 + $0x7f] sm:$0xff]
        %v6553 = vld [vmem:[#allocation2 + $0x87] sm:$0xff]
        %v6554 = vld [vmem:[#allocation2 + $0x8f] sm:$0xff]
        %v6555 = vld [vmem:[#allocation2 + $0x97] sm:$0xff]
        %v6556 = vld [vmem:[#allocation2 + $0x9f] sm:$0xff]
        %v6557 = vld [vmem:[#allocation2 + $0xa7] sm:$0xff]
        %v6558 = vld [vmem:[#allocation2 + $0xaf] sm:$0xff]
        %v6559 = vld [vmem:[#allocation2 + $0xb7] sm:$0xff]
        %v6560 = vld [vmem:[#allocation2 + $0xbf] sm:$0xff]
        %v6561 = vld [vmem:[#allocation2 + $0xc7] sm:$0xff]
        %v6562 = vld [vmem:[#allocation2 + $0xcf] sm:$0xff]
        %s6563 = scalar_lea.vmem %s389, 2688 [#allocation5]
        %v6564 = vld [vmem:[%s6563] sm:$0xff]
        %v6565 = vld [vmem:[%s6563 + $0x8] sm:$0xff]
        %v6566 = vld [vmem:[%s6563 + $0x10] sm:$0xff]
        %v6567 = vld [vmem:[%s6563 + $0x18] sm:$0xff]
        %v6568 = vld [vmem:[%s6563 + $0x20] sm:$0xff]
        %v6569 = vld [vmem:[%s6563 + $0x28] sm:$0xff]
        %v6570 = vld [vmem:[%s6563 + $0x30] sm:$0xff]
        %v6571 = vld [vmem:[%s6563 + $0x38] sm:$0xff]
        %v6572 = vld [vmem:[%s6563 + $0x40] sm:$0xff]
        %v6573 = vld [vmem:[%s6563 + $0x48] sm:$0xff]
        %v6574 = vld [vmem:[%s6563 + $0x50] sm:$0xff]
        %v6575 = vld [vmem:[%s6563 + $0x58] sm:$0xff]
        %v6576 = vld [vmem:[%s6563 + $0x60] sm:$0xff]
        %v6577 = vld [vmem:[%s6563 + $0x68] sm:$0xff]
        %v6578 = vld [vmem:[%s6563 + $0x70] sm:$0xff]
        %v6579 = vld [vmem:[%s6563 + $0x78] sm:$0xff]
        %6580 = vmatprep.subr.mxu0 0.0
        %6581 = vmatpush1.msra.mxu0 %v6564
        %6582 = vmatprep.subr.mxu0 0.0
        %6583 = vmatpush1.msra.mxu0 %v6565
        %6584 = vmatprep.subr.mxu0 0.0
        %6585 = vmatpush1.msra.mxu0 %v6566
        %6586 = vmatprep.subr.mxu0 0.0
        %6587 = vmatpush1.msra.mxu0 %v6567
        %6588 = vmatprep.subr.mxu0 0.0
        %6589 = vmatpush1.msra.mxu0 %v6568
        %6590 = vmatprep.subr.mxu0 0.0
        %6591 = vmatpush1.msra.mxu0 %v6569
        %6592 = vmatprep.subr.mxu0 0.0
        %6593 = vmatpush1.msra.mxu0 %v6570
        %6594 = vmatprep.subr.mxu0 0.0
        %6595 = vmatpush1.msra.mxu0 %v6571
        %6596 = vmatprep.subr.mxu0 0.0
        %6597 = vmatpush1.msra.mxu0 %v6572
        %6598 = vmatprep.subr.mxu0 0.0
        %6599 = vmatpush1.msra.mxu0 %v6573
        %6600 = vmatprep.subr.mxu0 0.0
        %6601 = vmatpush1.msra.mxu0 %v6574
        %6602 = vmatprep.subr.mxu0 0.0
        %6603 = vmatpush1.msra.mxu0 %v6575
        %6604 = vmatprep.subr.mxu0 0.0
        %6605 = vmatpush1.msra.mxu0 %v6576
        %6606 = vmatprep.subr.mxu0 0.0
        %6607 = vmatpush1.msra.mxu0 %v6577
        %6608 = vmatprep.subr.mxu0 0.0
        %6609 = vmatpush1.msra.mxu0 %v6578
        %6610 = vmatprep.subr.mxu0 0.0
        %6611 = vmatpush1.msra.mxu0 %v6579
        %6612 = vmatprep.subr.mxu0 0.0
        %6613 = vmatpush1.msra.mxu0 0.0
        %6614 = vmatprep.subr.mxu0 0.0
        %6615 = vmatpush1.msra.mxu0 0.0
        %6616 = vmatprep.subr.mxu0 0.0
        %6617 = vmatpush1.msra.mxu0 0.0
        %6618 = vmatprep.subr.mxu0 0.0
        %6619 = vmatpush1.msra.mxu0 0.0
        %6620 = vmatprep.subr.mxu0 0.0
        %6621 = vmatpush1.msra.mxu0 0.0
        %6622 = vmatprep.subr.mxu0 0.0
        %6623 = vmatpush1.msra.mxu0 0.0
        %6624 = vmatprep.subr.mxu0 0.0
        %6625 = vmatpush1.msra.mxu0 0.0
        %6626 = vmatprep.subr.mxu0 0.0
        %6627 = vmatpush1.msra.mxu0 0.0
        %6628 = vmatprep.subr.mxu0 0.0
        %6629 = vmatpush1.msra.mxu0 0.0
        %6630 = vmatprep.subr.mxu0 0.0
        %6631 = vmatpush1.msra.mxu0 0.0
        %6632 = vmatprep.subr.mxu0 0.0
        %6633 = vmatpush1.msra.mxu0 0.0
        %6634 = vmatprep.subr.mxu0 0.0
        %6635 = vmatpush1.msra.mxu0 0.0
        %6636 = vmatprep.subr.mxu0 0.0
        %6637 = vmatpush1.msra.mxu0 0.0
        %6638 = vmatprep.subr.mxu0 0.0
        %6639 = vmatpush1.msra.mxu0 0.0
        %6640 = vmatprep.subr.mxu0 0.0
        %6641 = vmatpush1.msra.mxu0 0.0
        %6642 = vmatprep.subr.mxu0 0.0
        %6643 = vmatpush1.msra.mxu0 0.0
        %6644 = vmatprep.mubr.f32.mxu0 0.0
        %6645 = vmatmul.mubr.f32.gmra.mrb[0].mxu0 %v6538
        %v6646 = vpop.f32.mrb[0].mxu0
        %v6647 = vadd.f32 0.0, %v6646
        %v6648 = vpop.f32.mrb[0].mxu0
        %6649 = vmatprep.mubr.f32.mxu0 0.0
        %6650 = vmatmul.mubr.f32.gmra.mrb[0].mxu0 %v6539
        %v6651 = vpop.f32.mrb[0].mxu0
        %v6652 = vadd.f32 0.0, %v6651
        %v6653 = vpop.f32.mrb[0].mxu0
        %6654 = vmatprep.mubr.f32.mxu0 0.0
        %6655 = vmatmul.mubr.f32.gmra.mrb[0].mxu0 %v6540
        %v6656 = vpop.f32.mrb[0].mxu0
        %v6657 = vadd.f32 0.0, %v6656
        %v6658 = vpop.f32.mrb[0].mxu0
        %6659 = vmatprep.mubr.f32.mxu0 0.0
        %6660 = vmatmul.mubr.f32.gmra.mrb[0].mxu0 %v6541
        %v6661 = vpop.f32.mrb[0].mxu0
        %v6662 = vadd.f32 0.0, %v6661
        %v6663 = vpop.f32.mrb[0].mxu0
        %6664 = vmatprep.mubr.f32.mxu0 0.0
        %6665 = vmatmul.mubr.f32.gmra.mrb[0].mxu0 %v6542
        %v6666 = vpop.f32.mrb[0].mxu0
        %v6667 = vadd.f32 0.0, %v6666
        %v6668 = vpop.f32.mrb[0].mxu0
        %6669 = vmatprep.mubr.f32.mxu0 0.0
        %6670 = vmatmul.mubr.f32.gmra.mrb[0].mxu0 %v6543
        %v6671 = vpop.f32.mrb[0].mxu0
        %v6672 = vadd.f32 0.0, %v6671
        %v6673 = vpop.f32.mrb[0].mxu0
        %6674 = vmatprep.mubr.f32.mxu0 0.0
        %6675 = vmatmul.mubr.f32.gmra.mrb[0].mxu0 %v6544
        %v6676 = vpop.f32.mrb[0].mxu0
        %v6677 = vadd.f32 0.0, %v6676
        %v6678 = vpop.f32.mrb[0].mxu0
        %6679 = vmatprep.mubr.f32.mxu0 0.0
        %6680 = vmatmul.mubr.f32.gmra.mrb[0].mxu0 %v6545
        %v6681 = vpop.f32.mrb[0].mxu0
        %v6682 = vadd.f32 0.0, %v6681
        %v6683 = vpop.f32.mrb[0].mxu0
        %6684 = vmatprep.mubr.f32.mxu0 0.0
        %6685 = vmatmul.mubr.f32.gmra.mrb[0].mxu0 %v6546
        %v6686 = vpop.f32.mrb[0].mxu0
        %v6687 = vadd.f32 0.0, %v6686
        %v6688 = vpop.f32.mrb[0].mxu0
        %6689 = vmatprep.mubr.f32.mxu0 0.0
        %6690 = vmatmul.mubr.f32.gmra.mrb[0].mxu0 %v6547
        %v6691 = vpop.f32.mrb[0].mxu0
        %v6692 = vadd.f32 0.0, %v6691
        %v6693 = vpop.f32.mrb[0].mxu0
        %6694 = vmatprep.mubr.f32.mxu0 0.0
        %6695 = vmatmul.mubr.f32.gmra.mrb[0].mxu0 %v6548
        %v6696 = vpop.f32.mrb[0].mxu0
        %v6697 = vadd.f32 0.0, %v6696
        %v6698 = vpop.f32.mrb[0].mxu0
        %6699 = vmatprep.mubr.f32.mxu0 0.0
        %6700 = vmatmul.mubr.f32.gmra.mrb[0].mxu0 %v6549
        %v6701 = vpop.f32.mrb[0].mxu0
        %v6702 = vadd.f32 0.0, %v6701
        %v6703 = vpop.f32.mrb[0].mxu0
        %6704 = vmatprep.mubr.f32.mxu0 0.0
        %6705 = vmatmul.mubr.f32.gmra.mrb[0].mxu0 %v6550
        %v6706 = vpop.f32.mrb[0].mxu0
        %v6707 = vadd.f32 0.0, %v6706
        %v6708 = vpop.f32.mrb[0].mxu0
        %6709 = vmatprep.mubr.f32.mxu0 0.0
        %6710 = vmatmul.mubr.f32.gmra.mrb[0].mxu0 %v6551
        %v6711 = vpop.f32.mrb[0].mxu0
        %v6712 = vadd.f32 0.0, %v6711
        %v6713 = vpop.f32.mrb[0].mxu0
        %6714 = vmatprep.mubr.f32.mxu0 0.0
        %6715 = vmatmul.mubr.f32.gmra.mrb[0].mxu0 %v6552
        %v6716 = vpop.f32.mrb[0].mxu0
        %v6717 = vadd.f32 0.0, %v6716
        %v6718 = vpop.f32.mrb[0].mxu0
        %6719 = vmatprep.mubr.f32.mxu0 0.0
        %6720 = vmatmul.mubr.f32.gmra.mrb[0].mxu0 %v6553
        %v6721 = vpop.f32.mrb[0].mxu0
        %v6722 = vadd.f32 0.0, %v6721
        %v6723 = vpop.f32.mrb[0].mxu0
        %6724 = vmatprep.mubr.f32.mxu0 0.0
        %6725 = vmatmul.mubr.f32.gmra.mrb[0].mxu0 %v6554
        %v6726 = vpop.f32.mrb[0].mxu0
        %v6727 = vadd.f32 0.0, %v6726
        %v6728 = vpop.f32.mrb[0].mxu0
        %6729 = vmatprep.mubr.f32.mxu0 0.0
        %6730 = vmatmul.mubr.f32.gmra.mrb[0].mxu0 %v6555
        %v6731 = vpop.f32.mrb[0].mxu0
        %v6732 = vadd.f32 0.0, %v6731
        %v6733 = vpop.f32.mrb[0].mxu0
        %6734 = vmatprep.mubr.f32.mxu0 0.0
        %6735 = vmatmul.mubr.f32.gmra.mrb[0].mxu0 %v6556
        %v6736 = vpop.f32.mrb[0].mxu0
        %v6737 = vadd.f32 0.0, %v6736
        %v6738 = vpop.f32.mrb[0].mxu0
        %6739 = vmatprep.mubr.f32.mxu0 0.0
        %6740 = vmatmul.mubr.f32.gmra.mrb[0].mxu0 %v6557
        %v6741 = vpop.f32.mrb[0].mxu0
        %v6742 = vadd.f32 0.0, %v6741
        %v6743 = vpop.f32.mrb[0].mxu0
        %6744 = vmatprep.mubr.f32.mxu0 0.0
        %6745 = vmatmul.mubr.f32.gmra.mrb[0].mxu0 %v6558
        %v6746 = vpop.f32.mrb[0].mxu0
        %v6747 = vadd.f32 0.0, %v6746
        %v6748 = vpop.f32.mrb[0].mxu0
        %6749 = vmatprep.mubr.f32.mxu0 0.0
        %6750 = vmatmul.mubr.f32.gmra.mrb[0].mxu0 %v6559
        %v6751 = vpop.f32.mrb[0].mxu0
        %v6752 = vadd.f32 0.0, %v6751
        %v6753 = vpop.f32.mrb[0].mxu0
        %6754 = vmatprep.mubr.f32.mxu0 0.0
        %6755 = vmatmul.mubr.f32.gmra.mrb[0].mxu0 %v6560
        %v6756 = vpop.f32.mrb[0].mxu0
        %v6757 = vadd.f32 0.0, %v6756
        %v6758 = vpop.f32.mrb[0].mxu0
        %6759 = vmatprep.mubr.f32.mxu0 0.0
        %6760 = vmatmul.mubr.f32.gmra.mrb[0].mxu0 %v6561
        %v6761 = vpop.f32.mrb[0].mxu0
        %v6762 = vadd.f32 0.0, %v6761
        %v6763 = vpop.f32.mrb[0].mxu0
        %6764 = vmatprep.mubr.f32.mxu0 0.0
        %6765 = vmatmul.mubr.f32.gmra.mrb[0].mxu0 %v6562
        %v6766 = vpop.f32.mrb[0].mxu0
        %v6767 = vadd.f32 0.0, %v6766
        %v6768 = vpop.f32.mrb[0].mxu0
        %6769 = vdwg.mxu0
        %v6770 = vadd.f32 %v6513, %v6647
        %v6771 = vadd.f32 %v6514, %v6652
        %v6772 = vadd.f32 %v6515, %v6657
        %v6773 = vadd.f32 %v6516, %v6662
        %v6774 = vadd.f32 %v6517, %v6667
        %v6775 = vadd.f32 %v6518, %v6672
        %v6776 = vadd.f32 %v6519, %v6677
        %v6777 = vadd.f32 %v6520, %v6682
        %v6778 = vadd.f32 %v6521, %v6687
        %v6779 = vadd.f32 %v6522, %v6692
        %v6780 = vadd.f32 %v6523, %v6697
        %v6781 = vadd.f32 %v6524, %v6702
        %v6782 = vadd.f32 %v6525, %v6707
        %v6783 = vadd.f32 %v6526, %v6712
        %v6784 = vadd.f32 %v6527, %v6717
        %v6785 = vadd.f32 %v6528, %v6722
        %v6786 = vadd.f32 %v6529, %v6727
        %v6787 = vadd.f32 %v6530, %v6732
        %v6788 = vadd.f32 %v6531, %v6737
        %v6789 = vadd.f32 %v6532, %v6742
        %v6790 = vadd.f32 %v6533, %v6747
        %v6791 = vadd.f32 %v6534, %v6752
        %v6792 = vadd.f32 %v6535, %v6757
        %v6793 = vadd.f32 %v6536, %v6762
        %v6794 = vadd.f32 %v6537, %v6767
        %v6795 = vld [vmem:[#allocation2 + $0x10] sm:$0xff]
        %v6796 = vld [vmem:[#allocation2 + $0x18] sm:$0xff]
        %v6797 = vld [vmem:[#allocation2 + $0x20] sm:$0xff]
        %v6798 = vld [vmem:[#allocation2 + $0x28] sm:$0xff]
        %v6799 = vld [vmem:[#allocation2 + $0x30] sm:$0xff]
        %v6800 = vld [vmem:[#allocation2 + $0x38] sm:$0xff]
        %v6801 = vld [vmem:[#allocation2 + $0x40] sm:$0xff]
        %v6802 = vld [vmem:[#allocation2 + $0x48] sm:$0xff]
        %v6803 = vld [vmem:[#allocation2 + $0x50] sm:$0xff]
        %v6804 = vld [vmem:[#allocation2 + $0x58] sm:$0xff]
        %v6805 = vld [vmem:[#allocation2 + $0x60] sm:$0xff]
        %v6806 = vld [vmem:[#allocation2 + $0x68] sm:$0xff]
        %v6807 = vld [vmem:[#allocation2 + $0x70] sm:$0xff]
        %v6808 = vld [vmem:[#allocation2 + $0x78] sm:$0xff]
        %v6809 = vld [vmem:[#allocation2 + $0x80] sm:$0xff]
        %v6810 = vld [vmem:[#allocation2 + $0x88] sm:$0xff]
        %v6811 = vld [vmem:[#allocation2 + $0x90] sm:$0xff]
        %v6812 = vld [vmem:[#allocation2 + $0x98] sm:$0xff]
        %v6813 = vld [vmem:[#allocation2 + $0xa0] sm:$0xff]
        %v6814 = vld [vmem:[#allocation2 + $0xa8] sm:$0xff]
        %v6815 = vld [vmem:[#allocation2 + $0xb0] sm:$0xff]
        %v6816 = vld [vmem:[#allocation2 + $0xb8] sm:$0xff]
        %v6817 = vld [vmem:[#allocation2 + $0xc0] sm:$0xff]
        %v6818 = vld [vmem:[#allocation2 + $0xc8] sm:$0xff]
        %v6819 = vld [vmem:[#allocation2 + $0xd0] sm:$0xff]
        %s6820 = scalar_lea.vmem %s389, 2816 [#allocation5]
        %v6821 = vld [vmem:[%s6820] sm:$0xff]
        %v6822 = vld [vmem:[%s6820 + $0x8] sm:$0xff]
        %v6823 = vld [vmem:[%s6820 + $0x10] sm:$0xff]
        %v6824 = vld [vmem:[%s6820 + $0x18] sm:$0xff]
        %v6825 = vld [vmem:[%s6820 + $0x20] sm:$0xff]
        %v6826 = vld [vmem:[%s6820 + $0x28] sm:$0xff]
        %v6827 = vld [vmem:[%s6820 + $0x30] sm:$0xff]
        %v6828 = vld [vmem:[%s6820 + $0x38] sm:$0xff]
        %v6829 = vld [vmem:[%s6820 + $0x40] sm:$0xff]
        %v6830 = vld [vmem:[%s6820 + $0x48] sm:$0xff]
        %v6831 = vld [vmem:[%s6820 + $0x50] sm:$0xff]
        %v6832 = vld [vmem:[%s6820 + $0x58] sm:$0xff]
        %v6833 = vld [vmem:[%s6820 + $0x60] sm:$0xff]
        %v6834 = vld [vmem:[%s6820 + $0x68] sm:$0xff]
        %v6835 = vld [vmem:[%s6820 + $0x70] sm:$0xff]
        %v6836 = vld [vmem:[%s6820 + $0x78] sm:$0xff]
        %6837 = vmatprep.subr.mxu0 0.0
        %6838 = vmatpush1.msra.mxu0 %v6821
        %6839 = vmatprep.subr.mxu0 0.0
        %6840 = vmatpush1.msra.mxu0 %v6822
        %6841 = vmatprep.subr.mxu0 0.0
        %6842 = vmatpush1.msra.mxu0 %v6823
        %6843 = vmatprep.subr.mxu0 0.0
        %6844 = vmatpush1.msra.mxu0 %v6824
        %6845 = vmatprep.subr.mxu0 0.0
        %6846 = vmatpush1.msra.mxu0 %v6825
        %6847 = vmatprep.subr.mxu0 0.0
        %6848 = vmatpush1.msra.mxu0 %v6826
        %6849 = vmatprep.subr.mxu0 0.0
        %6850 = vmatpush1.msra.mxu0 %v6827
        %6851 = vmatprep.subr.mxu0 0.0
        %6852 = vmatpush1.msra.mxu0 %v6828
        %6853 = vmatprep.subr.mxu0 0.0
        %6854 = vmatpush1.msra.mxu0 %v6829
        %6855 = vmatprep.subr.mxu0 0.0
        %6856 = vmatpush1.msra.mxu0 %v6830
        %6857 = vmatprep.subr.mxu0 0.0
        %6858 = vmatpush1.msra.mxu0 %v6831
        %6859 = vmatprep.subr.mxu0 0.0
        %6860 = vmatpush1.msra.mxu0 %v6832
        %6861 = vmatprep.subr.mxu0 0.0
        %6862 = vmatpush1.msra.mxu0 %v6833
        %6863 = vmatprep.subr.mxu0 0.0
        %6864 = vmatpush1.msra.mxu0 %v6834
        %6865 = vmatprep.subr.mxu0 0.0
        %6866 = vmatpush1.msra.mxu0 %v6835
        %6867 = vmatprep.subr.mxu0 0.0
        %6868 = vmatpush1.msra.mxu0 %v6836
        %6869 = vmatprep.subr.mxu0 0.0
        %6870 = vmatpush1.msra.mxu0 0.0
        %6871 = vmatprep.subr.mxu0 0.0
        %6872 = vmatpush1.msra.mxu0 0.0
        %6873 = vmatprep.subr.mxu0 0.0
        %6874 = vmatpush1.msra.mxu0 0.0
        %6875 = vmatprep.subr.mxu0 0.0
        %6876 = vmatpush1.msra.mxu0 0.0
        %6877 = vmatprep.subr.mxu0 0.0
        %6878 = vmatpush1.msra.mxu0 0.0
        %6879 = vmatprep.subr.mxu0 0.0
        %6880 = vmatpush1.msra.mxu0 0.0
        %6881 = vmatprep.subr.mxu0 0.0
        %6882 = vmatpush1.msra.mxu0 0.0
        %6883 = vmatprep.subr.mxu0 0.0
        %6884 = vmatpush1.msra.mxu0 0.0
        %6885 = vmatprep.subr.mxu0 0.0
        %6886 = vmatpush1.msra.mxu0 0.0
        %6887 = vmatprep.subr.mxu0 0.0
        %6888 = vmatpush1.msra.mxu0 0.0
        %6889 = vmatprep.subr.mxu0 0.0
        %6890 = vmatpush1.msra.mxu0 0.0
        %6891 = vmatprep.subr.mxu0 0.0
        %6892 = vmatpush1.msra.mxu0 0.0
        %6893 = vmatprep.subr.mxu0 0.0
        %6894 = vmatpush1.msra.mxu0 0.0
        %6895 = vmatprep.subr.mxu0 0.0
        %6896 = vmatpush1.msra.mxu0 0.0
        %6897 = vmatprep.subr.mxu0 0.0
        %6898 = vmatpush1.msra.mxu0 0.0
        %6899 = vmatprep.subr.mxu0 0.0
        %6900 = vmatpush1.msra.mxu0 0.0
        %6901 = vmatprep.mubr.f32.mxu0 0.0
        %6902 = vmatmul.mubr.f32.gmra.mrb[0].mxu0 %v6795
        %v6903 = vpop.f32.mrb[0].mxu0
        %v6904 = vadd.f32 0.0, %v6903
        %v6905 = vpop.f32.mrb[0].mxu0
        %6906 = vmatprep.mubr.f32.mxu0 0.0
        %6907 = vmatmul.mubr.f32.gmra.mrb[0].mxu0 %v6796
        %v6908 = vpop.f32.mrb[0].mxu0
        %v6909 = vadd.f32 0.0, %v6908
        %v6910 = vpop.f32.mrb[0].mxu0
        %6911 = vmatprep.mubr.f32.mxu0 0.0
        %6912 = vmatmul.mubr.f32.gmra.mrb[0].mxu0 %v6797
        %v6913 = vpop.f32.mrb[0].mxu0
        %v6914 = vadd.f32 0.0, %v6913
        %v6915 = vpop.f32.mrb[0].mxu0
        %6916 = vmatprep.mubr.f32.mxu0 0.0
        %6917 = vmatmul.mubr.f32.gmra.mrb[0].mxu0 %v6798
        %v6918 = vpop.f32.mrb[0].mxu0
        %v6919 = vadd.f32 0.0, %v6918
        %v6920 = vpop.f32.mrb[0].mxu0
        %6921 = vmatprep.mubr.f32.mxu0 0.0
        %6922 = vmatmul.mubr.f32.gmra.mrb[0].mxu0 %v6799
        %v6923 = vpop.f32.mrb[0].mxu0
        %v6924 = vadd.f32 0.0, %v6923
        %v6925 = vpop.f32.mrb[0].mxu0
        %6926 = vmatprep.mubr.f32.mxu0 0.0
        %6927 = vmatmul.mubr.f32.gmra.mrb[0].mxu0 %v6800
        %v6928 = vpop.f32.mrb[0].mxu0
        %v6929 = vadd.f32 0.0, %v6928
        %v6930 = vpop.f32.mrb[0].mxu0
        %6931 = vmatprep.mubr.f32.mxu0 0.0
        %6932 = vmatmul.mubr.f32.gmra.mrb[0].mxu0 %v6801
        %v6933 = vpop.f32.mrb[0].mxu0
        %v6934 = vadd.f32 0.0, %v6933
        %v6935 = vpop.f32.mrb[0].mxu0
        %6936 = vmatprep.mubr.f32.mxu0 0.0
        %6937 = vmatmul.mubr.f32.gmra.mrb[0].mxu0 %v6802
        %v6938 = vpop.f32.mrb[0].mxu0
        %v6939 = vadd.f32 0.0, %v6938
        %v6940 = vpop.f32.mrb[0].mxu0
        %6941 = vmatprep.mubr.f32.mxu0 0.0
        %6942 = vmatmul.mubr.f32.gmra.mrb[0].mxu0 %v6803
        %v6943 = vpop.f32.mrb[0].mxu0
        %v6944 = vadd.f32 0.0, %v6943
        %v6945 = vpop.f32.mrb[0].mxu0
        %6946 = vmatprep.mubr.f32.mxu0 0.0
        %6947 = vmatmul.mubr.f32.gmra.mrb[0].mxu0 %v6804
        %v6948 = vpop.f32.mrb[0].mxu0
        %v6949 = vadd.f32 0.0, %v6948
        %v6950 = vpop.f32.mrb[0].mxu0
        %6951 = vmatprep.mubr.f32.mxu0 0.0
        %6952 = vmatmul.mubr.f32.gmra.mrb[0].mxu0 %v6805
        %v6953 = vpop.f32.mrb[0].mxu0
        %v6954 = vadd.f32 0.0, %v6953
        %v6955 = vpop.f32.mrb[0].mxu0
        %6956 = vmatprep.mubr.f32.mxu0 0.0
        %6957 = vmatmul.mubr.f32.gmra.mrb[0].mxu0 %v6806
        %v6958 = vpop.f32.mrb[0].mxu0
        %v6959 = vadd.f32 0.0, %v6958
        %v6960 = vpop.f32.mrb[0].mxu0
        %6961 = vmatprep.mubr.f32.mxu0 0.0
        %6962 = vmatmul.mubr.f32.gmra.mrb[0].mxu0 %v6807
        %v6963 = vpop.f32.mrb[0].mxu0
        %v6964 = vadd.f32 0.0, %v6963
        %v6965 = vpop.f32.mrb[0].mxu0
        %6966 = vmatprep.mubr.f32.mxu0 0.0
        %6967 = vmatmul.mubr.f32.gmra.mrb[0].mxu0 %v6808
        %v6968 = vpop.f32.mrb[0].mxu0
        %v6969 = vadd.f32 0.0, %v6968
        %v6970 = vpop.f32.mrb[0].mxu0
        %6971 = vmatprep.mubr.f32.mxu0 0.0
        %6972 = vmatmul.mubr.f32.gmra.mrb[0].mxu0 %v6809
        %v6973 = vpop.f32.mrb[0].mxu0
        %v6974 = vadd.f32 0.0, %v6973
        %v6975 = vpop.f32.mrb[0].mxu0
        %6976 = vmatprep.mubr.f32.mxu0 0.0
        %6977 = vmatmul.mubr.f32.gmra.mrb[0].mxu0 %v6810
        %v6978 = vpop.f32.mrb[0].mxu0
        %v6979 = vadd.f32 0.0, %v6978
        %v6980 = vpop.f32.mrb[0].mxu0
        %6981 = vmatprep.mubr.f32.mxu0 0.0
        %6982 = vmatmul.mubr.f32.gmra.mrb[0].mxu0 %v6811
        %v6983 = vpop.f32.mrb[0].mxu0
        %v6984 = vadd.f32 0.0, %v6983
        %v6985 = vpop.f32.mrb[0].mxu0
        %6986 = vmatprep.mubr.f32.mxu0 0.0
        %6987 = vmatmul.mubr.f32.gmra.mrb[0].mxu0 %v6812
        %v6988 = vpop.f32.mrb[0].mxu0
        %v6989 = vadd.f32 0.0, %v6988
        %v6990 = vpop.f32.mrb[0].mxu0
        %6991 = vmatprep.mubr.f32.mxu0 0.0
        %6992 = vmatmul.mubr.f32.gmra.mrb[0].mxu0 %v6813
        %v6993 = vpop.f32.mrb[0].mxu0
        %v6994 = vadd.f32 0.0, %v6993
        %v6995 = vpop.f32.mrb[0].mxu0
        %6996 = vmatprep.mubr.f32.mxu0 0.0
        %6997 = vmatmul.mubr.f32.gmra.mrb[0].mxu0 %v6814
        %v6998 = vpop.f32.mrb[0].mxu0
        %v6999 = vadd.f32 0.0, %v6998
        %v7000 = vpop.f32.mrb[0].mxu0
        %7001 = vmatprep.mubr.f32.mxu0 0.0
        %7002 = vmatmul.mubr.f32.gmra.mrb[0].mxu0 %v6815
        %v7003 = vpop.f32.mrb[0].mxu0
        %v7004 = vadd.f32 0.0, %v7003
        %v7005 = vpop.f32.mrb[0].mxu0
        %7006 = vmatprep.mubr.f32.mxu0 0.0
        %7007 = vmatmul.mubr.f32.gmra.mrb[0].mxu0 %v6816
        %v7008 = vpop.f32.mrb[0].mxu0
        %v7009 = vadd.f32 0.0, %v7008
        %v7010 = vpop.f32.mrb[0].mxu0
        %7011 = vmatprep.mubr.f32.mxu0 0.0
        %7012 = vmatmul.mubr.f32.gmra.mrb[0].mxu0 %v6817
        %v7013 = vpop.f32.mrb[0].mxu0
        %v7014 = vadd.f32 0.0, %v7013
        %v7015 = vpop.f32.mrb[0].mxu0
        %7016 = vmatprep.mubr.f32.mxu0 0.0
        %7017 = vmatmul.mubr.f32.gmra.mrb[0].mxu0 %v6818
        %v7018 = vpop.f32.mrb[0].mxu0
        %v7019 = vadd.f32 0.0, %v7018
        %v7020 = vpop.f32.mrb[0].mxu0
        %7021 = vmatprep.mubr.f32.mxu0 0.0
        %7022 = vmatmul.mubr.f32.gmra.mrb[0].mxu0 %v6819
        %v7023 = vpop.f32.mrb[0].mxu0
        %v7024 = vadd.f32 0.0, %v7023
        %v7025 = vpop.f32.mrb[0].mxu0
        %7026 = vdwg.mxu0
        %v7027 = vadd.f32 %v6770, %v6904
        %v7028 = vadd.f32 %v6771, %v6909
        %v7029 = vadd.f32 %v6772, %v6914
        %v7030 = vadd.f32 %v6773, %v6919
        %v7031 = vadd.f32 %v6774, %v6924
        %v7032 = vadd.f32 %v6775, %v6929
        %v7033 = vadd.f32 %v6776, %v6934
        %v7034 = vadd.f32 %v6777, %v6939
        %v7035 = vadd.f32 %v6778, %v6944
        %v7036 = vadd.f32 %v6779, %v6949
        %v7037 = vadd.f32 %v6780, %v6954
        %v7038 = vadd.f32 %v6781, %v6959
        %v7039 = vadd.f32 %v6782, %v6964
        %v7040 = vadd.f32 %v6783, %v6969
        %v7041 = vadd.f32 %v6784, %v6974
        %v7042 = vadd.f32 %v6785, %v6979
        %v7043 = vadd.f32 %v6786, %v6984
        %v7044 = vadd.f32 %v6787, %v6989
        %v7045 = vadd.f32 %v6788, %v6994
        %v7046 = vadd.f32 %v6789, %v6999
        %v7047 = vadd.f32 %v6790, %v7004
        %v7048 = vadd.f32 %v6791, %v7009
        %v7049 = vadd.f32 %v6792, %v7014
        %v7050 = vadd.f32 %v6793, %v7019
        %v7051 = vadd.f32 %v6794, %v7024
        %v7052 = vld [vmem:[#allocation2 + $0x11] sm:$0xff]
        %v7053 = vld [vmem:[#allocation2 + $0x19] sm:$0xff]
        %v7054 = vld [vmem:[#allocation2 + $0x21] sm:$0xff]
        %v7055 = vld [vmem:[#allocation2 + $0x29] sm:$0xff]
        %v7056 = vld [vmem:[#allocation2 + $0x31] sm:$0xff]
        %v7057 = vld [vmem:[#allocation2 + $0x39] sm:$0xff]
        %v7058 = vld [vmem:[#allocation2 + $0x41] sm:$0xff]
        %v7059 = vld [vmem:[#allocation2 + $0x49] sm:$0xff]
        %v7060 = vld [vmem:[#allocation2 + $0x51] sm:$0xff]
        %v7061 = vld [vmem:[#allocation2 + $0x59] sm:$0xff]
        %v7062 = vld [vmem:[#allocation2 + $0x61] sm:$0xff]
        %v7063 = vld [vmem:[#allocation2 + $0x69] sm:$0xff]
        %v7064 = vld [vmem:[#allocation2 + $0x71] sm:$0xff]
        %v7065 = vld [vmem:[#allocation2 + $0x79] sm:$0xff]
        %v7066 = vld [vmem:[#allocation2 + $0x81] sm:$0xff]
        %v7067 = vld [vmem:[#allocation2 + $0x89] sm:$0xff]
        %v7068 = vld [vmem:[#allocation2 + $0x91] sm:$0xff]
        %v7069 = vld [vmem:[#allocation2 + $0x99] sm:$0xff]
        %v7070 = vld [vmem:[#allocation2 + $0xa1] sm:$0xff]
        %v7071 = vld [vmem:[#allocation2 + $0xa9] sm:$0xff]
        %v7072 = vld [vmem:[#allocation2 + $0xb1] sm:$0xff]
        %v7073 = vld [vmem:[#allocation2 + $0xb9] sm:$0xff]
        %v7074 = vld [vmem:[#allocation2 + $0xc1] sm:$0xff]
        %v7075 = vld [vmem:[#allocation2 + $0xc9] sm:$0xff]
        %v7076 = vld [vmem:[#allocation2 + $0xd1] sm:$0xff]
        %s7077 = scalar_lea.vmem %s389, 2944 [#allocation5]
        %v7078 = vld [vmem:[%s7077] sm:$0xff]
        %v7079 = vld [vmem:[%s7077 + $0x8] sm:$0xff]
        %v7080 = vld [vmem:[%s7077 + $0x10] sm:$0xff]
        %v7081 = vld [vmem:[%s7077 + $0x18] sm:$0xff]
        %v7082 = vld [vmem:[%s7077 + $0x20] sm:$0xff]
        %v7083 = vld [vmem:[%s7077 + $0x28] sm:$0xff]
        %v7084 = vld [vmem:[%s7077 + $0x30] sm:$0xff]
        %v7085 = vld [vmem:[%s7077 + $0x38] sm:$0xff]
        %v7086 = vld [vmem:[%s7077 + $0x40] sm:$0xff]
        %v7087 = vld [vmem:[%s7077 + $0x48] sm:$0xff]
        %v7088 = vld [vmem:[%s7077 + $0x50] sm:$0xff]
        %v7089 = vld [vmem:[%s7077 + $0x58] sm:$0xff]
        %v7090 = vld [vmem:[%s7077 + $0x60] sm:$0xff]
        %v7091 = vld [vmem:[%s7077 + $0x68] sm:$0xff]
        %v7092 = vld [vmem:[%s7077 + $0x70] sm:$0xff]
        %v7093 = vld [vmem:[%s7077 + $0x78] sm:$0xff]
        %7094 = vmatprep.subr.mxu0 0.0
        %7095 = vmatpush1.msra.mxu0 %v7078
        %7096 = vmatprep.subr.mxu0 0.0
        %7097 = vmatpush1.msra.mxu0 %v7079
        %7098 = vmatprep.subr.mxu0 0.0
        %7099 = vmatpush1.msra.mxu0 %v7080
        %7100 = vmatprep.subr.mxu0 0.0
        %7101 = vmatpush1.msra.mxu0 %v7081
        %7102 = vmatprep.subr.mxu0 0.0
        %7103 = vmatpush1.msra.mxu0 %v7082
        %7104 = vmatprep.subr.mxu0 0.0
        %7105 = vmatpush1.msra.mxu0 %v7083
        %7106 = vmatprep.subr.mxu0 0.0
        %7107 = vmatpush1.msra.mxu0 %v7084
        %7108 = vmatprep.subr.mxu0 0.0
        %7109 = vmatpush1.msra.mxu0 %v7085
        %7110 = vmatprep.subr.mxu0 0.0
        %7111 = vmatpush1.msra.mxu0 %v7086
        %7112 = vmatprep.subr.mxu0 0.0
        %7113 = vmatpush1.msra.mxu0 %v7087
        %7114 = vmatprep.subr.mxu0 0.0
        %7115 = vmatpush1.msra.mxu0 %v7088
        %7116 = vmatprep.subr.mxu0 0.0
        %7117 = vmatpush1.msra.mxu0 %v7089
        %7118 = vmatprep.subr.mxu0 0.0
        %7119 = vmatpush1.msra.mxu0 %v7090
        %7120 = vmatprep.subr.mxu0 0.0
        %7121 = vmatpush1.msra.mxu0 %v7091
        %7122 = vmatprep.subr.mxu0 0.0
        %7123 = vmatpush1.msra.mxu0 %v7092
        %7124 = vmatprep.subr.mxu0 0.0
        %7125 = vmatpush1.msra.mxu0 %v7093
        %7126 = vmatprep.subr.mxu0 0.0
        %7127 = vmatpush1.msra.mxu0 0.0
        %7128 = vmatprep.subr.mxu0 0.0
        %7129 = vmatpush1.msra.mxu0 0.0
        %7130 = vmatprep.subr.mxu0 0.0
        %7131 = vmatpush1.msra.mxu0 0.0
        %7132 = vmatprep.subr.mxu0 0.0
        %7133 = vmatpush1.msra.mxu0 0.0
        %7134 = vmatprep.subr.mxu0 0.0
        %7135 = vmatpush1.msra.mxu0 0.0
        %7136 = vmatprep.subr.mxu0 0.0
        %7137 = vmatpush1.msra.mxu0 0.0
        %7138 = vmatprep.subr.mxu0 0.0
        %7139 = vmatpush1.msra.mxu0 0.0
        %7140 = vmatprep.subr.mxu0 0.0
        %7141 = vmatpush1.msra.mxu0 0.0
        %7142 = vmatprep.subr.mxu0 0.0
        %7143 = vmatpush1.msra.mxu0 0.0
        %7144 = vmatprep.subr.mxu0 0.0
        %7145 = vmatpush1.msra.mxu0 0.0
        %7146 = vmatprep.subr.mxu0 0.0
        %7147 = vmatpush1.msra.mxu0 0.0
        %7148 = vmatprep.subr.mxu0 0.0
        %7149 = vmatpush1.msra.mxu0 0.0
        %7150 = vmatprep.subr.mxu0 0.0
        %7151 = vmatpush1.msra.mxu0 0.0
        %7152 = vmatprep.subr.mxu0 0.0
        %7153 = vmatpush1.msra.mxu0 0.0
        %7154 = vmatprep.subr.mxu0 0.0
        %7155 = vmatpush1.msra.mxu0 0.0
        %7156 = vmatprep.subr.mxu0 0.0
        %7157 = vmatpush1.msra.mxu0 0.0
        %7158 = vmatprep.mubr.f32.mxu0 0.0
        %7159 = vmatmul.mubr.f32.gmra.mrb[0].mxu0 %v7052
        %v7160 = vpop.f32.mrb[0].mxu0
        %v7161 = vadd.f32 0.0, %v7160
        %v7162 = vpop.f32.mrb[0].mxu0
        %7163 = vmatprep.mubr.f32.mxu0 0.0
        %7164 = vmatmul.mubr.f32.gmra.mrb[0].mxu0 %v7053
        %v7165 = vpop.f32.mrb[0].mxu0
        %v7166 = vadd.f32 0.0, %v7165
        %v7167 = vpop.f32.mrb[0].mxu0
        %7168 = vmatprep.mubr.f32.mxu0 0.0
        %7169 = vmatmul.mubr.f32.gmra.mrb[0].mxu0 %v7054
        %v7170 = vpop.f32.mrb[0].mxu0
        %v7171 = vadd.f32 0.0, %v7170
        %v7172 = vpop.f32.mrb[0].mxu0
        %7173 = vmatprep.mubr.f32.mxu0 0.0
        %7174 = vmatmul.mubr.f32.gmra.mrb[0].mxu0 %v7055
        %v7175 = vpop.f32.mrb[0].mxu0
        %v7176 = vadd.f32 0.0, %v7175
        %v7177 = vpop.f32.mrb[0].mxu0
        %7178 = vmatprep.mubr.f32.mxu0 0.0
        %7179 = vmatmul.mubr.f32.gmra.mrb[0].mxu0 %v7056
        %v7180 = vpop.f32.mrb[0].mxu0
        %v7181 = vadd.f32 0.0, %v7180
        %v7182 = vpop.f32.mrb[0].mxu0
        %7183 = vmatprep.mubr.f32.mxu0 0.0
        %7184 = vmatmul.mubr.f32.gmra.mrb[0].mxu0 %v7057
        %v7185 = vpop.f32.mrb[0].mxu0
        %v7186 = vadd.f32 0.0, %v7185
        %v7187 = vpop.f32.mrb[0].mxu0
        %7188 = vmatprep.mubr.f32.mxu0 0.0
        %7189 = vmatmul.mubr.f32.gmra.mrb[0].mxu0 %v7058
        %v7190 = vpop.f32.mrb[0].mxu0
        %v7191 = vadd.f32 0.0, %v7190
        %v7192 = vpop.f32.mrb[0].mxu0
        %7193 = vmatprep.mubr.f32.mxu0 0.0
        %7194 = vmatmul.mubr.f32.gmra.mrb[0].mxu0 %v7059
        %v7195 = vpop.f32.mrb[0].mxu0
        %v7196 = vadd.f32 0.0, %v7195
        %v7197 = vpop.f32.mrb[0].mxu0
        %7198 = vmatprep.mubr.f32.mxu0 0.0
        %7199 = vmatmul.mubr.f32.gmra.mrb[0].mxu0 %v7060
        %v7200 = vpop.f32.mrb[0].mxu0
        %v7201 = vadd.f32 0.0, %v7200
        %v7202 = vpop.f32.mrb[0].mxu0
        %7203 = vmatprep.mubr.f32.mxu0 0.0
        %7204 = vmatmul.mubr.f32.gmra.mrb[0].mxu0 %v7061
        %v7205 = vpop.f32.mrb[0].mxu0
        %v7206 = vadd.f32 0.0, %v7205
        %v7207 = vpop.f32.mrb[0].mxu0
        %7208 = vmatprep.mubr.f32.mxu0 0.0
        %7209 = vmatmul.mubr.f32.gmra.mrb[0].mxu0 %v7062
        %v7210 = vpop.f32.mrb[0].mxu0
        %v7211 = vadd.f32 0.0, %v7210
        %v7212 = vpop.f32.mrb[0].mxu0
        %7213 = vmatprep.mubr.f32.mxu0 0.0
        %7214 = vmatmul.mubr.f32.gmra.mrb[0].mxu0 %v7063
        %v7215 = vpop.f32.mrb[0].mxu0
        %v7216 = vadd.f32 0.0, %v7215
        %v7217 = vpop.f32.mrb[0].mxu0
        %7218 = vmatprep.mubr.f32.mxu0 0.0
        %7219 = vmatmul.mubr.f32.gmra.mrb[0].mxu0 %v7064
        %v7220 = vpop.f32.mrb[0].mxu0
        %v7221 = vadd.f32 0.0, %v7220
        %v7222 = vpop.f32.mrb[0].mxu0
        %7223 = vmatprep.mubr.f32.mxu0 0.0
        %7224 = vmatmul.mubr.f32.gmra.mrb[0].mxu0 %v7065
        %v7225 = vpop.f32.mrb[0].mxu0
        %v7226 = vadd.f32 0.0, %v7225
        %v7227 = vpop.f32.mrb[0].mxu0
        %7228 = vmatprep.mubr.f32.mxu0 0.0
        %7229 = vmatmul.mubr.f32.gmra.mrb[0].mxu0 %v7066
        %v7230 = vpop.f32.mrb[0].mxu0
        %v7231 = vadd.f32 0.0, %v7230
        %v7232 = vpop.f32.mrb[0].mxu0
        %7233 = vmatprep.mubr.f32.mxu0 0.0
        %7234 = vmatmul.mubr.f32.gmra.mrb[0].mxu0 %v7067
        %v7235 = vpop.f32.mrb[0].mxu0
        %v7236 = vadd.f32 0.0, %v7235
        %v7237 = vpop.f32.mrb[0].mxu0
        %7238 = vmatprep.mubr.f32.mxu0 0.0
        %7239 = vmatmul.mubr.f32.gmra.mrb[0].mxu0 %v7068
        %v7240 = vpop.f32.mrb[0].mxu0
        %v7241 = vadd.f32 0.0, %v7240
        %v7242 = vpop.f32.mrb[0].mxu0
        %7243 = vmatprep.mubr.f32.mxu0 0.0
        %7244 = vmatmul.mubr.f32.gmra.mrb[0].mxu0 %v7069
        %v7245 = vpop.f32.mrb[0].mxu0
        %v7246 = vadd.f32 0.0, %v7245
        %v7247 = vpop.f32.mrb[0].mxu0
        %7248 = vmatprep.mubr.f32.mxu0 0.0
        %7249 = vmatmul.mubr.f32.gmra.mrb[0].mxu0 %v7070
        %v7250 = vpop.f32.mrb[0].mxu0
        %v7251 = vadd.f32 0.0, %v7250
        %v7252 = vpop.f32.mrb[0].mxu0
        %7253 = vmatprep.mubr.f32.mxu0 0.0
        %7254 = vmatmul.mubr.f32.gmra.mrb[0].mxu0 %v7071
        %v7255 = vpop.f32.mrb[0].mxu0
        %v7256 = vadd.f32 0.0, %v7255
        %v7257 = vpop.f32.mrb[0].mxu0
        %7258 = vmatprep.mubr.f32.mxu0 0.0
        %7259 = vmatmul.mubr.f32.gmra.mrb[0].mxu0 %v7072
        %v7260 = vpop.f32.mrb[0].mxu0
        %v7261 = vadd.f32 0.0, %v7260
        %v7262 = vpop.f32.mrb[0].mxu0
        %7263 = vmatprep.mubr.f32.mxu0 0.0
        %7264 = vmatmul.mubr.f32.gmra.mrb[0].mxu0 %v7073
        %v7265 = vpop.f32.mrb[0].mxu0
        %v7266 = vadd.f32 0.0, %v7265
        %v7267 = vpop.f32.mrb[0].mxu0
        %7268 = vmatprep.mubr.f32.mxu0 0.0
        %7269 = vmatmul.mubr.f32.gmra.mrb[0].mxu0 %v7074
        %v7270 = vpop.f32.mrb[0].mxu0
        %v7271 = vadd.f32 0.0, %v7270
        %v7272 = vpop.f32.mrb[0].mxu0
        %7273 = vmatprep.mubr.f32.mxu0 0.0
        %7274 = vmatmul.mubr.f32.gmra.mrb[0].mxu0 %v7075
        %v7275 = vpop.f32.mrb[0].mxu0
        %v7276 = vadd.f32 0.0, %v7275
        %v7277 = vpop.f32.mrb[0].mxu0
        %7278 = vmatprep.mubr.f32.mxu0 0.0
        %7279 = vmatmul.mubr.f32.gmra.mrb[0].mxu0 %v7076
        %v7280 = vpop.f32.mrb[0].mxu0
        %v7281 = vadd.f32 0.0, %v7280
        %v7282 = vpop.f32.mrb[0].mxu0
        %7283 = vdwg.mxu0
        %v7284 = vadd.f32 %v7027, %v7161
        %v7285 = vadd.f32 %v7028, %v7166
        %v7286 = vadd.f32 %v7029, %v7171
        %v7287 = vadd.f32 %v7030, %v7176
        %v7288 = vadd.f32 %v7031, %v7181
        %v7289 = vadd.f32 %v7032, %v7186
        %v7290 = vadd.f32 %v7033, %v7191
        %v7291 = vadd.f32 %v7034, %v7196
        %v7292 = vadd.f32 %v7035, %v7201
        %v7293 = vadd.f32 %v7036, %v7206
        %v7294 = vadd.f32 %v7037, %v7211
        %v7295 = vadd.f32 %v7038, %v7216
        %v7296 = vadd.f32 %v7039, %v7221
        %v7297 = vadd.f32 %v7040, %v7226
        %v7298 = vadd.f32 %v7041, %v7231
        %v7299 = vadd.f32 %v7042, %v7236
        %v7300 = vadd.f32 %v7043, %v7241
        %v7301 = vadd.f32 %v7044, %v7246
        %v7302 = vadd.f32 %v7045, %v7251
        %v7303 = vadd.f32 %v7046, %v7256
        %v7304 = vadd.f32 %v7047, %v7261
        %v7305 = vadd.f32 %v7048, %v7266
        %v7306 = vadd.f32 %v7049, %v7271
        %v7307 = vadd.f32 %v7050, %v7276
        %v7308 = vadd.f32 %v7051, %v7281
        %v7309 = vld [vmem:[#allocation2 + $0x14] sm:$0xff]
        %v7310 = vld [vmem:[#allocation2 + $0x1c] sm:$0xff]
        %v7311 = vld [vmem:[#allocation2 + $0x24] sm:$0xff]
        %v7312 = vld [vmem:[#allocation2 + $0x2c] sm:$0xff]
        %v7313 = vld [vmem:[#allocation2 + $0x34] sm:$0xff]
        %v7314 = vld [vmem:[#allocation2 + $0x3c] sm:$0xff]
        %v7315 = vld [vmem:[#allocation2 + $0x44] sm:$0xff]
        %v7316 = vld [vmem:[#allocation2 + $0x4c] sm:$0xff]
        %v7317 = vld [vmem:[#allocation2 + $0x54] sm:$0xff]
        %v7318 = vld [vmem:[#allocation2 + $0x5c] sm:$0xff]
        %v7319 = vld [vmem:[#allocation2 + $0x64] sm:$0xff]
        %v7320 = vld [vmem:[#allocation2 + $0x6c] sm:$0xff]
        %v7321 = vld [vmem:[#allocation2 + $0x74] sm:$0xff]
        %v7322 = vld [vmem:[#allocation2 + $0x7c] sm:$0xff]
        %v7323 = vld [vmem:[#allocation2 + $0x84] sm:$0xff]
        %v7324 = vld [vmem:[#allocation2 + $0x8c] sm:$0xff]
        %v7325 = vld [vmem:[#allocation2 + $0x94] sm:$0xff]
        %v7326 = vld [vmem:[#allocation2 + $0x9c] sm:$0xff]
        %v7327 = vld [vmem:[#allocation2 + $0xa4] sm:$0xff]
        %v7328 = vld [vmem:[#allocation2 + $0xac] sm:$0xff]
        %v7329 = vld [vmem:[#allocation2 + $0xb4] sm:$0xff]
        %v7330 = vld [vmem:[#allocation2 + $0xbc] sm:$0xff]
        %v7331 = vld [vmem:[#allocation2 + $0xc4] sm:$0xff]
        %v7332 = vld [vmem:[#allocation2 + $0xcc] sm:$0xff]
        %v7333 = vld [vmem:[#allocation2 + $0xd4] sm:$0xff]
        %s7334 = scalar_lea.vmem %s389, 3072 [#allocation5]
        %v7335 = vld [vmem:[%s7334] sm:$0xff]
        %v7336 = vld [vmem:[%s7334 + $0x8] sm:$0xff]
        %v7337 = vld [vmem:[%s7334 + $0x10] sm:$0xff]
        %v7338 = vld [vmem:[%s7334 + $0x18] sm:$0xff]
        %v7339 = vld [vmem:[%s7334 + $0x20] sm:$0xff]
        %v7340 = vld [vmem:[%s7334 + $0x28] sm:$0xff]
        %v7341 = vld [vmem:[%s7334 + $0x30] sm:$0xff]
        %v7342 = vld [vmem:[%s7334 + $0x38] sm:$0xff]
        %v7343 = vld [vmem:[%s7334 + $0x40] sm:$0xff]
        %v7344 = vld [vmem:[%s7334 + $0x48] sm:$0xff]
        %v7345 = vld [vmem:[%s7334 + $0x50] sm:$0xff]
        %v7346 = vld [vmem:[%s7334 + $0x58] sm:$0xff]
        %v7347 = vld [vmem:[%s7334 + $0x60] sm:$0xff]
        %v7348 = vld [vmem:[%s7334 + $0x68] sm:$0xff]
        %v7349 = vld [vmem:[%s7334 + $0x70] sm:$0xff]
        %v7350 = vld [vmem:[%s7334 + $0x78] sm:$0xff]
        %7351 = vmatprep.subr.mxu0 0.0
        %7352 = vmatpush1.msra.mxu0 %v7335
        %7353 = vmatprep.subr.mxu0 0.0
        %7354 = vmatpush1.msra.mxu0 %v7336
        %7355 = vmatprep.subr.mxu0 0.0
        %7356 = vmatpush1.msra.mxu0 %v7337
        %7357 = vmatprep.subr.mxu0 0.0
        %7358 = vmatpush1.msra.mxu0 %v7338
        %7359 = vmatprep.subr.mxu0 0.0
        %7360 = vmatpush1.msra.mxu0 %v7339
        %7361 = vmatprep.subr.mxu0 0.0
        %7362 = vmatpush1.msra.mxu0 %v7340
        %7363 = vmatprep.subr.mxu0 0.0
        %7364 = vmatpush1.msra.mxu0 %v7341
        %7365 = vmatprep.subr.mxu0 0.0
        %7366 = vmatpush1.msra.mxu0 %v7342
        %7367 = vmatprep.subr.mxu0 0.0
        %7368 = vmatpush1.msra.mxu0 %v7343
        %7369 = vmatprep.subr.mxu0 0.0
        %7370 = vmatpush1.msra.mxu0 %v7344
        %7371 = vmatprep.subr.mxu0 0.0
        %7372 = vmatpush1.msra.mxu0 %v7345
        %7373 = vmatprep.subr.mxu0 0.0
        %7374 = vmatpush1.msra.mxu0 %v7346
        %7375 = vmatprep.subr.mxu0 0.0
        %7376 = vmatpush1.msra.mxu0 %v7347
        %7377 = vmatprep.subr.mxu0 0.0
        %7378 = vmatpush1.msra.mxu0 %v7348
        %7379 = vmatprep.subr.mxu0 0.0
        %7380 = vmatpush1.msra.mxu0 %v7349
        %7381 = vmatprep.subr.mxu0 0.0
        %7382 = vmatpush1.msra.mxu0 %v7350
        %7383 = vmatprep.subr.mxu0 0.0
        %7384 = vmatpush1.msra.mxu0 0.0
        %7385 = vmatprep.subr.mxu0 0.0
        %7386 = vmatpush1.msra.mxu0 0.0
        %7387 = vmatprep.subr.mxu0 0.0
        %7388 = vmatpush1.msra.mxu0 0.0
        %7389 = vmatprep.subr.mxu0 0.0
        %7390 = vmatpush1.msra.mxu0 0.0
        %7391 = vmatprep.subr.mxu0 0.0
        %7392 = vmatpush1.msra.mxu0 0.0
        %7393 = vmatprep.subr.mxu0 0.0
        %7394 = vmatpush1.msra.mxu0 0.0
        %7395 = vmatprep.subr.mxu0 0.0
        %7396 = vmatpush1.msra.mxu0 0.0
        %7397 = vmatprep.subr.mxu0 0.0
        %7398 = vmatpush1.msra.mxu0 0.0
        %7399 = vmatprep.subr.mxu0 0.0
        %7400 = vmatpush1.msra.mxu0 0.0
        %7401 = vmatprep.subr.mxu0 0.0
        %7402 = vmatpush1.msra.mxu0 0.0
        %7403 = vmatprep.subr.mxu0 0.0
        %7404 = vmatpush1.msra.mxu0 0.0
        %7405 = vmatprep.subr.mxu0 0.0
        %7406 = vmatpush1.msra.mxu0 0.0
        %7407 = vmatprep.subr.mxu0 0.0
        %7408 = vmatpush1.msra.mxu0 0.0
        %7409 = vmatprep.subr.mxu0 0.0
        %7410 = vmatpush1.msra.mxu0 0.0
        %7411 = vmatprep.subr.mxu0 0.0
        %7412 = vmatpush1.msra.mxu0 0.0
        %7413 = vmatprep.subr.mxu0 0.0
        %7414 = vmatpush1.msra.mxu0 0.0
        %7415 = vmatprep.mubr.f32.mxu0 0.0
        %7416 = vmatmul.mubr.f32.gmra.mrb[0].mxu0 %v7309
        %v7417 = vpop.f32.mrb[0].mxu0
        %v7418 = vadd.f32 0.0, %v7417
        %v7419 = vpop.f32.mrb[0].mxu0
        %7420 = vmatprep.mubr.f32.mxu0 0.0
        %7421 = vmatmul.mubr.f32.gmra.mrb[0].mxu0 %v7310
        %v7422 = vpop.f32.mrb[0].mxu0
        %v7423 = vadd.f32 0.0, %v7422
        %v7424 = vpop.f32.mrb[0].mxu0
        %7425 = vmatprep.mubr.f32.mxu0 0.0
        %7426 = vmatmul.mubr.f32.gmra.mrb[0].mxu0 %v7311
        %v7427 = vpop.f32.mrb[0].mxu0
        %v7428 = vadd.f32 0.0, %v7427
        %v7429 = vpop.f32.mrb[0].mxu0
        %7430 = vmatprep.mubr.f32.mxu0 0.0
        %7431 = vmatmul.mubr.f32.gmra.mrb[0].mxu0 %v7312
        %v7432 = vpop.f32.mrb[0].mxu0
        %v7433 = vadd.f32 0.0, %v7432
        %v7434 = vpop.f32.mrb[0].mxu0
        %7435 = vmatprep.mubr.f32.mxu0 0.0
        %7436 = vmatmul.mubr.f32.gmra.mrb[0].mxu0 %v7313
        %v7437 = vpop.f32.mrb[0].mxu0
        %v7438 = vadd.f32 0.0, %v7437
        %v7439 = vpop.f32.mrb[0].mxu0
        %7440 = vmatprep.mubr.f32.mxu0 0.0
        %7441 = vmatmul.mubr.f32.gmra.mrb[0].mxu0 %v7314
        %v7442 = vpop.f32.mrb[0].mxu0
        %v7443 = vadd.f32 0.0, %v7442
        %v7444 = vpop.f32.mrb[0].mxu0
        %7445 = vmatprep.mubr.f32.mxu0 0.0
        %7446 = vmatmul.mubr.f32.gmra.mrb[0].mxu0 %v7315
        %v7447 = vpop.f32.mrb[0].mxu0
        %v7448 = vadd.f32 0.0, %v7447
        %v7449 = vpop.f32.mrb[0].mxu0
        %7450 = vmatprep.mubr.f32.mxu0 0.0
        %7451 = vmatmul.mubr.f32.gmra.mrb[0].mxu0 %v7316
        %v7452 = vpop.f32.mrb[0].mxu0
        %v7453 = vadd.f32 0.0, %v7452
        %v7454 = vpop.f32.mrb[0].mxu0
        %7455 = vmatprep.mubr.f32.mxu0 0.0
        %7456 = vmatmul.mubr.f32.gmra.mrb[0].mxu0 %v7317
        %v7457 = vpop.f32.mrb[0].mxu0
        %v7458 = vadd.f32 0.0, %v7457
        %v7459 = vpop.f32.mrb[0].mxu0
        %7460 = vmatprep.mubr.f32.mxu0 0.0
        %7461 = vmatmul.mubr.f32.gmra.mrb[0].mxu0 %v7318
        %v7462 = vpop.f32.mrb[0].mxu0
        %v7463 = vadd.f32 0.0, %v7462
        %v7464 = vpop.f32.mrb[0].mxu0
        %7465 = vmatprep.mubr.f32.mxu0 0.0
        %7466 = vmatmul.mubr.f32.gmra.mrb[0].mxu0 %v7319
        %v7467 = vpop.f32.mrb[0].mxu0
        %v7468 = vadd.f32 0.0, %v7467
        %v7469 = vpop.f32.mrb[0].mxu0
        %7470 = vmatprep.mubr.f32.mxu0 0.0
        %7471 = vmatmul.mubr.f32.gmra.mrb[0].mxu0 %v7320
        %v7472 = vpop.f32.mrb[0].mxu0
        %v7473 = vadd.f32 0.0, %v7472
        %v7474 = vpop.f32.mrb[0].mxu0
        %7475 = vmatprep.mubr.f32.mxu0 0.0
        %7476 = vmatmul.mubr.f32.gmra.mrb[0].mxu0 %v7321
        %v7477 = vpop.f32.mrb[0].mxu0
        %v7478 = vadd.f32 0.0, %v7477
        %v7479 = vpop.f32.mrb[0].mxu0
        %7480 = vmatprep.mubr.f32.mxu0 0.0
        %7481 = vmatmul.mubr.f32.gmra.mrb[0].mxu0 %v7322
        %v7482 = vpop.f32.mrb[0].mxu0
        %v7483 = vadd.f32 0.0, %v7482
        %v7484 = vpop.f32.mrb[0].mxu0
        %7485 = vmatprep.mubr.f32.mxu0 0.0
        %7486 = vmatmul.mubr.f32.gmra.mrb[0].mxu0 %v7323
        %v7487 = vpop.f32.mrb[0].mxu0
        %v7488 = vadd.f32 0.0, %v7487
        %v7489 = vpop.f32.mrb[0].mxu0
        %7490 = vmatprep.mubr.f32.mxu0 0.0
        %7491 = vmatmul.mubr.f32.gmra.mrb[0].mxu0 %v7324
        %v7492 = vpop.f32.mrb[0].mxu0
        %v7493 = vadd.f32 0.0, %v7492
        %v7494 = vpop.f32.mrb[0].mxu0
        %7495 = vmatprep.mubr.f32.mxu0 0.0
        %7496 = vmatmul.mubr.f32.gmra.mrb[0].mxu0 %v7325
        %v7497 = vpop.f32.mrb[0].mxu0
        %v7498 = vadd.f32 0.0, %v7497
        %v7499 = vpop.f32.mrb[0].mxu0
        %7500 = vmatprep.mubr.f32.mxu0 0.0
        %7501 = vmatmul.mubr.f32.gmra.mrb[0].mxu0 %v7326
        %v7502 = vpop.f32.mrb[0].mxu0
        %v7503 = vadd.f32 0.0, %v7502
        %v7504 = vpop.f32.mrb[0].mxu0
        %7505 = vmatprep.mubr.f32.mxu0 0.0
        %7506 = vmatmul.mubr.f32.gmra.mrb[0].mxu0 %v7327
        %v7507 = vpop.f32.mrb[0].mxu0
        %v7508 = vadd.f32 0.0, %v7507
        %v7509 = vpop.f32.mrb[0].mxu0
        %7510 = vmatprep.mubr.f32.mxu0 0.0
        %7511 = vmatmul.mubr.f32.gmra.mrb[0].mxu0 %v7328
        %v7512 = vpop.f32.mrb[0].mxu0
        %v7513 = vadd.f32 0.0, %v7512
        %v7514 = vpop.f32.mrb[0].mxu0
        %7515 = vmatprep.mubr.f32.mxu0 0.0
        %7516 = vmatmul.mubr.f32.gmra.mrb[0].mxu0 %v7329
        %v7517 = vpop.f32.mrb[0].mxu0
        %v7518 = vadd.f32 0.0, %v7517
        %v7519 = vpop.f32.mrb[0].mxu0
        %7520 = vmatprep.mubr.f32.mxu0 0.0
        %7521 = vmatmul.mubr.f32.gmra.mrb[0].mxu0 %v7330
        %v7522 = vpop.f32.mrb[0].mxu0
        %v7523 = vadd.f32 0.0, %v7522
        %v7524 = vpop.f32.mrb[0].mxu0
        %7525 = vmatprep.mubr.f32.mxu0 0.0
        %7526 = vmatmul.mubr.f32.gmra.mrb[0].mxu0 %v7331
        %v7527 = vpop.f32.mrb[0].mxu0
        %v7528 = vadd.f32 0.0, %v7527
        %v7529 = vpop.f32.mrb[0].mxu0
        %7530 = vmatprep.mubr.f32.mxu0 0.0
        %7531 = vmatmul.mubr.f32.gmra.mrb[0].mxu0 %v7332
        %v7532 = vpop.f32.mrb[0].mxu0
        %v7533 = vadd.f32 0.0, %v7532
        %v7534 = vpop.f32.mrb[0].mxu0
        %7535 = vmatprep.mubr.f32.mxu0 0.0
        %7536 = vmatmul.mubr.f32.gmra.mrb[0].mxu0 %v7333
        %v7537 = vpop.f32.mrb[0].mxu0
        %v7538 = vadd.f32 0.0, %v7537
        %v7539 = vpop.f32.mrb[0].mxu0
        %7540 = vdwg.mxu0
        %v7541 = vadd.f32 %v7284, %v7418
        %v7542 = vadd.f32 %v7285, %v7423
        %v7543 = vadd.f32 %v7286, %v7428
        %v7544 = vadd.f32 %v7287, %v7433
        %v7545 = vadd.f32 %v7288, %v7438
        %v7546 = vadd.f32 %v7289, %v7443
        %v7547 = vadd.f32 %v7290, %v7448
        %v7548 = vadd.f32 %v7291, %v7453
        %v7549 = vadd.f32 %v7292, %v7458
        %v7550 = vadd.f32 %v7293, %v7463
        %v7551 = vadd.f32 %v7294, %v7468
        %v7552 = vadd.f32 %v7295, %v7473
        %v7553 = vadd.f32 %v7296, %v7478
        %v7554 = vadd.f32 %v7297, %v7483
        %v7555 = vadd.f32 %v7298, %v7488
        %v7556 = vadd.f32 %v7299, %v7493
        %v7557 = vadd.f32 %v7300, %v7498
        %v7558 = vadd.f32 %v7301, %v7503
        %v7559 = vadd.f32 %v7302, %v7508
        %v7560 = vadd.f32 %v7303, %v7513
        %v7561 = vadd.f32 %v7304, %v7518
        %v7562 = vadd.f32 %v7305, %v7523
        %v7563 = vadd.f32 %v7306, %v7528
        %v7564 = vadd.f32 %v7307, %v7533
        %v7565 = vadd.f32 %v7308, %v7538
        %v7566 = vld [vmem:[#allocation2 + $0x15] sm:$0xff]
        %v7567 = vld [vmem:[#allocation2 + $0x1d] sm:$0xff]
        %v7568 = vld [vmem:[#allocation2 + $0x25] sm:$0xff]
        %v7569 = vld [vmem:[#allocation2 + $0x2d] sm:$0xff]
        %v7570 = vld [vmem:[#allocation2 + $0x35] sm:$0xff]
        %v7571 = vld [vmem:[#allocation2 + $0x3d] sm:$0xff]
        %v7572 = vld [vmem:[#allocation2 + $0x45] sm:$0xff]
        %v7573 = vld [vmem:[#allocation2 + $0x4d] sm:$0xff]
        %v7574 = vld [vmem:[#allocation2 + $0x55] sm:$0xff]
        %v7575 = vld [vmem:[#allocation2 + $0x5d] sm:$0xff]
        %v7576 = vld [vmem:[#allocation2 + $0x65] sm:$0xff]
        %v7577 = vld [vmem:[#allocation2 + $0x6d] sm:$0xff]
        %v7578 = vld [vmem:[#allocation2 + $0x75] sm:$0xff]
        %v7579 = vld [vmem:[#allocation2 + $0x7d] sm:$0xff]
        %v7580 = vld [vmem:[#allocation2 + $0x85] sm:$0xff]
        %v7581 = vld [vmem:[#allocation2 + $0x8d] sm:$0xff]
        %v7582 = vld [vmem:[#allocation2 + $0x95] sm:$0xff]
        %v7583 = vld [vmem:[#allocation2 + $0x9d] sm:$0xff]
        %v7584 = vld [vmem:[#allocation2 + $0xa5] sm:$0xff]
        %v7585 = vld [vmem:[#allocation2 + $0xad] sm:$0xff]
        %v7586 = vld [vmem:[#allocation2 + $0xb5] sm:$0xff]
        %v7587 = vld [vmem:[#allocation2 + $0xbd] sm:$0xff]
        %v7588 = vld [vmem:[#allocation2 + $0xc5] sm:$0xff]
        %v7589 = vld [vmem:[#allocation2 + $0xcd] sm:$0xff]
        %v7590 = vld [vmem:[#allocation2 + $0xd5] sm:$0xff]
        %s7591 = scalar_lea.vmem %s389, 3200 [#allocation5]
        %v7592 = vld [vmem:[%s7591] sm:$0xff]
        %v7593 = vld [vmem:[%s7591 + $0x8] sm:$0xff]
        %v7594 = vld [vmem:[%s7591 + $0x10] sm:$0xff]
        %v7595 = vld [vmem:[%s7591 + $0x18] sm:$0xff]
        %v7596 = vld [vmem:[%s7591 + $0x20] sm:$0xff]
        %v7597 = vld [vmem:[%s7591 + $0x28] sm:$0xff]
        %v7598 = vld [vmem:[%s7591 + $0x30] sm:$0xff]
        %v7599 = vld [vmem:[%s7591 + $0x38] sm:$0xff]
        %v7600 = vld [vmem:[%s7591 + $0x40] sm:$0xff]
        %v7601 = vld [vmem:[%s7591 + $0x48] sm:$0xff]
        %v7602 = vld [vmem:[%s7591 + $0x50] sm:$0xff]
        %v7603 = vld [vmem:[%s7591 + $0x58] sm:$0xff]
        %v7604 = vld [vmem:[%s7591 + $0x60] sm:$0xff]
        %v7605 = vld [vmem:[%s7591 + $0x68] sm:$0xff]
        %v7606 = vld [vmem:[%s7591 + $0x70] sm:$0xff]
        %v7607 = vld [vmem:[%s7591 + $0x78] sm:$0xff]
        %7608 = vmatprep.subr.mxu0 0.0
        %7609 = vmatpush1.msra.mxu0 %v7592
        %7610 = vmatprep.subr.mxu0 0.0
        %7611 = vmatpush1.msra.mxu0 %v7593
        %7612 = vmatprep.subr.mxu0 0.0
        %7613 = vmatpush1.msra.mxu0 %v7594
        %7614 = vmatprep.subr.mxu0 0.0
        %7615 = vmatpush1.msra.mxu0 %v7595
        %7616 = vmatprep.subr.mxu0 0.0
        %7617 = vmatpush1.msra.mxu0 %v7596
        %7618 = vmatprep.subr.mxu0 0.0
        %7619 = vmatpush1.msra.mxu0 %v7597
        %7620 = vmatprep.subr.mxu0 0.0
        %7621 = vmatpush1.msra.mxu0 %v7598
        %7622 = vmatprep.subr.mxu0 0.0
        %7623 = vmatpush1.msra.mxu0 %v7599
        %7624 = vmatprep.subr.mxu0 0.0
        %7625 = vmatpush1.msra.mxu0 %v7600
        %7626 = vmatprep.subr.mxu0 0.0
        %7627 = vmatpush1.msra.mxu0 %v7601
        %7628 = vmatprep.subr.mxu0 0.0
        %7629 = vmatpush1.msra.mxu0 %v7602
        %7630 = vmatprep.subr.mxu0 0.0
        %7631 = vmatpush1.msra.mxu0 %v7603
        %7632 = vmatprep.subr.mxu0 0.0
        %7633 = vmatpush1.msra.mxu0 %v7604
        %7634 = vmatprep.subr.mxu0 0.0
        %7635 = vmatpush1.msra.mxu0 %v7605
        %7636 = vmatprep.subr.mxu0 0.0
        %7637 = vmatpush1.msra.mxu0 %v7606
        %7638 = vmatprep.subr.mxu0 0.0
        %7639 = vmatpush1.msra.mxu0 %v7607
        %7640 = vmatprep.subr.mxu0 0.0
        %7641 = vmatpush1.msra.mxu0 0.0
        %7642 = vmatprep.subr.mxu0 0.0
        %7643 = vmatpush1.msra.mxu0 0.0
        %7644 = vmatprep.subr.mxu0 0.0
        %7645 = vmatpush1.msra.mxu0 0.0
        %7646 = vmatprep.subr.mxu0 0.0
        %7647 = vmatpush1.msra.mxu0 0.0
        %7648 = vmatprep.subr.mxu0 0.0
        %7649 = vmatpush1.msra.mxu0 0.0
        %7650 = vmatprep.subr.mxu0 0.0
        %7651 = vmatpush1.msra.mxu0 0.0
        %7652 = vmatprep.subr.mxu0 0.0
        %7653 = vmatpush1.msra.mxu0 0.0
        %7654 = vmatprep.subr.mxu0 0.0
        %7655 = vmatpush1.msra.mxu0 0.0
        %7656 = vmatprep.subr.mxu0 0.0
        %7657 = vmatpush1.msra.mxu0 0.0
        %7658 = vmatprep.subr.mxu0 0.0
        %7659 = vmatpush1.msra.mxu0 0.0
        %7660 = vmatprep.subr.mxu0 0.0
        %7661 = vmatpush1.msra.mxu0 0.0
        %7662 = vmatprep.subr.mxu0 0.0
        %7663 = vmatpush1.msra.mxu0 0.0
        %7664 = vmatprep.subr.mxu0 0.0
        %7665 = vmatpush1.msra.mxu0 0.0
        %7666 = vmatprep.subr.mxu0 0.0
        %7667 = vmatpush1.msra.mxu0 0.0
        %7668 = vmatprep.subr.mxu0 0.0
        %7669 = vmatpush1.msra.mxu0 0.0
        %7670 = vmatprep.subr.mxu0 0.0
        %7671 = vmatpush1.msra.mxu0 0.0
        %7672 = vmatprep.mubr.f32.mxu0 0.0
        %7673 = vmatmul.mubr.f32.gmra.mrb[0].mxu0 %v7566
        %v7674 = vpop.f32.mrb[0].mxu0
        %v7675 = vadd.f32 0.0, %v7674
        %v7676 = vpop.f32.mrb[0].mxu0
        %7677 = vmatprep.mubr.f32.mxu0 0.0
        %7678 = vmatmul.mubr.f32.gmra.mrb[0].mxu0 %v7567
        %v7679 = vpop.f32.mrb[0].mxu0
        %v7680 = vadd.f32 0.0, %v7679
        %v7681 = vpop.f32.mrb[0].mxu0
        %7682 = vmatprep.mubr.f32.mxu0 0.0
        %7683 = vmatmul.mubr.f32.gmra.mrb[0].mxu0 %v7568
        %v7684 = vpop.f32.mrb[0].mxu0
        %v7685 = vadd.f32 0.0, %v7684
        %v7686 = vpop.f32.mrb[0].mxu0
        %7687 = vmatprep.mubr.f32.mxu0 0.0
        %7688 = vmatmul.mubr.f32.gmra.mrb[0].mxu0 %v7569
        %v7689 = vpop.f32.mrb[0].mxu0
        %v7690 = vadd.f32 0.0, %v7689
        %v7691 = vpop.f32.mrb[0].mxu0
        %7692 = vmatprep.mubr.f32.mxu0 0.0
        %7693 = vmatmul.mubr.f32.gmra.mrb[0].mxu0 %v7570
        %v7694 = vpop.f32.mrb[0].mxu0
        %v7695 = vadd.f32 0.0, %v7694
        %v7696 = vpop.f32.mrb[0].mxu0
        %7697 = vmatprep.mubr.f32.mxu0 0.0
        %7698 = vmatmul.mubr.f32.gmra.mrb[0].mxu0 %v7571
        %v7699 = vpop.f32.mrb[0].mxu0
        %v7700 = vadd.f32 0.0, %v7699
        %v7701 = vpop.f32.mrb[0].mxu0
        %7702 = vmatprep.mubr.f32.mxu0 0.0
        %7703 = vmatmul.mubr.f32.gmra.mrb[0].mxu0 %v7572
        %v7704 = vpop.f32.mrb[0].mxu0
        %v7705 = vadd.f32 0.0, %v7704
        %v7706 = vpop.f32.mrb[0].mxu0
        %7707 = vmatprep.mubr.f32.mxu0 0.0
        %7708 = vmatmul.mubr.f32.gmra.mrb[0].mxu0 %v7573
        %v7709 = vpop.f32.mrb[0].mxu0
        %v7710 = vadd.f32 0.0, %v7709
        %v7711 = vpop.f32.mrb[0].mxu0
        %7712 = vmatprep.mubr.f32.mxu0 0.0
        %7713 = vmatmul.mubr.f32.gmra.mrb[0].mxu0 %v7574
        %v7714 = vpop.f32.mrb[0].mxu0
        %v7715 = vadd.f32 0.0, %v7714
        %v7716 = vpop.f32.mrb[0].mxu0
        %7717 = vmatprep.mubr.f32.mxu0 0.0
        %7718 = vmatmul.mubr.f32.gmra.mrb[0].mxu0 %v7575
        %v7719 = vpop.f32.mrb[0].mxu0
        %v7720 = vadd.f32 0.0, %v7719
        %v7721 = vpop.f32.mrb[0].mxu0
        %7722 = vmatprep.mubr.f32.mxu0 0.0
        %7723 = vmatmul.mubr.f32.gmra.mrb[0].mxu0 %v7576
        %v7724 = vpop.f32.mrb[0].mxu0
        %v7725 = vadd.f32 0.0, %v7724
        %v7726 = vpop.f32.mrb[0].mxu0
        %7727 = vmatprep.mubr.f32.mxu0 0.0
        %7728 = vmatmul.mubr.f32.gmra.mrb[0].mxu0 %v7577
        %v7729 = vpop.f32.mrb[0].mxu0
        %v7730 = vadd.f32 0.0, %v7729
        %v7731 = vpop.f32.mrb[0].mxu0
        %7732 = vmatprep.mubr.f32.mxu0 0.0
        %7733 = vmatmul.mubr.f32.gmra.mrb[0].mxu0 %v7578
        %v7734 = vpop.f32.mrb[0].mxu0
        %v7735 = vadd.f32 0.0, %v7734
        %v7736 = vpop.f32.mrb[0].mxu0
        %7737 = vmatprep.mubr.f32.mxu0 0.0
        %7738 = vmatmul.mubr.f32.gmra.mrb[0].mxu0 %v7579
        %v7739 = vpop.f32.mrb[0].mxu0
        %v7740 = vadd.f32 0.0, %v7739
        %v7741 = vpop.f32.mrb[0].mxu0
        %7742 = vmatprep.mubr.f32.mxu0 0.0
        %7743 = vmatmul.mubr.f32.gmra.mrb[0].mxu0 %v7580
        %v7744 = vpop.f32.mrb[0].mxu0
        %v7745 = vadd.f32 0.0, %v7744
        %v7746 = vpop.f32.mrb[0].mxu0
        %7747 = vmatprep.mubr.f32.mxu0 0.0
        %7748 = vmatmul.mubr.f32.gmra.mrb[0].mxu0 %v7581
        %v7749 = vpop.f32.mrb[0].mxu0
        %v7750 = vadd.f32 0.0, %v7749
        %v7751 = vpop.f32.mrb[0].mxu0
        %7752 = vmatprep.mubr.f32.mxu0 0.0
        %7753 = vmatmul.mubr.f32.gmra.mrb[0].mxu0 %v7582
        %v7754 = vpop.f32.mrb[0].mxu0
        %v7755 = vadd.f32 0.0, %v7754
        %v7756 = vpop.f32.mrb[0].mxu0
        %7757 = vmatprep.mubr.f32.mxu0 0.0
        %7758 = vmatmul.mubr.f32.gmra.mrb[0].mxu0 %v7583
        %v7759 = vpop.f32.mrb[0].mxu0
        %v7760 = vadd.f32 0.0, %v7759
        %v7761 = vpop.f32.mrb[0].mxu0
        %7762 = vmatprep.mubr.f32.mxu0 0.0
        %7763 = vmatmul.mubr.f32.gmra.mrb[0].mxu0 %v7584
        %v7764 = vpop.f32.mrb[0].mxu0
        %v7765 = vadd.f32 0.0, %v7764
        %v7766 = vpop.f32.mrb[0].mxu0
        %7767 = vmatprep.mubr.f32.mxu0 0.0
        %7768 = vmatmul.mubr.f32.gmra.mrb[0].mxu0 %v7585
        %v7769 = vpop.f32.mrb[0].mxu0
        %v7770 = vadd.f32 0.0, %v7769
        %v7771 = vpop.f32.mrb[0].mxu0
        %7772 = vmatprep.mubr.f32.mxu0 0.0
        %7773 = vmatmul.mubr.f32.gmra.mrb[0].mxu0 %v7586
        %v7774 = vpop.f32.mrb[0].mxu0
        %v7775 = vadd.f32 0.0, %v7774
        %v7776 = vpop.f32.mrb[0].mxu0
        %7777 = vmatprep.mubr.f32.mxu0 0.0
        %7778 = vmatmul.mubr.f32.gmra.mrb[0].mxu0 %v7587
        %v7779 = vpop.f32.mrb[0].mxu0
        %v7780 = vadd.f32 0.0, %v7779
        %v7781 = vpop.f32.mrb[0].mxu0
        %7782 = vmatprep.mubr.f32.mxu0 0.0
        %7783 = vmatmul.mubr.f32.gmra.mrb[0].mxu0 %v7588
        %v7784 = vpop.f32.mrb[0].mxu0
        %v7785 = vadd.f32 0.0, %v7784
        %v7786 = vpop.f32.mrb[0].mxu0
        %7787 = vmatprep.mubr.f32.mxu0 0.0
        %7788 = vmatmul.mubr.f32.gmra.mrb[0].mxu0 %v7589
        %v7789 = vpop.f32.mrb[0].mxu0
        %v7790 = vadd.f32 0.0, %v7789
        %v7791 = vpop.f32.mrb[0].mxu0
        %7792 = vmatprep.mubr.f32.mxu0 0.0
        %7793 = vmatmul.mubr.f32.gmra.mrb[0].mxu0 %v7590
        %v7794 = vpop.f32.mrb[0].mxu0
        %v7795 = vadd.f32 0.0, %v7794
        %v7796 = vpop.f32.mrb[0].mxu0
        %7797 = vdwg.mxu0
        %v7798 = vadd.f32 %v7541, %v7675
        %v7799 = vadd.f32 %v7542, %v7680
        %v7800 = vadd.f32 %v7543, %v7685
        %v7801 = vadd.f32 %v7544, %v7690
        %v7802 = vadd.f32 %v7545, %v7695
        %v7803 = vadd.f32 %v7546, %v7700
        %v7804 = vadd.f32 %v7547, %v7705
        %v7805 = vadd.f32 %v7548, %v7710
        %v7806 = vadd.f32 %v7549, %v7715
        %v7807 = vadd.f32 %v7550, %v7720
        %v7808 = vadd.f32 %v7551, %v7725
        %v7809 = vadd.f32 %v7552, %v7730
        %v7810 = vadd.f32 %v7553, %v7735
        %v7811 = vadd.f32 %v7554, %v7740
        %v7812 = vadd.f32 %v7555, %v7745
        %v7813 = vadd.f32 %v7556, %v7750
        %v7814 = vadd.f32 %v7557, %v7755
        %v7815 = vadd.f32 %v7558, %v7760
        %v7816 = vadd.f32 %v7559, %v7765
        %v7817 = vadd.f32 %v7560, %v7770
        %v7818 = vadd.f32 %v7561, %v7775
        %v7819 = vadd.f32 %v7562, %v7780
        %v7820 = vadd.f32 %v7563, %v7785
        %v7821 = vadd.f32 %v7564, %v7790
        %v7822 = vadd.f32 %v7565, %v7795
        %v7823 = vld [vmem:[#allocation2 + $0x16] sm:$0xff]
        %v7824 = vld [vmem:[#allocation2 + $0x1e] sm:$0xff]
        %v7825 = vld [vmem:[#allocation2 + $0x26] sm:$0xff]
        %v7826 = vld [vmem:[#allocation2 + $0x2e] sm:$0xff]
        %v7827 = vld [vmem:[#allocation2 + $0x36] sm:$0xff]
        %v7828 = vld [vmem:[#allocation2 + $0x3e] sm:$0xff]
        %v7829 = vld [vmem:[#allocation2 + $0x46] sm:$0xff]
        %v7830 = vld [vmem:[#allocation2 + $0x4e] sm:$0xff]
        %v7831 = vld [vmem:[#allocation2 + $0x56] sm:$0xff]
        %v7832 = vld [vmem:[#allocation2 + $0x5e] sm:$0xff]
        %v7833 = vld [vmem:[#allocation2 + $0x66] sm:$0xff]
        %v7834 = vld [vmem:[#allocation2 + $0x6e] sm:$0xff]
        %v7835 = vld [vmem:[#allocation2 + $0x76] sm:$0xff]
        %v7836 = vld [vmem:[#allocation2 + $0x7e] sm:$0xff]
        %v7837 = vld [vmem:[#allocation2 + $0x86] sm:$0xff]
        %v7838 = vld [vmem:[#allocation2 + $0x8e] sm:$0xff]
        %v7839 = vld [vmem:[#allocation2 + $0x96] sm:$0xff]
        %v7840 = vld [vmem:[#allocation2 + $0x9e] sm:$0xff]
        %v7841 = vld [vmem:[#allocation2 + $0xa6] sm:$0xff]
        %v7842 = vld [vmem:[#allocation2 + $0xae] sm:$0xff]
        %v7843 = vld [vmem:[#allocation2 + $0xb6] sm:$0xff]
        %v7844 = vld [vmem:[#allocation2 + $0xbe] sm:$0xff]
        %v7845 = vld [vmem:[#allocation2 + $0xc6] sm:$0xff]
        %v7846 = vld [vmem:[#allocation2 + $0xce] sm:$0xff]
        %v7847 = vld [vmem:[#allocation2 + $0xd6] sm:$0xff]
        %s7848 = scalar_lea.vmem %s389, 3328 [#allocation5]
        %v7849 = vld [vmem:[%s7848] sm:$0xff]
        %v7850 = vld [vmem:[%s7848 + $0x8] sm:$0xff]
        %v7851 = vld [vmem:[%s7848 + $0x10] sm:$0xff]
        %v7852 = vld [vmem:[%s7848 + $0x18] sm:$0xff]
        %v7853 = vld [vmem:[%s7848 + $0x20] sm:$0xff]
        %v7854 = vld [vmem:[%s7848 + $0x28] sm:$0xff]
        %v7855 = vld [vmem:[%s7848 + $0x30] sm:$0xff]
        %v7856 = vld [vmem:[%s7848 + $0x38] sm:$0xff]
        %v7857 = vld [vmem:[%s7848 + $0x40] sm:$0xff]
        %v7858 = vld [vmem:[%s7848 + $0x48] sm:$0xff]
        %v7859 = vld [vmem:[%s7848 + $0x50] sm:$0xff]
        %v7860 = vld [vmem:[%s7848 + $0x58] sm:$0xff]
        %v7861 = vld [vmem:[%s7848 + $0x60] sm:$0xff]
        %v7862 = vld [vmem:[%s7848 + $0x68] sm:$0xff]
        %v7863 = vld [vmem:[%s7848 + $0x70] sm:$0xff]
        %v7864 = vld [vmem:[%s7848 + $0x78] sm:$0xff]
        %7865 = vmatprep.subr.mxu0 0.0
        %7866 = vmatpush1.msra.mxu0 %v7849
        %7867 = vmatprep.subr.mxu0 0.0
        %7868 = vmatpush1.msra.mxu0 %v7850
        %7869 = vmatprep.subr.mxu0 0.0
        %7870 = vmatpush1.msra.mxu0 %v7851
        %7871 = vmatprep.subr.mxu0 0.0
        %7872 = vmatpush1.msra.mxu0 %v7852
        %7873 = vmatprep.subr.mxu0 0.0
        %7874 = vmatpush1.msra.mxu0 %v7853
        %7875 = vmatprep.subr.mxu0 0.0
        %7876 = vmatpush1.msra.mxu0 %v7854
        %7877 = vmatprep.subr.mxu0 0.0
        %7878 = vmatpush1.msra.mxu0 %v7855
        %7879 = vmatprep.subr.mxu0 0.0
        %7880 = vmatpush1.msra.mxu0 %v7856
        %7881 = vmatprep.subr.mxu0 0.0
        %7882 = vmatpush1.msra.mxu0 %v7857
        %7883 = vmatprep.subr.mxu0 0.0
        %7884 = vmatpush1.msra.mxu0 %v7858
        %7885 = vmatprep.subr.mxu0 0.0
        %7886 = vmatpush1.msra.mxu0 %v7859
        %7887 = vmatprep.subr.mxu0 0.0
        %7888 = vmatpush1.msra.mxu0 %v7860
        %7889 = vmatprep.subr.mxu0 0.0
        %7890 = vmatpush1.msra.mxu0 %v7861
        %7891 = vmatprep.subr.mxu0 0.0
        %7892 = vmatpush1.msra.mxu0 %v7862
        %7893 = vmatprep.subr.mxu0 0.0
        %7894 = vmatpush1.msra.mxu0 %v7863
        %7895 = vmatprep.subr.mxu0 0.0
        %7896 = vmatpush1.msra.mxu0 %v7864
        %7897 = vmatprep.subr.mxu0 0.0
        %7898 = vmatpush1.msra.mxu0 0.0
        %7899 = vmatprep.subr.mxu0 0.0
        %7900 = vmatpush1.msra.mxu0 0.0
        %7901 = vmatprep.subr.mxu0 0.0
        %7902 = vmatpush1.msra.mxu0 0.0
        %7903 = vmatprep.subr.mxu0 0.0
        %7904 = vmatpush1.msra.mxu0 0.0
        %7905 = vmatprep.subr.mxu0 0.0
        %7906 = vmatpush1.msra.mxu0 0.0
        %7907 = vmatprep.subr.mxu0 0.0
        %7908 = vmatpush1.msra.mxu0 0.0
        %7909 = vmatprep.subr.mxu0 0.0
        %7910 = vmatpush1.msra.mxu0 0.0
        %7911 = vmatprep.subr.mxu0 0.0
        %7912 = vmatpush1.msra.mxu0 0.0
        %7913 = vmatprep.subr.mxu0 0.0
        %7914 = vmatpush1.msra.mxu0 0.0
        %7915 = vmatprep.subr.mxu0 0.0
        %7916 = vmatpush1.msra.mxu0 0.0
        %7917 = vmatprep.subr.mxu0 0.0
        %7918 = vmatpush1.msra.mxu0 0.0
        %7919 = vmatprep.subr.mxu0 0.0
        %7920 = vmatpush1.msra.mxu0 0.0
        %7921 = vmatprep.subr.mxu0 0.0
        %7922 = vmatpush1.msra.mxu0 0.0
        %7923 = vmatprep.subr.mxu0 0.0
        %7924 = vmatpush1.msra.mxu0 0.0
        %7925 = vmatprep.subr.mxu0 0.0
        %7926 = vmatpush1.msra.mxu0 0.0
        %7927 = vmatprep.subr.mxu0 0.0
        %7928 = vmatpush1.msra.mxu0 0.0
        %7929 = vmatprep.mubr.f32.mxu0 0.0
        %7930 = vmatmul.mubr.f32.gmra.mrb[0].mxu0 %v7823
        %v7931 = vpop.f32.mrb[0].mxu0
        %v7932 = vadd.f32 0.0, %v7931
        %v7933 = vpop.f32.mrb[0].mxu0
        %7934 = vmatprep.mubr.f32.mxu0 0.0
        %7935 = vmatmul.mubr.f32.gmra.mrb[0].mxu0 %v7824
        %v7936 = vpop.f32.mrb[0].mxu0
        %v7937 = vadd.f32 0.0, %v7936
        %v7938 = vpop.f32.mrb[0].mxu0
        %7939 = vmatprep.mubr.f32.mxu0 0.0
        %7940 = vmatmul.mubr.f32.gmra.mrb[0].mxu0 %v7825
        %v7941 = vpop.f32.mrb[0].mxu0
        %v7942 = vadd.f32 0.0, %v7941
        %v7943 = vpop.f32.mrb[0].mxu0
        %7944 = vmatprep.mubr.f32.mxu0 0.0
        %7945 = vmatmul.mubr.f32.gmra.mrb[0].mxu0 %v7826
        %v7946 = vpop.f32.mrb[0].mxu0
        %v7947 = vadd.f32 0.0, %v7946
        %v7948 = vpop.f32.mrb[0].mxu0
        %7949 = vmatprep.mubr.f32.mxu0 0.0
        %7950 = vmatmul.mubr.f32.gmra.mrb[0].mxu0 %v7827
        %v7951 = vpop.f32.mrb[0].mxu0
        %v7952 = vadd.f32 0.0, %v7951
        %v7953 = vpop.f32.mrb[0].mxu0
        %7954 = vmatprep.mubr.f32.mxu0 0.0
        %7955 = vmatmul.mubr.f32.gmra.mrb[0].mxu0 %v7828
        %v7956 = vpop.f32.mrb[0].mxu0
        %v7957 = vadd.f32 0.0, %v7956
        %v7958 = vpop.f32.mrb[0].mxu0
        %7959 = vmatprep.mubr.f32.mxu0 0.0
        %7960 = vmatmul.mubr.f32.gmra.mrb[0].mxu0 %v7829
        %v7961 = vpop.f32.mrb[0].mxu0
        %v7962 = vadd.f32 0.0, %v7961
        %v7963 = vpop.f32.mrb[0].mxu0
        %7964 = vmatprep.mubr.f32.mxu0 0.0
        %7965 = vmatmul.mubr.f32.gmra.mrb[0].mxu0 %v7830
        %v7966 = vpop.f32.mrb[0].mxu0
        %v7967 = vadd.f32 0.0, %v7966
        %v7968 = vpop.f32.mrb[0].mxu0
        %7969 = vmatprep.mubr.f32.mxu0 0.0
        %7970 = vmatmul.mubr.f32.gmra.mrb[0].mxu0 %v7831
        %v7971 = vpop.f32.mrb[0].mxu0
        %v7972 = vadd.f32 0.0, %v7971
        %v7973 = vpop.f32.mrb[0].mxu0
        %7974 = vmatprep.mubr.f32.mxu0 0.0
        %7975 = vmatmul.mubr.f32.gmra.mrb[0].mxu0 %v7832
        %v7976 = vpop.f32.mrb[0].mxu0
        %v7977 = vadd.f32 0.0, %v7976
        %v7978 = vpop.f32.mrb[0].mxu0
        %7979 = vmatprep.mubr.f32.mxu0 0.0
        %7980 = vmatmul.mubr.f32.gmra.mrb[0].mxu0 %v7833
        %v7981 = vpop.f32.mrb[0].mxu0
        %v7982 = vadd.f32 0.0, %v7981
        %v7983 = vpop.f32.mrb[0].mxu0
        %7984 = vmatprep.mubr.f32.mxu0 0.0
        %7985 = vmatmul.mubr.f32.gmra.mrb[0].mxu0 %v7834
        %v7986 = vpop.f32.mrb[0].mxu0
        %v7987 = vadd.f32 0.0, %v7986
        %v7988 = vpop.f32.mrb[0].mxu0
        %7989 = vmatprep.mubr.f32.mxu0 0.0
        %7990 = vmatmul.mubr.f32.gmra.mrb[0].mxu0 %v7835
        %v7991 = vpop.f32.mrb[0].mxu0
        %v7992 = vadd.f32 0.0, %v7991
        %v7993 = vpop.f32.mrb[0].mxu0
        %7994 = vmatprep.mubr.f32.mxu0 0.0
        %7995 = vmatmul.mubr.f32.gmra.mrb[0].mxu0 %v7836
        %v7996 = vpop.f32.mrb[0].mxu0
        %v7997 = vadd.f32 0.0, %v7996
        %v7998 = vpop.f32.mrb[0].mxu0
        %7999 = vmatprep.mubr.f32.mxu0 0.0
        %8000 = vmatmul.mubr.f32.gmra.mrb[0].mxu0 %v7837
        %v8001 = vpop.f32.mrb[0].mxu0
        %v8002 = vadd.f32 0.0, %v8001
        %v8003 = vpop.f32.mrb[0].mxu0
        %8004 = vmatprep.mubr.f32.mxu0 0.0
        %8005 = vmatmul.mubr.f32.gmra.mrb[0].mxu0 %v7838
        %v8006 = vpop.f32.mrb[0].mxu0
        %v8007 = vadd.f32 0.0, %v8006
        %v8008 = vpop.f32.mrb[0].mxu0
        %8009 = vmatprep.mubr.f32.mxu0 0.0
        %8010 = vmatmul.mubr.f32.gmra.mrb[0].mxu0 %v7839
        %v8011 = vpop.f32.mrb[0].mxu0
        %v8012 = vadd.f32 0.0, %v8011
        %v8013 = vpop.f32.mrb[0].mxu0
        %8014 = vmatprep.mubr.f32.mxu0 0.0
        %8015 = vmatmul.mubr.f32.gmra.mrb[0].mxu0 %v7840
        %v8016 = vpop.f32.mrb[0].mxu0
        %v8017 = vadd.f32 0.0, %v8016
        %v8018 = vpop.f32.mrb[0].mxu0
        %8019 = vmatprep.mubr.f32.mxu0 0.0
        %8020 = vmatmul.mubr.f32.gmra.mrb[0].mxu0 %v7841
        %v8021 = vpop.f32.mrb[0].mxu0
        %v8022 = vadd.f32 0.0, %v8021
        %v8023 = vpop.f32.mrb[0].mxu0
        %8024 = vmatprep.mubr.f32.mxu0 0.0
        %8025 = vmatmul.mubr.f32.gmra.mrb[0].mxu0 %v7842
        %v8026 = vpop.f32.mrb[0].mxu0
        %v8027 = vadd.f32 0.0, %v8026
        %v8028 = vpop.f32.mrb[0].mxu0
        %8029 = vmatprep.mubr.f32.mxu0 0.0
        %8030 = vmatmul.mubr.f32.gmra.mrb[0].mxu0 %v7843
        %v8031 = vpop.f32.mrb[0].mxu0
        %v8032 = vadd.f32 0.0, %v8031
        %v8033 = vpop.f32.mrb[0].mxu0
        %8034 = vmatprep.mubr.f32.mxu0 0.0
        %8035 = vmatmul.mubr.f32.gmra.mrb[0].mxu0 %v7844
        %v8036 = vpop.f32.mrb[0].mxu0
        %v8037 = vadd.f32 0.0, %v8036
        %v8038 = vpop.f32.mrb[0].mxu0
        %8039 = vmatprep.mubr.f32.mxu0 0.0
        %8040 = vmatmul.mubr.f32.gmra.mrb[0].mxu0 %v7845
        %v8041 = vpop.f32.mrb[0].mxu0
        %v8042 = vadd.f32 0.0, %v8041
        %v8043 = vpop.f32.mrb[0].mxu0
        %8044 = vmatprep.mubr.f32.mxu0 0.0
        %8045 = vmatmul.mubr.f32.gmra.mrb[0].mxu0 %v7846
        %v8046 = vpop.f32.mrb[0].mxu0
        %v8047 = vadd.f32 0.0, %v8046
        %v8048 = vpop.f32.mrb[0].mxu0
        %8049 = vmatprep.mubr.f32.mxu0 0.0
        %8050 = vmatmul.mubr.f32.gmra.mrb[0].mxu0 %v7847
        %v8051 = vpop.f32.mrb[0].mxu0
        %v8052 = vadd.f32 0.0, %v8051
        %v8053 = vpop.f32.mrb[0].mxu0
        %8054 = vdwg.mxu0
        %v8055 = vadd.f32 %v7798, %v7932
        %v8056 = vadd.f32 %v7799, %v7937
        %v8057 = vadd.f32 %v7800, %v7942
        %v8058 = vadd.f32 %v7801, %v7947
        %v8059 = vadd.f32 %v7802, %v7952
        %v8060 = vadd.f32 %v7803, %v7957
        %v8061 = vadd.f32 %v7804, %v7962
        %v8062 = vadd.f32 %v7805, %v7967
        %v8063 = vadd.f32 %v7806, %v7972
        %v8064 = vadd.f32 %v7807, %v7977
        %v8065 = vadd.f32 %v7808, %v7982
        %v8066 = vadd.f32 %v7809, %v7987
        %v8067 = vadd.f32 %v7810, %v7992
        %v8068 = vadd.f32 %v7811, %v7997
        %v8069 = vadd.f32 %v7812, %v8002
        %v8070 = vadd.f32 %v7813, %v8007
        %v8071 = vadd.f32 %v7814, %v8012
        %v8072 = vadd.f32 %v7815, %v8017
        %v8073 = vadd.f32 %v7816, %v8022
        %v8074 = vadd.f32 %v7817, %v8027
        %v8075 = vadd.f32 %v7818, %v8032
        %v8076 = vadd.f32 %v7819, %v8037
        %v8077 = vadd.f32 %v7820, %v8042
        %v8078 = vadd.f32 %v7821, %v8047
        %v8079 = vadd.f32 %v7822, %v8052
        %v8080 = vld [vmem:[#allocation2 + $0x19] sm:$0xff]
        %v8081 = vld [vmem:[#allocation2 + $0x21] sm:$0xff]
        %v8082 = vld [vmem:[#allocation2 + $0x29] sm:$0xff]
        %v8083 = vld [vmem:[#allocation2 + $0x31] sm:$0xff]
        %v8084 = vld [vmem:[#allocation2 + $0x39] sm:$0xff]
        %v8085 = vld [vmem:[#allocation2 + $0x41] sm:$0xff]
        %v8086 = vld [vmem:[#allocation2 + $0x49] sm:$0xff]
        %v8087 = vld [vmem:[#allocation2 + $0x51] sm:$0xff]
        %v8088 = vld [vmem:[#allocation2 + $0x59] sm:$0xff]
        %v8089 = vld [vmem:[#allocation2 + $0x61] sm:$0xff]
        %v8090 = vld [vmem:[#allocation2 + $0x69] sm:$0xff]
        %v8091 = vld [vmem:[#allocation2 + $0x71] sm:$0xff]
        %v8092 = vld [vmem:[#allocation2 + $0x79] sm:$0xff]
        %v8093 = vld [vmem:[#allocation2 + $0x81] sm:$0xff]
        %v8094 = vld [vmem:[#allocation2 + $0x89] sm:$0xff]
        %v8095 = vld [vmem:[#allocation2 + $0x91] sm:$0xff]
        %v8096 = vld [vmem:[#allocation2 + $0x99] sm:$0xff]
        %v8097 = vld [vmem:[#allocation2 + $0xa1] sm:$0xff]
        %v8098 = vld [vmem:[#allocation2 + $0xa9] sm:$0xff]
        %v8099 = vld [vmem:[#allocation2 + $0xb1] sm:$0xff]
        %v8100 = vld [vmem:[#allocation2 + $0xb9] sm:$0xff]
        %v8101 = vld [vmem:[#allocation2 + $0xc1] sm:$0xff]
        %v8102 = vld [vmem:[#allocation2 + $0xc9] sm:$0xff]
        %v8103 = vld [vmem:[#allocation2 + $0xd1] sm:$0xff]
        %v8104 = vld [vmem:[#allocation2 + $0xd9] sm:$0xff]
        %s8105 = scalar_lea.vmem %s389, 3456 [#allocation5]
        %v8106 = vld [vmem:[%s8105] sm:$0xff]
        %v8107 = vld [vmem:[%s8105 + $0x8] sm:$0xff]
        %v8108 = vld [vmem:[%s8105 + $0x10] sm:$0xff]
        %v8109 = vld [vmem:[%s8105 + $0x18] sm:$0xff]
        %v8110 = vld [vmem:[%s8105 + $0x20] sm:$0xff]
        %v8111 = vld [vmem:[%s8105 + $0x28] sm:$0xff]
        %v8112 = vld [vmem:[%s8105 + $0x30] sm:$0xff]
        %v8113 = vld [vmem:[%s8105 + $0x38] sm:$0xff]
        %v8114 = vld [vmem:[%s8105 + $0x40] sm:$0xff]
        %v8115 = vld [vmem:[%s8105 + $0x48] sm:$0xff]
        %v8116 = vld [vmem:[%s8105 + $0x50] sm:$0xff]
        %v8117 = vld [vmem:[%s8105 + $0x58] sm:$0xff]
        %v8118 = vld [vmem:[%s8105 + $0x60] sm:$0xff]
        %v8119 = vld [vmem:[%s8105 + $0x68] sm:$0xff]
        %v8120 = vld [vmem:[%s8105 + $0x70] sm:$0xff]
        %v8121 = vld [vmem:[%s8105 + $0x78] sm:$0xff]
        %8122 = vmatprep.subr.mxu0 0.0
        %8123 = vmatpush1.msra.mxu0 %v8106
        %8124 = vmatprep.subr.mxu0 0.0
        %8125 = vmatpush1.msra.mxu0 %v8107
        %8126 = vmatprep.subr.mxu0 0.0
        %8127 = vmatpush1.msra.mxu0 %v8108
        %8128 = vmatprep.subr.mxu0 0.0
        %8129 = vmatpush1.msra.mxu0 %v8109
        %8130 = vmatprep.subr.mxu0 0.0
        %8131 = vmatpush1.msra.mxu0 %v8110
        %8132 = vmatprep.subr.mxu0 0.0
        %8133 = vmatpush1.msra.mxu0 %v8111
        %8134 = vmatprep.subr.mxu0 0.0
        %8135 = vmatpush1.msra.mxu0 %v8112
        %8136 = vmatprep.subr.mxu0 0.0
        %8137 = vmatpush1.msra.mxu0 %v8113
        %8138 = vmatprep.subr.mxu0 0.0
        %8139 = vmatpush1.msra.mxu0 %v8114
        %8140 = vmatprep.subr.mxu0 0.0
        %8141 = vmatpush1.msra.mxu0 %v8115
        %8142 = vmatprep.subr.mxu0 0.0
        %8143 = vmatpush1.msra.mxu0 %v8116
        %8144 = vmatprep.subr.mxu0 0.0
        %8145 = vmatpush1.msra.mxu0 %v8117
        %8146 = vmatprep.subr.mxu0 0.0
        %8147 = vmatpush1.msra.mxu0 %v8118
        %8148 = vmatprep.subr.mxu0 0.0
        %8149 = vmatpush1.msra.mxu0 %v8119
        %8150 = vmatprep.subr.mxu0 0.0
        %8151 = vmatpush1.msra.mxu0 %v8120
        %8152 = vmatprep.subr.mxu0 0.0
        %8153 = vmatpush1.msra.mxu0 %v8121
        %8154 = vmatprep.subr.mxu0 0.0
        %8155 = vmatpush1.msra.mxu0 0.0
        %8156 = vmatprep.subr.mxu0 0.0
        %8157 = vmatpush1.msra.mxu0 0.0
        %8158 = vmatprep.subr.mxu0 0.0
        %8159 = vmatpush1.msra.mxu0 0.0
        %8160 = vmatprep.subr.mxu0 0.0
        %8161 = vmatpush1.msra.mxu0 0.0
        %8162 = vmatprep.subr.mxu0 0.0
        %8163 = vmatpush1.msra.mxu0 0.0
        %8164 = vmatprep.subr.mxu0 0.0
        %8165 = vmatpush1.msra.mxu0 0.0
        %8166 = vmatprep.subr.mxu0 0.0
        %8167 = vmatpush1.msra.mxu0 0.0
        %8168 = vmatprep.subr.mxu0 0.0
        %8169 = vmatpush1.msra.mxu0 0.0
        %8170 = vmatprep.subr.mxu0 0.0
        %8171 = vmatpush1.msra.mxu0 0.0
        %8172 = vmatprep.subr.mxu0 0.0
        %8173 = vmatpush1.msra.mxu0 0.0
        %8174 = vmatprep.subr.mxu0 0.0
        %8175 = vmatpush1.msra.mxu0 0.0
        %8176 = vmatprep.subr.mxu0 0.0
        %8177 = vmatpush1.msra.mxu0 0.0
        %8178 = vmatprep.subr.mxu0 0.0
        %8179 = vmatpush1.msra.mxu0 0.0
        %8180 = vmatprep.subr.mxu0 0.0
        %8181 = vmatpush1.msra.mxu0 0.0
        %8182 = vmatprep.subr.mxu0 0.0
        %8183 = vmatpush1.msra.mxu0 0.0
        %8184 = vmatprep.subr.mxu0 0.0
        %8185 = vmatpush1.msra.mxu0 0.0
        %8186 = vmatprep.mubr.f32.mxu0 0.0
        %8187 = vmatmul.mubr.f32.gmra.mrb[0].mxu0 %v8080
        %v8188 = vpop.f32.mrb[0].mxu0
        %v8189 = vadd.f32 0.0, %v8188
        %v8190 = vpop.f32.mrb[0].mxu0
        %8191 = vmatprep.mubr.f32.mxu0 0.0
        %8192 = vmatmul.mubr.f32.gmra.mrb[0].mxu0 %v8081
        %v8193 = vpop.f32.mrb[0].mxu0
        %v8194 = vadd.f32 0.0, %v8193
        %v8195 = vpop.f32.mrb[0].mxu0
        %8196 = vmatprep.mubr.f32.mxu0 0.0
        %8197 = vmatmul.mubr.f32.gmra.mrb[0].mxu0 %v8082
        %v8198 = vpop.f32.mrb[0].mxu0
        %v8199 = vadd.f32 0.0, %v8198
        %v8200 = vpop.f32.mrb[0].mxu0
        %8201 = vmatprep.mubr.f32.mxu0 0.0
        %8202 = vmatmul.mubr.f32.gmra.mrb[0].mxu0 %v8083
        %v8203 = vpop.f32.mrb[0].mxu0
        %v8204 = vadd.f32 0.0, %v8203
        %v8205 = vpop.f32.mrb[0].mxu0
        %8206 = vmatprep.mubr.f32.mxu0 0.0
        %8207 = vmatmul.mubr.f32.gmra.mrb[0].mxu0 %v8084
        %v8208 = vpop.f32.mrb[0].mxu0
        %v8209 = vadd.f32 0.0, %v8208
        %v8210 = vpop.f32.mrb[0].mxu0
        %8211 = vmatprep.mubr.f32.mxu0 0.0
        %8212 = vmatmul.mubr.f32.gmra.mrb[0].mxu0 %v8085
        %v8213 = vpop.f32.mrb[0].mxu0
        %v8214 = vadd.f32 0.0, %v8213
        %v8215 = vpop.f32.mrb[0].mxu0
        %8216 = vmatprep.mubr.f32.mxu0 0.0
        %8217 = vmatmul.mubr.f32.gmra.mrb[0].mxu0 %v8086
        %v8218 = vpop.f32.mrb[0].mxu0
        %v8219 = vadd.f32 0.0, %v8218
        %v8220 = vpop.f32.mrb[0].mxu0
        %8221 = vmatprep.mubr.f32.mxu0 0.0
        %8222 = vmatmul.mubr.f32.gmra.mrb[0].mxu0 %v8087
        %v8223 = vpop.f32.mrb[0].mxu0
        %v8224 = vadd.f32 0.0, %v8223
        %v8225 = vpop.f32.mrb[0].mxu0
        %8226 = vmatprep.mubr.f32.mxu0 0.0
        %8227 = vmatmul.mubr.f32.gmra.mrb[0].mxu0 %v8088
        %v8228 = vpop.f32.mrb[0].mxu0
        %v8229 = vadd.f32 0.0, %v8228
        %v8230 = vpop.f32.mrb[0].mxu0
        %8231 = vmatprep.mubr.f32.mxu0 0.0
        %8232 = vmatmul.mubr.f32.gmra.mrb[0].mxu0 %v8089
        %v8233 = vpop.f32.mrb[0].mxu0
        %v8234 = vadd.f32 0.0, %v8233
        %v8235 = vpop.f32.mrb[0].mxu0
        %8236 = vmatprep.mubr.f32.mxu0 0.0
        %8237 = vmatmul.mubr.f32.gmra.mrb[0].mxu0 %v8090
        %v8238 = vpop.f32.mrb[0].mxu0
        %v8239 = vadd.f32 0.0, %v8238
        %v8240 = vpop.f32.mrb[0].mxu0
        %8241 = vmatprep.mubr.f32.mxu0 0.0
        %8242 = vmatmul.mubr.f32.gmra.mrb[0].mxu0 %v8091
        %v8243 = vpop.f32.mrb[0].mxu0
        %v8244 = vadd.f32 0.0, %v8243
        %v8245 = vpop.f32.mrb[0].mxu0
        %8246 = vmatprep.mubr.f32.mxu0 0.0
        %8247 = vmatmul.mubr.f32.gmra.mrb[0].mxu0 %v8092
        %v8248 = vpop.f32.mrb[0].mxu0
        %v8249 = vadd.f32 0.0, %v8248
        %v8250 = vpop.f32.mrb[0].mxu0
        %8251 = vmatprep.mubr.f32.mxu0 0.0
        %8252 = vmatmul.mubr.f32.gmra.mrb[0].mxu0 %v8093
        %v8253 = vpop.f32.mrb[0].mxu0
        %v8254 = vadd.f32 0.0, %v8253
        %v8255 = vpop.f32.mrb[0].mxu0
        %8256 = vmatprep.mubr.f32.mxu0 0.0
        %8257 = vmatmul.mubr.f32.gmra.mrb[0].mxu0 %v8094
        %v8258 = vpop.f32.mrb[0].mxu0
        %v8259 = vadd.f32 0.0, %v8258
        %v8260 = vpop.f32.mrb[0].mxu0
        %8261 = vmatprep.mubr.f32.mxu0 0.0
        %8262 = vmatmul.mubr.f32.gmra.mrb[0].mxu0 %v8095
        %v8263 = vpop.f32.mrb[0].mxu0
        %v8264 = vadd.f32 0.0, %v8263
        %v8265 = vpop.f32.mrb[0].mxu0
        %8266 = vmatprep.mubr.f32.mxu0 0.0
        %8267 = vmatmul.mubr.f32.gmra.mrb[0].mxu0 %v8096
        %v8268 = vpop.f32.mrb[0].mxu0
        %v8269 = vadd.f32 0.0, %v8268
        %v8270 = vpop.f32.mrb[0].mxu0
        %8271 = vmatprep.mubr.f32.mxu0 0.0
        %8272 = vmatmul.mubr.f32.gmra.mrb[0].mxu0 %v8097
        %v8273 = vpop.f32.mrb[0].mxu0
        %v8274 = vadd.f32 0.0, %v8273
        %v8275 = vpop.f32.mrb[0].mxu0
        %8276 = vmatprep.mubr.f32.mxu0 0.0
        %8277 = vmatmul.mubr.f32.gmra.mrb[0].mxu0 %v8098
        %v8278 = vpop.f32.mrb[0].mxu0
        %v8279 = vadd.f32 0.0, %v8278
        %v8280 = vpop.f32.mrb[0].mxu0
        %8281 = vmatprep.mubr.f32.mxu0 0.0
        %8282 = vmatmul.mubr.f32.gmra.mrb[0].mxu0 %v8099
        %v8283 = vpop.f32.mrb[0].mxu0
        %v8284 = vadd.f32 0.0, %v8283
        %v8285 = vpop.f32.mrb[0].mxu0
        %8286 = vmatprep.mubr.f32.mxu0 0.0
        %8287 = vmatmul.mubr.f32.gmra.mrb[0].mxu0 %v8100
        %v8288 = vpop.f32.mrb[0].mxu0
        %v8289 = vadd.f32 0.0, %v8288
        %v8290 = vpop.f32.mrb[0].mxu0
        %8291 = vmatprep.mubr.f32.mxu0 0.0
        %8292 = vmatmul.mubr.f32.gmra.mrb[0].mxu0 %v8101
        %v8293 = vpop.f32.mrb[0].mxu0
        %v8294 = vadd.f32 0.0, %v8293
        %v8295 = vpop.f32.mrb[0].mxu0
        %8296 = vmatprep.mubr.f32.mxu0 0.0
        %8297 = vmatmul.mubr.f32.gmra.mrb[0].mxu0 %v8102
        %v8298 = vpop.f32.mrb[0].mxu0
        %v8299 = vadd.f32 0.0, %v8298
        %v8300 = vpop.f32.mrb[0].mxu0
        %8301 = vmatprep.mubr.f32.mxu0 0.0
        %8302 = vmatmul.mubr.f32.gmra.mrb[0].mxu0 %v8103
        %v8303 = vpop.f32.mrb[0].mxu0
        %v8304 = vadd.f32 0.0, %v8303
        %v8305 = vpop.f32.mrb[0].mxu0
        %8306 = vmatprep.mubr.f32.mxu0 0.0
        %8307 = vmatmul.mubr.f32.gmra.mrb[0].mxu0 %v8104
        %v8308 = vpop.f32.mrb[0].mxu0
        %v8309 = vadd.f32 0.0, %v8308
        %v8310 = vpop.f32.mrb[0].mxu0
        %8311 = vdwg.mxu0
        %v8312 = vadd.f32 %v8055, %v8189
        %v8313 = vadd.f32 %v8056, %v8194
        %v8314 = vadd.f32 %v8057, %v8199
        %v8315 = vadd.f32 %v8058, %v8204
        %v8316 = vadd.f32 %v8059, %v8209
        %v8317 = vadd.f32 %v8060, %v8214
        %v8318 = vadd.f32 %v8061, %v8219
        %v8319 = vadd.f32 %v8062, %v8224
        %v8320 = vadd.f32 %v8063, %v8229
        %v8321 = vadd.f32 %v8064, %v8234
        %v8322 = vadd.f32 %v8065, %v8239
        %v8323 = vadd.f32 %v8066, %v8244
        %v8324 = vadd.f32 %v8067, %v8249
        %v8325 = vadd.f32 %v8068, %v8254
        %v8326 = vadd.f32 %v8069, %v8259
        %v8327 = vadd.f32 %v8070, %v8264
        %v8328 = vadd.f32 %v8071, %v8269
        %v8329 = vadd.f32 %v8072, %v8274
        %v8330 = vadd.f32 %v8073, %v8279
        %v8331 = vadd.f32 %v8074, %v8284
        %v8332 = vadd.f32 %v8075, %v8289
        %v8333 = vadd.f32 %v8076, %v8294
        %v8334 = vadd.f32 %v8077, %v8299
        %v8335 = vadd.f32 %v8078, %v8304
        %v8336 = vadd.f32 %v8079, %v8309
        %v8337 = vld [vmem:[#allocation2 + $0x1a] sm:$0xff]
        %v8338 = vld [vmem:[#allocation2 + $0x22] sm:$0xff]
        %v8339 = vld [vmem:[#allocation2 + $0x2a] sm:$0xff]
        %v8340 = vld [vmem:[#allocation2 + $0x32] sm:$0xff]
        %v8341 = vld [vmem:[#allocation2 + $0x3a] sm:$0xff]
        %v8342 = vld [vmem:[#allocation2 + $0x42] sm:$0xff]
        %v8343 = vld [vmem:[#allocation2 + $0x4a] sm:$0xff]
        %v8344 = vld [vmem:[#allocation2 + $0x52] sm:$0xff]
        %v8345 = vld [vmem:[#allocation2 + $0x5a] sm:$0xff]
        %v8346 = vld [vmem:[#allocation2 + $0x62] sm:$0xff]
        %v8347 = vld [vmem:[#allocation2 + $0x6a] sm:$0xff]
        %v8348 = vld [vmem:[#allocation2 + $0x72] sm:$0xff]
        %v8349 = vld [vmem:[#allocation2 + $0x7a] sm:$0xff]
        %v8350 = vld [vmem:[#allocation2 + $0x82] sm:$0xff]
        %v8351 = vld [vmem:[#allocation2 + $0x8a] sm:$0xff]
        %v8352 = vld [vmem:[#allocation2 + $0x92] sm:$0xff]
        %v8353 = vld [vmem:[#allocation2 + $0x9a] sm:$0xff]
        %v8354 = vld [vmem:[#allocation2 + $0xa2] sm:$0xff]
        %v8355 = vld [vmem:[#allocation2 + $0xaa] sm:$0xff]
        %v8356 = vld [vmem:[#allocation2 + $0xb2] sm:$0xff]
        %v8357 = vld [vmem:[#allocation2 + $0xba] sm:$0xff]
        %v8358 = vld [vmem:[#allocation2 + $0xc2] sm:$0xff]
        %v8359 = vld [vmem:[#allocation2 + $0xca] sm:$0xff]
        %v8360 = vld [vmem:[#allocation2 + $0xd2] sm:$0xff]
        %v8361 = vld [vmem:[#allocation2 + $0xda] sm:$0xff]
        %s8362 = scalar_lea.vmem %s389, 3584 [#allocation5]
        %v8363 = vld [vmem:[%s8362] sm:$0xff]
        %v8364 = vld [vmem:[%s8362 + $0x8] sm:$0xff]
        %v8365 = vld [vmem:[%s8362 + $0x10] sm:$0xff]
        %v8366 = vld [vmem:[%s8362 + $0x18] sm:$0xff]
        %v8367 = vld [vmem:[%s8362 + $0x20] sm:$0xff]
        %v8368 = vld [vmem:[%s8362 + $0x28] sm:$0xff]
        %v8369 = vld [vmem:[%s8362 + $0x30] sm:$0xff]
        %v8370 = vld [vmem:[%s8362 + $0x38] sm:$0xff]
        %v8371 = vld [vmem:[%s8362 + $0x40] sm:$0xff]
        %v8372 = vld [vmem:[%s8362 + $0x48] sm:$0xff]
        %v8373 = vld [vmem:[%s8362 + $0x50] sm:$0xff]
        %v8374 = vld [vmem:[%s8362 + $0x58] sm:$0xff]
        %v8375 = vld [vmem:[%s8362 + $0x60] sm:$0xff]
        %v8376 = vld [vmem:[%s8362 + $0x68] sm:$0xff]
        %v8377 = vld [vmem:[%s8362 + $0x70] sm:$0xff]
        %v8378 = vld [vmem:[%s8362 + $0x78] sm:$0xff]
        %8379 = vmatprep.subr.mxu0 0.0
        %8380 = vmatpush1.msra.mxu0 %v8363
        %8381 = vmatprep.subr.mxu0 0.0
        %8382 = vmatpush1.msra.mxu0 %v8364
        %8383 = vmatprep.subr.mxu0 0.0
        %8384 = vmatpush1.msra.mxu0 %v8365
        %8385 = vmatprep.subr.mxu0 0.0
        %8386 = vmatpush1.msra.mxu0 %v8366
        %8387 = vmatprep.subr.mxu0 0.0
        %8388 = vmatpush1.msra.mxu0 %v8367
        %8389 = vmatprep.subr.mxu0 0.0
        %8390 = vmatpush1.msra.mxu0 %v8368
        %8391 = vmatprep.subr.mxu0 0.0
        %8392 = vmatpush1.msra.mxu0 %v8369
        %8393 = vmatprep.subr.mxu0 0.0
        %8394 = vmatpush1.msra.mxu0 %v8370
        %8395 = vmatprep.subr.mxu0 0.0
        %8396 = vmatpush1.msra.mxu0 %v8371
        %8397 = vmatprep.subr.mxu0 0.0
        %8398 = vmatpush1.msra.mxu0 %v8372
        %8399 = vmatprep.subr.mxu0 0.0
        %8400 = vmatpush1.msra.mxu0 %v8373
        %8401 = vmatprep.subr.mxu0 0.0
        %8402 = vmatpush1.msra.mxu0 %v8374
        %8403 = vmatprep.subr.mxu0 0.0
        %8404 = vmatpush1.msra.mxu0 %v8375
        %8405 = vmatprep.subr.mxu0 0.0
        %8406 = vmatpush1.msra.mxu0 %v8376
        %8407 = vmatprep.subr.mxu0 0.0
        %8408 = vmatpush1.msra.mxu0 %v8377
        %8409 = vmatprep.subr.mxu0 0.0
        %8410 = vmatpush1.msra.mxu0 %v8378
        %8411 = vmatprep.subr.mxu0 0.0
        %8412 = vmatpush1.msra.mxu0 0.0
        %8413 = vmatprep.subr.mxu0 0.0
        %8414 = vmatpush1.msra.mxu0 0.0
        %8415 = vmatprep.subr.mxu0 0.0
        %8416 = vmatpush1.msra.mxu0 0.0
        %8417 = vmatprep.subr.mxu0 0.0
        %8418 = vmatpush1.msra.mxu0 0.0
        %8419 = vmatprep.subr.mxu0 0.0
        %8420 = vmatpush1.msra.mxu0 0.0
        %8421 = vmatprep.subr.mxu0 0.0
        %8422 = vmatpush1.msra.mxu0 0.0
        %8423 = vmatprep.subr.mxu0 0.0
        %8424 = vmatpush1.msra.mxu0 0.0
        %8425 = vmatprep.subr.mxu0 0.0
        %8426 = vmatpush1.msra.mxu0 0.0
        %8427 = vmatprep.subr.mxu0 0.0
        %8428 = vmatpush1.msra.mxu0 0.0
        %8429 = vmatprep.subr.mxu0 0.0
        %8430 = vmatpush1.msra.mxu0 0.0
        %8431 = vmatprep.subr.mxu0 0.0
        %8432 = vmatpush1.msra.mxu0 0.0
        %8433 = vmatprep.subr.mxu0 0.0
        %8434 = vmatpush1.msra.mxu0 0.0
        %8435 = vmatprep.subr.mxu0 0.0
        %8436 = vmatpush1.msra.mxu0 0.0
        %8437 = vmatprep.subr.mxu0 0.0
        %8438 = vmatpush1.msra.mxu0 0.0
        %8439 = vmatprep.subr.mxu0 0.0
        %8440 = vmatpush1.msra.mxu0 0.0
        %8441 = vmatprep.subr.mxu0 0.0
        %8442 = vmatpush1.msra.mxu0 0.0
        %8443 = vmatprep.mubr.f32.mxu0 0.0
        %8444 = vmatmul.mubr.f32.gmra.mrb[0].mxu0 %v8337
        %v8445 = vpop.f32.mrb[0].mxu0
        %v8446 = vadd.f32 0.0, %v8445
        %v8447 = vpop.f32.mrb[0].mxu0
        %8448 = vmatprep.mubr.f32.mxu0 0.0
        %8449 = vmatmul.mubr.f32.gmra.mrb[0].mxu0 %v8338
        %v8450 = vpop.f32.mrb[0].mxu0
        %v8451 = vadd.f32 0.0, %v8450
        %v8452 = vpop.f32.mrb[0].mxu0
        %8453 = vmatprep.mubr.f32.mxu0 0.0
        %8454 = vmatmul.mubr.f32.gmra.mrb[0].mxu0 %v8339
        %v8455 = vpop.f32.mrb[0].mxu0
        %v8456 = vadd.f32 0.0, %v8455
        %v8457 = vpop.f32.mrb[0].mxu0
        %8458 = vmatprep.mubr.f32.mxu0 0.0
        %8459 = vmatmul.mubr.f32.gmra.mrb[0].mxu0 %v8340
        %v8460 = vpop.f32.mrb[0].mxu0
        %v8461 = vadd.f32 0.0, %v8460
        %v8462 = vpop.f32.mrb[0].mxu0
        %8463 = vmatprep.mubr.f32.mxu0 0.0
        %8464 = vmatmul.mubr.f32.gmra.mrb[0].mxu0 %v8341
        %v8465 = vpop.f32.mrb[0].mxu0
        %v8466 = vadd.f32 0.0, %v8465
        %v8467 = vpop.f32.mrb[0].mxu0
        %8468 = vmatprep.mubr.f32.mxu0 0.0
        %8469 = vmatmul.mubr.f32.gmra.mrb[0].mxu0 %v8342
        %v8470 = vpop.f32.mrb[0].mxu0
        %v8471 = vadd.f32 0.0, %v8470
        %v8472 = vpop.f32.mrb[0].mxu0
        %8473 = vmatprep.mubr.f32.mxu0 0.0
        %8474 = vmatmul.mubr.f32.gmra.mrb[0].mxu0 %v8343
        %v8475 = vpop.f32.mrb[0].mxu0
        %v8476 = vadd.f32 0.0, %v8475
        %v8477 = vpop.f32.mrb[0].mxu0
        %8478 = vmatprep.mubr.f32.mxu0 0.0
        %8479 = vmatmul.mubr.f32.gmra.mrb[0].mxu0 %v8344
        %v8480 = vpop.f32.mrb[0].mxu0
        %v8481 = vadd.f32 0.0, %v8480
        %v8482 = vpop.f32.mrb[0].mxu0
        %8483 = vmatprep.mubr.f32.mxu0 0.0
        %8484 = vmatmul.mubr.f32.gmra.mrb[0].mxu0 %v8345
        %v8485 = vpop.f32.mrb[0].mxu0
        %v8486 = vadd.f32 0.0, %v8485
        %v8487 = vpop.f32.mrb[0].mxu0
        %8488 = vmatprep.mubr.f32.mxu0 0.0
        %8489 = vmatmul.mubr.f32.gmra.mrb[0].mxu0 %v8346
        %v8490 = vpop.f32.mrb[0].mxu0
        %v8491 = vadd.f32 0.0, %v8490
        %v8492 = vpop.f32.mrb[0].mxu0
        %8493 = vmatprep.mubr.f32.mxu0 0.0
        %8494 = vmatmul.mubr.f32.gmra.mrb[0].mxu0 %v8347
        %v8495 = vpop.f32.mrb[0].mxu0
        %v8496 = vadd.f32 0.0, %v8495
        %v8497 = vpop.f32.mrb[0].mxu0
        %8498 = vmatprep.mubr.f32.mxu0 0.0
        %8499 = vmatmul.mubr.f32.gmra.mrb[0].mxu0 %v8348
        %v8500 = vpop.f32.mrb[0].mxu0
        %v8501 = vadd.f32 0.0, %v8500
        %v8502 = vpop.f32.mrb[0].mxu0
        %8503 = vmatprep.mubr.f32.mxu0 0.0
        %8504 = vmatmul.mubr.f32.gmra.mrb[0].mxu0 %v8349
        %v8505 = vpop.f32.mrb[0].mxu0
        %v8506 = vadd.f32 0.0, %v8505
        %v8507 = vpop.f32.mrb[0].mxu0
        %8508 = vmatprep.mubr.f32.mxu0 0.0
        %8509 = vmatmul.mubr.f32.gmra.mrb[0].mxu0 %v8350
        %v8510 = vpop.f32.mrb[0].mxu0
        %v8511 = vadd.f32 0.0, %v8510
        %v8512 = vpop.f32.mrb[0].mxu0
        %8513 = vmatprep.mubr.f32.mxu0 0.0
        %8514 = vmatmul.mubr.f32.gmra.mrb[0].mxu0 %v8351
        %v8515 = vpop.f32.mrb[0].mxu0
        %v8516 = vadd.f32 0.0, %v8515
        %v8517 = vpop.f32.mrb[0].mxu0
        %8518 = vmatprep.mubr.f32.mxu0 0.0
        %8519 = vmatmul.mubr.f32.gmra.mrb[0].mxu0 %v8352
        %v8520 = vpop.f32.mrb[0].mxu0
        %v8521 = vadd.f32 0.0, %v8520
        %v8522 = vpop.f32.mrb[0].mxu0
        %8523 = vmatprep.mubr.f32.mxu0 0.0
        %8524 = vmatmul.mubr.f32.gmra.mrb[0].mxu0 %v8353
        %v8525 = vpop.f32.mrb[0].mxu0
        %v8526 = vadd.f32 0.0, %v8525
        %v8527 = vpop.f32.mrb[0].mxu0
        %8528 = vmatprep.mubr.f32.mxu0 0.0
        %8529 = vmatmul.mubr.f32.gmra.mrb[0].mxu0 %v8354
        %v8530 = vpop.f32.mrb[0].mxu0
        %v8531 = vadd.f32 0.0, %v8530
        %v8532 = vpop.f32.mrb[0].mxu0
        %8533 = vmatprep.mubr.f32.mxu0 0.0
        %8534 = vmatmul.mubr.f32.gmra.mrb[0].mxu0 %v8355
        %v8535 = vpop.f32.mrb[0].mxu0
        %v8536 = vadd.f32 0.0, %v8535
        %v8537 = vpop.f32.mrb[0].mxu0
        %8538 = vmatprep.mubr.f32.mxu0 0.0
        %8539 = vmatmul.mubr.f32.gmra.mrb[0].mxu0 %v8356
        %v8540 = vpop.f32.mrb[0].mxu0
        %v8541 = vadd.f32 0.0, %v8540
        %v8542 = vpop.f32.mrb[0].mxu0
        %8543 = vmatprep.mubr.f32.mxu0 0.0
        %8544 = vmatmul.mubr.f32.gmra.mrb[0].mxu0 %v8357
        %v8545 = vpop.f32.mrb[0].mxu0
        %v8546 = vadd.f32 0.0, %v8545
        %v8547 = vpop.f32.mrb[0].mxu0
        %8548 = vmatprep.mubr.f32.mxu0 0.0
        %8549 = vmatmul.mubr.f32.gmra.mrb[0].mxu0 %v8358
        %v8550 = vpop.f32.mrb[0].mxu0
        %v8551 = vadd.f32 0.0, %v8550
        %v8552 = vpop.f32.mrb[0].mxu0
        %8553 = vmatprep.mubr.f32.mxu0 0.0
        %8554 = vmatmul.mubr.f32.gmra.mrb[0].mxu0 %v8359
        %v8555 = vpop.f32.mrb[0].mxu0
        %v8556 = vadd.f32 0.0, %v8555
        %v8557 = vpop.f32.mrb[0].mxu0
        %8558 = vmatprep.mubr.f32.mxu0 0.0
        %8559 = vmatmul.mubr.f32.gmra.mrb[0].mxu0 %v8360
        %v8560 = vpop.f32.mrb[0].mxu0
        %v8561 = vadd.f32 0.0, %v8560
        %v8562 = vpop.f32.mrb[0].mxu0
        %8563 = vmatprep.mubr.f32.mxu0 0.0
        %8564 = vmatmul.mubr.f32.gmra.mrb[0].mxu0 %v8361
        %v8565 = vpop.f32.mrb[0].mxu0
        %v8566 = vadd.f32 0.0, %v8565
        %v8567 = vpop.f32.mrb[0].mxu0
        %8568 = vdwg.mxu0
        %v8569 = vadd.f32 %v8312, %v8446
        %v8570 = vadd.f32 %v8313, %v8451
        %v8571 = vadd.f32 %v8314, %v8456
        %v8572 = vadd.f32 %v8315, %v8461
        %v8573 = vadd.f32 %v8316, %v8466
        %v8574 = vadd.f32 %v8317, %v8471
        %v8575 = vadd.f32 %v8318, %v8476
        %v8576 = vadd.f32 %v8319, %v8481
        %v8577 = vadd.f32 %v8320, %v8486
        %v8578 = vadd.f32 %v8321, %v8491
        %v8579 = vadd.f32 %v8322, %v8496
        %v8580 = vadd.f32 %v8323, %v8501
        %v8581 = vadd.f32 %v8324, %v8506
        %v8582 = vadd.f32 %v8325, %v8511
        %v8583 = vadd.f32 %v8326, %v8516
        %v8584 = vadd.f32 %v8327, %v8521
        %v8585 = vadd.f32 %v8328, %v8526
        %v8586 = vadd.f32 %v8329, %v8531
        %v8587 = vadd.f32 %v8330, %v8536
        %v8588 = vadd.f32 %v8331, %v8541
        %v8589 = vadd.f32 %v8332, %v8546
        %v8590 = vadd.f32 %v8333, %v8551
        %v8591 = vadd.f32 %v8334, %v8556
        %v8592 = vadd.f32 %v8335, %v8561
        %v8593 = vadd.f32 %v8336, %v8566
        %v8594 = vld [vmem:[#allocation2 + $0x1b] sm:$0xff]
        %v8595 = vld [vmem:[#allocation2 + $0x23] sm:$0xff]
        %v8596 = vld [vmem:[#allocation2 + $0x2b] sm:$0xff]
        %v8597 = vld [vmem:[#allocation2 + $0x33] sm:$0xff]
        %v8598 = vld [vmem:[#allocation2 + $0x3b] sm:$0xff]
        %v8599 = vld [vmem:[#allocation2 + $0x43] sm:$0xff]
        %v8600 = vld [vmem:[#allocation2 + $0x4b] sm:$0xff]
        %v8601 = vld [vmem:[#allocation2 + $0x53] sm:$0xff]
        %v8602 = vld [vmem:[#allocation2 + $0x5b] sm:$0xff]
        %v8603 = vld [vmem:[#allocation2 + $0x63] sm:$0xff]
        %v8604 = vld [vmem:[#allocation2 + $0x6b] sm:$0xff]
        %v8605 = vld [vmem:[#allocation2 + $0x73] sm:$0xff]
        %v8606 = vld [vmem:[#allocation2 + $0x7b] sm:$0xff]
        %v8607 = vld [vmem:[#allocation2 + $0x83] sm:$0xff]
        %v8608 = vld [vmem:[#allocation2 + $0x8b] sm:$0xff]
        %v8609 = vld [vmem:[#allocation2 + $0x93] sm:$0xff]
        %v8610 = vld [vmem:[#allocation2 + $0x9b] sm:$0xff]
        %v8611 = vld [vmem:[#allocation2 + $0xa3] sm:$0xff]
        %v8612 = vld [vmem:[#allocation2 + $0xab] sm:$0xff]
        %v8613 = vld [vmem:[#allocation2 + $0xb3] sm:$0xff]
        %v8614 = vld [vmem:[#allocation2 + $0xbb] sm:$0xff]
        %v8615 = vld [vmem:[#allocation2 + $0xc3] sm:$0xff]
        %v8616 = vld [vmem:[#allocation2 + $0xcb] sm:$0xff]
        %v8617 = vld [vmem:[#allocation2 + $0xd3] sm:$0xff]
        %v8618 = vld [vmem:[#allocation2 + $0xdb] sm:$0xff]
        %s8619 = scalar_lea.vmem %s389, 3712 [#allocation5]
        %v8620 = vld [vmem:[%s8619] sm:$0xff]
        %v8621 = vld [vmem:[%s8619 + $0x8] sm:$0xff]
        %v8622 = vld [vmem:[%s8619 + $0x10] sm:$0xff]
        %v8623 = vld [vmem:[%s8619 + $0x18] sm:$0xff]
        %v8624 = vld [vmem:[%s8619 + $0x20] sm:$0xff]
        %v8625 = vld [vmem:[%s8619 + $0x28] sm:$0xff]
        %v8626 = vld [vmem:[%s8619 + $0x30] sm:$0xff]
        %v8627 = vld [vmem:[%s8619 + $0x38] sm:$0xff]
        %v8628 = vld [vmem:[%s8619 + $0x40] sm:$0xff]
        %v8629 = vld [vmem:[%s8619 + $0x48] sm:$0xff]
        %v8630 = vld [vmem:[%s8619 + $0x50] sm:$0xff]
        %v8631 = vld [vmem:[%s8619 + $0x58] sm:$0xff]
        %v8632 = vld [vmem:[%s8619 + $0x60] sm:$0xff]
        %v8633 = vld [vmem:[%s8619 + $0x68] sm:$0xff]
        %v8634 = vld [vmem:[%s8619 + $0x70] sm:$0xff]
        %v8635 = vld [vmem:[%s8619 + $0x78] sm:$0xff]
        %8636 = vmatprep.subr.mxu0 0.0
        %8637 = vmatpush1.msra.mxu0 %v8620
        %8638 = vmatprep.subr.mxu0 0.0
        %8639 = vmatpush1.msra.mxu0 %v8621
        %8640 = vmatprep.subr.mxu0 0.0
        %8641 = vmatpush1.msra.mxu0 %v8622
        %8642 = vmatprep.subr.mxu0 0.0
        %8643 = vmatpush1.msra.mxu0 %v8623
        %8644 = vmatprep.subr.mxu0 0.0
        %8645 = vmatpush1.msra.mxu0 %v8624
        %8646 = vmatprep.subr.mxu0 0.0
        %8647 = vmatpush1.msra.mxu0 %v8625
        %8648 = vmatprep.subr.mxu0 0.0
        %8649 = vmatpush1.msra.mxu0 %v8626
        %8650 = vmatprep.subr.mxu0 0.0
        %8651 = vmatpush1.msra.mxu0 %v8627
        %8652 = vmatprep.subr.mxu0 0.0
        %8653 = vmatpush1.msra.mxu0 %v8628
        %8654 = vmatprep.subr.mxu0 0.0
        %8655 = vmatpush1.msra.mxu0 %v8629
        %8656 = vmatprep.subr.mxu0 0.0
        %8657 = vmatpush1.msra.mxu0 %v8630
        %8658 = vmatprep.subr.mxu0 0.0
        %8659 = vmatpush1.msra.mxu0 %v8631
        %8660 = vmatprep.subr.mxu0 0.0
        %8661 = vmatpush1.msra.mxu0 %v8632
        %8662 = vmatprep.subr.mxu0 0.0
        %8663 = vmatpush1.msra.mxu0 %v8633
        %8664 = vmatprep.subr.mxu0 0.0
        %8665 = vmatpush1.msra.mxu0 %v8634
        %8666 = vmatprep.subr.mxu0 0.0
        %8667 = vmatpush1.msra.mxu0 %v8635
        %8668 = vmatprep.subr.mxu0 0.0
        %8669 = vmatpush1.msra.mxu0 0.0
        %8670 = vmatprep.subr.mxu0 0.0
        %8671 = vmatpush1.msra.mxu0 0.0
        %8672 = vmatprep.subr.mxu0 0.0
        %8673 = vmatpush1.msra.mxu0 0.0
        %8674 = vmatprep.subr.mxu0 0.0
        %8675 = vmatpush1.msra.mxu0 0.0
        %8676 = vmatprep.subr.mxu0 0.0
        %8677 = vmatpush1.msra.mxu0 0.0
        %8678 = vmatprep.subr.mxu0 0.0
        %8679 = vmatpush1.msra.mxu0 0.0
        %8680 = vmatprep.subr.mxu0 0.0
        %8681 = vmatpush1.msra.mxu0 0.0
        %8682 = vmatprep.subr.mxu0 0.0
        %8683 = vmatpush1.msra.mxu0 0.0
        %8684 = vmatprep.subr.mxu0 0.0
        %8685 = vmatpush1.msra.mxu0 0.0
        %8686 = vmatprep.subr.mxu0 0.0
        %8687 = vmatpush1.msra.mxu0 0.0
        %8688 = vmatprep.subr.mxu0 0.0
        %8689 = vmatpush1.msra.mxu0 0.0
        %8690 = vmatprep.subr.mxu0 0.0
        %8691 = vmatpush1.msra.mxu0 0.0
        %8692 = vmatprep.subr.mxu0 0.0
        %8693 = vmatpush1.msra.mxu0 0.0
        %8694 = vmatprep.subr.mxu0 0.0
        %8695 = vmatpush1.msra.mxu0 0.0
        %8696 = vmatprep.subr.mxu0 0.0
        %8697 = vmatpush1.msra.mxu0 0.0
        %8698 = vmatprep.subr.mxu0 0.0
        %8699 = vmatpush1.msra.mxu0 0.0
        %8700 = vmatprep.mubr.f32.mxu0 0.0
        %8701 = vmatmul.mubr.f32.gmra.mrb[0].mxu0 %v8594
        %v8702 = vpop.f32.mrb[0].mxu0
        %v8703 = vadd.f32 0.0, %v8702
        %v8704 = vpop.f32.mrb[0].mxu0
        %8705 = vmatprep.mubr.f32.mxu0 0.0
        %8706 = vmatmul.mubr.f32.gmra.mrb[0].mxu0 %v8595
        %v8707 = vpop.f32.mrb[0].mxu0
        %v8708 = vadd.f32 0.0, %v8707
        %v8709 = vpop.f32.mrb[0].mxu0
        %8710 = vmatprep.mubr.f32.mxu0 0.0
        %8711 = vmatmul.mubr.f32.gmra.mrb[0].mxu0 %v8596
        %v8712 = vpop.f32.mrb[0].mxu0
        %v8713 = vadd.f32 0.0, %v8712
        %v8714 = vpop.f32.mrb[0].mxu0
        %8715 = vmatprep.mubr.f32.mxu0 0.0
        %8716 = vmatmul.mubr.f32.gmra.mrb[0].mxu0 %v8597
        %v8717 = vpop.f32.mrb[0].mxu0
        %v8718 = vadd.f32 0.0, %v8717
        %v8719 = vpop.f32.mrb[0].mxu0
        %8720 = vmatprep.mubr.f32.mxu0 0.0
        %8721 = vmatmul.mubr.f32.gmra.mrb[0].mxu0 %v8598
        %v8722 = vpop.f32.mrb[0].mxu0
        %v8723 = vadd.f32 0.0, %v8722
        %v8724 = vpop.f32.mrb[0].mxu0
        %8725 = vmatprep.mubr.f32.mxu0 0.0
        %8726 = vmatmul.mubr.f32.gmra.mrb[0].mxu0 %v8599
        %v8727 = vpop.f32.mrb[0].mxu0
        %v8728 = vadd.f32 0.0, %v8727
        %v8729 = vpop.f32.mrb[0].mxu0
        %8730 = vmatprep.mubr.f32.mxu0 0.0
        %8731 = vmatmul.mubr.f32.gmra.mrb[0].mxu0 %v8600
        %v8732 = vpop.f32.mrb[0].mxu0
        %v8733 = vadd.f32 0.0, %v8732
        %v8734 = vpop.f32.mrb[0].mxu0
        %8735 = vmatprep.mubr.f32.mxu0 0.0
        %8736 = vmatmul.mubr.f32.gmra.mrb[0].mxu0 %v8601
        %v8737 = vpop.f32.mrb[0].mxu0
        %v8738 = vadd.f32 0.0, %v8737
        %v8739 = vpop.f32.mrb[0].mxu0
        %8740 = vmatprep.mubr.f32.mxu0 0.0
        %8741 = vmatmul.mubr.f32.gmra.mrb[0].mxu0 %v8602
        %v8742 = vpop.f32.mrb[0].mxu0
        %v8743 = vadd.f32 0.0, %v8742
        %v8744 = vpop.f32.mrb[0].mxu0
        %8745 = vmatprep.mubr.f32.mxu0 0.0
        %8746 = vmatmul.mubr.f32.gmra.mrb[0].mxu0 %v8603
        %v8747 = vpop.f32.mrb[0].mxu0
        %v8748 = vadd.f32 0.0, %v8747
        %v8749 = vpop.f32.mrb[0].mxu0
        %8750 = vmatprep.mubr.f32.mxu0 0.0
        %8751 = vmatmul.mubr.f32.gmra.mrb[0].mxu0 %v8604
        %v8752 = vpop.f32.mrb[0].mxu0
        %v8753 = vadd.f32 0.0, %v8752
        %v8754 = vpop.f32.mrb[0].mxu0
        %8755 = vmatprep.mubr.f32.mxu0 0.0
        %8756 = vmatmul.mubr.f32.gmra.mrb[0].mxu0 %v8605
        %v8757 = vpop.f32.mrb[0].mxu0
        %v8758 = vadd.f32 0.0, %v8757
        %v8759 = vpop.f32.mrb[0].mxu0
        %8760 = vmatprep.mubr.f32.mxu0 0.0
        %8761 = vmatmul.mubr.f32.gmra.mrb[0].mxu0 %v8606
        %v8762 = vpop.f32.mrb[0].mxu0
        %v8763 = vadd.f32 0.0, %v8762
        %v8764 = vpop.f32.mrb[0].mxu0
        %8765 = vmatprep.mubr.f32.mxu0 0.0
        %8766 = vmatmul.mubr.f32.gmra.mrb[0].mxu0 %v8607
        %v8767 = vpop.f32.mrb[0].mxu0
        %v8768 = vadd.f32 0.0, %v8767
        %v8769 = vpop.f32.mrb[0].mxu0
        %8770 = vmatprep.mubr.f32.mxu0 0.0
        %8771 = vmatmul.mubr.f32.gmra.mrb[0].mxu0 %v8608
        %v8772 = vpop.f32.mrb[0].mxu0
        %v8773 = vadd.f32 0.0, %v8772
        %v8774 = vpop.f32.mrb[0].mxu0
        %8775 = vmatprep.mubr.f32.mxu0 0.0
        %8776 = vmatmul.mubr.f32.gmra.mrb[0].mxu0 %v8609
        %v8777 = vpop.f32.mrb[0].mxu0
        %v8778 = vadd.f32 0.0, %v8777
        %v8779 = vpop.f32.mrb[0].mxu0
        %8780 = vmatprep.mubr.f32.mxu0 0.0
        %8781 = vmatmul.mubr.f32.gmra.mrb[0].mxu0 %v8610
        %v8782 = vpop.f32.mrb[0].mxu0
        %v8783 = vadd.f32 0.0, %v8782
        %v8784 = vpop.f32.mrb[0].mxu0
        %8785 = vmatprep.mubr.f32.mxu0 0.0
        %8786 = vmatmul.mubr.f32.gmra.mrb[0].mxu0 %v8611
        %v8787 = vpop.f32.mrb[0].mxu0
        %v8788 = vadd.f32 0.0, %v8787
        %v8789 = vpop.f32.mrb[0].mxu0
        %8790 = vmatprep.mubr.f32.mxu0 0.0
        %8791 = vmatmul.mubr.f32.gmra.mrb[0].mxu0 %v8612
        %v8792 = vpop.f32.mrb[0].mxu0
        %v8793 = vadd.f32 0.0, %v8792
        %v8794 = vpop.f32.mrb[0].mxu0
        %8795 = vmatprep.mubr.f32.mxu0 0.0
        %8796 = vmatmul.mubr.f32.gmra.mrb[0].mxu0 %v8613
        %v8797 = vpop.f32.mrb[0].mxu0
        %v8798 = vadd.f32 0.0, %v8797
        %v8799 = vpop.f32.mrb[0].mxu0
        %8800 = vmatprep.mubr.f32.mxu0 0.0
        %8801 = vmatmul.mubr.f32.gmra.mrb[0].mxu0 %v8614
        %v8802 = vpop.f32.mrb[0].mxu0
        %v8803 = vadd.f32 0.0, %v8802
        %v8804 = vpop.f32.mrb[0].mxu0
        %8805 = vmatprep.mubr.f32.mxu0 0.0
        %8806 = vmatmul.mubr.f32.gmra.mrb[0].mxu0 %v8615
        %v8807 = vpop.f32.mrb[0].mxu0
        %v8808 = vadd.f32 0.0, %v8807
        %v8809 = vpop.f32.mrb[0].mxu0
        %8810 = vmatprep.mubr.f32.mxu0 0.0
        %8811 = vmatmul.mubr.f32.gmra.mrb[0].mxu0 %v8616
        %v8812 = vpop.f32.mrb[0].mxu0
        %v8813 = vadd.f32 0.0, %v8812
        %v8814 = vpop.f32.mrb[0].mxu0
        %8815 = vmatprep.mubr.f32.mxu0 0.0
        %8816 = vmatmul.mubr.f32.gmra.mrb[0].mxu0 %v8617
        %v8817 = vpop.f32.mrb[0].mxu0
        %v8818 = vadd.f32 0.0, %v8817
        %v8819 = vpop.f32.mrb[0].mxu0
        %8820 = vmatprep.mubr.f32.mxu0 0.0
        %8821 = vmatmul.mubr.f32.gmra.mrb[0].mxu0 %v8618
        %v8822 = vpop.f32.mrb[0].mxu0
        %v8823 = vadd.f32 0.0, %v8822
        %v8824 = vpop.f32.mrb[0].mxu0
        %8825 = vdwg.mxu0
        %v8826 = vadd.f32 %v8569, %v8703
        %v8827 = vadd.f32 %v8570, %v8708
        %v8828 = vadd.f32 %v8571, %v8713
        %v8829 = vadd.f32 %v8572, %v8718
        %v8830 = vadd.f32 %v8573, %v8723
        %v8831 = vadd.f32 %v8574, %v8728
        %v8832 = vadd.f32 %v8575, %v8733
        %v8833 = vadd.f32 %v8576, %v8738
        %v8834 = vadd.f32 %v8577, %v8743
        %v8835 = vadd.f32 %v8578, %v8748
        %v8836 = vadd.f32 %v8579, %v8753
        %v8837 = vadd.f32 %v8580, %v8758
        %v8838 = vadd.f32 %v8581, %v8763
        %v8839 = vadd.f32 %v8582, %v8768
        %v8840 = vadd.f32 %v8583, %v8773
        %v8841 = vadd.f32 %v8584, %v8778
        %v8842 = vadd.f32 %v8585, %v8783
        %v8843 = vadd.f32 %v8586, %v8788
        %v8844 = vadd.f32 %v8587, %v8793
        %v8845 = vadd.f32 %v8588, %v8798
        %v8846 = vadd.f32 %v8589, %v8803
        %v8847 = vadd.f32 %v8590, %v8808
        %v8848 = vadd.f32 %v8591, %v8813
        %v8849 = vadd.f32 %v8592, %v8818
        %v8850 = vadd.f32 %v8593, %v8823
        %s8851 = scalar_lea.vmem %s398, 8 [#allocation7]
        %v8852 = vld [vmem:[%s8851] sm:$0xff]
        %v8853 = vadd.f32 %v8826, %v8852
        %v8854 = vadd.f32 %v8827, %v8852
        %v8855 = vadd.f32 %v8828, %v8852
        %v8856 = vadd.f32 %v8829, %v8852
        %v8857 = vadd.f32 %v8830, %v8852
        %v8858 = vadd.f32 %v8831, %v8852
        %v8859 = vadd.f32 %v8832, %v8852
        %v8860 = vadd.f32 %v8833, %v8852
        %v8861 = vadd.f32 %v8834, %v8852
        %v8862 = vadd.f32 %v8835, %v8852
        %v8863 = vadd.f32 %v8836, %v8852
        %v8864 = vadd.f32 %v8837, %v8852
        %v8865 = vadd.f32 %v8838, %v8852
        %v8866 = vadd.f32 %v8839, %v8852
        %v8867 = vadd.f32 %v8840, %v8852
        %v8868 = vadd.f32 %v8841, %v8852
        %v8869 = vadd.f32 %v8842, %v8852
        %v8870 = vadd.f32 %v8843, %v8852
        %v8871 = vadd.f32 %v8844, %v8852
        %v8872 = vadd.f32 %v8845, %v8852
        %v8873 = vadd.f32 %v8846, %v8852
        %v8874 = vadd.f32 %v8847, %v8852
        %v8875 = vadd.f32 %v8848, %v8852
        %v8876 = vadd.f32 %v8849, %v8852
        %v8877 = vadd.f32 %v8850, %v8852
        %v8878 = vmax.f32 %v8853, 0.0
        %v8879 = vmax.f32 %v8854, 0.0
        %v8880 = vmax.f32 %v8855, 0.0
        %v8881 = vmax.f32 %v8856, 0.0
        %v8882 = vmax.f32 %v8857, 0.0
        %v8883 = vmax.f32 %v8858, 0.0
        %v8884 = vmax.f32 %v8859, 0.0
        %v8885 = vmax.f32 %v8860, 0.0
        %v8886 = vmax.f32 %v8861, 0.0
        %v8887 = vmax.f32 %v8862, 0.0
        %v8888 = vmax.f32 %v8863, 0.0
        %v8889 = vmax.f32 %v8864, 0.0
        %v8890 = vmax.f32 %v8865, 0.0
        %v8891 = vmax.f32 %v8866, 0.0
        %v8892 = vmax.f32 %v8867, 0.0
        %v8893 = vmax.f32 %v8868, 0.0
        %v8894 = vmax.f32 %v8869, 0.0
        %v8895 = vmax.f32 %v8870, 0.0
        %v8896 = vmax.f32 %v8871, 0.0
        %v8897 = vmax.f32 %v8872, 0.0
        %v8898 = vmax.f32 %v8873, 0.0
        %v8899 = vmax.f32 %v8874, 0.0
        %v8900 = vmax.f32 %v8875, 0.0
        %v8901 = vmax.f32 %v8876, 0.0
        %v8902 = vmax.f32 %v8877, 0.0
        %v8903 = vmin.f32 %v8878, 6.0
        %v8904 = vmin.f32 %v8879, 6.0
        %v8905 = vmin.f32 %v8880, 6.0
        %v8906 = vmin.f32 %v8881, 6.0
        %v8907 = vmin.f32 %v8882, 6.0
        %v8908 = vmin.f32 %v8883, 6.0
        %v8909 = vmin.f32 %v8884, 6.0
        %v8910 = vmin.f32 %v8885, 6.0
        %v8911 = vmin.f32 %v8886, 6.0
        %v8912 = vmin.f32 %v8887, 6.0
        %v8913 = vmin.f32 %v8888, 6.0
        %v8914 = vmin.f32 %v8889, 6.0
        %v8915 = vmin.f32 %v8890, 6.0
        %v8916 = vmin.f32 %v8891, 6.0
        %v8917 = vmin.f32 %v8892, 6.0
        %v8918 = vmin.f32 %v8893, 6.0
        %v8919 = vmin.f32 %v8894, 6.0
        %v8920 = vmin.f32 %v8895, 6.0
        %v8921 = vmin.f32 %v8896, 6.0
        %v8922 = vmin.f32 %v8897, 6.0
        %v8923 = vmin.f32 %v8898, 6.0
        %v8924 = vmin.f32 %v8899, 6.0
        %v8925 = vmin.f32 %v8900, 6.0
        %v8926 = vmin.f32 %v8901, 6.0
        %v8927 = vmin.f32 %v8902, 6.0
        %p8928 = scmp.lt.s32.totalorder %s27, 1
        // Predicated region
        $region85: #{forward.1} parent=51 // pred_check
          %p8929 = pneg %p8928
        $region86: #{forward.1} parent=51 // pred_check_branch
          %8931 = sbr.rel (%p8929) target = $region88
        $region87: #{forward.1} parent=51 // pred_region
          %v8932 = vld [vmem:[#allocation3] sm:$0xff]
          %v8933 = vld [vmem:[#allocation3 + $0x8] sm:$0xff]
          %v8934 = vld [vmem:[#allocation3 + $0x10] sm:$0xff]
          %v8935 = vld [vmem:[#allocation3 + $0x18] sm:$0xff]
          %v8936 = vld [vmem:[#allocation3 + $0x20] sm:$0xff]
          %v8937 = vld [vmem:[#allocation3 + $0x28] sm:$0xff]
          %v8938 = vld [vmem:[#allocation3 + $0x30] sm:$0xff]
          %v8939 = vld [vmem:[#allocation3 + $0x38] sm:$0xff]
          %v8940 = vld [vmem:[#allocation3 + $0x40] sm:$0xff]
          %v8941 = vld [vmem:[#allocation3 + $0x48] sm:$0xff]
          %v8942 = vld [vmem:[#allocation3 + $0x50] sm:$0xff]
          %v8943 = vld [vmem:[#allocation3 + $0x58] sm:$0xff]
          %v8944 = vld [vmem:[#allocation3 + $0x60] sm:$0xff]
          %v8945 = vld [vmem:[#allocation3 + $0x68] sm:$0xff]
          %v8946 = vld [vmem:[#allocation3 + $0x70] sm:$0xff]
          %v8947 = vld [vmem:[#allocation3 + $0x78] sm:$0xff]
          %v8948 = vld [vmem:[#allocation3 + $0x80] sm:$0xff]
          %v8949 = vld [vmem:[#allocation3 + $0x88] sm:$0xff]
          %v8950 = vld [vmem:[#allocation3 + $0x90] sm:$0xff]
          %v8951 = vld [vmem:[#allocation3 + $0x98] sm:$0xff]
          %v8952 = vld [vmem:[#allocation3 + $0xa0] sm:$0xff]
          %v8953 = vld [vmem:[#allocation3 + $0xa8] sm:$0xff]
          %v8954 = vld [vmem:[#allocation3 + $0xb0] sm:$0xff]
          %v8955 = vld [vmem:[#allocation3 + $0xb8] sm:$0xff]
          %v8956 = vld [vmem:[#allocation3 + $0xc0] sm:$0xff]
          %v8957 = vmul.f32 %v8903, %v8932
          %v8958 = vmul.f32 %v8904, %v8933
          %v8959 = vmul.f32 %v8905, %v8934
          %v8960 = vmul.f32 %v8906, %v8935
          %v8961 = vmul.f32 %v8907, %v8936
          %v8962 = vmul.f32 %v8908, %v8937
          %v8963 = vmul.f32 %v8909, %v8938
          %v8964 = vmul.f32 %v8910, %v8939
          %v8965 = vmul.f32 %v8911, %v8940
          %v8966 = vmul.f32 %v8912, %v8941
          %v8967 = vmul.f32 %v8913, %v8942
          %v8968 = vmul.f32 %v8914, %v8943
          %v8969 = vmul.f32 %v8915, %v8944
          %v8970 = vmul.f32 %v8916, %v8945
          %v8971 = vmul.f32 %v8917, %v8946
          %v8972 = vmul.f32 %v8918, %v8947
          %v8973 = vmul.f32 %v8919, %v8948
          %v8974 = vmul.f32 %v8920, %v8949
          %v8975 = vmul.f32 %v8921, %v8950
          %v8976 = vmul.f32 %v8922, %v8951
          %v8977 = vmul.f32 %v8923, %v8952
          %v8978 = vmul.f32 %v8924, %v8953
          %v8979 = vmul.f32 %v8925, %v8954
          %v8980 = vmul.f32 %v8926, %v8955
          %v8981 = vmul.f32 %v8927, %v8956
          %8982 = vst [vmem:[#allocation2 + $0x10] sm:$0xff] %v8957
          %8983 = vst [vmem:[#allocation2 + $0x18] sm:$0xff] %v8958
          %8984 = vst [vmem:[#allocation2 + $0x20] sm:$0xff] %v8959
          %8985 = vst [vmem:[#allocation2 + $0x28] sm:$0xff] %v8960
          %8986 = vst [vmem:[#allocation2 + $0x30] sm:$0xff] %v8961
          %8987 = vst [vmem:[#allocation2 + $0x38] sm:$0xff] %v8962
          %8988 = vst [vmem:[#allocation2 + $0x40] sm:$0xff] %v8963
          %8989 = vst [vmem:[#allocation2 + $0x48] sm:$0xff] %v8964
          %8990 = vst [vmem:[#allocation2 + $0x50] sm:$0xff] %v8965
          %8991 = vst [vmem:[#allocation2 + $0x58] sm:$0xff] %v8966
          %8992 = vst [vmem:[#allocation2 + $0x60] sm:$0xff] %v8967
          %8993 = vst [vmem:[#allocation2 + $0x68] sm:$0xff] %v8968
          %8994 = vst [vmem:[#allocation2 + $0x70] sm:$0xff] %v8969
          %8995 = vst [vmem:[#allocation2 + $0x78] sm:$0xff] %v8970
          %8996 = vst [vmem:[#allocation2 + $0x80] sm:$0xff] %v8971
          %8997 = vst [vmem:[#allocation2 + $0x88] sm:$0xff] %v8972
          %8998 = vst [vmem:[#allocation2 + $0x90] sm:$0xff] %v8973
          %8999 = vst [vmem:[#allocation2 + $0x98] sm:$0xff] %v8974
          %9000 = vst [vmem:[#allocation2 + $0xa0] sm:$0xff] %v8975
          %9001 = vst [vmem:[#allocation2 + $0xa8] sm:$0xff] %v8976
          %9002 = vst [vmem:[#allocation2 + $0xb0] sm:$0xff] %v8977
          %9003 = vst [vmem:[#allocation2 + $0xb8] sm:$0xff] %v8978
          %9004 = vst [vmem:[#allocation2 + $0xc0] sm:$0xff] %v8979
          %9005 = vst [vmem:[#allocation2 + $0xc8] sm:$0xff] %v8980
          %9006 = vst [vmem:[#allocation2 + $0xd0] sm:$0xff] %v8981
        $region88: #{forward.1} parent=51 // pred_fallthru
          _
        %p9007 = scmp.eq.s32.totalorder %s27, 1
        // Predicated region
        $region89: #{forward.1} parent=51 // pred_check
          %p9008 = pneg %p9007
        $region90: #{forward.1} parent=51 // pred_check_branch
          %9010 = sbr.rel (%p9008) target = $region92
        $region91: #{forward.1} parent=51 // pred_region
          %v9011 = vld [vmem:[#allocation11] sm:$0xff]
          %v9012 = vld [vmem:[#allocation11 + $0x8] sm:$0xff]
          %v9013 = vld [vmem:[#allocation11 + $0x10] sm:$0xff]
          %v9014 = vld [vmem:[#allocation11 + $0x18] sm:$0xff]
          %v9015 = vld [vmem:[#allocation11 + $0x20] sm:$0xff]
          %v9016 = vld [vmem:[#allocation11 + $0x28] sm:$0xff]
          %v9017 = vld [vmem:[#allocation11 + $0x30] sm:$0xff]
          %v9018 = vld [vmem:[#allocation11 + $0x38] sm:$0xff]
          %v9019 = vld [vmem:[#allocation11 + $0x40] sm:$0xff]
          %v9020 = vld [vmem:[#allocation11 + $0x48] sm:$0xff]
          %v9021 = vld [vmem:[#allocation11 + $0x50] sm:$0xff]
          %v9022 = vld [vmem:[#allocation11 + $0x58] sm:$0xff]
          %v9023 = vld [vmem:[#allocation11 + $0x60] sm:$0xff]
          %v9024 = vld [vmem:[#allocation11 + $0x68] sm:$0xff]
          %v9025 = vld [vmem:[#allocation11 + $0x70] sm:$0xff]
          %v9026 = vld [vmem:[#allocation11 + $0x78] sm:$0xff]
          %9027 = vmatprep.subr.mxu0 0.0
          %9028 = vmatpush1.msra.mxu0 %v9011
          %9029 = vmatprep.subr.mxu0 0.0
          %9030 = vmatpush1.msra.mxu0 %v9012
          %9031 = vmatprep.subr.mxu0 0.0
          %9032 = vmatpush1.msra.mxu0 %v9013
          %9033 = vmatprep.subr.mxu0 0.0
          %9034 = vmatpush1.msra.mxu0 %v9014
          %9035 = vmatprep.subr.mxu0 0.0
          %9036 = vmatpush1.msra.mxu0 %v9015
          %9037 = vmatprep.subr.mxu0 0.0
          %9038 = vmatpush1.msra.mxu0 %v9016
          %9039 = vmatprep.subr.mxu0 0.0
          %9040 = vmatpush1.msra.mxu0 %v9017
          %9041 = vmatprep.subr.mxu0 0.0
          %9042 = vmatpush1.msra.mxu0 %v9018
          %9043 = vmatprep.subr.mxu0 0.0
          %9044 = vmatpush1.msra.mxu0 %v9019
          %9045 = vmatprep.subr.mxu0 0.0
          %9046 = vmatpush1.msra.mxu0 %v9020
          %9047 = vmatprep.subr.mxu0 0.0
          %9048 = vmatpush1.msra.mxu0 %v9021
          %9049 = vmatprep.subr.mxu0 0.0
          %9050 = vmatpush1.msra.mxu0 %v9022
          %9051 = vmatprep.subr.mxu0 0.0
          %9052 = vmatpush1.msra.mxu0 %v9023
          %9053 = vmatprep.subr.mxu0 0.0
          %9054 = vmatpush1.msra.mxu0 %v9024
          %9055 = vmatprep.subr.mxu0 0.0
          %9056 = vmatpush1.msra.mxu0 %v9025
          %9057 = vmatprep.subr.mxu0 0.0
          %9058 = vmatpush1.msra.mxu0 %v9026
          %9059 = vmatprep.subr.mxu0 0.0
          %9060 = vmatpush1.msra.mxu0 0.0
          %9061 = vmatprep.subr.mxu0 0.0
          %9062 = vmatpush1.msra.mxu0 0.0
          %9063 = vmatprep.subr.mxu0 0.0
          %9064 = vmatpush1.msra.mxu0 0.0
          %9065 = vmatprep.subr.mxu0 0.0
          %9066 = vmatpush1.msra.mxu0 0.0
          %9067 = vmatprep.subr.mxu0 0.0
          %9068 = vmatpush1.msra.mxu0 0.0
          %9069 = vmatprep.subr.mxu0 0.0
          %9070 = vmatpush1.msra.mxu0 0.0
          %9071 = vmatprep.subr.mxu0 0.0
          %9072 = vmatpush1.msra.mxu0 0.0
          %9073 = vmatprep.subr.mxu0 0.0
          %9074 = vmatpush1.msra.mxu0 0.0
          %9075 = vmatprep.subr.mxu0 0.0
          %9076 = vmatpush1.msra.mxu0 0.0
          %9077 = vmatprep.subr.mxu0 0.0
          %9078 = vmatpush1.msra.mxu0 0.0
          %9079 = vmatprep.subr.mxu0 0.0
          %9080 = vmatpush1.msra.mxu0 0.0
          %9081 = vmatprep.subr.mxu0 0.0
          %9082 = vmatpush1.msra.mxu0 0.0
          %9083 = vmatprep.subr.mxu0 0.0
          %9084 = vmatpush1.msra.mxu0 0.0
          %9085 = vmatprep.subr.mxu0 0.0
          %9086 = vmatpush1.msra.mxu0 0.0
          %9087 = vmatprep.subr.mxu0 0.0
          %9088 = vmatpush1.msra.mxu0 0.0
          %9089 = vmatprep.subr.mxu0 0.0
          %9090 = vmatpush1.msra.mxu0 0.0
          %9091 = vmatprep.mubr.f32.mxu0 0.0
          %9092 = vmatmul.mubr.f32.gmra.mrb[0].mxu0 %v8903
          %v9093 = vpop.f32.mrb[0].mxu0
          %v9094 = vadd.f32 0.0, %v9093
          %v9095 = vpop.f32.mrb[0].mxu0
          %9096 = vmatprep.mubr.f32.mxu0 0.0
          %9097 = vmatmul.mubr.f32.gmra.mrb[0].mxu0 %v8904
          %v9098 = vpop.f32.mrb[0].mxu0
          %v9099 = vadd.f32 0.0, %v9098
          %v9100 = vpop.f32.mrb[0].mxu0
          %9101 = vmatprep.mubr.f32.mxu0 0.0
          %9102 = vmatmul.mubr.f32.gmra.mrb[0].mxu0 %v8905
          %v9103 = vpop.f32.mrb[0].mxu0
          %v9104 = vadd.f32 0.0, %v9103
          %v9105 = vpop.f32.mrb[0].mxu0
          %9106 = vmatprep.mubr.f32.mxu0 0.0
          %9107 = vmatmul.mubr.f32.gmra.mrb[0].mxu0 %v8906
          %v9108 = vpop.f32.mrb[0].mxu0
          %v9109 = vadd.f32 0.0, %v9108
          %v9110 = vpop.f32.mrb[0].mxu0
          %9111 = vmatprep.mubr.f32.mxu0 0.0
          %9112 = vmatmul.mubr.f32.gmra.mrb[0].mxu0 %v8907
          %v9113 = vpop.f32.mrb[0].mxu0
          %v9114 = vadd.f32 0.0, %v9113
          %v9115 = vpop.f32.mrb[0].mxu0
          %9116 = vmatprep.mubr.f32.mxu0 0.0
          %9117 = vmatmul.mubr.f32.gmra.mrb[0].mxu0 %v8908
          %v9118 = vpop.f32.mrb[0].mxu0
          %v9119 = vadd.f32 0.0, %v9118
          %v9120 = vpop.f32.mrb[0].mxu0
          %9121 = vmatprep.mubr.f32.mxu0 0.0
          %9122 = vmatmul.mubr.f32.gmra.mrb[0].mxu0 %v8909
          %v9123 = vpop.f32.mrb[0].mxu0
          %v9124 = vadd.f32 0.0, %v9123
          %v9125 = vpop.f32.mrb[0].mxu0
          %9126 = vmatprep.mubr.f32.mxu0 0.0
          %9127 = vmatmul.mubr.f32.gmra.mrb[0].mxu0 %v8910
          %v9128 = vpop.f32.mrb[0].mxu0
          %v9129 = vadd.f32 0.0, %v9128
          %v9130 = vpop.f32.mrb[0].mxu0
          %9131 = vmatprep.mubr.f32.mxu0 0.0
          %9132 = vmatmul.mubr.f32.gmra.mrb[0].mxu0 %v8911
          %v9133 = vpop.f32.mrb[0].mxu0
          %v9134 = vadd.f32 0.0, %v9133
          %v9135 = vpop.f32.mrb[0].mxu0
          %9136 = vmatprep.mubr.f32.mxu0 0.0
          %9137 = vmatmul.mubr.f32.gmra.mrb[0].mxu0 %v8912
          %v9138 = vpop.f32.mrb[0].mxu0
          %v9139 = vadd.f32 0.0, %v9138
          %v9140 = vpop.f32.mrb[0].mxu0
          %9141 = vmatprep.mubr.f32.mxu0 0.0
          %9142 = vmatmul.mubr.f32.gmra.mrb[0].mxu0 %v8913
          %v9143 = vpop.f32.mrb[0].mxu0
          %v9144 = vadd.f32 0.0, %v9143
          %v9145 = vpop.f32.mrb[0].mxu0
          %9146 = vmatprep.mubr.f32.mxu0 0.0
          %9147 = vmatmul.mubr.f32.gmra.mrb[0].mxu0 %v8914
          %v9148 = vpop.f32.mrb[0].mxu0
          %v9149 = vadd.f32 0.0, %v9148
          %v9150 = vpop.f32.mrb[0].mxu0
          %9151 = vmatprep.mubr.f32.mxu0 0.0
          %9152 = vmatmul.mubr.f32.gmra.mrb[0].mxu0 %v8915
          %v9153 = vpop.f32.mrb[0].mxu0
          %v9154 = vadd.f32 0.0, %v9153
          %v9155 = vpop.f32.mrb[0].mxu0
          %9156 = vmatprep.mubr.f32.mxu0 0.0
          %9157 = vmatmul.mubr.f32.gmra.mrb[0].mxu0 %v8916
          %v9158 = vpop.f32.mrb[0].mxu0
          %v9159 = vadd.f32 0.0, %v9158
          %v9160 = vpop.f32.mrb[0].mxu0
          %9161 = vmatprep.mubr.f32.mxu0 0.0
          %9162 = vmatmul.mubr.f32.gmra.mrb[0].mxu0 %v8917
          %v9163 = vpop.f32.mrb[0].mxu0
          %v9164 = vadd.f32 0.0, %v9163
          %v9165 = vpop.f32.mrb[0].mxu0
          %9166 = vmatprep.mubr.f32.mxu0 0.0
          %9167 = vmatmul.mubr.f32.gmra.mrb[0].mxu0 %v8918
          %v9168 = vpop.f32.mrb[0].mxu0
          %v9169 = vadd.f32 0.0, %v9168
          %v9170 = vpop.f32.mrb[0].mxu0
          %9171 = vmatprep.mubr.f32.mxu0 0.0
          %9172 = vmatmul.mubr.f32.gmra.mrb[0].mxu0 %v8919
          %v9173 = vpop.f32.mrb[0].mxu0
          %v9174 = vadd.f32 0.0, %v9173
          %v9175 = vpop.f32.mrb[0].mxu0
          %9176 = vmatprep.mubr.f32.mxu0 0.0
          %9177 = vmatmul.mubr.f32.gmra.mrb[0].mxu0 %v8920
          %v9178 = vpop.f32.mrb[0].mxu0
          %v9179 = vadd.f32 0.0, %v9178
          %v9180 = vpop.f32.mrb[0].mxu0
          %9181 = vmatprep.mubr.f32.mxu0 0.0
          %9182 = vmatmul.mubr.f32.gmra.mrb[0].mxu0 %v8921
          %v9183 = vpop.f32.mrb[0].mxu0
          %v9184 = vadd.f32 0.0, %v9183
          %v9185 = vpop.f32.mrb[0].mxu0
          %9186 = vmatprep.mubr.f32.mxu0 0.0
          %9187 = vmatmul.mubr.f32.gmra.mrb[0].mxu0 %v8922
          %v9188 = vpop.f32.mrb[0].mxu0
          %v9189 = vadd.f32 0.0, %v9188
          %v9190 = vpop.f32.mrb[0].mxu0
          %9191 = vmatprep.mubr.f32.mxu0 0.0
          %9192 = vmatmul.mubr.f32.gmra.mrb[0].mxu0 %v8923
          %v9193 = vpop.f32.mrb[0].mxu0
          %v9194 = vadd.f32 0.0, %v9193
          %v9195 = vpop.f32.mrb[0].mxu0
          %9196 = vmatprep.mubr.f32.mxu0 0.0
          %9197 = vmatmul.mubr.f32.gmra.mrb[0].mxu0 %v8924
          %v9198 = vpop.f32.mrb[0].mxu0
          %v9199 = vadd.f32 0.0, %v9198
          %v9200 = vpop.f32.mrb[0].mxu0
          %9201 = vmatprep.mubr.f32.mxu0 0.0
          %9202 = vmatmul.mubr.f32.gmra.mrb[0].mxu0 %v8925
          %v9203 = vpop.f32.mrb[0].mxu0
          %v9204 = vadd.f32 0.0, %v9203
          %v9205 = vpop.f32.mrb[0].mxu0
          %9206 = vmatprep.mubr.f32.mxu0 0.0
          %9207 = vmatmul.mubr.f32.gmra.mrb[0].mxu0 %v8926
          %v9208 = vpop.f32.mrb[0].mxu0
          %v9209 = vadd.f32 0.0, %v9208
          %v9210 = vpop.f32.mrb[0].mxu0
          %9211 = vmatprep.mubr.f32.mxu0 0.0
          %9212 = vmatmul.mubr.f32.gmra.mrb[0].mxu0 %v8927
          %v9213 = vpop.f32.mrb[0].mxu0
          %v9214 = vadd.f32 0.0, %v9213
          %v9215 = vpop.f32.mrb[0].mxu0
          %9216 = vdwg.mxu0
          %v9217 = vld [vmem:[#allocation13] sm:$0xff]
          %v9218 = vadd.f32 %v9094, %v9217
          %v9219 = vadd.f32 %v9099, %v9217
          %v9220 = vadd.f32 %v9104, %v9217
          %v9221 = vadd.f32 %v9109, %v9217
          %v9222 = vadd.f32 %v9114, %v9217
          %v9223 = vadd.f32 %v9119, %v9217
          %v9224 = vadd.f32 %v9124, %v9217
          %v9225 = vadd.f32 %v9129, %v9217
          %v9226 = vadd.f32 %v9134, %v9217
          %v9227 = vadd.f32 %v9139, %v9217
          %v9228 = vadd.f32 %v9144, %v9217
          %v9229 = vadd.f32 %v9149, %v9217
          %v9230 = vadd.f32 %v9154, %v9217
          %v9231 = vadd.f32 %v9159, %v9217
          %v9232 = vadd.f32 %v9164, %v9217
          %v9233 = vadd.f32 %v9169, %v9217
          %v9234 = vadd.f32 %v9174, %v9217
          %v9235 = vadd.f32 %v9179, %v9217
          %v9236 = vadd.f32 %v9184, %v9217
          %v9237 = vadd.f32 %v9189, %v9217
          %v9238 = vadd.f32 %v9194, %v9217
          %v9239 = vadd.f32 %v9199, %v9217
          %v9240 = vadd.f32 %v9204, %v9217
          %v9241 = vadd.f32 %v9209, %v9217
          %v9242 = vadd.f32 %v9214, %v9217
          %9243 = vst [vmem:[%s8] sm:$0xff] %v9218
          %9244 = vst [vmem:[%s8 + $0x8] sm:$0xff] %v9219
          %9245 = vst [vmem:[%s8 + $0x10] sm:$0xff] %v9220
          %9246 = vst [vmem:[%s8 + $0x18] sm:$0xff] %v9221
          %9247 = vst [vmem:[%s8 + $0x20] sm:$0xff] %v9222
          %9248 = vst [vmem:[%s8 + $0x28] sm:$0xff] %v9223
          %9249 = vst [vmem:[%s8 + $0x30] sm:$0xff] %v9224
          %9250 = vst [vmem:[%s8 + $0x38] sm:$0xff] %v9225
          %9251 = vst [vmem:[%s8 + $0x40] sm:$0xff] %v9226
          %9252 = vst [vmem:[%s8 + $0x48] sm:$0xff] %v9227
          %9253 = vst [vmem:[%s8 + $0x50] sm:$0xff] %v9228
          %9254 = vst [vmem:[%s8 + $0x58] sm:$0xff] %v9229
          %9255 = vst [vmem:[%s8 + $0x60] sm:$0xff] %v9230
          %9256 = vst [vmem:[%s8 + $0x68] sm:$0xff] %v9231
          %9257 = vst [vmem:[%s8 + $0x70] sm:$0xff] %v9232
          %9258 = vst [vmem:[%s8 + $0x78] sm:$0xff] %v9233
          %9259 = vst [vmem:[%s8 + $0x80] sm:$0xff] %v9234
          %9260 = vst [vmem:[%s8 + $0x88] sm:$0xff] %v9235
          %9261 = vst [vmem:[%s8 + $0x90] sm:$0xff] %v9236
          %9262 = vst [vmem:[%s8 + $0x98] sm:$0xff] %v9237
          %9263 = vst [vmem:[%s8 + $0xa0] sm:$0xff] %v9238
          %9264 = vst [vmem:[%s8 + $0xa8] sm:$0xff] %v9239
          %9265 = vst [vmem:[%s8 + $0xb0] sm:$0xff] %v9240
          %9266 = vst [vmem:[%s8 + $0xb8] sm:$0xff] %v9241
          %9267 = vst [vmem:[%s8 + $0xc0] sm:$0xff] %v9242
        $region92: #{forward.1} parent=51 // pred_fallthru
          _
        // Predicated region
        $region93: #{forward.1} parent=51 // pred_check
          %p9268 = pneg %p228
        $region94: #{forward.1} parent=51 // pred_check_branch
          %9270 = sbr.rel (%p9268) target = $region96
        $region95: #{forward.1} parent=51 // pred_region
          _
        $region96: #{forward.1} parent=51 // pred_fallthru
          _
        // Predicated region
        $region97: #{forward.1} parent=51 // pred_check
          %p9271 = pneg %p228
        $region98: #{forward.1} parent=51 // pred_check_branch
          %9273 = sbr.rel (%p9271) target = $region100
        $region99: #{forward.1} parent=51 // pred_region
          _
        $region100: #{forward.1} parent=51 // pred_fallthru
          _
      $region52: #{forward.1} parent=5 // pred_fallthru
        _
      %p9274 = scmp.le.s32.totalorder 2, %s22
      // Predicated region
      $region101: #{forward.1} parent=5 // pred_check
        %p9275 = pneg %p9274
      $region102: #{forward.1} parent=5 // pred_check_branch
        %9277 = sbr.rel (%p9275) target = $region104
      $region103: #{forward.1} parent=5 // pred_region
        %s9278 = ssub.s32 %s22, 2
      $region104: #{forward.1} parent=5 // pred_fallthru
        _
    $region6: #{forward.1} parent=1 // loop_footer
      %s26 = sadd.s32 1, %s22
    $region7: #{forward.1} parent=1 // loop_footer_branch
      %21 = sbr.rel target = $region3
    $region8: #{forward.1} parent=1 // loop_exit
      _
    %9279 = vsyncpa [#allocation4], 1
    %s9280 = scalar_lea.sflag [#allocation4], 1
    %9281 = vsyncpa %s9280, 1
    %9282 = vsyncpa [#allocation6], 1
    %s9283 = scalar_lea.sflag [#allocation6], 1
    %9284 = vsyncpa %s9283, 1
    %9285 = vsyncpa [#allocation9], 1
    %s9286 = scalar_lea.sflag [#allocation9], 1
    %9287 = vsyncpa %s9286, 1
    %9288 = vsyncpa [#allocation12], 1

</llo_original>
